<compile_context>
chip_gen: v6e
topology: v6e:2x2x1
jax: 0.10.0
libtpu: 0.0.40
codegen_flags: <defaults>
</compile_context>

<pallas_src>
import math

import jax
import jax.numpy as jnp
from jax import lax
from jax.experimental import pallas as pl
from jax.experimental.pallas import tpu as pltpu

BN_EPS = 1e-5
LANE = 128


def _round_up(x, m):
    return (x + m - 1) // m * m


def _basicblock_kernel(x_ref, wa_ref, ga_ref, ba_ref, wb_ref, gb_ref, bb_ref,
                       out_ref, padbuf, colbuf):
    """Whole block in VMEM (channel-padded to a full lane width).

    x_ref:   (N, H, W, Cp)        unpadded input, NHWC, Cp = channels padded to 128
    wa_ref:  (9*Cp, Cp)           conv_a weights, im2col layout (tap-major rows)
    wb_ref:  (9*Cp, Cp)           conv_b weights, im2col layout
    g*/b*:   (1, Cp)              BN affine params (zero in padded channels)
    out_ref: (N, H, W, Cp)
    padbuf:  (N, H+2, W+2, Cp)    spatially padded activation (reused by both convs)
    colbuf:  (N, H, W, 9*Cp)      im2col buffer (reused by both convs)
    """
    N, H, W, Cp = x_ref.shape
    NHW = N * H * W
    inv_nhw = 1.0 / float(NHW)

    # --- zero ONLY the 1-pixel halo of the padded scratch (done once; the halo
    #     is never overwritten so it stays valid for both convs).
    padbuf[:, 0:1, :, :] = jnp.zeros((N, 1, W + 2, Cp), jnp.float32)
    padbuf[:, H + 1:H + 2, :, :] = jnp.zeros((N, 1, W + 2, Cp), jnp.float32)
    padbuf[:, :, 0:1, :] = jnp.zeros((N, H + 2, 1, Cp), jnp.float32)
    padbuf[:, :, W + 1:W + 2, :] = jnp.zeros((N, H + 2, 1, Cp), jnp.float32)

    def conv3x3(w_mat):
        # Build im2col once: tap t = dh*3+dw occupies lane block [t*Cp, (t+1)*Cp).
        # Lane offsets are multiples of 128 -> aligned, unmasked stores.
        for dh in range(3):
            for dw in range(3):
                t = dh * 3 + dw
                colbuf[:, :, :, t * Cp:(t + 1) * Cp] = \
                    padbuf[:, dh:dh + H, dw:dw + W, :]
        cols = colbuf[...].reshape(NHW, 9 * Cp)      # leading-dim merge only
        # Single MXU matmul per conv: M=NHW, K=9*Cp, N=Cp.
        return jnp.dot(cols, w_mat, preferred_element_type=jnp.float32)

    def batchnorm(acc, gamma, beta):
        # Single stats pass: var = E[x^2] - mean^2 (kept in f32).
        s = jnp.sum(acc, axis=0, keepdims=True)
        ss = jnp.sum(acc * acc, axis=0, keepdims=True)
        mean = s * inv_nhw
        var = jnp.maximum(ss * inv_nhw - mean * mean, 0.0)
        scale = gamma * lax.rsqrt(var + BN_EPS)       # per-channel scale
        shift = beta - mean * scale                   # per-channel shift
        return acc * scale + shift                    # one FMA pass

    # ---- conv_a -> bn_a -> relu
    padbuf[:, 1:1 + H, 1:1 + W, :] = x_ref[...]
    ya = jnp.maximum(
        batchnorm(conv3x3(wa_ref[...]), ga_ref[...], ba_ref[...]), 0.0)

    # ---- conv_b -> bn_b (interior of padbuf overwritten; halo still zero)
    padbuf[:, 1:1 + H, 1:1 + W, :] = ya.reshape(N, H, W, Cp)
    yb = batchnorm(conv3x3(wb_ref[...]), gb_ref[...], bb_ref[...])

    # ---- identity residual (downsample is None) + relu
    out = jnp.maximum(x_ref[...].reshape(NHW, Cp) + yb, 0.0)
    out_ref[...] = out.reshape(N, H, W, Cp)


def resnet_basicblock_forward(x_nchw, params):
    """Pallas implementation of ResNetBasicblock.forward (stride=1, downsample=None).

    x_nchw: (N, C, H, W) float32  ->  returns (N, C, H, W) float32
    """
    x = jnp.transpose(x_nchw, (0, 2, 3, 1)).astype(jnp.float32)    # NCHW -> NHWC
    N, H, W, C = x.shape
    Cout, Cin = params["wa"].shape[0], params["wa"].shape[1]
    assert C == Cin and Cin == Cout, "identity residual requires inplanes == planes"

    # Lane-dense layout: pad channel dim to a full 128-lane vreg width.
    Cp = _round_up(max(Cin, Cout), LANE)
    xp = jnp.pad(x, ((0, 0), (0, 0), (0, 0), (0, Cp - C)))

    def prep_w(w_oihw):
        # PyTorch OIHW -> HWIO -> channel-pad -> im2col matrix (9*Cp, Cp).
        w = jnp.transpose(w_oihw, (2, 3, 1, 0)).astype(jnp.float32)
        w = jnp.pad(w, ((0, 0), (0, 0), (0, Cp - Cin), (0, Cp - Cout)))
        return w.reshape(9 * Cp, Cp)

    def prep_v(v):
        return jnp.pad(v.astype(jnp.float32), (0, Cp - Cout)).reshape(1, Cp)

    wa = prep_w(params["wa"])
    wb = prep_w(params["wb"])
    ga, ba = prep_v(params["ga"]), prep_v(params["ba"])
    gb, bb = prep_v(params["gb"]), prep_v(params["bb"])

    # Size the VMEM request from the real footprint, capped for v7x (64 MiB phys).
    buf_elems = (xp.size + wa.size + wb.size + 4 * Cp            # inputs
                 + N * H * W * Cp                                # output
                 + N * (H + 2) * (W + 2) * Cp                    # padbuf scratch
                 + N * H * W * 9 * Cp)                           # im2col scratch
    vmem_limit = min(48 << 20, int(buf_elems * 4 * 2) + (8 << 20))

    vmem_spec = pl.BlockSpec(memory_space=pltpu.MemorySpace.VMEM)

    out_nhwc = pl.pallas_call(
        _basicblock_kernel,
        out_shape=jax.ShapeDtypeStruct((N, H, W, Cp), jnp.float32),
        in_specs=[vmem_spec] * 7,
        out_specs=vmem_spec,
        scratch_shapes=[
            pltpu.VMEM((N, H + 2, W + 2, Cp), jnp.float32),   # padded activation
            pltpu.VMEM((N, H, W, 9 * Cp), jnp.float32),        # im2col buffer
        ],
        compiler_params=pltpu.CompilerParams(vmem_limit_bytes=vmem_limit),
    )(xp, wa, ga, ba, wb, gb, bb)

    out_nhwc = out_nhwc[..., :Cout]                              # strip channel pad
    return jnp.transpose(out_nhwc, (0, 3, 1, 2))                 # NHWC -> NCHW


# ---------------------------------------------------------------------------
# Pure-JAX reference (same math) for a correctness check.
# ---------------------------------------------------------------------------
def _reference_forward(x_nchw, params):
    x = jnp.transpose(x_nchw, (0, 2, 3, 1)).astype(jnp.float32)
    dn = ("NHWC", "HWIO", "NHWC")

    def conv(inp, w_oihw):
        w = jnp.transpose(w_oihw, (2, 3, 1, 0)).astype(jnp.float32)
        return lax.conv_general_dilated(inp, w, (1, 1), "SAME",
                                        dimension_numbers=dn)

    def bn(inp, g, b):
        mean = jnp.mean(inp, axis=(0, 1, 2), keepdims=True)
        var = jnp.mean((inp - mean) ** 2, axis=(0, 1, 2), keepdims=True)
        return (inp - mean) * lax.rsqrt(var + BN_EPS) * g + b

    y = jnp.maximum(bn(conv(x, params["wa"]), params["ga"], params["ba"]), 0.0)
    y = bn(conv(y, params["wb"]), params["gb"], params["bb"])
    y = jnp.maximum(x + y, 0.0)
    return jnp.transpose(y, (0, 3, 1, 2))


if __name__ == "__main__":
    # Small shapes consistent with the module: N=2, inplanes=planes=4, 16x16.
    N, C, H, W = 2, 4, 16, 16
    key = jax.random.PRNGKey(0)
    kx, kwa, kwb, kga, kba, kgb, kbb = jax.random.split(key, 7)

    fan_a = C * 3 * 3
    params = {
        # conv weights in PyTorch OIHW layout, deterministic kaiming-ish init
        "wa": jax.random.normal(kwa, (C, C, 3, 3), jnp.float32) / math.sqrt(fan_a),
        "wb": jax.random.normal(kwb, (C, C, 3, 3), jnp.float32) / math.sqrt(fan_a),
        # BatchNorm affine params
        "ga": 1.0 + 0.1 * jax.random.normal(kga, (C,), jnp.float32),
        "ba": 0.1 * jax.random.normal(kba, (C,), jnp.float32),
        "gb": 1.0 + 0.1 * jax.random.normal(kgb, (C,), jnp.float32),
        "bb": 0.1 * jax.random.normal(kbb, (C,), jnp.float32),
    }
    x = jax.random.normal(kx, (N, C, H, W), jnp.float32)

    out = jax.block_until_ready(resnet_basicblock_forward(x, params))
    ref = jax.block_until_ready(_reference_forward(x, params))

    assert out.shape == (N, C, H, W)
    assert jnp.all(jnp.isfinite(out))
    assert jnp.max(jnp.abs(out - ref)) < 1e-2, jnp.max(jnp.abs(out - ref))

    print("KERNEL_OK")
</pallas_src>

<mosaic_0001>
module attributes {stable_mosaic.version = 11 : i64} {
  func.func @_basicblock_kernel(%arg0: memref<2x16x16x128xf32, #tpu.memory_space<vmem>>, %arg1: memref<1152x128xf32, #tpu.memory_space<vmem>>, %arg2: memref<1x128xf32, #tpu.memory_space<vmem>>, %arg3: memref<1x128xf32, #tpu.memory_space<vmem>>, %arg4: memref<1152x128xf32, #tpu.memory_space<vmem>>, %arg5: memref<1x128xf32, #tpu.memory_space<vmem>>, %arg6: memref<1x128xf32, #tpu.memory_space<vmem>>, %arg7: memref<2x16x16x128xf32, #tpu.memory_space<vmem>>, %arg8: memref<2x18x18x128xf32, #tpu.memory_space<vmem>>, %arg9: memref<2x16x16x1152xf32, #tpu.memory_space<vmem>>) attributes {dimension_semantics = [], scalar_prefetch = 0 : i64, scratch_operands = 2 : i64, tpu.core_type = #tpu.core_type<tc>} {
    %cst = arith.constant 0.000000e+00 : f32
    %0 = vector.broadcast %cst : f32 to vector<2x1x18x128xf32>
    %c0 = arith.constant 0 : index
    %c0_0 = arith.constant 0 : index
    %c0_1 = arith.constant 0 : index
    %c0_2 = arith.constant 0 : index
    %1 = vector.load %arg8[%c0, %c0_0, %c0_1, %c0_2] : memref<2x18x18x128xf32, #tpu.memory_space<vmem>>, vector<2x1x18x128xf32>
    tpu.vector_store %arg8[%c0, %c0_0, %c0_1, %c0_2], %0 {strides = array<i32>} : memref<2x18x18x128xf32, #tpu.memory_space<vmem>>, vector<2x1x18x128xf32>,
    %cst_3 = arith.constant 0.000000e+00 : f32
    %2 = vector.broadcast %cst_3 : f32 to vector<2x1x18x128xf32>
    %c0_4 = arith.constant 0 : index
    %c17 = arith.constant 17 : index
    %c0_5 = arith.constant 0 : index
    %c0_6 = arith.constant 0 : index
    %3 = vector.load %arg8[%c0_4, %c17, %c0_5, %c0_6] : memref<2x18x18x128xf32, #tpu.memory_space<vmem>>, vector<2x1x18x128xf32>
    tpu.vector_store %arg8[%c0_4, %c17, %c0_5, %c0_6], %2 {strides = array<i32>} : memref<2x18x18x128xf32, #tpu.memory_space<vmem>>, vector<2x1x18x128xf32>,
    %cst_7 = arith.constant 0.000000e+00 : f32
    %4 = vector.broadcast %cst_7 : f32 to vector<2x18x1x128xf32>
    %c0_8 = arith.constant 0 : index
    %c0_9 = arith.constant 0 : index
    %c0_10 = arith.constant 0 : index
    %c0_11 = arith.constant 0 : index
    %5 = vector.load %arg8[%c0_8, %c0_9, %c0_10, %c0_11] : memref<2x18x18x128xf32, #tpu.memory_space<vmem>>, vector<2x18x1x128xf32>
    tpu.vector_store %arg8[%c0_8, %c0_9, %c0_10, %c0_11], %4 {strides = array<i32>} : memref<2x18x18x128xf32, #tpu.memory_space<vmem>>, vector<2x18x1x128xf32>,
    %cst_12 = arith.constant 0.000000e+00 : f32
    %6 = vector.broadcast %cst_12 : f32 to vector<2x18x1x128xf32>
    %c0_13 = arith.constant 0 : index
    %c0_14 = arith.constant 0 : index
    %c17_15 = arith.constant 17 : index
    %c0_16 = arith.constant 0 : index
    %7 = vector.load %arg8[%c0_13, %c0_14, %c17_15, %c0_16] : memref<2x18x18x128xf32, #tpu.memory_space<vmem>>, vector<2x18x1x128xf32>
    tpu.vector_store %arg8[%c0_13, %c0_14, %c17_15, %c0_16], %6 {strides = array<i32>} : memref<2x18x18x128xf32, #tpu.memory_space<vmem>>, vector<2x18x1x128xf32>,
    %c0_17 = arith.constant 0 : index
    %c0_18 = arith.constant 0 : index
    %c0_19 = arith.constant 0 : index
    %c0_20 = arith.constant 0 : index
    %8 = vector.load %arg0[%c0_17, %c0_18, %c0_19, %c0_20] : memref<2x16x16x128xf32, #tpu.memory_space<vmem>>, vector<2x16x16x128xf32>
    %c0_21 = arith.constant 0 : index
    %c1 = arith.constant 1 : index
    %c1_22 = arith.constant 1 : index
    %c0_23 = arith.constant 0 : index
    %9 = vector.load %arg8[%c0_21, %c1, %c1_22, %c0_23] : memref<2x18x18x128xf32, #tpu.memory_space<vmem>>, vector<2x16x16x128xf32>
    tpu.vector_store %arg8[%c0_21, %c1, %c1_22, %c0_23], %8 {strides = array<i32>} : memref<2x18x18x128xf32, #tpu.memory_space<vmem>>, vector<2x16x16x128xf32>,
    %c0_24 = arith.constant 0 : index
    %c0_25 = arith.constant 0 : index
    %10 = vector.load %arg1[%c0_24, %c0_25] : memref<1152x128xf32, #tpu.memory_space<vmem>>, vector<1152x128xf32>
    %c0_26 = arith.constant 0 : index
    %c0_27 = arith.constant 0 : index
    %c0_28 = arith.constant 0 : index
    %c0_29 = arith.constant 0 : index
    %11 = vector.load %arg8[%c0_26, %c0_27, %c0_28, %c0_29] : memref<2x18x18x128xf32, #tpu.memory_space<vmem>>, vector<2x16x16x128xf32>
    %c0_30 = arith.constant 0 : index
    %c0_31 = arith.constant 0 : index
    %c0_32 = arith.constant 0 : index
    %c0_33 = arith.constant 0 : index
    %12 = vector.load %arg9[%c0_30, %c0_31, %c0_32, %c0_33] : memref<2x16x16x1152xf32, #tpu.memory_space<vmem>>, vector<2x16x16x128xf32>
    tpu.vector_store %arg9[%c0_30, %c0_31, %c0_32, %c0_33], %11 {strides = array<i32>} : memref<2x16x16x1152xf32, #tpu.memory_space<vmem>>, vector<2x16x16x128xf32>,
    %c0_34 = arith.constant 0 : index
    %c0_35 = arith.constant 0 : index
    %c1_36 = arith.constant 1 : index
    %c0_37 = arith.constant 0 : index
    %13 = vector.load %arg8[%c0_34, %c0_35, %c1_36, %c0_37] : memref<2x18x18x128xf32, #tpu.memory_space<vmem>>, vector<2x16x16x128xf32>
    %c0_38 = arith.constant 0 : index
    %c0_39 = arith.constant 0 : index
    %c0_40 = arith.constant 0 : index
    %c128 = arith.constant 128 : index
    %14 = vector.load %arg9[%c0_38, %c0_39, %c0_40, %c128] : memref<2x16x16x1152xf32, #tpu.memory_space<vmem>>, vector<2x16x16x128xf32>
    tpu.vector_store %arg9[%c0_38, %c0_39, %c0_40, %c128], %13 {strides = array<i32>} : memref<2x16x16x1152xf32, #tpu.memory_space<vmem>>, vector<2x16x16x128xf32>,
    %c0_41 = arith.constant 0 : index
    %c0_42 = arith.constant 0 : index
    %c2 = arith.constant 2 : index
    %c0_43 = arith.constant 0 : index
    %15 = vector.load %arg8[%c0_41, %c0_42, %c2, %c0_43] : memref<2x18x18x128xf32, #tpu.memory_space<vmem>>, vector<2x16x16x128xf32>
    %c0_44 = arith.constant 0 : index
    %c0_45 = arith.constant 0 : index
    %c0_46 = arith.constant 0 : index
    %c256 = arith.constant 256 : index
    %16 = vector.load %arg9[%c0_44, %c0_45, %c0_46, %c256] : memref<2x16x16x1152xf32, #tpu.memory_space<vmem>>, vector<2x16x16x128xf32>
    tpu.vector_store %arg9[%c0_44, %c0_45, %c0_46, %c256], %15 {strides = array<i32>} : memref<2x16x16x1152xf32, #tpu.memory_space<vmem>>, vector<2x16x16x128xf32>,
    %c0_47 = arith.constant 0 : index
    %c1_48 = arith.constant 1 : index
    %c0_49 = arith.constant 0 : index
    %c0_50 = arith.constant 0 : index
    %17 = vector.load %arg8[%c0_47, %c1_48, %c0_49, %c0_50] : memref<2x18x18x128xf32, #tpu.memory_space<vmem>>, vector<2x16x16x128xf32>
    %c0_51 = arith.constant 0 : index
    %c0_52 = arith.constant 0 : index
    %c0_53 = arith.constant 0 : index
    %c384 = arith.constant 384 : index
    %18 = vector.load %arg9[%c0_51, %c0_52, %c0_53, %c384] : memref<2x16x16x1152xf32, #tpu.memory_space<vmem>>, vector<2x16x16x128xf32>
    tpu.vector_store %arg9[%c0_51, %c0_52, %c0_53, %c384], %17 {strides = array<i32>} : memref<2x16x16x1152xf32, #tpu.memory_space<vmem>>, vector<2x16x16x128xf32>,
    %c0_54 = arith.constant 0 : index
    %c1_55 = arith.constant 1 : index
    %c1_56 = arith.constant 1 : index
    %c0_57 = arith.constant 0 : index
    %19 = vector.load %arg8[%c0_54, %c1_55, %c1_56, %c0_57] : memref<2x18x18x128xf32, #tpu.memory_space<vmem>>, vector<2x16x16x128xf32>
    %c0_58 = arith.constant 0 : index
    %c0_59 = arith.constant 0 : index
    %c0_60 = arith.constant 0 : index
    %c512 = arith.constant 512 : index
    %20 = vector.load %arg9[%c0_58, %c0_59, %c0_60, %c512] : memref<2x16x16x1152xf32, #tpu.memory_space<vmem>>, vector<2x16x16x128xf32>
    tpu.vector_store %arg9[%c0_58, %c0_59, %c0_60, %c512], %19 {strides = array<i32>} : memref<2x16x16x1152xf32, #tpu.memory_space<vmem>>, vector<2x16x16x128xf32>,
    %c0_61 = arith.constant 0 : index
    %c1_62 = arith.constant 1 : index
    %c2_63 = arith.constant 2 : index
    %c0_64 = arith.constant 0 : index
    %21 = vector.load %arg8[%c0_61, %c1_62, %c2_63, %c0_64] : memref<2x18x18x128xf32, #tpu.memory_space<vmem>>, vector<2x16x16x128xf32>
    %c0_65 = arith.constant 0 : index
    %c0_66 = arith.constant 0 : index
    %c0_67 = arith.constant 0 : index
    %c640 = arith.constant 640 : index
    %22 = vector.load %arg9[%c0_65, %c0_66, %c0_67, %c640] : memref<2x16x16x1152xf32, #tpu.memory_space<vmem>>, vector<2x16x16x128xf32>
    tpu.vector_store %arg9[%c0_65, %c0_66, %c0_67, %c640], %21 {strides = array<i32>} : memref<2x16x16x1152xf32, #tpu.memory_space<vmem>>, vector<2x16x16x128xf32>,
    %c0_68 = arith.constant 0 : index
    %c2_69 = arith.constant 2 : index
    %c0_70 = arith.constant 0 : index
    %c0_71 = arith.constant 0 : index
    %23 = vector.load %arg8[%c0_68, %c2_69, %c0_70, %c0_71] : memref<2x18x18x128xf32, #tpu.memory_space<vmem>>, vector<2x16x16x128xf32>
    %c0_72 = arith.constant 0 : index
    %c0_73 = arith.constant 0 : index
    %c0_74 = arith.constant 0 : index
    %c768 = arith.constant 768 : index
    %24 = vector.load %arg9[%c0_72, %c0_73, %c0_74, %c768] : memref<2x16x16x1152xf32, #tpu.memory_space<vmem>>, vector<2x16x16x128xf32>
    tpu.vector_store %arg9[%c0_72, %c0_73, %c0_74, %c768], %23 {strides = array<i32>} : memref<2x16x16x1152xf32, #tpu.memory_space<vmem>>, vector<2x16x16x128xf32>,
    %c0_75 = arith.constant 0 : index
    %c2_76 = arith.constant 2 : index
    %c1_77 = arith.constant 1 : index
    %c0_78 = arith.constant 0 : index
    %25 = vector.load %arg8[%c0_75, %c2_76, %c1_77, %c0_78] : memref<2x18x18x128xf32, #tpu.memory_space<vmem>>, vector<2x16x16x128xf32>
    %c0_79 = arith.constant 0 : index
    %c0_80 = arith.constant 0 : index
    %c0_81 = arith.constant 0 : index
    %c896 = arith.constant 896 : index
    %26 = vector.load %arg9[%c0_79, %c0_80, %c0_81, %c896] : memref<2x16x16x1152xf32, #tpu.memory_space<vmem>>, vector<2x16x16x128xf32>
    tpu.vector_store %arg9[%c0_79, %c0_80, %c0_81, %c896], %25 {strides = array<i32>} : memref<2x16x16x1152xf32, #tpu.memory_space<vmem>>, vector<2x16x16x128xf32>,
    %c0_82 = arith.constant 0 : index
    %c2_83 = arith.constant 2 : index
    %c2_84 = arith.constant 2 : index
    %c0_85 = arith.constant 0 : index
    %27 = vector.load %arg8[%c0_82, %c2_83, %c2_84, %c0_85] : memref<2x18x18x128xf32, #tpu.memory_space<vmem>>, vector<2x16x16x128xf32>
    %c0_86 = arith.constant 0 : index
    %c0_87 = arith.constant 0 : index
    %c0_88 = arith.constant 0 : index
    %c1024 = arith.constant 1024 : index
    %28 = vector.load %arg9[%c0_86, %c0_87, %c0_88, %c1024] : memref<2x16x16x1152xf32, #tpu.memory_space<vmem>>, vector<2x16x16x128xf32>
    tpu.vector_store %arg9[%c0_86, %c0_87, %c0_88, %c1024], %27 {strides = array<i32>} : memref<2x16x16x1152xf32, #tpu.memory_space<vmem>>, vector<2x16x16x128xf32>,
    %c0_89 = arith.constant 0 : index
    %c0_90 = arith.constant 0 : index
    %c0_91 = arith.constant 0 : index
    %c0_92 = arith.constant 0 : index
    %29 = vector.load %arg9[%c0_89, %c0_90, %c0_91, %c0_92] : memref<2x16x16x1152xf32, #tpu.memory_space<vmem>>, vector<2x16x16x1152xf32>
    %30 = vector.shape_cast %29 : vector<2x16x16x1152xf32> to vector<512x1152xf32>
    %cst_93 = arith.constant dense<0.000000e+00> : vector<512x128xf32>
    %31 = tpu.matmul %30, %10, %cst_93 {dimension_numbers = #tpu.dot_dimension_numbers<[1], [0], [0], [1], [0, 0, 1, 1], [], []>} : vector<512x1152xf32>, vector<1152x128xf32>, vector<512x128xf32> -> vector<512x128xf32>
    %c0_94 = arith.constant 0 : index
    %c0_95 = arith.constant 0 : index
    %32 = vector.load %arg2[%c0_94, %c0_95] : memref<1x128xf32, #tpu.memory_space<vmem>>, vector<1x128xf32>
    %c0_96 = arith.constant 0 : index
    %c0_97 = arith.constant 0 : index
    %33 = vector.load %arg3[%c0_96, %c0_97] : memref<1x128xf32, #tpu.memory_space<vmem>>, vector<1x128xf32>
    %cst_98 = arith.constant dense<0.000000e+00> : vector<128xf32>
    %34 = vector.multi_reduction <add>, %31, %cst_98 [0] : vector<512x128xf32> to vector<128xf32>
    %35 = vector.shape_cast %34 : vector<128xf32> to vector<1x128xf32>
    %36 = arith.mulf %31, %31 : vector<512x128xf32>
    %cst_99 = arith.constant dense<0.000000e+00> : vector<128xf32>
    %37 = vector.multi_reduction <add>, %36, %cst_99 [0] : vector<512x128xf32> to vector<128xf32>
    %38 = vector.shape_cast %37 : vector<128xf32> to vector<1x128xf32>
    %cst_100 = arith.constant 0.001953125 : f32
    %39 = vector.broadcast %cst_100 : f32 to vector<1x128xf32>
    %40 = arith.mulf %35, %39 : vector<1x128xf32>
    %cst_101 = arith.constant 0.001953125 : f32
    %41 = vector.broadcast %cst_101 : f32 to vector<1x128xf32>
    %42 = arith.mulf %38, %41 : vector<1x128xf32>
    %43 = arith.mulf %40, %40 : vector<1x128xf32>
    %44 = arith.subf %42, %43 : vector<1x128xf32>
    %cst_102 = arith.constant 0.000000e+00 : f32
    %45 = vector.broadcast %cst_102 : f32 to vector<1x128xf32>
    %46 = arith.maximumf %44, %45 : vector<1x128xf32>
    %cst_103 = arith.constant 9.99999974E-6 : f32
    %47 = vector.broadcast %cst_103 : f32 to vector<1x128xf32>
    %48 = arith.addf %46, %47 : vector<1x128xf32>
    %49 = math.rsqrt %48 : vector<1x128xf32>
    %50 = arith.mulf %32, %49 : vector<1x128xf32>
    %51 = arith.mulf %40, %50 : vector<1x128xf32>
    %52 = arith.subf %33, %51 : vector<1x128xf32>
    %53 = vector.broadcast %50 : vector<1x128xf32> to vector<512x128xf32>
    %54 = arith.mulf %31, %53 : vector<512x128xf32>
    %55 = vector.broadcast %52 : vector<1x128xf32> to vector<512x128xf32>
    %56 = arith.addf %54, %55 : vector<512x128xf32>
    %cst_104 = arith.constant 0.000000e+00 : f32
    %57 = vector.broadcast %cst_104 : f32 to vector<512x128xf32>
    %58 = arith.maximumf %56, %57 : vector<512x128xf32>
    %59 = vector.shape_cast %58 : vector<512x128xf32> to vector<2x16x16x128xf32>
    %c0_105 = arith.constant 0 : index
    %c1_106 = arith.constant 1 : index
    %c1_107 = arith.constant 1 : index
    %c0_108 = arith.constant 0 : index
    %60 = vector.load %arg8[%c0_105, %c1_106, %c1_107, %c0_108] : memref<2x18x18x128xf32, #tpu.memory_space<vmem>>, vector<2x16x16x128xf32>
    tpu.vector_store %arg8[%c0_105, %c1_106, %c1_107, %c0_108], %59 {strides = array<i32>} : memref<2x18x18x128xf32, #tpu.memory_space<vmem>>, vector<2x16x16x128xf32>,
    %c0_109 = arith.constant 0 : index
    %c0_110 = arith.constant 0 : index
    %61 = vector.load %arg4[%c0_109, %c0_110] : memref<1152x128xf32, #tpu.memory_space<vmem>>, vector<1152x128xf32>
    %c0_111 = arith.constant 0 : index
    %c0_112 = arith.constant 0 : index
    %c0_113 = arith.constant 0 : index
    %c0_114 = arith.constant 0 : index
    %62 = vector.load %arg8[%c0_111, %c0_112, %c0_113, %c0_114] : memref<2x18x18x128xf32, #tpu.memory_space<vmem>>, vector<2x16x16x128xf32>
    %c0_115 = arith.constant 0 : index
    %c0_116 = arith.constant 0 : index
    %c0_117 = arith.constant 0 : index
    %c0_118 = arith.constant 0 : index
    %63 = vector.load %arg9[%c0_115, %c0_116, %c0_117, %c0_118] : memref<2x16x16x1152xf32, #tpu.memory_space<vmem>>, vector<2x16x16x128xf32>
    tpu.vector_store %arg9[%c0_115, %c0_116, %c0_117, %c0_118], %62 {strides = array<i32>} : memref<2x16x16x1152xf32, #tpu.memory_space<vmem>>, vector<2x16x16x128xf32>,
    %c0_119 = arith.constant 0 : index
    %c0_120 = arith.constant 0 : index
    %c1_121 = arith.constant 1 : index
    %c0_122 = arith.constant 0 : index
    %64 = vector.load %arg8[%c0_119, %c0_120, %c1_121, %c0_122] : memref<2x18x18x128xf32, #tpu.memory_space<vmem>>, vector<2x16x16x128xf32>
    %c0_123 = arith.constant 0 : index
    %c0_124 = arith.constant 0 : index
    %c0_125 = arith.constant 0 : index
    %c128_126 = arith.constant 128 : index
    %65 = vector.load %arg9[%c0_123, %c0_124, %c0_125, %c128_126] : memref<2x16x16x1152xf32, #tpu.memory_space<vmem>>, vector<2x16x16x128xf32>
    tpu.vector_store %arg9[%c0_123, %c0_124, %c0_125, %c128_126], %64 {strides = array<i32>} : memref<2x16x16x1152xf32, #tpu.memory_space<vmem>>, vector<2x16x16x128xf32>,
    %c0_127 = arith.constant 0 : index
    %c0_128 = arith.constant 0 : index
    %c2_129 = arith.constant 2 : index
    %c0_130 = arith.constant 0 : index
    %66 = vector.load %arg8[%c0_127, %c0_128, %c2_129, %c0_130] : memref<2x18x18x128xf32, #tpu.memory_space<vmem>>, vector<2x16x16x128xf32>
    %c0_131 = arith.constant 0 : index
    %c0_132 = arith.constant 0 : index
    %c0_133 = arith.constant 0 : index
    %c256_134 = arith.constant 256 : index
    %67 = vector.load %arg9[%c0_131, %c0_132, %c0_133, %c256_134] : memref<2x16x16x1152xf32, #tpu.memory_space<vmem>>, vector<2x16x16x128xf32>
    tpu.vector_store %arg9[%c0_131, %c0_132, %c0_133, %c256_134], %66 {strides = array<i32>} : memref<2x16x16x1152xf32, #tpu.memory_space<vmem>>, vector<2x16x16x128xf32>,
    %c0_135 = arith.constant 0 : index
    %c1_136 = arith.constant 1 : index
    %c0_137 = arith.constant 0 : index
    %c0_138 = arith.constant 0 : index
    %68 = vector.load %arg8[%c0_135, %c1_136, %c0_137, %c0_138] : memref<2x18x18x128xf32, #tpu.memory_space<vmem>>, vector<2x16x16x128xf32>
    %c0_139 = arith.constant 0 : index
    %c0_140 = arith.constant 0 : index
    %c0_141 = arith.constant 0 : index
    %c384_142 = arith.constant 384 : index
    %69 = vector.load %arg9[%c0_139, %c0_140, %c0_141, %c384_142] : memref<2x16x16x1152xf32, #tpu.memory_space<vmem>>, vector<2x16x16x128xf32>
    tpu.vector_store %arg9[%c0_139, %c0_140, %c0_141, %c384_142], %68 {strides = array<i32>} : memref<2x16x16x1152xf32, #tpu.memory_space<vmem>>, vector<2x16x16x128xf32>,
    %c0_143 = arith.constant 0 : index
    %c1_144 = arith.constant 1 : index
    %c1_145 = arith.constant 1 : index
    %c0_146 = arith.constant 0 : index
    %70 = vector.load %arg8[%c0_143, %c1_144, %c1_145, %c0_146] : memref<2x18x18x128xf32, #tpu.memory_space<vmem>>, vector<2x16x16x128xf32>
    %c0_147 = arith.constant 0 : index
    %c0_148 = arith.constant 0 : index
    %c0_149 = arith.constant 0 : index
    %c512_150 = arith.constant 512 : index
    %71 = vector.load %arg9[%c0_147, %c0_148, %c0_149, %c512_150] : memref<2x16x16x1152xf32, #tpu.memory_space<vmem>>, vector<2x16x16x128xf32>
    tpu.vector_store %arg9[%c0_147, %c0_148, %c0_149, %c512_150], %70 {strides = array<i32>} : memref<2x16x16x1152xf32, #tpu.memory_space<vmem>>, vector<2x16x16x128xf32>,
    %c0_151 = arith.constant 0 : index
    %c1_152 = arith.constant 1 : index
    %c2_153 = arith.constant 2 : index
    %c0_154 = arith.constant 0 : index
    %72 = vector.load %arg8[%c0_151, %c1_152, %c2_153, %c0_154] : memref<2x18x18x128xf32, #tpu.memory_space<vmem>>, vector<2x16x16x128xf32>
    %c0_155 = arith.constant 0 : index
    %c0_156 = arith.constant 0 : index
    %c0_157 = arith.constant 0 : index
    %c640_158 = arith.constant 640 : index
    %73 = vector.load %arg9[%c0_155, %c0_156, %c0_157, %c640_158] : memref<2x16x16x1152xf32, #tpu.memory_space<vmem>>, vector<2x16x16x128xf32>
    tpu.vector_store %arg9[%c0_155, %c0_156, %c0_157, %c640_158], %72 {strides = array<i32>} : memref<2x16x16x1152xf32, #tpu.memory_space<vmem>>, vector<2x16x16x128xf32>,
    %c0_159 = arith.constant 0 : index
    %c2_160 = arith.constant 2 : index
    %c0_161 = arith.constant 0 : index
    %c0_162 = arith.constant 0 : index
    %74 = vector.load %arg8[%c0_159, %c2_160, %c0_161, %c0_162] : memref<2x18x18x128xf32, #tpu.memory_space<vmem>>, vector<2x16x16x128xf32>
    %c0_163 = arith.constant 0 : index
    %c0_164 = arith.constant 0 : index
    %c0_165 = arith.constant 0 : index
    %c768_166 = arith.constant 768 : index
    %75 = vector.load %arg9[%c0_163, %c0_164, %c0_165, %c768_166] : memref<2x16x16x1152xf32, #tpu.memory_space<vmem>>, vector<2x16x16x128xf32>
    tpu.vector_store %arg9[%c0_163, %c0_164, %c0_165, %c768_166], %74 {strides = array<i32>} : memref<2x16x16x1152xf32, #tpu.memory_space<vmem>>, vector<2x16x16x128xf32>,
    %c0_167 = arith.constant 0 : index
    %c2_168 = arith.constant 2 : index
    %c1_169 = arith.constant 1 : index
    %c0_170 = arith.constant 0 : index
    %76 = vector.load %arg8[%c0_167, %c2_168, %c1_169, %c0_170] : memref<2x18x18x128xf32, #tpu.memory_space<vmem>>, vector<2x16x16x128xf32>
    %c0_171 = arith.constant 0 : index
    %c0_172 = arith.constant 0 : index
    %c0_173 = arith.constant 0 : index
    %c896_174 = arith.constant 896 : index
    %77 = vector.load %arg9[%c0_171, %c0_172, %c0_173, %c896_174] : memref<2x16x16x1152xf32, #tpu.memory_space<vmem>>, vector<2x16x16x128xf32>
    tpu.vector_store %arg9[%c0_171, %c0_172, %c0_173, %c896_174], %76 {strides = array<i32>} : memref<2x16x16x1152xf32, #tpu.memory_space<vmem>>, vector<2x16x16x128xf32>,
    %c0_175 = arith.constant 0 : index
    %c2_176 = arith.constant 2 : index
    %c2_177 = arith.constant 2 : index
    %c0_178 = arith.constant 0 : index
    %78 = vector.load %arg8[%c0_175, %c2_176, %c2_177, %c0_178] : memref<2x18x18x128xf32, #tpu.memory_space<vmem>>, vector<2x16x16x128xf32>
    %c0_179 = arith.constant 0 : index
    %c0_180 = arith.constant 0 : index
    %c0_181 = arith.constant 0 : index
    %c1024_182 = arith.constant 1024 : index
    %79 = vector.load %arg9[%c0_179, %c0_180, %c0_181, %c1024_182] : memref<2x16x16x1152xf32, #tpu.memory_space<vmem>>, vector<2x16x16x128xf32>
    tpu.vector_store %arg9[%c0_179, %c0_180, %c0_181, %c1024_182], %78 {strides = array<i32>} : memref<2x16x16x1152xf32, #tpu.memory_space<vmem>>, vector<2x16x16x128xf32>,
    %c0_183 = arith.constant 0 : index
    %c0_184 = arith.constant 0 : index
    %c0_185 = arith.constant 0 : index
    %c0_186 = arith.constant 0 : index
    %80 = vector.load %arg9[%c0_183, %c0_184, %c0_185, %c0_186] : memref<2x16x16x1152xf32, #tpu.memory_space<vmem>>, vector<2x16x16x1152xf32>
    %81 = vector.shape_cast %80 : vector<2x16x16x1152xf32> to vector<512x1152xf32>
    %cst_187 = arith.constant dense<0.000000e+00> : vector<512x128xf32>
    %82 = tpu.matmul %81, %61, %cst_187 {dimension_numbers = #tpu.dot_dimension_numbers<[1], [0], [0], [1], [0, 0, 1, 1], [], []>} : vector<512x1152xf32>, vector<1152x128xf32>, vector<512x128xf32> -> vector<512x128xf32>
    %c0_188 = arith.constant 0 : index
    %c0_189 = arith.constant 0 : index
    %83 = vector.load %arg5[%c0_188, %c0_189] : memref<1x128xf32, #tpu.memory_space<vmem>>, vector<1x128xf32>
    %c0_190 = arith.constant 0 : index
    %c0_191 = arith.constant 0 : index
    %84 = vector.load %arg6[%c0_190, %c0_191] : memref<1x128xf32, #tpu.memory_space<vmem>>, vector<1x128xf32>
    %cst_192 = arith.constant dense<0.000000e+00> : vector<128xf32>
    %85 = vector.multi_reduction <add>, %82, %cst_192 [0] : vector<512x128xf32> to vector<128xf32>
    %86 = vector.shape_cast %85 : vector<128xf32> to vector<1x128xf32>
    %87 = arith.mulf %82, %82 : vector<512x128xf32>
    %cst_193 = arith.constant dense<0.000000e+00> : vector<128xf32>
    %88 = vector.multi_reduction <add>, %87, %cst_193 [0] : vector<512x128xf32> to vector<128xf32>
    %89 = vector.shape_cast %88 : vector<128xf32> to vector<1x128xf32>
    %cst_194 = arith.constant 0.001953125 : f32
    %90 = vector.broadcast %cst_194 : f32 to vector<1x128xf32>
    %91 = arith.mulf %86, %90 : vector<1x128xf32>
    %cst_195 = arith.constant 0.001953125 : f32
    %92 = vector.broadcast %cst_195 : f32 to vector<1x128xf32>
    %93 = arith.mulf %89, %92 : vector<1x128xf32>
    %94 = arith.mulf %91, %91 : vector<1x128xf32>
    %95 = arith.subf %93, %94 : vector<1x128xf32>
    %cst_196 = arith.constant 0.000000e+00 : f32
    %96 = vector.broadcast %cst_196 : f32 to vector<1x128xf32>
    %97 = arith.maximumf %95, %96 : vector<1x128xf32>
    %cst_197 = arith.constant 9.99999974E-6 : f32
    %98 = vector.broadcast %cst_197 : f32 to vector<1x128xf32>
    %99 = arith.addf %97, %98 : vector<1x128xf32>
    %100 = math.rsqrt %99 : vector<1x128xf32>
    %101 = arith.mulf %83, %100 : vector<1x128xf32>
    %102 = arith.mulf %91, %101 : vector<1x128xf32>
    %103 = arith.subf %84, %102 : vector<1x128xf32>
    %104 = vector.broadcast %101 : vector<1x128xf32> to vector<512x128xf32>
    %105 = arith.mulf %82, %104 : vector<512x128xf32>
    %106 = vector.broadcast %103 : vector<1x128xf32> to vector<512x128xf32>
    %107 = arith.addf %105, %106 : vector<512x128xf32>
    %c0_198 = arith.constant 0 : index
    %c0_199 = arith.constant 0 : index
    %c0_200 = arith.constant 0 : index
    %c0_201 = arith.constant 0 : index
    %108 = vector.load %arg0[%c0_198, %c0_199, %c0_200, %c0_201] : memref<2x16x16x128xf32, #tpu.memory_space<vmem>>, vector<2x16x16x128xf32>
    %109 = vector.shape_cast %108 : vector<2x16x16x128xf32> to vector<512x128xf32>
    %110 = arith.addf %109, %107 : vector<512x128xf32>
    %cst_202 = arith.constant 0.000000e+00 : f32
    %111 = vector.broadcast %cst_202 : f32 to vector<512x128xf32>
    %112 = arith.maximumf %110, %111 : vector<512x128xf32>
    %113 = vector.shape_cast %112 : vector<512x128xf32> to vector<2x16x16x128xf32>
    %c0_203 = arith.constant 0 : index
    %c0_204 = arith.constant 0 : index
    %c0_205 = arith.constant 0 : index
    %c0_206 = arith.constant 0 : index
    %114 = vector.load %arg7[%c0_203, %c0_204, %c0_205, %c0_206] : memref<2x16x16x128xf32, #tpu.memory_space<vmem>>, vector<2x16x16x128xf32>
    tpu.vector_store %arg7[%c0_203, %c0_204, %c0_205, %c0_206], %113 {strides = array<i32>} : memref<2x16x16x128xf32, #tpu.memory_space<vmem>>, vector<2x16x16x128xf32>,
    return
  }
}

</mosaic_0001>

<llo_original>
// kernel: tpu_custom_call.1
$region0: #{tpu_custom_call.1}
  #allocation0 [shape = 'u32[]', space=smem, size = 0x4, offset = 0x4, fixed_abs, tag = 'smem constant byte address 0x4 - core index']
  #allocation1 [shape = 'u32[144,128]{1,0:T(1,128)}', space=vmem, size = 0x12000, scoped, tag = 'internal scratch']
  #allocation2 [shape = 'f32[2,18,18,128]{3,2,1,0:T(8,128)}', space=vmem, size = 0x6c000, scoped, tag = 'scratch operand']
  #allocation3 [shape = 'f32[2,16,16,1152]{3,2,1,0:T(8,128)}', space=vmem, size = 0x240000, scoped, tag = 'scratch operand']
  %s0 = inlined_call_operand.hbm [shape: f32[2,16,16,128], index: 0, kind: input, shape index: {}]
  %s1 = inlined_call_operand.hbm [shape: f32[1152,128], index: 1, kind: input, shape index: {}]
  %s2 = inlined_call_operand.vmem [shape: f32[1,128], index: 2, kind: input, shape index: {}]
  %s3 = inlined_call_operand.vmem [shape: f32[1,128], index: 3, kind: input, shape index: {}]
  %s4 = inlined_call_operand.hbm [shape: f32[1152,128], index: 4, kind: input, shape index: {}]
  %s5 = inlined_call_operand.vmem [shape: f32[1,128], index: 5, kind: input, shape index: {}]
  %s6 = inlined_call_operand.vmem [shape: f32[1,128], index: 6, kind: input, shape index: {}]
  %s7 = inlined_call_operand.hbm [shape: f32[2,16,16,128], index: 7, kind: output, shape index: {}]
  %s8 = sld [smem:[#allocation0]]
  $region50: #{tpu_custom_call.1} parent=0
    _
  %s10 = ssub.s32 1, %s8
  %s11 = scalar_select 0, %s10, %s8
  $region1: #{tpu_custom_call.1} parent=0
    #allocation4 [shape = 'u8[262144]{0}', space=vmem, size = 0x40000, scoped, tag = 'input window, operand 0, single buffered']
    #allocation5 [shape = 's32[1]{0}', space=sflag, size = 0x4, scoped, tag = 'scoped memory for tpu_custom_call.1']
    #allocation6 [shape = 's32[1]{0}', space=sflag, size = 0x4, scoped, tag = 'scoped memory for tpu_custom_call.1']
    #allocation7 [shape = 'u8[589824]{0}', space=vmem, size = 0x90000, scoped, tag = 'input window, operand 1, single buffered']
    #allocation8 [shape = 's32[1]{0}', space=sflag, size = 0x4, scoped, tag = 'scoped memory for tpu_custom_call.1']
    #allocation9 [shape = 'u8[589824]{0}', space=vmem, size = 0x90000, scoped, tag = 'input window, operand 4, single buffered']
    #allocation10 [shape = 'u8[262144]{0}', space=vmem, size = 0x40000, scoped, tag = 'output window, operand 0, single buffered']
    %12 = vsyncpa [#allocation5], 0
    %13 = vsyncpa [#allocation8], 0
    %14 = vsyncpa [#allocation6], 0
    // Predicated region
    $region2: #{tpu_custom_call.1} parent=1 // pred_check
      _
    $region3: #{tpu_custom_call.1} parent=1 // pred_check_branch
      %16 = sbr.rel (0) target = $region5
    $region4: #{tpu_custom_call.1} parent=1 // pred_region
      %s18 = ssub.s32 8192, 8192
      %19 = vsyncadd [#allocation5], %s18
      %s20 = sshll.u32 [#allocation4], 4
      %s21 = int_to_ptr.vmem [resolvable:$true] %s20
      %26 = dma.hbm_to_vmem [thread:$0]  %s0, 8192, %s21, [#allocation5], 128, 128, 8
    $region5: #{tpu_custom_call.1} parent=1 // pred_fallthru
      _
    // Predicated region
    $region6: #{tpu_custom_call.1} parent=1 // pred_check
      _
    $region7: #{tpu_custom_call.1} parent=1 // pred_check_branch
      %28 = sbr.rel (0) target = $region9
    $region8: #{tpu_custom_call.1} parent=1 // pred_region
      %s30 = ssub.s32 18432, 18432
      %31 = vsyncadd [#allocation8], %s30
      %s32 = sshll.u32 [#allocation7], 4
      %s33 = int_to_ptr.vmem [resolvable:$true] %s32
      %38 = dma.hbm_to_vmem [thread:$0]  %s1, 18432, %s33, [#allocation8], 128, 128, 8
    $region9: #{tpu_custom_call.1} parent=1 // pred_fallthru
      _
    // Predicated region
    $region10: #{tpu_custom_call.1} parent=1 // pred_check
      _
    $region11: #{tpu_custom_call.1} parent=1 // pred_check_branch
      %40 = sbr.rel (0) target = $region13
    $region12: #{tpu_custom_call.1} parent=1 // pred_region
      _
    $region13: #{tpu_custom_call.1} parent=1 // pred_fallthru
      _
    // Predicated region
    $region14: #{tpu_custom_call.1} parent=1 // pred_check
      _
    $region15: #{tpu_custom_call.1} parent=1 // pred_check_branch
      %42 = sbr.rel (0) target = $region17
    $region16: #{tpu_custom_call.1} parent=1 // pred_region
      _
    $region17: #{tpu_custom_call.1} parent=1 // pred_fallthru
      _
    // Predicated region
    $region18: #{tpu_custom_call.1} parent=1 // pred_check
      _
    $region19: #{tpu_custom_call.1} parent=1 // pred_check_branch
      %44 = sbr.rel (0) target = $region21
    $region20: #{tpu_custom_call.1} parent=1 // pred_region
      %s46 = ssub.s32 18432, 18432
      %47 = vsyncadd [#allocation8], %s46
      %s48 = sshll.u32 [#allocation9], 4
      %s49 = int_to_ptr.vmem [resolvable:$true] %s48
      %54 = dma.hbm_to_vmem [thread:$0]  %s4, 18432, %s49, [#allocation8], 128, 128, 8
    $region21: #{tpu_custom_call.1} parent=1 // pred_fallthru
      _
    // Predicated region
    $region22: #{tpu_custom_call.1} parent=1 // pred_check
      _
    $region23: #{tpu_custom_call.1} parent=1 // pred_check_branch
      %56 = sbr.rel (0) target = $region25
    $region24: #{tpu_custom_call.1} parent=1 // pred_region
      _
    $region25: #{tpu_custom_call.1} parent=1 // pred_fallthru
      _
    // Predicated region
    $region26: #{tpu_custom_call.1} parent=1 // pred_check
      _
    $region27: #{tpu_custom_call.1} parent=1 // pred_check_branch
      %58 = sbr.rel (0) target = $region29
    $region28: #{tpu_custom_call.1} parent=1 // pred_region
      _
    $region29: #{tpu_custom_call.1} parent=1 // pred_fallthru
      _
    // Predicated region
    $region30: #{tpu_custom_call.1} parent=1 // pred_check
      _
    $region31: #{tpu_custom_call.1} parent=1 // pred_check_branch
      %60 = sbr.rel (0) target = $region33
    $region32: #{tpu_custom_call.1} parent=1 // pred_region
      %61 = dma.done [#allocation5], 8192
    $region33: #{tpu_custom_call.1} parent=1 // pred_fallthru
      _
    // Predicated region
    $region34: #{tpu_custom_call.1} parent=1 // pred_check
      _
    $region35: #{tpu_custom_call.1} parent=1 // pred_check_branch
      %63 = sbr.rel (0) target = $region37
    $region36: #{tpu_custom_call.1} parent=1 // pred_region
      %64 = dma.done [#allocation8], 18432
    $region37: #{tpu_custom_call.1} parent=1 // pred_fallthru
      _
    // Predicated region
    $region38: #{tpu_custom_call.1} parent=1 // pred_check
      _
    $region39: #{tpu_custom_call.1} parent=1 // pred_check_branch
      %66 = sbr.rel (0) target = $region41
    $region40: #{tpu_custom_call.1} parent=1 // pred_region
      %67 = dma.done [#allocation8], 18432
    $region41: #{tpu_custom_call.1} parent=1 // pred_fallthru
      _
    %68 = vst [vmem:[#allocation2] sm:$0xff] 0.0
    %69 = vst [vmem:[#allocation2 + $0x8] sm:$0xff] 0.0
    %70 = vst [vmem:[#allocation2 + $0x10] sm:$0x3] 0.0
    %71 = vst [vmem:[#allocation2 + $0x1b0] sm:$0xff] 0.0
    %72 = vst [vmem:[#allocation2 + $0x1b8] sm:$0xff] 0.0
    %73 = vst [vmem:[#allocation2 + $0x1c0] sm:$0x3] 0.0
    %s74 = scalar_lea.vmem [#allocation2], 408
    %75 = vst [vmem:[%s74] sm:$0xff] 0.0
    %76 = vst [vmem:[%s74 + $0x8] sm:$0xff] 0.0
    %77 = vst [vmem:[%s74 + $0x10] sm:$0x3] 0.0
    %78 = vst [vmem:[%s74 + $0x1b0] sm:$0xff] 0.0
    %79 = vst [vmem:[%s74 + $0x1b8] sm:$0xff] 0.0
    %80 = vst [vmem:[%s74 + $0x1c0] sm:$0x3] 0.0
    %81 = vst [vmem:[#allocation2] sm:$0x1] 0.0
    %82 = vst [vmem:[#allocation2 + $0x18] sm:$0x1] 0.0
    %83 = vst [vmem:[#allocation2 + $0x30] sm:$0x1] 0.0
    %84 = vst [vmem:[#allocation2 + $0x48] sm:$0x1] 0.0
    %85 = vst [vmem:[#allocation2 + $0x60] sm:$0x1] 0.0
    %86 = vst [vmem:[#allocation2 + $0x78] sm:$0x1] 0.0
    %87 = vst [vmem:[#allocation2 + $0x90] sm:$0x1] 0.0
    %88 = vst [vmem:[#allocation2 + $0xa8] sm:$0x1] 0.0
    %89 = vst [vmem:[#allocation2 + $0xc0] sm:$0x1] 0.0
    %90 = vst [vmem:[#allocation2 + $0xd8] sm:$0x1] 0.0
    %91 = vst [vmem:[#allocation2 + $0xf0] sm:$0x1] 0.0
    %92 = vst [vmem:[#allocation2 + $0x108] sm:$0x1] 0.0
    %93 = vst [vmem:[#allocation2 + $0x120] sm:$0x1] 0.0
    %94 = vst [vmem:[#allocation2 + $0x138] sm:$0x1] 0.0
    %95 = vst [vmem:[#allocation2 + $0x150] sm:$0x1] 0.0
    %96 = vst [vmem:[#allocation2 + $0x168] sm:$0x1] 0.0
    %97 = vst [vmem:[#allocation2 + $0x180] sm:$0x1] 0.0
    %98 = vst [vmem:[#allocation2 + $0x198] sm:$0x1] 0.0
    %99 = vst [vmem:[#allocation2 + $0x1b0] sm:$0x1] 0.0
    %100 = vst [vmem:[#allocation2 + $0x1c8] sm:$0x1] 0.0
    %101 = vst [vmem:[#allocation2 + $0x1e0] sm:$0x1] 0.0
    %102 = vst [vmem:[#allocation2 + $0x1f8] sm:$0x1] 0.0
    %103 = vst [vmem:[#allocation2 + $0x210] sm:$0x1] 0.0
    %104 = vst [vmem:[#allocation2 + $0x228] sm:$0x1] 0.0
    %105 = vst [vmem:[#allocation2 + $0x240] sm:$0x1] 0.0
    %106 = vst [vmem:[#allocation2 + $0x258] sm:$0x1] 0.0
    %107 = vst [vmem:[#allocation2 + $0x270] sm:$0x1] 0.0
    %108 = vst [vmem:[#allocation2 + $0x288] sm:$0x1] 0.0
    %109 = vst [vmem:[#allocation2 + $0x2a0] sm:$0x1] 0.0
    %110 = vst [vmem:[#allocation2 + $0x2b8] sm:$0x1] 0.0
    %111 = vst [vmem:[#allocation2 + $0x2d0] sm:$0x1] 0.0
    %112 = vst [vmem:[#allocation2 + $0x2e8] sm:$0x1] 0.0
    %113 = vst [vmem:[#allocation2 + $0x300] sm:$0x1] 0.0
    %114 = vst [vmem:[#allocation2 + $0x318] sm:$0x1] 0.0
    %115 = vst [vmem:[#allocation2 + $0x330] sm:$0x1] 0.0
    %116 = vst [vmem:[#allocation2 + $0x348] sm:$0x1] 0.0
    %117 = vst [vmem:[#allocation2 + $0x11] sm:$0x1] 0.0
    %118 = vst [vmem:[#allocation2 + $0x29] sm:$0x1] 0.0
    %119 = vst [vmem:[#allocation2 + $0x41] sm:$0x1] 0.0
    %120 = vst [vmem:[#allocation2 + $0x59] sm:$0x1] 0.0
    %121 = vst [vmem:[#allocation2 + $0x71] sm:$0x1] 0.0
    %122 = vst [vmem:[#allocation2 + $0x89] sm:$0x1] 0.0
    %123 = vst [vmem:[#allocation2 + $0xa1] sm:$0x1] 0.0
    %124 = vst [vmem:[#allocation2 + $0xb9] sm:$0x1] 0.0
    %125 = vst [vmem:[#allocation2 + $0xd1] sm:$0x1] 0.0
    %126 = vst [vmem:[#allocation2 + $0xe9] sm:$0x1] 0.0
    %127 = vst [vmem:[#allocation2 + $0x101] sm:$0x1] 0.0
    %128 = vst [vmem:[#allocation2 + $0x119] sm:$0x1] 0.0
    %129 = vst [vmem:[#allocation2 + $0x131] sm:$0x1] 0.0
    %130 = vst [vmem:[#allocation2 + $0x149] sm:$0x1] 0.0
    %131 = vst [vmem:[#allocation2 + $0x161] sm:$0x1] 0.0
    %132 = vst [vmem:[#allocation2 + $0x179] sm:$0x1] 0.0
    %133 = vst [vmem:[#allocation2 + $0x191] sm:$0x1] 0.0
    %134 = vst [vmem:[#allocation2 + $0x1a9] sm:$0x1] 0.0
    %135 = vst [vmem:[#allocation2 + $0x1c1] sm:$0x1] 0.0
    %136 = vst [vmem:[#allocation2 + $0x1d9] sm:$0x1] 0.0
    %137 = vst [vmem:[#allocation2 + $0x1f1] sm:$0x1] 0.0
    %138 = vst [vmem:[#allocation2 + $0x209] sm:$0x1] 0.0
    %139 = vst [vmem:[#allocation2 + $0x221] sm:$0x1] 0.0
    %140 = vst [vmem:[#allocation2 + $0x239] sm:$0x1] 0.0
    %141 = vst [vmem:[#allocation2 + $0x251] sm:$0x1] 0.0
    %142 = vst [vmem:[#allocation2 + $0x269] sm:$0x1] 0.0
    %143 = vst [vmem:[#allocation2 + $0x281] sm:$0x1] 0.0
    %144 = vst [vmem:[#allocation2 + $0x299] sm:$0x1] 0.0
    %145 = vst [vmem:[#allocation2 + $0x2b1] sm:$0x1] 0.0
    %146 = vst [vmem:[#allocation2 + $0x2c9] sm:$0x1] 0.0
    %147 = vst [vmem:[#allocation2 + $0x2e1] sm:$0x1] 0.0
    %148 = vst [vmem:[#allocation2 + $0x2f9] sm:$0x1] 0.0
    %149 = vst [vmem:[#allocation2 + $0x311] sm:$0x1] 0.0
    %150 = vst [vmem:[#allocation2 + $0x329] sm:$0x1] 0.0
    %151 = vst [vmem:[#allocation2 + $0x341] sm:$0x1] 0.0
    %152 = vst [vmem:[#allocation2 + $0x359] sm:$0x1] 0.0
    %v153 = vld [vmem:[#allocation4] sm:$0xff]
    %v154 = vld [vmem:[#allocation4 + $0x8] sm:$0xff]
    %v155 = vld [vmem:[#allocation4 + $0x10] sm:$0xff]
    %v156 = vld [vmem:[#allocation4 + $0x18] sm:$0xff]
    %v157 = vld [vmem:[#allocation4 + $0x20] sm:$0xff]
    %v158 = vld [vmem:[#allocation4 + $0x28] sm:$0xff]
    %v159 = vld [vmem:[#allocation4 + $0x30] sm:$0xff]
    %v160 = vld [vmem:[#allocation4 + $0x38] sm:$0xff]
    %v161 = vld [vmem:[#allocation4 + $0x40] sm:$0xff]
    %v162 = vld [vmem:[#allocation4 + $0x48] sm:$0xff]
    %v163 = vld [vmem:[#allocation4 + $0x50] sm:$0xff]
    %v164 = vld [vmem:[#allocation4 + $0x58] sm:$0xff]
    %v165 = vld [vmem:[#allocation4 + $0x60] sm:$0xff]
    %v166 = vld [vmem:[#allocation4 + $0x68] sm:$0xff]
    %v167 = vld [vmem:[#allocation4 + $0x70] sm:$0xff]
    %v168 = vld [vmem:[#allocation4 + $0x78] sm:$0xff]
    %v169 = vld [vmem:[#allocation4 + $0x80] sm:$0xff]
    %v170 = vld [vmem:[#allocation4 + $0x88] sm:$0xff]
    %v171 = vld [vmem:[#allocation4 + $0x90] sm:$0xff]
    %v172 = vld [vmem:[#allocation4 + $0x98] sm:$0xff]
    %v173 = vld [vmem:[#allocation4 + $0xa0] sm:$0xff]
    %v174 = vld [vmem:[#allocation4 + $0xa8] sm:$0xff]
    %v175 = vld [vmem:[#allocation4 + $0xb0] sm:$0xff]
    %v176 = vld [vmem:[#allocation4 + $0xb8] sm:$0xff]
    %v177 = vld [vmem:[#allocation4 + $0xc0] sm:$0xff]
    %v178 = vld [vmem:[#allocation4 + $0xc8] sm:$0xff]
    %v179 = vld [vmem:[#allocation4 + $0xd0] sm:$0xff]
    %v180 = vld [vmem:[#allocation4 + $0xd8] sm:$0xff]
    %v181 = vld [vmem:[#allocation4 + $0xe0] sm:$0xff]
    %v182 = vld [vmem:[#allocation4 + $0xe8] sm:$0xff]
    %v183 = vld [vmem:[#allocation4 + $0xf0] sm:$0xff]
    %v184 = vld [vmem:[#allocation4 + $0xf8] sm:$0xff]
    %v185 = vld [vmem:[#allocation4 + $0x100] sm:$0xff]
    %v186 = vld [vmem:[#allocation4 + $0x108] sm:$0xff]
    %v187 = vld [vmem:[#allocation4 + $0x110] sm:$0xff]
    %v188 = vld [vmem:[#allocation4 + $0x118] sm:$0xff]
    %v189 = vld [vmem:[#allocation4 + $0x120] sm:$0xff]
    %v190 = vld [vmem:[#allocation4 + $0x128] sm:$0xff]
    %v191 = vld [vmem:[#allocation4 + $0x130] sm:$0xff]
    %v192 = vld [vmem:[#allocation4 + $0x138] sm:$0xff]
    %v193 = vld [vmem:[#allocation4 + $0x140] sm:$0xff]
    %v194 = vld [vmem:[#allocation4 + $0x148] sm:$0xff]
    %v195 = vld [vmem:[#allocation4 + $0x150] sm:$0xff]
    %v196 = vld [vmem:[#allocation4 + $0x158] sm:$0xff]
    %v197 = vld [vmem:[#allocation4 + $0x160] sm:$0xff]
    %v198 = vld [vmem:[#allocation4 + $0x168] sm:$0xff]
    %v199 = vld [vmem:[#allocation4 + $0x170] sm:$0xff]
    %v200 = vld [vmem:[#allocation4 + $0x178] sm:$0xff]
    %v201 = vld [vmem:[#allocation4 + $0x180] sm:$0xff]
    %v202 = vld [vmem:[#allocation4 + $0x188] sm:$0xff]
    %v203 = vld [vmem:[#allocation4 + $0x190] sm:$0xff]
    %v204 = vld [vmem:[#allocation4 + $0x198] sm:$0xff]
    %v205 = vld [vmem:[#allocation4 + $0x1a0] sm:$0xff]
    %v206 = vld [vmem:[#allocation4 + $0x1a8] sm:$0xff]
    %v207 = vld [vmem:[#allocation4 + $0x1b0] sm:$0xff]
    %v208 = vld [vmem:[#allocation4 + $0x1b8] sm:$0xff]
    %v209 = vld [vmem:[#allocation4 + $0x1c0] sm:$0xff]
    %v210 = vld [vmem:[#allocation4 + $0x1c8] sm:$0xff]
    %v211 = vld [vmem:[#allocation4 + $0x1d0] sm:$0xff]
    %v212 = vld [vmem:[#allocation4 + $0x1d8] sm:$0xff]
    %v213 = vld [vmem:[#allocation4 + $0x1e0] sm:$0xff]
    %v214 = vld [vmem:[#allocation4 + $0x1e8] sm:$0xff]
    %v215 = vld [vmem:[#allocation4 + $0x1f0] sm:$0xff]
    %v216 = vld [vmem:[#allocation4 + $0x1f8] sm:$0xff]
    %s217 = scalar_lea.vmem [#allocation2], 24
    %218 = vst [vmem:[%s217 + $0x1] sm:$0xff] %v153
    %219 = vst [vmem:[%s217 + $0x9] sm:$0xff] %v154
    %220 = vst [vmem:[%s217 + $0x19] sm:$0xff] %v155
    %221 = vst [vmem:[%s217 + $0x21] sm:$0xff] %v156
    %222 = vst [vmem:[%s217 + $0x31] sm:$0xff] %v157
    %223 = vst [vmem:[%s217 + $0x39] sm:$0xff] %v158
    %224 = vst [vmem:[%s217 + $0x49] sm:$0xff] %v159
    %225 = vst [vmem:[%s217 + $0x51] sm:$0xff] %v160
    %226 = vst [vmem:[%s217 + $0x61] sm:$0xff] %v161
    %227 = vst [vmem:[%s217 + $0x69] sm:$0xff] %v162
    %228 = vst [vmem:[%s217 + $0x79] sm:$0xff] %v163
    %229 = vst [vmem:[%s217 + $0x81] sm:$0xff] %v164
    %230 = vst [vmem:[%s217 + $0x91] sm:$0xff] %v165
    %231 = vst [vmem:[%s217 + $0x99] sm:$0xff] %v166
    %232 = vst [vmem:[%s217 + $0xa9] sm:$0xff] %v167
    %233 = vst [vmem:[%s217 + $0xb1] sm:$0xff] %v168
    %234 = vst [vmem:[%s217 + $0xc1] sm:$0xff] %v169
    %235 = vst [vmem:[%s217 + $0xc9] sm:$0xff] %v170
    %236 = vst [vmem:[%s217 + $0xd9] sm:$0xff] %v171
    %237 = vst [vmem:[%s217 + $0xe1] sm:$0xff] %v172
    %238 = vst [vmem:[%s217 + $0xf1] sm:$0xff] %v173
    %239 = vst [vmem:[%s217 + $0xf9] sm:$0xff] %v174
    %240 = vst [vmem:[%s217 + $0x109] sm:$0xff] %v175
    %241 = vst [vmem:[%s217 + $0x111] sm:$0xff] %v176
    %242 = vst [vmem:[%s217 + $0x121] sm:$0xff] %v177
    %243 = vst [vmem:[%s217 + $0x129] sm:$0xff] %v178
    %244 = vst [vmem:[%s217 + $0x139] sm:$0xff] %v179
    %245 = vst [vmem:[%s217 + $0x141] sm:$0xff] %v180
    %246 = vst [vmem:[%s217 + $0x151] sm:$0xff] %v181
    %247 = vst [vmem:[%s217 + $0x159] sm:$0xff] %v182
    %248 = vst [vmem:[%s217 + $0x169] sm:$0xff] %v183
    %249 = vst [vmem:[%s217 + $0x171] sm:$0xff] %v184
    %250 = vst [vmem:[%s217 + $0x1b1] sm:$0xff] %v185
    %251 = vst [vmem:[%s217 + $0x1b9] sm:$0xff] %v186
    %252 = vst [vmem:[%s217 + $0x1c9] sm:$0xff] %v187
    %253 = vst [vmem:[%s217 + $0x1d1] sm:$0xff] %v188
    %254 = vst [vmem:[%s217 + $0x1e1] sm:$0xff] %v189
    %255 = vst [vmem:[%s217 + $0x1e9] sm:$0xff] %v190
    %256 = vst [vmem:[%s217 + $0x1f9] sm:$0xff] %v191
    %257 = vst [vmem:[%s217 + $0x201] sm:$0xff] %v192
    %258 = vst [vmem:[%s217 + $0x211] sm:$0xff] %v193
    %259 = vst [vmem:[%s217 + $0x219] sm:$0xff] %v194
    %260 = vst [vmem:[%s217 + $0x229] sm:$0xff] %v195
    %261 = vst [vmem:[%s217 + $0x231] sm:$0xff] %v196
    %262 = vst [vmem:[%s217 + $0x241] sm:$0xff] %v197
    %263 = vst [vmem:[%s217 + $0x249] sm:$0xff] %v198
    %264 = vst [vmem:[%s217 + $0x259] sm:$0xff] %v199
    %265 = vst [vmem:[%s217 + $0x261] sm:$0xff] %v200
    %266 = vst [vmem:[%s217 + $0x271] sm:$0xff] %v201
    %267 = vst [vmem:[%s217 + $0x279] sm:$0xff] %v202
    %268 = vst [vmem:[%s217 + $0x289] sm:$0xff] %v203
    %269 = vst [vmem:[%s217 + $0x291] sm:$0xff] %v204
    %270 = vst [vmem:[%s217 + $0x2a1] sm:$0xff] %v205
    %271 = vst [vmem:[%s217 + $0x2a9] sm:$0xff] %v206
    %272 = vst [vmem:[%s217 + $0x2b9] sm:$0xff] %v207
    %273 = vst [vmem:[%s217 + $0x2c1] sm:$0xff] %v208
    %274 = vst [vmem:[%s217 + $0x2d1] sm:$0xff] %v209
    %275 = vst [vmem:[%s217 + $0x2d9] sm:$0xff] %v210
    %276 = vst [vmem:[%s217 + $0x2e9] sm:$0xff] %v211
    %277 = vst [vmem:[%s217 + $0x2f1] sm:$0xff] %v212
    %278 = vst [vmem:[%s217 + $0x301] sm:$0xff] %v213
    %279 = vst [vmem:[%s217 + $0x309] sm:$0xff] %v214
    %280 = vst [vmem:[%s217 + $0x319] sm:$0xff] %v215
    %281 = vst [vmem:[%s217 + $0x321] sm:$0xff] %v216
    %v282 = vld [vmem:[#allocation7] sm:$0xff]
    %v283 = vld [vmem:[#allocation7 + $0x8] sm:$0xff]
    %v284 = vld [vmem:[#allocation7 + $0x10] sm:$0xff]
    %v285 = vld [vmem:[#allocation7 + $0x18] sm:$0xff]
    %v286 = vld [vmem:[#allocation7 + $0x20] sm:$0xff]
    %v287 = vld [vmem:[#allocation7 + $0x28] sm:$0xff]
    %v288 = vld [vmem:[#allocation7 + $0x30] sm:$0xff]
    %v289 = vld [vmem:[#allocation7 + $0x38] sm:$0xff]
    %v290 = vld [vmem:[#allocation7 + $0x40] sm:$0xff]
    %v291 = vld [vmem:[#allocation7 + $0x48] sm:$0xff]
    %v292 = vld [vmem:[#allocation7 + $0x50] sm:$0xff]
    %v293 = vld [vmem:[#allocation7 + $0x58] sm:$0xff]
    %v294 = vld [vmem:[#allocation7 + $0x60] sm:$0xff]
    %v295 = vld [vmem:[#allocation7 + $0x68] sm:$0xff]
    %v296 = vld [vmem:[#allocation7 + $0x70] sm:$0xff]
    %v297 = vld [vmem:[#allocation7 + $0x78] sm:$0xff]
    %v298 = vld [vmem:[#allocation7 + $0x80] sm:$0xff]
    %v299 = vld [vmem:[#allocation7 + $0x88] sm:$0xff]
    %v300 = vld [vmem:[#allocation7 + $0x90] sm:$0xff]
    %v301 = vld [vmem:[#allocation7 + $0x98] sm:$0xff]
    %v302 = vld [vmem:[#allocation7 + $0xa0] sm:$0xff]
    %v303 = vld [vmem:[#allocation7 + $0xa8] sm:$0xff]
    %v304 = vld [vmem:[#allocation7 + $0xb0] sm:$0xff]
    %v305 = vld [vmem:[#allocation7 + $0xb8] sm:$0xff]
    %v306 = vld [vmem:[#allocation7 + $0xc0] sm:$0xff]
    %v307 = vld [vmem:[#allocation7 + $0xc8] sm:$0xff]
    %v308 = vld [vmem:[#allocation7 + $0xd0] sm:$0xff]
    %v309 = vld [vmem:[#allocation7 + $0xd8] sm:$0xff]
    %v310 = vld [vmem:[#allocation7 + $0xe0] sm:$0xff]
    %v311 = vld [vmem:[#allocation7 + $0xe8] sm:$0xff]
    %v312 = vld [vmem:[#allocation7 + $0xf0] sm:$0xff]
    %v313 = vld [vmem:[#allocation7 + $0xf8] sm:$0xff]
    %v314 = vld [vmem:[#allocation7 + $0x100] sm:$0xff]
    %v315 = vld [vmem:[#allocation7 + $0x108] sm:$0xff]
    %v316 = vld [vmem:[#allocation7 + $0x110] sm:$0xff]
    %v317 = vld [vmem:[#allocation7 + $0x118] sm:$0xff]
    %v318 = vld [vmem:[#allocation7 + $0x120] sm:$0xff]
    %v319 = vld [vmem:[#allocation7 + $0x128] sm:$0xff]
    %v320 = vld [vmem:[#allocation7 + $0x130] sm:$0xff]
    %v321 = vld [vmem:[#allocation7 + $0x138] sm:$0xff]
    %v322 = vld [vmem:[#allocation7 + $0x140] sm:$0xff]
    %v323 = vld [vmem:[#allocation7 + $0x148] sm:$0xff]
    %v324 = vld [vmem:[#allocation7 + $0x150] sm:$0xff]
    %v325 = vld [vmem:[#allocation7 + $0x158] sm:$0xff]
    %v326 = vld [vmem:[#allocation7 + $0x160] sm:$0xff]
    %v327 = vld [vmem:[#allocation7 + $0x168] sm:$0xff]
    %v328 = vld [vmem:[#allocation7 + $0x170] sm:$0xff]
    %v329 = vld [vmem:[#allocation7 + $0x178] sm:$0xff]
    %v330 = vld [vmem:[#allocation7 + $0x180] sm:$0xff]
    %v331 = vld [vmem:[#allocation7 + $0x188] sm:$0xff]
    %v332 = vld [vmem:[#allocation7 + $0x190] sm:$0xff]
    %v333 = vld [vmem:[#allocation7 + $0x198] sm:$0xff]
    %v334 = vld [vmem:[#allocation7 + $0x1a0] sm:$0xff]
    %v335 = vld [vmem:[#allocation7 + $0x1a8] sm:$0xff]
    %v336 = vld [vmem:[#allocation7 + $0x1b0] sm:$0xff]
    %v337 = vld [vmem:[#allocation7 + $0x1b8] sm:$0xff]
    %v338 = vld [vmem:[#allocation7 + $0x1c0] sm:$0xff]
    %v339 = vld [vmem:[#allocation7 + $0x1c8] sm:$0xff]
    %v340 = vld [vmem:[#allocation7 + $0x1d0] sm:$0xff]
    %v341 = vld [vmem:[#allocation7 + $0x1d8] sm:$0xff]
    %v342 = vld [vmem:[#allocation7 + $0x1e0] sm:$0xff]
    %v343 = vld [vmem:[#allocation7 + $0x1e8] sm:$0xff]
    %v344 = vld [vmem:[#allocation7 + $0x1f0] sm:$0xff]
    %v345 = vld [vmem:[#allocation7 + $0x1f8] sm:$0xff]
    %v346 = vld [vmem:[#allocation7 + $0x200] sm:$0xff]
    %v347 = vld [vmem:[#allocation7 + $0x208] sm:$0xff]
    %v348 = vld [vmem:[#allocation7 + $0x210] sm:$0xff]
    %v349 = vld [vmem:[#allocation7 + $0x218] sm:$0xff]
    %v350 = vld [vmem:[#allocation7 + $0x220] sm:$0xff]
    %v351 = vld [vmem:[#allocation7 + $0x228] sm:$0xff]
    %v352 = vld [vmem:[#allocation7 + $0x230] sm:$0xff]
    %v353 = vld [vmem:[#allocation7 + $0x238] sm:$0xff]
    %v354 = vld [vmem:[#allocation7 + $0x240] sm:$0xff]
    %v355 = vld [vmem:[#allocation7 + $0x248] sm:$0xff]
    %v356 = vld [vmem:[#allocation7 + $0x250] sm:$0xff]
    %v357 = vld [vmem:[#allocation7 + $0x258] sm:$0xff]
    %v358 = vld [vmem:[#allocation7 + $0x260] sm:$0xff]
    %v359 = vld [vmem:[#allocation7 + $0x268] sm:$0xff]
    %v360 = vld [vmem:[#allocation7 + $0x270] sm:$0xff]
    %v361 = vld [vmem:[#allocation7 + $0x278] sm:$0xff]
    %v362 = vld [vmem:[#allocation7 + $0x280] sm:$0xff]
    %v363 = vld [vmem:[#allocation7 + $0x288] sm:$0xff]
    %v364 = vld [vmem:[#allocation7 + $0x290] sm:$0xff]
    %v365 = vld [vmem:[#allocation7 + $0x298] sm:$0xff]
    %v366 = vld [vmem:[#allocation7 + $0x2a0] sm:$0xff]
    %v367 = vld [vmem:[#allocation7 + $0x2a8] sm:$0xff]
    %v368 = vld [vmem:[#allocation7 + $0x2b0] sm:$0xff]
    %v369 = vld [vmem:[#allocation7 + $0x2b8] sm:$0xff]
    %v370 = vld [vmem:[#allocation7 + $0x2c0] sm:$0xff]
    %v371 = vld [vmem:[#allocation7 + $0x2c8] sm:$0xff]
    %v372 = vld [vmem:[#allocation7 + $0x2d0] sm:$0xff]
    %v373 = vld [vmem:[#allocation7 + $0x2d8] sm:$0xff]
    %v374 = vld [vmem:[#allocation7 + $0x2e0] sm:$0xff]
    %v375 = vld [vmem:[#allocation7 + $0x2e8] sm:$0xff]
    %v376 = vld [vmem:[#allocation7 + $0x2f0] sm:$0xff]
    %v377 = vld [vmem:[#allocation7 + $0x2f8] sm:$0xff]
    %v378 = vld [vmem:[#allocation7 + $0x300] sm:$0xff]
    %v379 = vld [vmem:[#allocation7 + $0x308] sm:$0xff]
    %v380 = vld [vmem:[#allocation7 + $0x310] sm:$0xff]
    %v381 = vld [vmem:[#allocation7 + $0x318] sm:$0xff]
    %v382 = vld [vmem:[#allocation7 + $0x320] sm:$0xff]
    %v383 = vld [vmem:[#allocation7 + $0x328] sm:$0xff]
    %v384 = vld [vmem:[#allocation7 + $0x330] sm:$0xff]
    %v385 = vld [vmem:[#allocation7 + $0x338] sm:$0xff]
    %v386 = vld [vmem:[#allocation7 + $0x340] sm:$0xff]
    %v387 = vld [vmem:[#allocation7 + $0x348] sm:$0xff]
    %v388 = vld [vmem:[#allocation7 + $0x350] sm:$0xff]
    %v389 = vld [vmem:[#allocation7 + $0x358] sm:$0xff]
    %v390 = vld [vmem:[#allocation7 + $0x360] sm:$0xff]
    %v391 = vld [vmem:[#allocation7 + $0x368] sm:$0xff]
    %v392 = vld [vmem:[#allocation7 + $0x370] sm:$0xff]
    %v393 = vld [vmem:[#allocation7 + $0x378] sm:$0xff]
    %v394 = vld [vmem:[#allocation7 + $0x380] sm:$0xff]
    %v395 = vld [vmem:[#allocation7 + $0x388] sm:$0xff]
    %v396 = vld [vmem:[#allocation7 + $0x390] sm:$0xff]
    %v397 = vld [vmem:[#allocation7 + $0x398] sm:$0xff]
    %v398 = vld [vmem:[#allocation7 + $0x3a0] sm:$0xff]
    %v399 = vld [vmem:[#allocation7 + $0x3a8] sm:$0xff]
    %v400 = vld [vmem:[#allocation7 + $0x3b0] sm:$0xff]
    %v401 = vld [vmem:[#allocation7 + $0x3b8] sm:$0xff]
    %v402 = vld [vmem:[#allocation7 + $0x3c0] sm:$0xff]
    %v403 = vld [vmem:[#allocation7 + $0x3c8] sm:$0xff]
    %v404 = vld [vmem:[#allocation7 + $0x3d0] sm:$0xff]
    %v405 = vld [vmem:[#allocation7 + $0x3d8] sm:$0xff]
    %v406 = vld [vmem:[#allocation7 + $0x3e0] sm:$0xff]
    %v407 = vld [vmem:[#allocation7 + $0x3e8] sm:$0xff]
    %v408 = vld [vmem:[#allocation7 + $0x3f0] sm:$0xff]
    %v409 = vld [vmem:[#allocation7 + $0x3f8] sm:$0xff]
    %v410 = vld [vmem:[#allocation7 + $0x400] sm:$0xff]
    %v411 = vld [vmem:[#allocation7 + $0x408] sm:$0xff]
    %v412 = vld [vmem:[#allocation7 + $0x410] sm:$0xff]
    %v413 = vld [vmem:[#allocation7 + $0x418] sm:$0xff]
    %v414 = vld [vmem:[#allocation7 + $0x420] sm:$0xff]
    %v415 = vld [vmem:[#allocation7 + $0x428] sm:$0xff]
    %v416 = vld [vmem:[#allocation7 + $0x430] sm:$0xff]
    %v417 = vld [vmem:[#allocation7 + $0x438] sm:$0xff]
    %v418 = vld [vmem:[#allocation7 + $0x440] sm:$0xff]
    %v419 = vld [vmem:[#allocation7 + $0x448] sm:$0xff]
    %v420 = vld [vmem:[#allocation7 + $0x450] sm:$0xff]
    %v421 = vld [vmem:[#allocation7 + $0x458] sm:$0xff]
    %v422 = vld [vmem:[#allocation7 + $0x460] sm:$0xff]
    %v423 = vld [vmem:[#allocation7 + $0x468] sm:$0xff]
    %v424 = vld [vmem:[#allocation7 + $0x470] sm:$0xff]
    %v425 = vld [vmem:[#allocation7 + $0x478] sm:$0xff]
    %v426 = vld [vmem:[#allocation2] sm:$0xff]
    %v427 = vld [vmem:[#allocation2 + $0x8] sm:$0xff]
    %v428 = vld [vmem:[#allocation2 + $0x18] sm:$0xff]
    %v429 = vld [vmem:[#allocation2 + $0x20] sm:$0xff]
    %v430 = vld [vmem:[#allocation2 + $0x30] sm:$0xff]
    %v431 = vld [vmem:[#allocation2 + $0x38] sm:$0xff]
    %v432 = vld [vmem:[#allocation2 + $0x48] sm:$0xff]
    %v433 = vld [vmem:[#allocation2 + $0x50] sm:$0xff]
    %v434 = vld [vmem:[#allocation2 + $0x60] sm:$0xff]
    %v435 = vld [vmem:[#allocation2 + $0x68] sm:$0xff]
    %v436 = vld [vmem:[#allocation2 + $0x78] sm:$0xff]
    %v437 = vld [vmem:[#allocation2 + $0x80] sm:$0xff]
    %v438 = vld [vmem:[#allocation2 + $0x90] sm:$0xff]
    %v439 = vld [vmem:[#allocation2 + $0x98] sm:$0xff]
    %v440 = vld [vmem:[#allocation2 + $0xa8] sm:$0xff]
    %v441 = vld [vmem:[#allocation2 + $0xb0] sm:$0xff]
    %v442 = vld [vmem:[#allocation2 + $0xc0] sm:$0xff]
    %v443 = vld [vmem:[#allocation2 + $0xc8] sm:$0xff]
    %v444 = vld [vmem:[#allocation2 + $0xd8] sm:$0xff]
    %v445 = vld [vmem:[#allocation2 + $0xe0] sm:$0xff]
    %v446 = vld [vmem:[#allocation2 + $0xf0] sm:$0xff]
    %v447 = vld [vmem:[#allocation2 + $0xf8] sm:$0xff]
    %v448 = vld [vmem:[#allocation2 + $0x108] sm:$0xff]
    %v449 = vld [vmem:[#allocation2 + $0x110] sm:$0xff]
    %v450 = vld [vmem:[#allocation2 + $0x120] sm:$0xff]
    %v451 = vld [vmem:[#allocation2 + $0x128] sm:$0xff]
    %v452 = vld [vmem:[#allocation2 + $0x138] sm:$0xff]
    %v453 = vld [vmem:[#allocation2 + $0x140] sm:$0xff]
    %v454 = vld [vmem:[#allocation2 + $0x150] sm:$0xff]
    %v455 = vld [vmem:[#allocation2 + $0x158] sm:$0xff]
    %v456 = vld [vmem:[#allocation2 + $0x168] sm:$0xff]
    %v457 = vld [vmem:[#allocation2 + $0x170] sm:$0xff]
    %v458 = vld [vmem:[#allocation2 + $0x1b0] sm:$0xff]
    %v459 = vld [vmem:[#allocation2 + $0x1b8] sm:$0xff]
    %v460 = vld [vmem:[#allocation2 + $0x1c8] sm:$0xff]
    %v461 = vld [vmem:[#allocation2 + $0x1d0] sm:$0xff]
    %v462 = vld [vmem:[#allocation2 + $0x1e0] sm:$0xff]
    %v463 = vld [vmem:[#allocation2 + $0x1e8] sm:$0xff]
    %v464 = vld [vmem:[#allocation2 + $0x1f8] sm:$0xff]
    %v465 = vld [vmem:[#allocation2 + $0x200] sm:$0xff]
    %v466 = vld [vmem:[#allocation2 + $0x210] sm:$0xff]
    %v467 = vld [vmem:[#allocation2 + $0x218] sm:$0xff]
    %v468 = vld [vmem:[#allocation2 + $0x228] sm:$0xff]
    %v469 = vld [vmem:[#allocation2 + $0x230] sm:$0xff]
    %v470 = vld [vmem:[#allocation2 + $0x240] sm:$0xff]
    %v471 = vld [vmem:[#allocation2 + $0x248] sm:$0xff]
    %v472 = vld [vmem:[#allocation2 + $0x258] sm:$0xff]
    %v473 = vld [vmem:[#allocation2 + $0x260] sm:$0xff]
    %v474 = vld [vmem:[#allocation2 + $0x270] sm:$0xff]
    %v475 = vld [vmem:[#allocation2 + $0x278] sm:$0xff]
    %v476 = vld [vmem:[#allocation2 + $0x288] sm:$0xff]
    %v477 = vld [vmem:[#allocation2 + $0x290] sm:$0xff]
    %v478 = vld [vmem:[#allocation2 + $0x2a0] sm:$0xff]
    %v479 = vld [vmem:[#allocation2 + $0x2a8] sm:$0xff]
    %v480 = vld [vmem:[#allocation2 + $0x2b8] sm:$0xff]
    %v481 = vld [vmem:[#allocation2 + $0x2c0] sm:$0xff]
    %v482 = vld [vmem:[#allocation2 + $0x2d0] sm:$0xff]
    %v483 = vld [vmem:[#allocation2 + $0x2d8] sm:$0xff]
    %v484 = vld [vmem:[#allocation2 + $0x2e8] sm:$0xff]
    %v485 = vld [vmem:[#allocation2 + $0x2f0] sm:$0xff]
    %v486 = vld [vmem:[#allocation2 + $0x300] sm:$0xff]
    %v487 = vld [vmem:[#allocation2 + $0x308] sm:$0xff]
    %v488 = vld [vmem:[#allocation2 + $0x318] sm:$0xff]
    %v489 = vld [vmem:[#allocation2 + $0x320] sm:$0xff]
    %490 = vst [vmem:[#allocation3] sm:$0xff] %v426
    %491 = vst [vmem:[#allocation3 + $0x48] sm:$0xff] %v427
    %492 = vst [vmem:[#allocation3 + $0x90] sm:$0xff] %v428
    %493 = vst [vmem:[#allocation3 + $0xd8] sm:$0xff] %v429
    %494 = vst [vmem:[#allocation3 + $0x120] sm:$0xff] %v430
    %495 = vst [vmem:[#allocation3 + $0x168] sm:$0xff] %v431
    %496 = vst [vmem:[#allocation3 + $0x1b0] sm:$0xff] %v432
    %497 = vst [vmem:[#allocation3 + $0x1f8] sm:$0xff] %v433
    %498 = vst [vmem:[#allocation3 + $0x240] sm:$0xff] %v434
    %499 = vst [vmem:[#allocation3 + $0x288] sm:$0xff] %v435
    %500 = vst [vmem:[#allocation3 + $0x2d0] sm:$0xff] %v436
    %501 = vst [vmem:[#allocation3 + $0x318] sm:$0xff] %v437
    %502 = vst [vmem:[#allocation3 + $0x360] sm:$0xff] %v438
    %503 = vst [vmem:[#allocation3 + $0x3a8] sm:$0xff] %v439
    %504 = vst [vmem:[#allocation3 + $0x3f0] sm:$0xff] %v440
    %505 = vst [vmem:[#allocation3 + $0x438] sm:$0xff] %v441
    %506 = vst [vmem:[#allocation3 + $0x480] sm:$0xff] %v442
    %507 = vst [vmem:[#allocation3 + $0x4c8] sm:$0xff] %v443
    %508 = vst [vmem:[#allocation3 + $0x510] sm:$0xff] %v444
    %509 = vst [vmem:[#allocation3 + $0x558] sm:$0xff] %v445
    %510 = vst [vmem:[#allocation3 + $0x5a0] sm:$0xff] %v446
    %511 = vst [vmem:[#allocation3 + $0x5e8] sm:$0xff] %v447
    %512 = vst [vmem:[#allocation3 + $0x630] sm:$0xff] %v448
    %513 = vst [vmem:[#allocation3 + $0x678] sm:$0xff] %v449
    %514 = vst [vmem:[#allocation3 + $0x6c0] sm:$0xff] %v450
    %515 = vst [vmem:[#allocation3 + $0x708] sm:$0xff] %v451
    %516 = vst [vmem:[#allocation3 + $0x750] sm:$0xff] %v452
    %517 = vst [vmem:[#allocation3 + $0x798] sm:$0xff] %v453
    %518 = vst [vmem:[#allocation3 + $0x7e0] sm:$0xff] %v454
    %519 = vst [vmem:[#allocation3 + $0x828] sm:$0xff] %v455
    %520 = vst [vmem:[#allocation3 + $0x870] sm:$0xff] %v456
    %521 = vst [vmem:[#allocation3 + $0x8b8] sm:$0xff] %v457
    %522 = vst [vmem:[#allocation3 + $0x900] sm:$0xff] %v458
    %523 = vst [vmem:[#allocation3 + $0x948] sm:$0xff] %v459
    %524 = vst [vmem:[#allocation3 + $0x990] sm:$0xff] %v460
    %525 = vst [vmem:[#allocation3 + $0x9d8] sm:$0xff] %v461
    %526 = vst [vmem:[#allocation3 + $0xa20] sm:$0xff] %v462
    %527 = vst [vmem:[#allocation3 + $0xa68] sm:$0xff] %v463
    %528 = vst [vmem:[#allocation3 + $0xab0] sm:$0xff] %v464
    %529 = vst [vmem:[#allocation3 + $0xaf8] sm:$0xff] %v465
    %530 = vst [vmem:[#allocation3 + $0xb40] sm:$0xff] %v466
    %531 = vst [vmem:[#allocation3 + $0xb88] sm:$0xff] %v467
    %532 = vst [vmem:[#allocation3 + $0xbd0] sm:$0xff] %v468
    %533 = vst [vmem:[#allocation3 + $0xc18] sm:$0xff] %v469
    %534 = vst [vmem:[#allocation3 + $0xc60] sm:$0xff] %v470
    %535 = vst [vmem:[#allocation3 + $0xca8] sm:$0xff] %v471
    %536 = vst [vmem:[#allocation3 + $0xcf0] sm:$0xff] %v472
    %537 = vst [vmem:[#allocation3 + $0xd38] sm:$0xff] %v473
    %538 = vst [vmem:[#allocation3 + $0xd80] sm:$0xff] %v474
    %539 = vst [vmem:[#allocation3 + $0xdc8] sm:$0xff] %v475
    %540 = vst [vmem:[#allocation3 + $0xe10] sm:$0xff] %v476
    %541 = vst [vmem:[#allocation3 + $0xe58] sm:$0xff] %v477
    %542 = vst [vmem:[#allocation3 + $0xea0] sm:$0xff] %v478
    %543 = vst [vmem:[#allocation3 + $0xee8] sm:$0xff] %v479
    %544 = vst [vmem:[#allocation3 + $0xf30] sm:$0xff] %v480
    %545 = vst [vmem:[#allocation3 + $0xf78] sm:$0xff] %v481
    %546 = vst [vmem:[#allocation3 + $0xfc0] sm:$0xff] %v482
    %547 = vst [vmem:[#allocation3 + $0x1008] sm:$0xff] %v483
    %548 = vst [vmem:[#allocation3 + $0x1050] sm:$0xff] %v484
    %549 = vst [vmem:[#allocation3 + $0x1098] sm:$0xff] %v485
    %550 = vst [vmem:[#allocation3 + $0x10e0] sm:$0xff] %v486
    %551 = vst [vmem:[#allocation3 + $0x1128] sm:$0xff] %v487
    %552 = vst [vmem:[#allocation3 + $0x1170] sm:$0xff] %v488
    %553 = vst [vmem:[#allocation3 + $0x11b8] sm:$0xff] %v489
    %v554 = vld [vmem:[#allocation2 + $0x1] sm:$0xff]
    %v555 = vld [vmem:[#allocation2 + $0x9] sm:$0xff]
    %v556 = vld [vmem:[#allocation2 + $0x19] sm:$0xff]
    %v557 = vld [vmem:[#allocation2 + $0x21] sm:$0xff]
    %v558 = vld [vmem:[#allocation2 + $0x31] sm:$0xff]
    %v559 = vld [vmem:[#allocation2 + $0x39] sm:$0xff]
    %v560 = vld [vmem:[#allocation2 + $0x49] sm:$0xff]
    %v561 = vld [vmem:[#allocation2 + $0x51] sm:$0xff]
    %v562 = vld [vmem:[#allocation2 + $0x61] sm:$0xff]
    %v563 = vld [vmem:[#allocation2 + $0x69] sm:$0xff]
    %v564 = vld [vmem:[#allocation2 + $0x79] sm:$0xff]
    %v565 = vld [vmem:[#allocation2 + $0x81] sm:$0xff]
    %v566 = vld [vmem:[#allocation2 + $0x91] sm:$0xff]
    %v567 = vld [vmem:[#allocation2 + $0x99] sm:$0xff]
    %v568 = vld [vmem:[#allocation2 + $0xa9] sm:$0xff]
    %v569 = vld [vmem:[#allocation2 + $0xb1] sm:$0xff]
    %v570 = vld [vmem:[#allocation2 + $0xc1] sm:$0xff]
    %v571 = vld [vmem:[#allocation2 + $0xc9] sm:$0xff]
    %v572 = vld [vmem:[#allocation2 + $0xd9] sm:$0xff]
    %v573 = vld [vmem:[#allocation2 + $0xe1] sm:$0xff]
    %v574 = vld [vmem:[#allocation2 + $0xf1] sm:$0xff]
    %v575 = vld [vmem:[#allocation2 + $0xf9] sm:$0xff]
    %v576 = vld [vmem:[#allocation2 + $0x109] sm:$0xff]
    %v577 = vld [vmem:[#allocation2 + $0x111] sm:$0xff]
    %v578 = vld [vmem:[#allocation2 + $0x121] sm:$0xff]
    %v579 = vld [vmem:[#allocation2 + $0x129] sm:$0xff]
    %v580 = vld [vmem:[#allocation2 + $0x139] sm:$0xff]
    %v581 = vld [vmem:[#allocation2 + $0x141] sm:$0xff]
    %v582 = vld [vmem:[#allocation2 + $0x151] sm:$0xff]
    %v583 = vld [vmem:[#allocation2 + $0x159] sm:$0xff]
    %v584 = vld [vmem:[#allocation2 + $0x169] sm:$0xff]
    %v585 = vld [vmem:[#allocation2 + $0x171] sm:$0xff]
    %v586 = vld [vmem:[#allocation2 + $0x1b1] sm:$0xff]
    %v587 = vld [vmem:[#allocation2 + $0x1b9] sm:$0xff]
    %v588 = vld [vmem:[#allocation2 + $0x1c9] sm:$0xff]
    %v589 = vld [vmem:[#allocation2 + $0x1d1] sm:$0xff]
    %v590 = vld [vmem:[#allocation2 + $0x1e1] sm:$0xff]
    %v591 = vld [vmem:[#allocation2 + $0x1e9] sm:$0xff]
    %v592 = vld [vmem:[#allocation2 + $0x1f9] sm:$0xff]
    %v593 = vld [vmem:[#allocation2 + $0x201] sm:$0xff]
    %v594 = vld [vmem:[#allocation2 + $0x211] sm:$0xff]
    %v595 = vld [vmem:[#allocation2 + $0x219] sm:$0xff]
    %v596 = vld [vmem:[#allocation2 + $0x229] sm:$0xff]
    %v597 = vld [vmem:[#allocation2 + $0x231] sm:$0xff]
    %v598 = vld [vmem:[#allocation2 + $0x241] sm:$0xff]
    %v599 = vld [vmem:[#allocation2 + $0x249] sm:$0xff]
    %v600 = vld [vmem:[#allocation2 + $0x259] sm:$0xff]
    %v601 = vld [vmem:[#allocation2 + $0x261] sm:$0xff]
    %v602 = vld [vmem:[#allocation2 + $0x271] sm:$0xff]
    %v603 = vld [vmem:[#allocation2 + $0x279] sm:$0xff]
    %v604 = vld [vmem:[#allocation2 + $0x289] sm:$0xff]
    %v605 = vld [vmem:[#allocation2 + $0x291] sm:$0xff]
    %v606 = vld [vmem:[#allocation2 + $0x2a1] sm:$0xff]
    %v607 = vld [vmem:[#allocation2 + $0x2a9] sm:$0xff]
    %v608 = vld [vmem:[#allocation2 + $0x2b9] sm:$0xff]
    %v609 = vld [vmem:[#allocation2 + $0x2c1] sm:$0xff]
    %v610 = vld [vmem:[#allocation2 + $0x2d1] sm:$0xff]
    %v611 = vld [vmem:[#allocation2 + $0x2d9] sm:$0xff]
    %v612 = vld [vmem:[#allocation2 + $0x2e9] sm:$0xff]
    %v613 = vld [vmem:[#allocation2 + $0x2f1] sm:$0xff]
    %v614 = vld [vmem:[#allocation2 + $0x301] sm:$0xff]
    %v615 = vld [vmem:[#allocation2 + $0x309] sm:$0xff]
    %v616 = vld [vmem:[#allocation2 + $0x319] sm:$0xff]
    %v617 = vld [vmem:[#allocation2 + $0x321] sm:$0xff]
    %618 = vst [vmem:[#allocation3 + $0x8] sm:$0xff] %v554
    %619 = vst [vmem:[#allocation3 + $0x50] sm:$0xff] %v555
    %620 = vst [vmem:[#allocation3 + $0x98] sm:$0xff] %v556
    %621 = vst [vmem:[#allocation3 + $0xe0] sm:$0xff] %v557
    %622 = vst [vmem:[#allocation3 + $0x128] sm:$0xff] %v558
    %623 = vst [vmem:[#allocation3 + $0x170] sm:$0xff] %v559
    %624 = vst [vmem:[#allocation3 + $0x1b8] sm:$0xff] %v560
    %625 = vst [vmem:[#allocation3 + $0x200] sm:$0xff] %v561
    %626 = vst [vmem:[#allocation3 + $0x248] sm:$0xff] %v562
    %627 = vst [vmem:[#allocation3 + $0x290] sm:$0xff] %v563
    %628 = vst [vmem:[#allocation3 + $0x2d8] sm:$0xff] %v564
    %629 = vst [vmem:[#allocation3 + $0x320] sm:$0xff] %v565
    %630 = vst [vmem:[#allocation3 + $0x368] sm:$0xff] %v566
    %631 = vst [vmem:[#allocation3 + $0x3b0] sm:$0xff] %v567
    %632 = vst [vmem:[#allocation3 + $0x3f8] sm:$0xff] %v568
    %633 = vst [vmem:[#allocation3 + $0x440] sm:$0xff] %v569
    %634 = vst [vmem:[#allocation3 + $0x488] sm:$0xff] %v570
    %635 = vst [vmem:[#allocation3 + $0x4d0] sm:$0xff] %v571
    %636 = vst [vmem:[#allocation3 + $0x518] sm:$0xff] %v572
    %637 = vst [vmem:[#allocation3 + $0x560] sm:$0xff] %v573
    %638 = vst [vmem:[#allocation3 + $0x5a8] sm:$0xff] %v574
    %639 = vst [vmem:[#allocation3 + $0x5f0] sm:$0xff] %v575
    %640 = vst [vmem:[#allocation3 + $0x638] sm:$0xff] %v576
    %641 = vst [vmem:[#allocation3 + $0x680] sm:$0xff] %v577
    %642 = vst [vmem:[#allocation3 + $0x6c8] sm:$0xff] %v578
    %643 = vst [vmem:[#allocation3 + $0x710] sm:$0xff] %v579
    %644 = vst [vmem:[#allocation3 + $0x758] sm:$0xff] %v580
    %645 = vst [vmem:[#allocation3 + $0x7a0] sm:$0xff] %v581
    %646 = vst [vmem:[#allocation3 + $0x7e8] sm:$0xff] %v582
    %647 = vst [vmem:[#allocation3 + $0x830] sm:$0xff] %v583
    %648 = vst [vmem:[#allocation3 + $0x878] sm:$0xff] %v584
    %649 = vst [vmem:[#allocation3 + $0x8c0] sm:$0xff] %v585
    %650 = vst [vmem:[#allocation3 + $0x908] sm:$0xff] %v586
    %651 = vst [vmem:[#allocation3 + $0x950] sm:$0xff] %v587
    %652 = vst [vmem:[#allocation3 + $0x998] sm:$0xff] %v588
    %653 = vst [vmem:[#allocation3 + $0x9e0] sm:$0xff] %v589
    %654 = vst [vmem:[#allocation3 + $0xa28] sm:$0xff] %v590
    %655 = vst [vmem:[#allocation3 + $0xa70] sm:$0xff] %v591
    %656 = vst [vmem:[#allocation3 + $0xab8] sm:$0xff] %v592
    %657 = vst [vmem:[#allocation3 + $0xb00] sm:$0xff] %v593
    %658 = vst [vmem:[#allocation3 + $0xb48] sm:$0xff] %v594
    %659 = vst [vmem:[#allocation3 + $0xb90] sm:$0xff] %v595
    %660 = vst [vmem:[#allocation3 + $0xbd8] sm:$0xff] %v596
    %661 = vst [vmem:[#allocation3 + $0xc20] sm:$0xff] %v597
    %662 = vst [vmem:[#allocation3 + $0xc68] sm:$0xff] %v598
    %663 = vst [vmem:[#allocation3 + $0xcb0] sm:$0xff] %v599
    %664 = vst [vmem:[#allocation3 + $0xcf8] sm:$0xff] %v600
    %665 = vst [vmem:[#allocation3 + $0xd40] sm:$0xff] %v601
    %666 = vst [vmem:[#allocation3 + $0xd88] sm:$0xff] %v602
    %667 = vst [vmem:[#allocation3 + $0xdd0] sm:$0xff] %v603
    %668 = vst [vmem:[#allocation3 + $0xe18] sm:$0xff] %v604
    %669 = vst [vmem:[#allocation3 + $0xe60] sm:$0xff] %v605
    %670 = vst [vmem:[#allocation3 + $0xea8] sm:$0xff] %v606
    %671 = vst [vmem:[#allocation3 + $0xef0] sm:$0xff] %v607
    %672 = vst [vmem:[#allocation3 + $0xf38] sm:$0xff] %v608
    %673 = vst [vmem:[#allocation3 + $0xf80] sm:$0xff] %v609
    %674 = vst [vmem:[#allocation3 + $0xfc8] sm:$0xff] %v610
    %675 = vst [vmem:[#allocation3 + $0x1010] sm:$0xff] %v611
    %676 = vst [vmem:[#allocation3 + $0x1058] sm:$0xff] %v612
    %677 = vst [vmem:[#allocation3 + $0x10a0] sm:$0xff] %v613
    %678 = vst [vmem:[#allocation3 + $0x10e8] sm:$0xff] %v614
    %679 = vst [vmem:[#allocation3 + $0x1130] sm:$0xff] %v615
    %680 = vst [vmem:[#allocation3 + $0x1178] sm:$0xff] %v616
    %681 = vst [vmem:[#allocation3 + $0x11c0] sm:$0xff] %v617
    %v682 = vld [vmem:[#allocation2 + $0x2] sm:$0xff]
    %v683 = vld [vmem:[#allocation2 + $0xa] sm:$0xff]
    %v684 = vld [vmem:[#allocation2 + $0x1a] sm:$0xff]
    %v685 = vld [vmem:[#allocation2 + $0x22] sm:$0xff]
    %v686 = vld [vmem:[#allocation2 + $0x32] sm:$0xff]
    %v687 = vld [vmem:[#allocation2 + $0x3a] sm:$0xff]
    %v688 = vld [vmem:[#allocation2 + $0x4a] sm:$0xff]
    %v689 = vld [vmem:[#allocation2 + $0x52] sm:$0xff]
    %v690 = vld [vmem:[#allocation2 + $0x62] sm:$0xff]
    %v691 = vld [vmem:[#allocation2 + $0x6a] sm:$0xff]
    %v692 = vld [vmem:[#allocation2 + $0x7a] sm:$0xff]
    %v693 = vld [vmem:[#allocation2 + $0x82] sm:$0xff]
    %v694 = vld [vmem:[#allocation2 + $0x92] sm:$0xff]
    %v695 = vld [vmem:[#allocation2 + $0x9a] sm:$0xff]
    %v696 = vld [vmem:[#allocation2 + $0xaa] sm:$0xff]
    %v697 = vld [vmem:[#allocation2 + $0xb2] sm:$0xff]
    %v698 = vld [vmem:[#allocation2 + $0xc2] sm:$0xff]
    %v699 = vld [vmem:[#allocation2 + $0xca] sm:$0xff]
    %v700 = vld [vmem:[#allocation2 + $0xda] sm:$0xff]
    %v701 = vld [vmem:[#allocation2 + $0xe2] sm:$0xff]
    %v702 = vld [vmem:[#allocation2 + $0xf2] sm:$0xff]
    %v703 = vld [vmem:[#allocation2 + $0xfa] sm:$0xff]
    %v704 = vld [vmem:[#allocation2 + $0x10a] sm:$0xff]
    %v705 = vld [vmem:[#allocation2 + $0x112] sm:$0xff]
    %v706 = vld [vmem:[#allocation2 + $0x122] sm:$0xff]
    %v707 = vld [vmem:[#allocation2 + $0x12a] sm:$0xff]
    %v708 = vld [vmem:[#allocation2 + $0x13a] sm:$0xff]
    %v709 = vld [vmem:[#allocation2 + $0x142] sm:$0xff]
    %v710 = vld [vmem:[#allocation2 + $0x152] sm:$0xff]
    %v711 = vld [vmem:[#allocation2 + $0x15a] sm:$0xff]
    %v712 = vld [vmem:[#allocation2 + $0x16a] sm:$0xff]
    %v713 = vld [vmem:[#allocation2 + $0x172] sm:$0xff]
    %v714 = vld [vmem:[#allocation2 + $0x1b2] sm:$0xff]
    %v715 = vld [vmem:[#allocation2 + $0x1ba] sm:$0xff]
    %v716 = vld [vmem:[#allocation2 + $0x1ca] sm:$0xff]
    %v717 = vld [vmem:[#allocation2 + $0x1d2] sm:$0xff]
    %v718 = vld [vmem:[#allocation2 + $0x1e2] sm:$0xff]
    %v719 = vld [vmem:[#allocation2 + $0x1ea] sm:$0xff]
    %v720 = vld [vmem:[#allocation2 + $0x1fa] sm:$0xff]
    %v721 = vld [vmem:[#allocation2 + $0x202] sm:$0xff]
    %v722 = vld [vmem:[#allocation2 + $0x212] sm:$0xff]
    %v723 = vld [vmem:[#allocation2 + $0x21a] sm:$0xff]
    %v724 = vld [vmem:[#allocation2 + $0x22a] sm:$0xff]
    %v725 = vld [vmem:[#allocation2 + $0x232] sm:$0xff]
    %v726 = vld [vmem:[#allocation2 + $0x242] sm:$0xff]
    %v727 = vld [vmem:[#allocation2 + $0x24a] sm:$0xff]
    %v728 = vld [vmem:[#allocation2 + $0x25a] sm:$0xff]
    %v729 = vld [vmem:[#allocation2 + $0x262] sm:$0xff]
    %v730 = vld [vmem:[#allocation2 + $0x272] sm:$0xff]
    %v731 = vld [vmem:[#allocation2 + $0x27a] sm:$0xff]
    %v732 = vld [vmem:[#allocation2 + $0x28a] sm:$0xff]
    %v733 = vld [vmem:[#allocation2 + $0x292] sm:$0xff]
    %v734 = vld [vmem:[#allocation2 + $0x2a2] sm:$0xff]
    %v735 = vld [vmem:[#allocation2 + $0x2aa] sm:$0xff]
    %v736 = vld [vmem:[#allocation2 + $0x2ba] sm:$0xff]
    %v737 = vld [vmem:[#allocation2 + $0x2c2] sm:$0xff]
    %v738 = vld [vmem:[#allocation2 + $0x2d2] sm:$0xff]
    %v739 = vld [vmem:[#allocation2 + $0x2da] sm:$0xff]
    %v740 = vld [vmem:[#allocation2 + $0x2ea] sm:$0xff]
    %v741 = vld [vmem:[#allocation2 + $0x2f2] sm:$0xff]
    %v742 = vld [vmem:[#allocation2 + $0x302] sm:$0xff]
    %v743 = vld [vmem:[#allocation2 + $0x30a] sm:$0xff]
    %v744 = vld [vmem:[#allocation2 + $0x31a] sm:$0xff]
    %v745 = vld [vmem:[#allocation2 + $0x322] sm:$0xff]
    %746 = vst [vmem:[#allocation3 + $0x10] sm:$0xff] %v682
    %747 = vst [vmem:[#allocation3 + $0x58] sm:$0xff] %v683
    %748 = vst [vmem:[#allocation3 + $0xa0] sm:$0xff] %v684
    %749 = vst [vmem:[#allocation3 + $0xe8] sm:$0xff] %v685
    %750 = vst [vmem:[#allocation3 + $0x130] sm:$0xff] %v686
    %751 = vst [vmem:[#allocation3 + $0x178] sm:$0xff] %v687
    %752 = vst [vmem:[#allocation3 + $0x1c0] sm:$0xff] %v688
    %753 = vst [vmem:[#allocation3 + $0x208] sm:$0xff] %v689
    %754 = vst [vmem:[#allocation3 + $0x250] sm:$0xff] %v690
    %755 = vst [vmem:[#allocation3 + $0x298] sm:$0xff] %v691
    %756 = vst [vmem:[#allocation3 + $0x2e0] sm:$0xff] %v692
    %757 = vst [vmem:[#allocation3 + $0x328] sm:$0xff] %v693
    %758 = vst [vmem:[#allocation3 + $0x370] sm:$0xff] %v694
    %759 = vst [vmem:[#allocation3 + $0x3b8] sm:$0xff] %v695
    %760 = vst [vmem:[#allocation3 + $0x400] sm:$0xff] %v696
    %761 = vst [vmem:[#allocation3 + $0x448] sm:$0xff] %v697
    %762 = vst [vmem:[#allocation3 + $0x490] sm:$0xff] %v698
    %763 = vst [vmem:[#allocation3 + $0x4d8] sm:$0xff] %v699
    %764 = vst [vmem:[#allocation3 + $0x520] sm:$0xff] %v700
    %765 = vst [vmem:[#allocation3 + $0x568] sm:$0xff] %v701
    %766 = vst [vmem:[#allocation3 + $0x5b0] sm:$0xff] %v702
    %767 = vst [vmem:[#allocation3 + $0x5f8] sm:$0xff] %v703
    %768 = vst [vmem:[#allocation3 + $0x640] sm:$0xff] %v704
    %769 = vst [vmem:[#allocation3 + $0x688] sm:$0xff] %v705
    %770 = vst [vmem:[#allocation3 + $0x6d0] sm:$0xff] %v706
    %771 = vst [vmem:[#allocation3 + $0x718] sm:$0xff] %v707
    %772 = vst [vmem:[#allocation3 + $0x760] sm:$0xff] %v708
    %773 = vst [vmem:[#allocation3 + $0x7a8] sm:$0xff] %v709
    %774 = vst [vmem:[#allocation3 + $0x7f0] sm:$0xff] %v710
    %775 = vst [vmem:[#allocation3 + $0x838] sm:$0xff] %v711
    %776 = vst [vmem:[#allocation3 + $0x880] sm:$0xff] %v712
    %777 = vst [vmem:[#allocation3 + $0x8c8] sm:$0xff] %v713
    %778 = vst [vmem:[#allocation3 + $0x910] sm:$0xff] %v714
    %779 = vst [vmem:[#allocation3 + $0x958] sm:$0xff] %v715
    %780 = vst [vmem:[#allocation3 + $0x9a0] sm:$0xff] %v716
    %781 = vst [vmem:[#allocation3 + $0x9e8] sm:$0xff] %v717
    %782 = vst [vmem:[#allocation3 + $0xa30] sm:$0xff] %v718
    %783 = vst [vmem:[#allocation3 + $0xa78] sm:$0xff] %v719
    %784 = vst [vmem:[#allocation3 + $0xac0] sm:$0xff] %v720
    %785 = vst [vmem:[#allocation3 + $0xb08] sm:$0xff] %v721
    %786 = vst [vmem:[#allocation3 + $0xb50] sm:$0xff] %v722
    %787 = vst [vmem:[#allocation3 + $0xb98] sm:$0xff] %v723
    %788 = vst [vmem:[#allocation3 + $0xbe0] sm:$0xff] %v724
    %789 = vst [vmem:[#allocation3 + $0xc28] sm:$0xff] %v725
    %790 = vst [vmem:[#allocation3 + $0xc70] sm:$0xff] %v726
    %791 = vst [vmem:[#allocation3 + $0xcb8] sm:$0xff] %v727
    %792 = vst [vmem:[#allocation3 + $0xd00] sm:$0xff] %v728
    %793 = vst [vmem:[#allocation3 + $0xd48] sm:$0xff] %v729
    %794 = vst [vmem:[#allocation3 + $0xd90] sm:$0xff] %v730
    %795 = vst [vmem:[#allocation3 + $0xdd8] sm:$0xff] %v731
    %796 = vst [vmem:[#allocation3 + $0xe20] sm:$0xff] %v732
    %797 = vst [vmem:[#allocation3 + $0xe68] sm:$0xff] %v733
    %798 = vst [vmem:[#allocation3 + $0xeb0] sm:$0xff] %v734
    %799 = vst [vmem:[#allocation3 + $0xef8] sm:$0xff] %v735
    %800 = vst [vmem:[#allocation3 + $0xf40] sm:$0xff] %v736
    %801 = vst [vmem:[#allocation3 + $0xf88] sm:$0xff] %v737
    %802 = vst [vmem:[#allocation3 + $0xfd0] sm:$0xff] %v738
    %803 = vst [vmem:[#allocation3 + $0x1018] sm:$0xff] %v739
    %804 = vst [vmem:[#allocation3 + $0x1060] sm:$0xff] %v740
    %805 = vst [vmem:[#allocation3 + $0x10a8] sm:$0xff] %v741
    %806 = vst [vmem:[#allocation3 + $0x10f0] sm:$0xff] %v742
    %807 = vst [vmem:[#allocation3 + $0x1138] sm:$0xff] %v743
    %808 = vst [vmem:[#allocation3 + $0x1180] sm:$0xff] %v744
    %809 = vst [vmem:[#allocation3 + $0x11c8] sm:$0xff] %v745
    %v810 = vld [vmem:[%s217] sm:$0xff]
    %v811 = vld [vmem:[%s217 + $0x8] sm:$0xff]
    %v812 = vld [vmem:[%s217 + $0x18] sm:$0xff]
    %v813 = vld [vmem:[%s217 + $0x20] sm:$0xff]
    %v814 = vld [vmem:[%s217 + $0x30] sm:$0xff]
    %v815 = vld [vmem:[%s217 + $0x38] sm:$0xff]
    %v816 = vld [vmem:[%s217 + $0x48] sm:$0xff]
    %v817 = vld [vmem:[%s217 + $0x50] sm:$0xff]
    %v818 = vld [vmem:[%s217 + $0x60] sm:$0xff]
    %v819 = vld [vmem:[%s217 + $0x68] sm:$0xff]
    %v820 = vld [vmem:[%s217 + $0x78] sm:$0xff]
    %v821 = vld [vmem:[%s217 + $0x80] sm:$0xff]
    %v822 = vld [vmem:[%s217 + $0x90] sm:$0xff]
    %v823 = vld [vmem:[%s217 + $0x98] sm:$0xff]
    %v824 = vld [vmem:[%s217 + $0xa8] sm:$0xff]
    %v825 = vld [vmem:[%s217 + $0xb0] sm:$0xff]
    %v826 = vld [vmem:[%s217 + $0xc0] sm:$0xff]
    %v827 = vld [vmem:[%s217 + $0xc8] sm:$0xff]
    %v828 = vld [vmem:[%s217 + $0xd8] sm:$0xff]
    %v829 = vld [vmem:[%s217 + $0xe0] sm:$0xff]
    %v830 = vld [vmem:[%s217 + $0xf0] sm:$0xff]
    %v831 = vld [vmem:[%s217 + $0xf8] sm:$0xff]
    %v832 = vld [vmem:[%s217 + $0x108] sm:$0xff]
    %v833 = vld [vmem:[%s217 + $0x110] sm:$0xff]
    %v834 = vld [vmem:[%s217 + $0x120] sm:$0xff]
    %v835 = vld [vmem:[%s217 + $0x128] sm:$0xff]
    %v836 = vld [vmem:[%s217 + $0x138] sm:$0xff]
    %v837 = vld [vmem:[%s217 + $0x140] sm:$0xff]
    %v838 = vld [vmem:[%s217 + $0x150] sm:$0xff]
    %v839 = vld [vmem:[%s217 + $0x158] sm:$0xff]
    %v840 = vld [vmem:[%s217 + $0x168] sm:$0xff]
    %v841 = vld [vmem:[%s217 + $0x170] sm:$0xff]
    %v842 = vld [vmem:[%s217 + $0x1b0] sm:$0xff]
    %v843 = vld [vmem:[%s217 + $0x1b8] sm:$0xff]
    %v844 = vld [vmem:[%s217 + $0x1c8] sm:$0xff]
    %v845 = vld [vmem:[%s217 + $0x1d0] sm:$0xff]
    %v846 = vld [vmem:[%s217 + $0x1e0] sm:$0xff]
    %v847 = vld [vmem:[%s217 + $0x1e8] sm:$0xff]
    %v848 = vld [vmem:[%s217 + $0x1f8] sm:$0xff]
    %v849 = vld [vmem:[%s217 + $0x200] sm:$0xff]
    %v850 = vld [vmem:[%s217 + $0x210] sm:$0xff]
    %v851 = vld [vmem:[%s217 + $0x218] sm:$0xff]
    %v852 = vld [vmem:[%s217 + $0x228] sm:$0xff]
    %v853 = vld [vmem:[%s217 + $0x230] sm:$0xff]
    %v854 = vld [vmem:[%s217 + $0x240] sm:$0xff]
    %v855 = vld [vmem:[%s217 + $0x248] sm:$0xff]
    %v856 = vld [vmem:[%s217 + $0x258] sm:$0xff]
    %v857 = vld [vmem:[%s217 + $0x260] sm:$0xff]
    %v858 = vld [vmem:[%s217 + $0x270] sm:$0xff]
    %v859 = vld [vmem:[%s217 + $0x278] sm:$0xff]
    %v860 = vld [vmem:[%s217 + $0x288] sm:$0xff]
    %v861 = vld [vmem:[%s217 + $0x290] sm:$0xff]
    %v862 = vld [vmem:[%s217 + $0x2a0] sm:$0xff]
    %v863 = vld [vmem:[%s217 + $0x2a8] sm:$0xff]
    %v864 = vld [vmem:[%s217 + $0x2b8] sm:$0xff]
    %v865 = vld [vmem:[%s217 + $0x2c0] sm:$0xff]
    %v866 = vld [vmem:[%s217 + $0x2d0] sm:$0xff]
    %v867 = vld [vmem:[%s217 + $0x2d8] sm:$0xff]
    %v868 = vld [vmem:[%s217 + $0x2e8] sm:$0xff]
    %v869 = vld [vmem:[%s217 + $0x2f0] sm:$0xff]
    %v870 = vld [vmem:[%s217 + $0x300] sm:$0xff]
    %v871 = vld [vmem:[%s217 + $0x308] sm:$0xff]
    %v872 = vld [vmem:[%s217 + $0x318] sm:$0xff]
    %v873 = vld [vmem:[%s217 + $0x320] sm:$0xff]
    %874 = vst [vmem:[#allocation3 + $0x18] sm:$0xff] %v810
    %875 = vst [vmem:[#allocation3 + $0x60] sm:$0xff] %v811
    %876 = vst [vmem:[#allocation3 + $0xa8] sm:$0xff] %v812
    %877 = vst [vmem:[#allocation3 + $0xf0] sm:$0xff] %v813
    %878 = vst [vmem:[#allocation3 + $0x138] sm:$0xff] %v814
    %879 = vst [vmem:[#allocation3 + $0x180] sm:$0xff] %v815
    %880 = vst [vmem:[#allocation3 + $0x1c8] sm:$0xff] %v816
    %881 = vst [vmem:[#allocation3 + $0x210] sm:$0xff] %v817
    %882 = vst [vmem:[#allocation3 + $0x258] sm:$0xff] %v818
    %883 = vst [vmem:[#allocation3 + $0x2a0] sm:$0xff] %v819
    %884 = vst [vmem:[#allocation3 + $0x2e8] sm:$0xff] %v820
    %885 = vst [vmem:[#allocation3 + $0x330] sm:$0xff] %v821
    %886 = vst [vmem:[#allocation3 + $0x378] sm:$0xff] %v822
    %887 = vst [vmem:[#allocation3 + $0x3c0] sm:$0xff] %v823
    %888 = vst [vmem:[#allocation3 + $0x408] sm:$0xff] %v824
    %889 = vst [vmem:[#allocation3 + $0x450] sm:$0xff] %v825
    %890 = vst [vmem:[#allocation3 + $0x498] sm:$0xff] %v826
    %891 = vst [vmem:[#allocation3 + $0x4e0] sm:$0xff] %v827
    %892 = vst [vmem:[#allocation3 + $0x528] sm:$0xff] %v828
    %893 = vst [vmem:[#allocation3 + $0x570] sm:$0xff] %v829
    %894 = vst [vmem:[#allocation3 + $0x5b8] sm:$0xff] %v830
    %895 = vst [vmem:[#allocation3 + $0x600] sm:$0xff] %v831
    %896 = vst [vmem:[#allocation3 + $0x648] sm:$0xff] %v832
    %897 = vst [vmem:[#allocation3 + $0x690] sm:$0xff] %v833
    %898 = vst [vmem:[#allocation3 + $0x6d8] sm:$0xff] %v834
    %899 = vst [vmem:[#allocation3 + $0x720] sm:$0xff] %v835
    %900 = vst [vmem:[#allocation3 + $0x768] sm:$0xff] %v836
    %901 = vst [vmem:[#allocation3 + $0x7b0] sm:$0xff] %v837
    %902 = vst [vmem:[#allocation3 + $0x7f8] sm:$0xff] %v838
    %903 = vst [vmem:[#allocation3 + $0x840] sm:$0xff] %v839
    %904 = vst [vmem:[#allocation3 + $0x888] sm:$0xff] %v840
    %905 = vst [vmem:[#allocation3 + $0x8d0] sm:$0xff] %v841
    %906 = vst [vmem:[#allocation3 + $0x918] sm:$0xff] %v842
    %907 = vst [vmem:[#allocation3 + $0x960] sm:$0xff] %v843
    %908 = vst [vmem:[#allocation3 + $0x9a8] sm:$0xff] %v844
    %909 = vst [vmem:[#allocation3 + $0x9f0] sm:$0xff] %v845
    %910 = vst [vmem:[#allocation3 + $0xa38] sm:$0xff] %v846
    %911 = vst [vmem:[#allocation3 + $0xa80] sm:$0xff] %v847
    %912 = vst [vmem:[#allocation3 + $0xac8] sm:$0xff] %v848
    %913 = vst [vmem:[#allocation3 + $0xb10] sm:$0xff] %v849
    %914 = vst [vmem:[#allocation3 + $0xb58] sm:$0xff] %v850
    %915 = vst [vmem:[#allocation3 + $0xba0] sm:$0xff] %v851
    %916 = vst [vmem:[#allocation3 + $0xbe8] sm:$0xff] %v852
    %917 = vst [vmem:[#allocation3 + $0xc30] sm:$0xff] %v853
    %918 = vst [vmem:[#allocation3 + $0xc78] sm:$0xff] %v854
    %919 = vst [vmem:[#allocation3 + $0xcc0] sm:$0xff] %v855
    %920 = vst [vmem:[#allocation3 + $0xd08] sm:$0xff] %v856
    %921 = vst [vmem:[#allocation3 + $0xd50] sm:$0xff] %v857
    %922 = vst [vmem:[#allocation3 + $0xd98] sm:$0xff] %v858
    %923 = vst [vmem:[#allocation3 + $0xde0] sm:$0xff] %v859
    %924 = vst [vmem:[#allocation3 + $0xe28] sm:$0xff] %v860
    %925 = vst [vmem:[#allocation3 + $0xe70] sm:$0xff] %v861
    %926 = vst [vmem:[#allocation3 + $0xeb8] sm:$0xff] %v862
    %927 = vst [vmem:[#allocation3 + $0xf00] sm:$0xff] %v863
    %928 = vst [vmem:[#allocation3 + $0xf48] sm:$0xff] %v864
    %929 = vst [vmem:[#allocation3 + $0xf90] sm:$0xff] %v865
    %930 = vst [vmem:[#allocation3 + $0xfd8] sm:$0xff] %v866
    %931 = vst [vmem:[#allocation3 + $0x1020] sm:$0xff] %v867
    %932 = vst [vmem:[#allocation3 + $0x1068] sm:$0xff] %v868
    %933 = vst [vmem:[#allocation3 + $0x10b0] sm:$0xff] %v869
    %934 = vst [vmem:[#allocation3 + $0x10f8] sm:$0xff] %v870
    %935 = vst [vmem:[#allocation3 + $0x1140] sm:$0xff] %v871
    %936 = vst [vmem:[#allocation3 + $0x1188] sm:$0xff] %v872
    %937 = vst [vmem:[#allocation3 + $0x11d0] sm:$0xff] %v873
    %v938 = vld [vmem:[%s217 + $0x1] sm:$0xff]
    %v939 = vld [vmem:[%s217 + $0x9] sm:$0xff]
    %v940 = vld [vmem:[%s217 + $0x19] sm:$0xff]
    %v941 = vld [vmem:[%s217 + $0x21] sm:$0xff]
    %v942 = vld [vmem:[%s217 + $0x31] sm:$0xff]
    %v943 = vld [vmem:[%s217 + $0x39] sm:$0xff]
    %v944 = vld [vmem:[%s217 + $0x49] sm:$0xff]
    %v945 = vld [vmem:[%s217 + $0x51] sm:$0xff]
    %v946 = vld [vmem:[%s217 + $0x61] sm:$0xff]
    %v947 = vld [vmem:[%s217 + $0x69] sm:$0xff]
    %v948 = vld [vmem:[%s217 + $0x79] sm:$0xff]
    %v949 = vld [vmem:[%s217 + $0x81] sm:$0xff]
    %v950 = vld [vmem:[%s217 + $0x91] sm:$0xff]
    %v951 = vld [vmem:[%s217 + $0x99] sm:$0xff]
    %v952 = vld [vmem:[%s217 + $0xa9] sm:$0xff]
    %v953 = vld [vmem:[%s217 + $0xb1] sm:$0xff]
    %v954 = vld [vmem:[%s217 + $0xc1] sm:$0xff]
    %v955 = vld [vmem:[%s217 + $0xc9] sm:$0xff]
    %v956 = vld [vmem:[%s217 + $0xd9] sm:$0xff]
    %v957 = vld [vmem:[%s217 + $0xe1] sm:$0xff]
    %v958 = vld [vmem:[%s217 + $0xf1] sm:$0xff]
    %v959 = vld [vmem:[%s217 + $0xf9] sm:$0xff]
    %v960 = vld [vmem:[%s217 + $0x109] sm:$0xff]
    %v961 = vld [vmem:[%s217 + $0x111] sm:$0xff]
    %v962 = vld [vmem:[%s217 + $0x121] sm:$0xff]
    %v963 = vld [vmem:[%s217 + $0x129] sm:$0xff]
    %v964 = vld [vmem:[%s217 + $0x139] sm:$0xff]
    %v965 = vld [vmem:[%s217 + $0x141] sm:$0xff]
    %v966 = vld [vmem:[%s217 + $0x151] sm:$0xff]
    %v967 = vld [vmem:[%s217 + $0x159] sm:$0xff]
    %v968 = vld [vmem:[%s217 + $0x169] sm:$0xff]
    %v969 = vld [vmem:[%s217 + $0x171] sm:$0xff]
    %v970 = vld [vmem:[%s217 + $0x1b1] sm:$0xff]
    %v971 = vld [vmem:[%s217 + $0x1b9] sm:$0xff]
    %v972 = vld [vmem:[%s217 + $0x1c9] sm:$0xff]
    %v973 = vld [vmem:[%s217 + $0x1d1] sm:$0xff]
    %v974 = vld [vmem:[%s217 + $0x1e1] sm:$0xff]
    %v975 = vld [vmem:[%s217 + $0x1e9] sm:$0xff]
    %v976 = vld [vmem:[%s217 + $0x1f9] sm:$0xff]
    %v977 = vld [vmem:[%s217 + $0x201] sm:$0xff]
    %v978 = vld [vmem:[%s217 + $0x211] sm:$0xff]
    %v979 = vld [vmem:[%s217 + $0x219] sm:$0xff]
    %v980 = vld [vmem:[%s217 + $0x229] sm:$0xff]
    %v981 = vld [vmem:[%s217 + $0x231] sm:$0xff]
    %v982 = vld [vmem:[%s217 + $0x241] sm:$0xff]
    %v983 = vld [vmem:[%s217 + $0x249] sm:$0xff]
    %v984 = vld [vmem:[%s217 + $0x259] sm:$0xff]
    %v985 = vld [vmem:[%s217 + $0x261] sm:$0xff]
    %v986 = vld [vmem:[%s217 + $0x271] sm:$0xff]
    %v987 = vld [vmem:[%s217 + $0x279] sm:$0xff]
    %v988 = vld [vmem:[%s217 + $0x289] sm:$0xff]
    %v989 = vld [vmem:[%s217 + $0x291] sm:$0xff]
    %v990 = vld [vmem:[%s217 + $0x2a1] sm:$0xff]
    %v991 = vld [vmem:[%s217 + $0x2a9] sm:$0xff]
    %v992 = vld [vmem:[%s217 + $0x2b9] sm:$0xff]
    %v993 = vld [vmem:[%s217 + $0x2c1] sm:$0xff]
    %v994 = vld [vmem:[%s217 + $0x2d1] sm:$0xff]
    %v995 = vld [vmem:[%s217 + $0x2d9] sm:$0xff]
    %v996 = vld [vmem:[%s217 + $0x2e9] sm:$0xff]
    %v997 = vld [vmem:[%s217 + $0x2f1] sm:$0xff]
    %v998 = vld [vmem:[%s217 + $0x301] sm:$0xff]
    %v999 = vld [vmem:[%s217 + $0x309] sm:$0xff]
    %v1000 = vld [vmem:[%s217 + $0x319] sm:$0xff]
    %v1001 = vld [vmem:[%s217 + $0x321] sm:$0xff]
    %1002 = vst [vmem:[#allocation3 + $0x20] sm:$0xff] %v938
    %1003 = vst [vmem:[#allocation3 + $0x68] sm:$0xff] %v939
    %1004 = vst [vmem:[#allocation3 + $0xb0] sm:$0xff] %v940
    %1005 = vst [vmem:[#allocation3 + $0xf8] sm:$0xff] %v941
    %1006 = vst [vmem:[#allocation3 + $0x140] sm:$0xff] %v942
    %1007 = vst [vmem:[#allocation3 + $0x188] sm:$0xff] %v943
    %1008 = vst [vmem:[#allocation3 + $0x1d0] sm:$0xff] %v944
    %1009 = vst [vmem:[#allocation3 + $0x218] sm:$0xff] %v945
    %1010 = vst [vmem:[#allocation3 + $0x260] sm:$0xff] %v946
    %1011 = vst [vmem:[#allocation3 + $0x2a8] sm:$0xff] %v947
    %1012 = vst [vmem:[#allocation3 + $0x2f0] sm:$0xff] %v948
    %1013 = vst [vmem:[#allocation3 + $0x338] sm:$0xff] %v949
    %1014 = vst [vmem:[#allocation3 + $0x380] sm:$0xff] %v950
    %1015 = vst [vmem:[#allocation3 + $0x3c8] sm:$0xff] %v951
    %1016 = vst [vmem:[#allocation3 + $0x410] sm:$0xff] %v952
    %1017 = vst [vmem:[#allocation3 + $0x458] sm:$0xff] %v953
    %1018 = vst [vmem:[#allocation3 + $0x4a0] sm:$0xff] %v954
    %1019 = vst [vmem:[#allocation3 + $0x4e8] sm:$0xff] %v955
    %1020 = vst [vmem:[#allocation3 + $0x530] sm:$0xff] %v956
    %1021 = vst [vmem:[#allocation3 + $0x578] sm:$0xff] %v957
    %1022 = vst [vmem:[#allocation3 + $0x5c0] sm:$0xff] %v958
    %1023 = vst [vmem:[#allocation3 + $0x608] sm:$0xff] %v959
    %1024 = vst [vmem:[#allocation3 + $0x650] sm:$0xff] %v960
    %1025 = vst [vmem:[#allocation3 + $0x698] sm:$0xff] %v961
    %1026 = vst [vmem:[#allocation3 + $0x6e0] sm:$0xff] %v962
    %1027 = vst [vmem:[#allocation3 + $0x728] sm:$0xff] %v963
    %1028 = vst [vmem:[#allocation3 + $0x770] sm:$0xff] %v964
    %1029 = vst [vmem:[#allocation3 + $0x7b8] sm:$0xff] %v965
    %1030 = vst [vmem:[#allocation3 + $0x800] sm:$0xff] %v966
    %1031 = vst [vmem:[#allocation3 + $0x848] sm:$0xff] %v967
    %1032 = vst [vmem:[#allocation3 + $0x890] sm:$0xff] %v968
    %1033 = vst [vmem:[#allocation3 + $0x8d8] sm:$0xff] %v969
    %1034 = vst [vmem:[#allocation3 + $0x920] sm:$0xff] %v970
    %1035 = vst [vmem:[#allocation3 + $0x968] sm:$0xff] %v971
    %1036 = vst [vmem:[#allocation3 + $0x9b0] sm:$0xff] %v972
    %1037 = vst [vmem:[#allocation3 + $0x9f8] sm:$0xff] %v973
    %1038 = vst [vmem:[#allocation3 + $0xa40] sm:$0xff] %v974
    %1039 = vst [vmem:[#allocation3 + $0xa88] sm:$0xff] %v975
    %1040 = vst [vmem:[#allocation3 + $0xad0] sm:$0xff] %v976
    %1041 = vst [vmem:[#allocation3 + $0xb18] sm:$0xff] %v977
    %1042 = vst [vmem:[#allocation3 + $0xb60] sm:$0xff] %v978
    %1043 = vst [vmem:[#allocation3 + $0xba8] sm:$0xff] %v979
    %1044 = vst [vmem:[#allocation3 + $0xbf0] sm:$0xff] %v980
    %1045 = vst [vmem:[#allocation3 + $0xc38] sm:$0xff] %v981
    %1046 = vst [vmem:[#allocation3 + $0xc80] sm:$0xff] %v982
    %1047 = vst [vmem:[#allocation3 + $0xcc8] sm:$0xff] %v983
    %1048 = vst [vmem:[#allocation3 + $0xd10] sm:$0xff] %v984
    %1049 = vst [vmem:[#allocation3 + $0xd58] sm:$0xff] %v985
    %1050 = vst [vmem:[#allocation3 + $0xda0] sm:$0xff] %v986
    %1051 = vst [vmem:[#allocation3 + $0xde8] sm:$0xff] %v987
    %1052 = vst [vmem:[#allocation3 + $0xe30] sm:$0xff] %v988
    %1053 = vst [vmem:[#allocation3 + $0xe78] sm:$0xff] %v989
    %1054 = vst [vmem:[#allocation3 + $0xec0] sm:$0xff] %v990
    %1055 = vst [vmem:[#allocation3 + $0xf08] sm:$0xff] %v991
    %1056 = vst [vmem:[#allocation3 + $0xf50] sm:$0xff] %v992
    %1057 = vst [vmem:[#allocation3 + $0xf98] sm:$0xff] %v993
    %1058 = vst [vmem:[#allocation3 + $0xfe0] sm:$0xff] %v994
    %1059 = vst [vmem:[#allocation3 + $0x1028] sm:$0xff] %v995
    %1060 = vst [vmem:[#allocation3 + $0x1070] sm:$0xff] %v996
    %1061 = vst [vmem:[#allocation3 + $0x10b8] sm:$0xff] %v997
    %1062 = vst [vmem:[#allocation3 + $0x1100] sm:$0xff] %v998
    %1063 = vst [vmem:[#allocation3 + $0x1148] sm:$0xff] %v999
    %1064 = vst [vmem:[#allocation3 + $0x1190] sm:$0xff] %v1000
    %1065 = vst [vmem:[#allocation3 + $0x11d8] sm:$0xff] %v1001
    %v1066 = vld [vmem:[%s217 + $0x2] sm:$0xff]
    %v1067 = vld [vmem:[%s217 + $0xa] sm:$0xff]
    %v1068 = vld [vmem:[%s217 + $0x1a] sm:$0xff]
    %v1069 = vld [vmem:[%s217 + $0x22] sm:$0xff]
    %v1070 = vld [vmem:[%s217 + $0x32] sm:$0xff]
    %v1071 = vld [vmem:[%s217 + $0x3a] sm:$0xff]
    %v1072 = vld [vmem:[%s217 + $0x4a] sm:$0xff]
    %v1073 = vld [vmem:[%s217 + $0x52] sm:$0xff]
    %v1074 = vld [vmem:[%s217 + $0x62] sm:$0xff]
    %v1075 = vld [vmem:[%s217 + $0x6a] sm:$0xff]
    %v1076 = vld [vmem:[%s217 + $0x7a] sm:$0xff]
    %v1077 = vld [vmem:[%s217 + $0x82] sm:$0xff]
    %v1078 = vld [vmem:[%s217 + $0x92] sm:$0xff]
    %v1079 = vld [vmem:[%s217 + $0x9a] sm:$0xff]
    %v1080 = vld [vmem:[%s217 + $0xaa] sm:$0xff]
    %v1081 = vld [vmem:[%s217 + $0xb2] sm:$0xff]
    %v1082 = vld [vmem:[%s217 + $0xc2] sm:$0xff]
    %v1083 = vld [vmem:[%s217 + $0xca] sm:$0xff]
    %v1084 = vld [vmem:[%s217 + $0xda] sm:$0xff]
    %v1085 = vld [vmem:[%s217 + $0xe2] sm:$0xff]
    %v1086 = vld [vmem:[%s217 + $0xf2] sm:$0xff]
    %v1087 = vld [vmem:[%s217 + $0xfa] sm:$0xff]
    %v1088 = vld [vmem:[%s217 + $0x10a] sm:$0xff]
    %v1089 = vld [vmem:[%s217 + $0x112] sm:$0xff]
    %v1090 = vld [vmem:[%s217 + $0x122] sm:$0xff]
    %v1091 = vld [vmem:[%s217 + $0x12a] sm:$0xff]
    %v1092 = vld [vmem:[%s217 + $0x13a] sm:$0xff]
    %v1093 = vld [vmem:[%s217 + $0x142] sm:$0xff]
    %v1094 = vld [vmem:[%s217 + $0x152] sm:$0xff]
    %v1095 = vld [vmem:[%s217 + $0x15a] sm:$0xff]
    %v1096 = vld [vmem:[%s217 + $0x16a] sm:$0xff]
    %v1097 = vld [vmem:[%s217 + $0x172] sm:$0xff]
    %v1098 = vld [vmem:[%s217 + $0x1b2] sm:$0xff]
    %v1099 = vld [vmem:[%s217 + $0x1ba] sm:$0xff]
    %v1100 = vld [vmem:[%s217 + $0x1ca] sm:$0xff]
    %v1101 = vld [vmem:[%s217 + $0x1d2] sm:$0xff]
    %v1102 = vld [vmem:[%s217 + $0x1e2] sm:$0xff]
    %v1103 = vld [vmem:[%s217 + $0x1ea] sm:$0xff]
    %v1104 = vld [vmem:[%s217 + $0x1fa] sm:$0xff]
    %v1105 = vld [vmem:[%s217 + $0x202] sm:$0xff]
    %v1106 = vld [vmem:[%s217 + $0x212] sm:$0xff]
    %v1107 = vld [vmem:[%s217 + $0x21a] sm:$0xff]
    %v1108 = vld [vmem:[%s217 + $0x22a] sm:$0xff]
    %v1109 = vld [vmem:[%s217 + $0x232] sm:$0xff]
    %v1110 = vld [vmem:[%s217 + $0x242] sm:$0xff]
    %v1111 = vld [vmem:[%s217 + $0x24a] sm:$0xff]
    %v1112 = vld [vmem:[%s217 + $0x25a] sm:$0xff]
    %v1113 = vld [vmem:[%s217 + $0x262] sm:$0xff]
    %v1114 = vld [vmem:[%s217 + $0x272] sm:$0xff]
    %v1115 = vld [vmem:[%s217 + $0x27a] sm:$0xff]
    %v1116 = vld [vmem:[%s217 + $0x28a] sm:$0xff]
    %v1117 = vld [vmem:[%s217 + $0x292] sm:$0xff]
    %v1118 = vld [vmem:[%s217 + $0x2a2] sm:$0xff]
    %v1119 = vld [vmem:[%s217 + $0x2aa] sm:$0xff]
    %v1120 = vld [vmem:[%s217 + $0x2ba] sm:$0xff]
    %v1121 = vld [vmem:[%s217 + $0x2c2] sm:$0xff]
    %v1122 = vld [vmem:[%s217 + $0x2d2] sm:$0xff]
    %v1123 = vld [vmem:[%s217 + $0x2da] sm:$0xff]
    %v1124 = vld [vmem:[%s217 + $0x2ea] sm:$0xff]
    %v1125 = vld [vmem:[%s217 + $0x2f2] sm:$0xff]
    %v1126 = vld [vmem:[%s217 + $0x302] sm:$0xff]
    %v1127 = vld [vmem:[%s217 + $0x30a] sm:$0xff]
    %v1128 = vld [vmem:[%s217 + $0x31a] sm:$0xff]
    %v1129 = vld [vmem:[%s217 + $0x322] sm:$0xff]
    %1130 = vst [vmem:[#allocation3 + $0x28] sm:$0xff] %v1066
    %1131 = vst [vmem:[#allocation3 + $0x70] sm:$0xff] %v1067
    %1132 = vst [vmem:[#allocation3 + $0xb8] sm:$0xff] %v1068
    %1133 = vst [vmem:[#allocation3 + $0x100] sm:$0xff] %v1069
    %1134 = vst [vmem:[#allocation3 + $0x148] sm:$0xff] %v1070
    %1135 = vst [vmem:[#allocation3 + $0x190] sm:$0xff] %v1071
    %1136 = vst [vmem:[#allocation3 + $0x1d8] sm:$0xff] %v1072
    %1137 = vst [vmem:[#allocation3 + $0x220] sm:$0xff] %v1073
    %1138 = vst [vmem:[#allocation3 + $0x268] sm:$0xff] %v1074
    %1139 = vst [vmem:[#allocation3 + $0x2b0] sm:$0xff] %v1075
    %1140 = vst [vmem:[#allocation3 + $0x2f8] sm:$0xff] %v1076
    %1141 = vst [vmem:[#allocation3 + $0x340] sm:$0xff] %v1077
    %1142 = vst [vmem:[#allocation3 + $0x388] sm:$0xff] %v1078
    %1143 = vst [vmem:[#allocation3 + $0x3d0] sm:$0xff] %v1079
    %1144 = vst [vmem:[#allocation3 + $0x418] sm:$0xff] %v1080
    %1145 = vst [vmem:[#allocation3 + $0x460] sm:$0xff] %v1081
    %1146 = vst [vmem:[#allocation3 + $0x4a8] sm:$0xff] %v1082
    %1147 = vst [vmem:[#allocation3 + $0x4f0] sm:$0xff] %v1083
    %1148 = vst [vmem:[#allocation3 + $0x538] sm:$0xff] %v1084
    %1149 = vst [vmem:[#allocation3 + $0x580] sm:$0xff] %v1085
    %1150 = vst [vmem:[#allocation3 + $0x5c8] sm:$0xff] %v1086
    %1151 = vst [vmem:[#allocation3 + $0x610] sm:$0xff] %v1087
    %1152 = vst [vmem:[#allocation3 + $0x658] sm:$0xff] %v1088
    %1153 = vst [vmem:[#allocation3 + $0x6a0] sm:$0xff] %v1089
    %1154 = vst [vmem:[#allocation3 + $0x6e8] sm:$0xff] %v1090
    %1155 = vst [vmem:[#allocation3 + $0x730] sm:$0xff] %v1091
    %1156 = vst [vmem:[#allocation3 + $0x778] sm:$0xff] %v1092
    %1157 = vst [vmem:[#allocation3 + $0x7c0] sm:$0xff] %v1093
    %1158 = vst [vmem:[#allocation3 + $0x808] sm:$0xff] %v1094
    %1159 = vst [vmem:[#allocation3 + $0x850] sm:$0xff] %v1095
    %1160 = vst [vmem:[#allocation3 + $0x898] sm:$0xff] %v1096
    %1161 = vst [vmem:[#allocation3 + $0x8e0] sm:$0xff] %v1097
    %1162 = vst [vmem:[#allocation3 + $0x928] sm:$0xff] %v1098
    %1163 = vst [vmem:[#allocation3 + $0x970] sm:$0xff] %v1099
    %1164 = vst [vmem:[#allocation3 + $0x9b8] sm:$0xff] %v1100
    %1165 = vst [vmem:[#allocation3 + $0xa00] sm:$0xff] %v1101
    %1166 = vst [vmem:[#allocation3 + $0xa48] sm:$0xff] %v1102
    %1167 = vst [vmem:[#allocation3 + $0xa90] sm:$0xff] %v1103
    %1168 = vst [vmem:[#allocation3 + $0xad8] sm:$0xff] %v1104
    %1169 = vst [vmem:[#allocation3 + $0xb20] sm:$0xff] %v1105
    %1170 = vst [vmem:[#allocation3 + $0xb68] sm:$0xff] %v1106
    %1171 = vst [vmem:[#allocation3 + $0xbb0] sm:$0xff] %v1107
    %1172 = vst [vmem:[#allocation3 + $0xbf8] sm:$0xff] %v1108
    %1173 = vst [vmem:[#allocation3 + $0xc40] sm:$0xff] %v1109
    %1174 = vst [vmem:[#allocation3 + $0xc88] sm:$0xff] %v1110
    %1175 = vst [vmem:[#allocation3 + $0xcd0] sm:$0xff] %v1111
    %1176 = vst [vmem:[#allocation3 + $0xd18] sm:$0xff] %v1112
    %1177 = vst [vmem:[#allocation3 + $0xd60] sm:$0xff] %v1113
    %1178 = vst [vmem:[#allocation3 + $0xda8] sm:$0xff] %v1114
    %1179 = vst [vmem:[#allocation3 + $0xdf0] sm:$0xff] %v1115
    %1180 = vst [vmem:[#allocation3 + $0xe38] sm:$0xff] %v1116
    %1181 = vst [vmem:[#allocation3 + $0xe80] sm:$0xff] %v1117
    %1182 = vst [vmem:[#allocation3 + $0xec8] sm:$0xff] %v1118
    %1183 = vst [vmem:[#allocation3 + $0xf10] sm:$0xff] %v1119
    %1184 = vst [vmem:[#allocation3 + $0xf58] sm:$0xff] %v1120
    %1185 = vst [vmem:[#allocation3 + $0xfa0] sm:$0xff] %v1121
    %1186 = vst [vmem:[#allocation3 + $0xfe8] sm:$0xff] %v1122
    %1187 = vst [vmem:[#allocation3 + $0x1030] sm:$0xff] %v1123
    %1188 = vst [vmem:[#allocation3 + $0x1078] sm:$0xff] %v1124
    %1189 = vst [vmem:[#allocation3 + $0x10c0] sm:$0xff] %v1125
    %1190 = vst [vmem:[#allocation3 + $0x1108] sm:$0xff] %v1126
    %1191 = vst [vmem:[#allocation3 + $0x1150] sm:$0xff] %v1127
    %1192 = vst [vmem:[#allocation3 + $0x1198] sm:$0xff] %v1128
    %1193 = vst [vmem:[#allocation3 + $0x11e0] sm:$0xff] %v1129
    %s1194 = scalar_lea.vmem [#allocation2], 48
    %v1195 = vld [vmem:[%s1194] sm:$0xff]
    %v1196 = vld [vmem:[%s1194 + $0x8] sm:$0xff]
    %v1197 = vld [vmem:[%s1194 + $0x18] sm:$0xff]
    %v1198 = vld [vmem:[%s1194 + $0x20] sm:$0xff]
    %v1199 = vld [vmem:[%s1194 + $0x30] sm:$0xff]
    %v1200 = vld [vmem:[%s1194 + $0x38] sm:$0xff]
    %v1201 = vld [vmem:[%s1194 + $0x48] sm:$0xff]
    %v1202 = vld [vmem:[%s1194 + $0x50] sm:$0xff]
    %v1203 = vld [vmem:[%s1194 + $0x60] sm:$0xff]
    %v1204 = vld [vmem:[%s1194 + $0x68] sm:$0xff]
    %v1205 = vld [vmem:[%s1194 + $0x78] sm:$0xff]
    %v1206 = vld [vmem:[%s1194 + $0x80] sm:$0xff]
    %v1207 = vld [vmem:[%s1194 + $0x90] sm:$0xff]
    %v1208 = vld [vmem:[%s1194 + $0x98] sm:$0xff]
    %v1209 = vld [vmem:[%s1194 + $0xa8] sm:$0xff]
    %v1210 = vld [vmem:[%s1194 + $0xb0] sm:$0xff]
    %v1211 = vld [vmem:[%s1194 + $0xc0] sm:$0xff]
    %v1212 = vld [vmem:[%s1194 + $0xc8] sm:$0xff]
    %v1213 = vld [vmem:[%s1194 + $0xd8] sm:$0xff]
    %v1214 = vld [vmem:[%s1194 + $0xe0] sm:$0xff]
    %v1215 = vld [vmem:[%s1194 + $0xf0] sm:$0xff]
    %v1216 = vld [vmem:[%s1194 + $0xf8] sm:$0xff]
    %v1217 = vld [vmem:[%s1194 + $0x108] sm:$0xff]
    %v1218 = vld [vmem:[%s1194 + $0x110] sm:$0xff]
    %v1219 = vld [vmem:[%s1194 + $0x120] sm:$0xff]
    %v1220 = vld [vmem:[%s1194 + $0x128] sm:$0xff]
    %v1221 = vld [vmem:[%s1194 + $0x138] sm:$0xff]
    %v1222 = vld [vmem:[%s1194 + $0x140] sm:$0xff]
    %v1223 = vld [vmem:[%s1194 + $0x150] sm:$0xff]
    %v1224 = vld [vmem:[%s1194 + $0x158] sm:$0xff]
    %v1225 = vld [vmem:[%s1194 + $0x168] sm:$0xff]
    %v1226 = vld [vmem:[%s1194 + $0x170] sm:$0xff]
    %v1227 = vld [vmem:[%s1194 + $0x1b0] sm:$0xff]
    %v1228 = vld [vmem:[%s1194 + $0x1b8] sm:$0xff]
    %v1229 = vld [vmem:[%s1194 + $0x1c8] sm:$0xff]
    %v1230 = vld [vmem:[%s1194 + $0x1d0] sm:$0xff]
    %v1231 = vld [vmem:[%s1194 + $0x1e0] sm:$0xff]
    %v1232 = vld [vmem:[%s1194 + $0x1e8] sm:$0xff]
    %v1233 = vld [vmem:[%s1194 + $0x1f8] sm:$0xff]
    %v1234 = vld [vmem:[%s1194 + $0x200] sm:$0xff]
    %v1235 = vld [vmem:[%s1194 + $0x210] sm:$0xff]
    %v1236 = vld [vmem:[%s1194 + $0x218] sm:$0xff]
    %v1237 = vld [vmem:[%s1194 + $0x228] sm:$0xff]
    %v1238 = vld [vmem:[%s1194 + $0x230] sm:$0xff]
    %v1239 = vld [vmem:[%s1194 + $0x240] sm:$0xff]
    %v1240 = vld [vmem:[%s1194 + $0x248] sm:$0xff]
    %v1241 = vld [vmem:[%s1194 + $0x258] sm:$0xff]
    %v1242 = vld [vmem:[%s1194 + $0x260] sm:$0xff]
    %v1243 = vld [vmem:[%s1194 + $0x270] sm:$0xff]
    %v1244 = vld [vmem:[%s1194 + $0x278] sm:$0xff]
    %v1245 = vld [vmem:[%s1194 + $0x288] sm:$0xff]
    %v1246 = vld [vmem:[%s1194 + $0x290] sm:$0xff]
    %v1247 = vld [vmem:[%s1194 + $0x2a0] sm:$0xff]
    %v1248 = vld [vmem:[%s1194 + $0x2a8] sm:$0xff]
    %v1249 = vld [vmem:[%s1194 + $0x2b8] sm:$0xff]
    %v1250 = vld [vmem:[%s1194 + $0x2c0] sm:$0xff]
    %v1251 = vld [vmem:[%s1194 + $0x2d0] sm:$0xff]
    %v1252 = vld [vmem:[%s1194 + $0x2d8] sm:$0xff]
    %v1253 = vld [vmem:[%s1194 + $0x2e8] sm:$0xff]
    %v1254 = vld [vmem:[%s1194 + $0x2f0] sm:$0xff]
    %v1255 = vld [vmem:[%s1194 + $0x300] sm:$0xff]
    %v1256 = vld [vmem:[%s1194 + $0x308] sm:$0xff]
    %v1257 = vld [vmem:[%s1194 + $0x318] sm:$0xff]
    %v1258 = vld [vmem:[%s1194 + $0x320] sm:$0xff]
    %1259 = vst [vmem:[#allocation3 + $0x30] sm:$0xff] %v1195
    %1260 = vst [vmem:[#allocation3 + $0x78] sm:$0xff] %v1196
    %1261 = vst [vmem:[#allocation3 + $0xc0] sm:$0xff] %v1197
    %1262 = vst [vmem:[#allocation3 + $0x108] sm:$0xff] %v1198
    %1263 = vst [vmem:[#allocation3 + $0x150] sm:$0xff] %v1199
    %1264 = vst [vmem:[#allocation3 + $0x198] sm:$0xff] %v1200
    %1265 = vst [vmem:[#allocation3 + $0x1e0] sm:$0xff] %v1201
    %1266 = vst [vmem:[#allocation3 + $0x228] sm:$0xff] %v1202
    %1267 = vst [vmem:[#allocation3 + $0x270] sm:$0xff] %v1203
    %1268 = vst [vmem:[#allocation3 + $0x2b8] sm:$0xff] %v1204
    %1269 = vst [vmem:[#allocation3 + $0x300] sm:$0xff] %v1205
    %1270 = vst [vmem:[#allocation3 + $0x348] sm:$0xff] %v1206
    %1271 = vst [vmem:[#allocation3 + $0x390] sm:$0xff] %v1207
    %1272 = vst [vmem:[#allocation3 + $0x3d8] sm:$0xff] %v1208
    %1273 = vst [vmem:[#allocation3 + $0x420] sm:$0xff] %v1209
    %1274 = vst [vmem:[#allocation3 + $0x468] sm:$0xff] %v1210
    %1275 = vst [vmem:[#allocation3 + $0x4b0] sm:$0xff] %v1211
    %1276 = vst [vmem:[#allocation3 + $0x4f8] sm:$0xff] %v1212
    %1277 = vst [vmem:[#allocation3 + $0x540] sm:$0xff] %v1213
    %1278 = vst [vmem:[#allocation3 + $0x588] sm:$0xff] %v1214
    %1279 = vst [vmem:[#allocation3 + $0x5d0] sm:$0xff] %v1215
    %1280 = vst [vmem:[#allocation3 + $0x618] sm:$0xff] %v1216
    %1281 = vst [vmem:[#allocation3 + $0x660] sm:$0xff] %v1217
    %1282 = vst [vmem:[#allocation3 + $0x6a8] sm:$0xff] %v1218
    %1283 = vst [vmem:[#allocation3 + $0x6f0] sm:$0xff] %v1219
    %1284 = vst [vmem:[#allocation3 + $0x738] sm:$0xff] %v1220
    %1285 = vst [vmem:[#allocation3 + $0x780] sm:$0xff] %v1221
    %1286 = vst [vmem:[#allocation3 + $0x7c8] sm:$0xff] %v1222
    %1287 = vst [vmem:[#allocation3 + $0x810] sm:$0xff] %v1223
    %1288 = vst [vmem:[#allocation3 + $0x858] sm:$0xff] %v1224
    %1289 = vst [vmem:[#allocation3 + $0x8a0] sm:$0xff] %v1225
    %1290 = vst [vmem:[#allocation3 + $0x8e8] sm:$0xff] %v1226
    %1291 = vst [vmem:[#allocation3 + $0x930] sm:$0xff] %v1227
    %1292 = vst [vmem:[#allocation3 + $0x978] sm:$0xff] %v1228
    %1293 = vst [vmem:[#allocation3 + $0x9c0] sm:$0xff] %v1229
    %1294 = vst [vmem:[#allocation3 + $0xa08] sm:$0xff] %v1230
    %1295 = vst [vmem:[#allocation3 + $0xa50] sm:$0xff] %v1231
    %1296 = vst [vmem:[#allocation3 + $0xa98] sm:$0xff] %v1232
    %1297 = vst [vmem:[#allocation3 + $0xae0] sm:$0xff] %v1233
    %1298 = vst [vmem:[#allocation3 + $0xb28] sm:$0xff] %v1234
    %1299 = vst [vmem:[#allocation3 + $0xb70] sm:$0xff] %v1235
    %1300 = vst [vmem:[#allocation3 + $0xbb8] sm:$0xff] %v1236
    %1301 = vst [vmem:[#allocation3 + $0xc00] sm:$0xff] %v1237
    %1302 = vst [vmem:[#allocation3 + $0xc48] sm:$0xff] %v1238
    %1303 = vst [vmem:[#allocation3 + $0xc90] sm:$0xff] %v1239
    %1304 = vst [vmem:[#allocation3 + $0xcd8] sm:$0xff] %v1240
    %1305 = vst [vmem:[#allocation3 + $0xd20] sm:$0xff] %v1241
    %1306 = vst [vmem:[#allocation3 + $0xd68] sm:$0xff] %v1242
    %1307 = vst [vmem:[#allocation3 + $0xdb0] sm:$0xff] %v1243
    %1308 = vst [vmem:[#allocation3 + $0xdf8] sm:$0xff] %v1244
    %1309 = vst [vmem:[#allocation3 + $0xe40] sm:$0xff] %v1245
    %1310 = vst [vmem:[#allocation3 + $0xe88] sm:$0xff] %v1246
    %1311 = vst [vmem:[#allocation3 + $0xed0] sm:$0xff] %v1247
    %1312 = vst [vmem:[#allocation3 + $0xf18] sm:$0xff] %v1248
    %1313 = vst [vmem:[#allocation3 + $0xf60] sm:$0xff] %v1249
    %1314 = vst [vmem:[#allocation3 + $0xfa8] sm:$0xff] %v1250
    %1315 = vst [vmem:[#allocation3 + $0xff0] sm:$0xff] %v1251
    %1316 = vst [vmem:[#allocation3 + $0x1038] sm:$0xff] %v1252
    %1317 = vst [vmem:[#allocation3 + $0x1080] sm:$0xff] %v1253
    %1318 = vst [vmem:[#allocation3 + $0x10c8] sm:$0xff] %v1254
    %1319 = vst [vmem:[#allocation3 + $0x1110] sm:$0xff] %v1255
    %1320 = vst [vmem:[#allocation3 + $0x1158] sm:$0xff] %v1256
    %1321 = vst [vmem:[#allocation3 + $0x11a0] sm:$0xff] %v1257
    %1322 = vst [vmem:[#allocation3 + $0x11e8] sm:$0xff] %v1258
    %v1323 = vld [vmem:[%s1194 + $0x1] sm:$0xff]
    %v1324 = vld [vmem:[%s1194 + $0x9] sm:$0xff]
    %v1325 = vld [vmem:[%s1194 + $0x19] sm:$0xff]
    %v1326 = vld [vmem:[%s1194 + $0x21] sm:$0xff]
    %v1327 = vld [vmem:[%s1194 + $0x31] sm:$0xff]
    %v1328 = vld [vmem:[%s1194 + $0x39] sm:$0xff]
    %v1329 = vld [vmem:[%s1194 + $0x49] sm:$0xff]
    %v1330 = vld [vmem:[%s1194 + $0x51] sm:$0xff]
    %v1331 = vld [vmem:[%s1194 + $0x61] sm:$0xff]
    %v1332 = vld [vmem:[%s1194 + $0x69] sm:$0xff]
    %v1333 = vld [vmem:[%s1194 + $0x79] sm:$0xff]
    %v1334 = vld [vmem:[%s1194 + $0x81] sm:$0xff]
    %v1335 = vld [vmem:[%s1194 + $0x91] sm:$0xff]
    %v1336 = vld [vmem:[%s1194 + $0x99] sm:$0xff]
    %v1337 = vld [vmem:[%s1194 + $0xa9] sm:$0xff]
    %v1338 = vld [vmem:[%s1194 + $0xb1] sm:$0xff]
    %v1339 = vld [vmem:[%s1194 + $0xc1] sm:$0xff]
    %v1340 = vld [vmem:[%s1194 + $0xc9] sm:$0xff]
    %v1341 = vld [vmem:[%s1194 + $0xd9] sm:$0xff]
    %v1342 = vld [vmem:[%s1194 + $0xe1] sm:$0xff]
    %v1343 = vld [vmem:[%s1194 + $0xf1] sm:$0xff]
    %v1344 = vld [vmem:[%s1194 + $0xf9] sm:$0xff]
    %v1345 = vld [vmem:[%s1194 + $0x109] sm:$0xff]
    %v1346 = vld [vmem:[%s1194 + $0x111] sm:$0xff]
    %v1347 = vld [vmem:[%s1194 + $0x121] sm:$0xff]
    %v1348 = vld [vmem:[%s1194 + $0x129] sm:$0xff]
    %v1349 = vld [vmem:[%s1194 + $0x139] sm:$0xff]
    %v1350 = vld [vmem:[%s1194 + $0x141] sm:$0xff]
    %v1351 = vld [vmem:[%s1194 + $0x151] sm:$0xff]
    %v1352 = vld [vmem:[%s1194 + $0x159] sm:$0xff]
    %v1353 = vld [vmem:[%s1194 + $0x169] sm:$0xff]
    %v1354 = vld [vmem:[%s1194 + $0x171] sm:$0xff]
    %v1355 = vld [vmem:[%s1194 + $0x1b1] sm:$0xff]
    %v1356 = vld [vmem:[%s1194 + $0x1b9] sm:$0xff]
    %v1357 = vld [vmem:[%s1194 + $0x1c9] sm:$0xff]
    %v1358 = vld [vmem:[%s1194 + $0x1d1] sm:$0xff]
    %v1359 = vld [vmem:[%s1194 + $0x1e1] sm:$0xff]
    %v1360 = vld [vmem:[%s1194 + $0x1e9] sm:$0xff]
    %v1361 = vld [vmem:[%s1194 + $0x1f9] sm:$0xff]
    %v1362 = vld [vmem:[%s1194 + $0x201] sm:$0xff]
    %v1363 = vld [vmem:[%s1194 + $0x211] sm:$0xff]
    %v1364 = vld [vmem:[%s1194 + $0x219] sm:$0xff]
    %v1365 = vld [vmem:[%s1194 + $0x229] sm:$0xff]
    %v1366 = vld [vmem:[%s1194 + $0x231] sm:$0xff]
    %v1367 = vld [vmem:[%s1194 + $0x241] sm:$0xff]
    %v1368 = vld [vmem:[%s1194 + $0x249] sm:$0xff]
    %v1369 = vld [vmem:[%s1194 + $0x259] sm:$0xff]
    %v1370 = vld [vmem:[%s1194 + $0x261] sm:$0xff]
    %v1371 = vld [vmem:[%s1194 + $0x271] sm:$0xff]
    %v1372 = vld [vmem:[%s1194 + $0x279] sm:$0xff]
    %v1373 = vld [vmem:[%s1194 + $0x289] sm:$0xff]
    %v1374 = vld [vmem:[%s1194 + $0x291] sm:$0xff]
    %v1375 = vld [vmem:[%s1194 + $0x2a1] sm:$0xff]
    %v1376 = vld [vmem:[%s1194 + $0x2a9] sm:$0xff]
    %v1377 = vld [vmem:[%s1194 + $0x2b9] sm:$0xff]
    %v1378 = vld [vmem:[%s1194 + $0x2c1] sm:$0xff]
    %v1379 = vld [vmem:[%s1194 + $0x2d1] sm:$0xff]
    %v1380 = vld [vmem:[%s1194 + $0x2d9] sm:$0xff]
    %v1381 = vld [vmem:[%s1194 + $0x2e9] sm:$0xff]
    %v1382 = vld [vmem:[%s1194 + $0x2f1] sm:$0xff]
    %v1383 = vld [vmem:[%s1194 + $0x301] sm:$0xff]
    %v1384 = vld [vmem:[%s1194 + $0x309] sm:$0xff]
    %v1385 = vld [vmem:[%s1194 + $0x319] sm:$0xff]
    %v1386 = vld [vmem:[%s1194 + $0x321] sm:$0xff]
    %1387 = vst [vmem:[#allocation3 + $0x38] sm:$0xff] %v1323
    %1388 = vst [vmem:[#allocation3 + $0x80] sm:$0xff] %v1324
    %1389 = vst [vmem:[#allocation3 + $0xc8] sm:$0xff] %v1325
    %1390 = vst [vmem:[#allocation3 + $0x110] sm:$0xff] %v1326
    %1391 = vst [vmem:[#allocation3 + $0x158] sm:$0xff] %v1327
    %1392 = vst [vmem:[#allocation3 + $0x1a0] sm:$0xff] %v1328
    %1393 = vst [vmem:[#allocation3 + $0x1e8] sm:$0xff] %v1329
    %1394 = vst [vmem:[#allocation3 + $0x230] sm:$0xff] %v1330
    %1395 = vst [vmem:[#allocation3 + $0x278] sm:$0xff] %v1331
    %1396 = vst [vmem:[#allocation3 + $0x2c0] sm:$0xff] %v1332
    %1397 = vst [vmem:[#allocation3 + $0x308] sm:$0xff] %v1333
    %1398 = vst [vmem:[#allocation3 + $0x350] sm:$0xff] %v1334
    %1399 = vst [vmem:[#allocation3 + $0x398] sm:$0xff] %v1335
    %1400 = vst [vmem:[#allocation3 + $0x3e0] sm:$0xff] %v1336
    %1401 = vst [vmem:[#allocation3 + $0x428] sm:$0xff] %v1337
    %1402 = vst [vmem:[#allocation3 + $0x470] sm:$0xff] %v1338
    %1403 = vst [vmem:[#allocation3 + $0x4b8] sm:$0xff] %v1339
    %1404 = vst [vmem:[#allocation3 + $0x500] sm:$0xff] %v1340
    %1405 = vst [vmem:[#allocation3 + $0x548] sm:$0xff] %v1341
    %1406 = vst [vmem:[#allocation3 + $0x590] sm:$0xff] %v1342
    %1407 = vst [vmem:[#allocation3 + $0x5d8] sm:$0xff] %v1343
    %1408 = vst [vmem:[#allocation3 + $0x620] sm:$0xff] %v1344
    %1409 = vst [vmem:[#allocation3 + $0x668] sm:$0xff] %v1345
    %1410 = vst [vmem:[#allocation3 + $0x6b0] sm:$0xff] %v1346
    %1411 = vst [vmem:[#allocation3 + $0x6f8] sm:$0xff] %v1347
    %1412 = vst [vmem:[#allocation3 + $0x740] sm:$0xff] %v1348
    %1413 = vst [vmem:[#allocation3 + $0x788] sm:$0xff] %v1349
    %1414 = vst [vmem:[#allocation3 + $0x7d0] sm:$0xff] %v1350
    %1415 = vst [vmem:[#allocation3 + $0x818] sm:$0xff] %v1351
    %1416 = vst [vmem:[#allocation3 + $0x860] sm:$0xff] %v1352
    %1417 = vst [vmem:[#allocation3 + $0x8a8] sm:$0xff] %v1353
    %1418 = vst [vmem:[#allocation3 + $0x8f0] sm:$0xff] %v1354
    %1419 = vst [vmem:[#allocation3 + $0x938] sm:$0xff] %v1355
    %1420 = vst [vmem:[#allocation3 + $0x980] sm:$0xff] %v1356
    %1421 = vst [vmem:[#allocation3 + $0x9c8] sm:$0xff] %v1357
    %1422 = vst [vmem:[#allocation3 + $0xa10] sm:$0xff] %v1358
    %1423 = vst [vmem:[#allocation3 + $0xa58] sm:$0xff] %v1359
    %1424 = vst [vmem:[#allocation3 + $0xaa0] sm:$0xff] %v1360
    %1425 = vst [vmem:[#allocation3 + $0xae8] sm:$0xff] %v1361
    %1426 = vst [vmem:[#allocation3 + $0xb30] sm:$0xff] %v1362
    %1427 = vst [vmem:[#allocation3 + $0xb78] sm:$0xff] %v1363
    %1428 = vst [vmem:[#allocation3 + $0xbc0] sm:$0xff] %v1364
    %1429 = vst [vmem:[#allocation3 + $0xc08] sm:$0xff] %v1365
    %1430 = vst [vmem:[#allocation3 + $0xc50] sm:$0xff] %v1366
    %1431 = vst [vmem:[#allocation3 + $0xc98] sm:$0xff] %v1367
    %1432 = vst [vmem:[#allocation3 + $0xce0] sm:$0xff] %v1368
    %1433 = vst [vmem:[#allocation3 + $0xd28] sm:$0xff] %v1369
    %1434 = vst [vmem:[#allocation3 + $0xd70] sm:$0xff] %v1370
    %1435 = vst [vmem:[#allocation3 + $0xdb8] sm:$0xff] %v1371
    %1436 = vst [vmem:[#allocation3 + $0xe00] sm:$0xff] %v1372
    %1437 = vst [vmem:[#allocation3 + $0xe48] sm:$0xff] %v1373
    %1438 = vst [vmem:[#allocation3 + $0xe90] sm:$0xff] %v1374
    %1439 = vst [vmem:[#allocation3 + $0xed8] sm:$0xff] %v1375
    %1440 = vst [vmem:[#allocation3 + $0xf20] sm:$0xff] %v1376
    %1441 = vst [vmem:[#allocation3 + $0xf68] sm:$0xff] %v1377
    %1442 = vst [vmem:[#allocation3 + $0xfb0] sm:$0xff] %v1378
    %1443 = vst [vmem:[#allocation3 + $0xff8] sm:$0xff] %v1379
    %1444 = vst [vmem:[#allocation3 + $0x1040] sm:$0xff] %v1380
    %1445 = vst [vmem:[#allocation3 + $0x1088] sm:$0xff] %v1381
    %1446 = vst [vmem:[#allocation3 + $0x10d0] sm:$0xff] %v1382
    %1447 = vst [vmem:[#allocation3 + $0x1118] sm:$0xff] %v1383
    %1448 = vst [vmem:[#allocation3 + $0x1160] sm:$0xff] %v1384
    %1449 = vst [vmem:[#allocation3 + $0x11a8] sm:$0xff] %v1385
    %1450 = vst [vmem:[#allocation3 + $0x11f0] sm:$0xff] %v1386
    %v1451 = vld [vmem:[%s1194 + $0x2] sm:$0xff]
    %v1452 = vld [vmem:[%s1194 + $0xa] sm:$0xff]
    %v1453 = vld [vmem:[%s1194 + $0x1a] sm:$0xff]
    %v1454 = vld [vmem:[%s1194 + $0x22] sm:$0xff]
    %v1455 = vld [vmem:[%s1194 + $0x32] sm:$0xff]
    %v1456 = vld [vmem:[%s1194 + $0x3a] sm:$0xff]
    %v1457 = vld [vmem:[%s1194 + $0x4a] sm:$0xff]
    %v1458 = vld [vmem:[%s1194 + $0x52] sm:$0xff]
    %v1459 = vld [vmem:[%s1194 + $0x62] sm:$0xff]
    %v1460 = vld [vmem:[%s1194 + $0x6a] sm:$0xff]
    %v1461 = vld [vmem:[%s1194 + $0x7a] sm:$0xff]
    %v1462 = vld [vmem:[%s1194 + $0x82] sm:$0xff]
    %v1463 = vld [vmem:[%s1194 + $0x92] sm:$0xff]
    %v1464 = vld [vmem:[%s1194 + $0x9a] sm:$0xff]
    %v1465 = vld [vmem:[%s1194 + $0xaa] sm:$0xff]
    %v1466 = vld [vmem:[%s1194 + $0xb2] sm:$0xff]
    %v1467 = vld [vmem:[%s1194 + $0xc2] sm:$0xff]
    %v1468 = vld [vmem:[%s1194 + $0xca] sm:$0xff]
    %v1469 = vld [vmem:[%s1194 + $0xda] sm:$0xff]
    %v1470 = vld [vmem:[%s1194 + $0xe2] sm:$0xff]
    %v1471 = vld [vmem:[%s1194 + $0xf2] sm:$0xff]
    %v1472 = vld [vmem:[%s1194 + $0xfa] sm:$0xff]
    %v1473 = vld [vmem:[%s1194 + $0x10a] sm:$0xff]
    %v1474 = vld [vmem:[%s1194 + $0x112] sm:$0xff]
    %v1475 = vld [vmem:[%s1194 + $0x122] sm:$0xff]
    %v1476 = vld [vmem:[%s1194 + $0x12a] sm:$0xff]
    %v1477 = vld [vmem:[%s1194 + $0x13a] sm:$0xff]
    %v1478 = vld [vmem:[%s1194 + $0x142] sm:$0xff]
    %v1479 = vld [vmem:[%s1194 + $0x152] sm:$0xff]
    %v1480 = vld [vmem:[%s1194 + $0x15a] sm:$0xff]
    %v1481 = vld [vmem:[%s1194 + $0x16a] sm:$0xff]
    %v1482 = vld [vmem:[%s1194 + $0x172] sm:$0xff]
    %v1483 = vld [vmem:[%s1194 + $0x1b2] sm:$0xff]
    %v1484 = vld [vmem:[%s1194 + $0x1ba] sm:$0xff]
    %v1485 = vld [vmem:[%s1194 + $0x1ca] sm:$0xff]
    %v1486 = vld [vmem:[%s1194 + $0x1d2] sm:$0xff]
    %v1487 = vld [vmem:[%s1194 + $0x1e2] sm:$0xff]
    %v1488 = vld [vmem:[%s1194 + $0x1ea] sm:$0xff]
    %v1489 = vld [vmem:[%s1194 + $0x1fa] sm:$0xff]
    %v1490 = vld [vmem:[%s1194 + $0x202] sm:$0xff]
    %v1491 = vld [vmem:[%s1194 + $0x212] sm:$0xff]
    %v1492 = vld [vmem:[%s1194 + $0x21a] sm:$0xff]
    %v1493 = vld [vmem:[%s1194 + $0x22a] sm:$0xff]
    %v1494 = vld [vmem:[%s1194 + $0x232] sm:$0xff]
    %v1495 = vld [vmem:[%s1194 + $0x242] sm:$0xff]
    %v1496 = vld [vmem:[%s1194 + $0x24a] sm:$0xff]
    %v1497 = vld [vmem:[%s1194 + $0x25a] sm:$0xff]
    %v1498 = vld [vmem:[%s1194 + $0x262] sm:$0xff]
    %v1499 = vld [vmem:[%s1194 + $0x272] sm:$0xff]
    %v1500 = vld [vmem:[%s1194 + $0x27a] sm:$0xff]
    %v1501 = vld [vmem:[%s1194 + $0x28a] sm:$0xff]
    %v1502 = vld [vmem:[%s1194 + $0x292] sm:$0xff]
    %v1503 = vld [vmem:[%s1194 + $0x2a2] sm:$0xff]
    %v1504 = vld [vmem:[%s1194 + $0x2aa] sm:$0xff]
    %v1505 = vld [vmem:[%s1194 + $0x2ba] sm:$0xff]
    %v1506 = vld [vmem:[%s1194 + $0x2c2] sm:$0xff]
    %v1507 = vld [vmem:[%s1194 + $0x2d2] sm:$0xff]
    %v1508 = vld [vmem:[%s1194 + $0x2da] sm:$0xff]
    %v1509 = vld [vmem:[%s1194 + $0x2ea] sm:$0xff]
    %v1510 = vld [vmem:[%s1194 + $0x2f2] sm:$0xff]
    %v1511 = vld [vmem:[%s1194 + $0x302] sm:$0xff]
    %v1512 = vld [vmem:[%s1194 + $0x30a] sm:$0xff]
    %v1513 = vld [vmem:[%s1194 + $0x31a] sm:$0xff]
    %v1514 = vld [vmem:[%s1194 + $0x322] sm:$0xff]
    %1515 = vst [vmem:[#allocation3 + $0x40] sm:$0xff] %v1451
    %1516 = vst [vmem:[#allocation3 + $0x88] sm:$0xff] %v1452
    %1517 = vst [vmem:[#allocation3 + $0xd0] sm:$0xff] %v1453
    %1518 = vst [vmem:[#allocation3 + $0x118] sm:$0xff] %v1454
    %1519 = vst [vmem:[#allocation3 + $0x160] sm:$0xff] %v1455
    %1520 = vst [vmem:[#allocation3 + $0x1a8] sm:$0xff] %v1456
    %1521 = vst [vmem:[#allocation3 + $0x1f0] sm:$0xff] %v1457
    %1522 = vst [vmem:[#allocation3 + $0x238] sm:$0xff] %v1458
    %1523 = vst [vmem:[#allocation3 + $0x280] sm:$0xff] %v1459
    %1524 = vst [vmem:[#allocation3 + $0x2c8] sm:$0xff] %v1460
    %1525 = vst [vmem:[#allocation3 + $0x310] sm:$0xff] %v1461
    %1526 = vst [vmem:[#allocation3 + $0x358] sm:$0xff] %v1462
    %1527 = vst [vmem:[#allocation3 + $0x3a0] sm:$0xff] %v1463
    %1528 = vst [vmem:[#allocation3 + $0x3e8] sm:$0xff] %v1464
    %1529 = vst [vmem:[#allocation3 + $0x430] sm:$0xff] %v1465
    %1530 = vst [vmem:[#allocation3 + $0x478] sm:$0xff] %v1466
    %1531 = vst [vmem:[#allocation3 + $0x4c0] sm:$0xff] %v1467
    %1532 = vst [vmem:[#allocation3 + $0x508] sm:$0xff] %v1468
    %1533 = vst [vmem:[#allocation3 + $0x550] sm:$0xff] %v1469
    %1534 = vst [vmem:[#allocation3 + $0x598] sm:$0xff] %v1470
    %1535 = vst [vmem:[#allocation3 + $0x5e0] sm:$0xff] %v1471
    %1536 = vst [vmem:[#allocation3 + $0x628] sm:$0xff] %v1472
    %1537 = vst [vmem:[#allocation3 + $0x670] sm:$0xff] %v1473
    %1538 = vst [vmem:[#allocation3 + $0x6b8] sm:$0xff] %v1474
    %1539 = vst [vmem:[#allocation3 + $0x700] sm:$0xff] %v1475
    %1540 = vst [vmem:[#allocation3 + $0x748] sm:$0xff] %v1476
    %1541 = vst [vmem:[#allocation3 + $0x790] sm:$0xff] %v1477
    %1542 = vst [vmem:[#allocation3 + $0x7d8] sm:$0xff] %v1478
    %1543 = vst [vmem:[#allocation3 + $0x820] sm:$0xff] %v1479
    %1544 = vst [vmem:[#allocation3 + $0x868] sm:$0xff] %v1480
    %1545 = vst [vmem:[#allocation3 + $0x8b0] sm:$0xff] %v1481
    %1546 = vst [vmem:[#allocation3 + $0x8f8] sm:$0xff] %v1482
    %1547 = vst [vmem:[#allocation3 + $0x940] sm:$0xff] %v1483
    %1548 = vst [vmem:[#allocation3 + $0x988] sm:$0xff] %v1484
    %1549 = vst [vmem:[#allocation3 + $0x9d0] sm:$0xff] %v1485
    %1550 = vst [vmem:[#allocation3 + $0xa18] sm:$0xff] %v1486
    %1551 = vst [vmem:[#allocation3 + $0xa60] sm:$0xff] %v1487
    %1552 = vst [vmem:[#allocation3 + $0xaa8] sm:$0xff] %v1488
    %1553 = vst [vmem:[#allocation3 + $0xaf0] sm:$0xff] %v1489
    %1554 = vst [vmem:[#allocation3 + $0xb38] sm:$0xff] %v1490
    %1555 = vst [vmem:[#allocation3 + $0xb80] sm:$0xff] %v1491
    %1556 = vst [vmem:[#allocation3 + $0xbc8] sm:$0xff] %v1492
    %1557 = vst [vmem:[#allocation3 + $0xc10] sm:$0xff] %v1493
    %1558 = vst [vmem:[#allocation3 + $0xc58] sm:$0xff] %v1494
    %1559 = vst [vmem:[#allocation3 + $0xca0] sm:$0xff] %v1495
    %1560 = vst [vmem:[#allocation3 + $0xce8] sm:$0xff] %v1496
    %1561 = vst [vmem:[#allocation3 + $0xd30] sm:$0xff] %v1497
    %1562 = vst [vmem:[#allocation3 + $0xd78] sm:$0xff] %v1498
    %1563 = vst [vmem:[#allocation3 + $0xdc0] sm:$0xff] %v1499
    %1564 = vst [vmem:[#allocation3 + $0xe08] sm:$0xff] %v1500
    %1565 = vst [vmem:[#allocation3 + $0xe50] sm:$0xff] %v1501
    %1566 = vst [vmem:[#allocation3 + $0xe98] sm:$0xff] %v1502
    %1567 = vst [vmem:[#allocation3 + $0xee0] sm:$0xff] %v1503
    %1568 = vst [vmem:[#allocation3 + $0xf28] sm:$0xff] %v1504
    %1569 = vst [vmem:[#allocation3 + $0xf70] sm:$0xff] %v1505
    %1570 = vst [vmem:[#allocation3 + $0xfb8] sm:$0xff] %v1506
    %1571 = vst [vmem:[#allocation3 + $0x1000] sm:$0xff] %v1507
    %1572 = vst [vmem:[#allocation3 + $0x1048] sm:$0xff] %v1508
    %1573 = vst [vmem:[#allocation3 + $0x1090] sm:$0xff] %v1509
    %1574 = vst [vmem:[#allocation3 + $0x10d8] sm:$0xff] %v1510
    %1575 = vst [vmem:[#allocation3 + $0x1120] sm:$0xff] %v1511
    %1576 = vst [vmem:[#allocation3 + $0x1168] sm:$0xff] %v1512
    %1577 = vst [vmem:[#allocation3 + $0x11b0] sm:$0xff] %v1513
    %1578 = vst [vmem:[#allocation3 + $0x11f8] sm:$0xff] %v1514
    %v1579 = vld [vmem:[#allocation3] sm:$0xff]
    %v1580 = vld [vmem:[#allocation3 + $0x8] sm:$0xff]
    %v1581 = vld [vmem:[#allocation3 + $0x10] sm:$0xff]
    %v1582 = vld [vmem:[#allocation3 + $0x18] sm:$0xff]
    %v1583 = vld [vmem:[#allocation3 + $0x20] sm:$0xff]
    %v1584 = vld [vmem:[#allocation3 + $0x28] sm:$0xff]
    %v1585 = vld [vmem:[#allocation3 + $0x30] sm:$0xff]
    %v1586 = vld [vmem:[#allocation3 + $0x38] sm:$0xff]
    %v1587 = vld [vmem:[#allocation3 + $0x40] sm:$0xff]
    %v1588 = vld [vmem:[#allocation3 + $0x48] sm:$0xff]
    %v1589 = vld [vmem:[#allocation3 + $0x50] sm:$0xff]
    %v1590 = vld [vmem:[#allocation3 + $0x58] sm:$0xff]
    %v1591 = vld [vmem:[#allocation3 + $0x60] sm:$0xff]
    %v1592 = vld [vmem:[#allocation3 + $0x68] sm:$0xff]
    %v1593 = vld [vmem:[#allocation3 + $0x70] sm:$0xff]
    %v1594 = vld [vmem:[#allocation3 + $0x78] sm:$0xff]
    %v1595 = vld [vmem:[#allocation3 + $0x80] sm:$0xff]
    %v1596 = vld [vmem:[#allocation3 + $0x88] sm:$0xff]
    %v1597 = vld [vmem:[#allocation3 + $0x90] sm:$0xff]
    %v1598 = vld [vmem:[#allocation3 + $0x98] sm:$0xff]
    %v1599 = vld [vmem:[#allocation3 + $0xa0] sm:$0xff]
    %v1600 = vld [vmem:[#allocation3 + $0xa8] sm:$0xff]
    %v1601 = vld [vmem:[#allocation3 + $0xb0] sm:$0xff]
    %v1602 = vld [vmem:[#allocation3 + $0xb8] sm:$0xff]
    %v1603 = vld [vmem:[#allocation3 + $0xc0] sm:$0xff]
    %v1604 = vld [vmem:[#allocation3 + $0xc8] sm:$0xff]
    %v1605 = vld [vmem:[#allocation3 + $0xd0] sm:$0xff]
    %v1606 = vld [vmem:[#allocation3 + $0xd8] sm:$0xff]
    %v1607 = vld [vmem:[#allocation3 + $0xe0] sm:$0xff]
    %v1608 = vld [vmem:[#allocation3 + $0xe8] sm:$0xff]
    %v1609 = vld [vmem:[#allocation3 + $0xf0] sm:$0xff]
    %v1610 = vld [vmem:[#allocation3 + $0xf8] sm:$0xff]
    %v1611 = vld [vmem:[#allocation3 + $0x100] sm:$0xff]
    %v1612 = vld [vmem:[#allocation3 + $0x108] sm:$0xff]
    %v1613 = vld [vmem:[#allocation3 + $0x110] sm:$0xff]
    %v1614 = vld [vmem:[#allocation3 + $0x118] sm:$0xff]
    %v1615 = vld [vmem:[#allocation3 + $0x120] sm:$0xff]
    %v1616 = vld [vmem:[#allocation3 + $0x128] sm:$0xff]
    %v1617 = vld [vmem:[#allocation3 + $0x130] sm:$0xff]
    %v1618 = vld [vmem:[#allocation3 + $0x138] sm:$0xff]
    %v1619 = vld [vmem:[#allocation3 + $0x140] sm:$0xff]
    %v1620 = vld [vmem:[#allocation3 + $0x148] sm:$0xff]
    %v1621 = vld [vmem:[#allocation3 + $0x150] sm:$0xff]
    %v1622 = vld [vmem:[#allocation3 + $0x158] sm:$0xff]
    %v1623 = vld [vmem:[#allocation3 + $0x160] sm:$0xff]
    %v1624 = vld [vmem:[#allocation3 + $0x168] sm:$0xff]
    %v1625 = vld [vmem:[#allocation3 + $0x170] sm:$0xff]
    %v1626 = vld [vmem:[#allocation3 + $0x178] sm:$0xff]
    %v1627 = vld [vmem:[#allocation3 + $0x180] sm:$0xff]
    %v1628 = vld [vmem:[#allocation3 + $0x188] sm:$0xff]
    %v1629 = vld [vmem:[#allocation3 + $0x190] sm:$0xff]
    %v1630 = vld [vmem:[#allocation3 + $0x198] sm:$0xff]
    %v1631 = vld [vmem:[#allocation3 + $0x1a0] sm:$0xff]
    %v1632 = vld [vmem:[#allocation3 + $0x1a8] sm:$0xff]
    %v1633 = vld [vmem:[#allocation3 + $0x1b0] sm:$0xff]
    %v1634 = vld [vmem:[#allocation3 + $0x1b8] sm:$0xff]
    %v1635 = vld [vmem:[#allocation3 + $0x1c0] sm:$0xff]
    %v1636 = vld [vmem:[#allocation3 + $0x1c8] sm:$0xff]
    %v1637 = vld [vmem:[#allocation3 + $0x1d0] sm:$0xff]
    %v1638 = vld [vmem:[#allocation3 + $0x1d8] sm:$0xff]
    %v1639 = vld [vmem:[#allocation3 + $0x1e0] sm:$0xff]
    %v1640 = vld [vmem:[#allocation3 + $0x1e8] sm:$0xff]
    %v1641 = vld [vmem:[#allocation3 + $0x1f0] sm:$0xff]
    %v1642 = vld [vmem:[#allocation3 + $0x1f8] sm:$0xff]
    %v1643 = vld [vmem:[#allocation3 + $0x200] sm:$0xff]
    %v1644 = vld [vmem:[#allocation3 + $0x208] sm:$0xff]
    %v1645 = vld [vmem:[#allocation3 + $0x210] sm:$0xff]
    %v1646 = vld [vmem:[#allocation3 + $0x218] sm:$0xff]
    %v1647 = vld [vmem:[#allocation3 + $0x220] sm:$0xff]
    %v1648 = vld [vmem:[#allocation3 + $0x228] sm:$0xff]
    %v1649 = vld [vmem:[#allocation3 + $0x230] sm:$0xff]
    %v1650 = vld [vmem:[#allocation3 + $0x238] sm:$0xff]
    %v1651 = vld [vmem:[#allocation3 + $0x240] sm:$0xff]
    %v1652 = vld [vmem:[#allocation3 + $0x248] sm:$0xff]
    %v1653 = vld [vmem:[#allocation3 + $0x250] sm:$0xff]
    %v1654 = vld [vmem:[#allocation3 + $0x258] sm:$0xff]
    %v1655 = vld [vmem:[#allocation3 + $0x260] sm:$0xff]
    %v1656 = vld [vmem:[#allocation3 + $0x268] sm:$0xff]
    %v1657 = vld [vmem:[#allocation3 + $0x270] sm:$0xff]
    %v1658 = vld [vmem:[#allocation3 + $0x278] sm:$0xff]
    %v1659 = vld [vmem:[#allocation3 + $0x280] sm:$0xff]
    %v1660 = vld [vmem:[#allocation3 + $0x288] sm:$0xff]
    %v1661 = vld [vmem:[#allocation3 + $0x290] sm:$0xff]
    %v1662 = vld [vmem:[#allocation3 + $0x298] sm:$0xff]
    %v1663 = vld [vmem:[#allocation3 + $0x2a0] sm:$0xff]
    %v1664 = vld [vmem:[#allocation3 + $0x2a8] sm:$0xff]
    %v1665 = vld [vmem:[#allocation3 + $0x2b0] sm:$0xff]
    %v1666 = vld [vmem:[#allocation3 + $0x2b8] sm:$0xff]
    %v1667 = vld [vmem:[#allocation3 + $0x2c0] sm:$0xff]
    %v1668 = vld [vmem:[#allocation3 + $0x2c8] sm:$0xff]
    %v1669 = vld [vmem:[#allocation3 + $0x2d0] sm:$0xff]
    %v1670 = vld [vmem:[#allocation3 + $0x2d8] sm:$0xff]
    %v1671 = vld [vmem:[#allocation3 + $0x2e0] sm:$0xff]
    %v1672 = vld [vmem:[#allocation3 + $0x2e8] sm:$0xff]
    %v1673 = vld [vmem:[#allocation3 + $0x2f0] sm:$0xff]
    %v1674 = vld [vmem:[#allocation3 + $0x2f8] sm:$0xff]
    %v1675 = vld [vmem:[#allocation3 + $0x300] sm:$0xff]
    %v1676 = vld [vmem:[#allocation3 + $0x308] sm:$0xff]
    %v1677 = vld [vmem:[#allocation3 + $0x310] sm:$0xff]
    %v1678 = vld [vmem:[#allocation3 + $0x318] sm:$0xff]
    %v1679 = vld [vmem:[#allocation3 + $0x320] sm:$0xff]
    %v1680 = vld [vmem:[#allocation3 + $0x328] sm:$0xff]
    %v1681 = vld [vmem:[#allocation3 + $0x330] sm:$0xff]
    %v1682 = vld [vmem:[#allocation3 + $0x338] sm:$0xff]
    %v1683 = vld [vmem:[#allocation3 + $0x340] sm:$0xff]
    %v1684 = vld [vmem:[#allocation3 + $0x348] sm:$0xff]
    %v1685 = vld [vmem:[#allocation3 + $0x350] sm:$0xff]
    %v1686 = vld [vmem:[#allocation3 + $0x358] sm:$0xff]
    %v1687 = vld [vmem:[#allocation3 + $0x360] sm:$0xff]
    %v1688 = vld [vmem:[#allocation3 + $0x368] sm:$0xff]
    %v1689 = vld [vmem:[#allocation3 + $0x370] sm:$0xff]
    %v1690 = vld [vmem:[#allocation3 + $0x378] sm:$0xff]
    %v1691 = vld [vmem:[#allocation3 + $0x380] sm:$0xff]
    %v1692 = vld [vmem:[#allocation3 + $0x388] sm:$0xff]
    %v1693 = vld [vmem:[#allocation3 + $0x390] sm:$0xff]
    %v1694 = vld [vmem:[#allocation3 + $0x398] sm:$0xff]
    %v1695 = vld [vmem:[#allocation3 + $0x3a0] sm:$0xff]
    %v1696 = vld [vmem:[#allocation3 + $0x3a8] sm:$0xff]
    %v1697 = vld [vmem:[#allocation3 + $0x3b0] sm:$0xff]
    %v1698 = vld [vmem:[#allocation3 + $0x3b8] sm:$0xff]
    %v1699 = vld [vmem:[#allocation3 + $0x3c0] sm:$0xff]
    %v1700 = vld [vmem:[#allocation3 + $0x3c8] sm:$0xff]
    %v1701 = vld [vmem:[#allocation3 + $0x3d0] sm:$0xff]
    %v1702 = vld [vmem:[#allocation3 + $0x3d8] sm:$0xff]
    %v1703 = vld [vmem:[#allocation3 + $0x3e0] sm:$0xff]
    %v1704 = vld [vmem:[#allocation3 + $0x3e8] sm:$0xff]
    %v1705 = vld [vmem:[#allocation3 + $0x3f0] sm:$0xff]
    %v1706 = vld [vmem:[#allocation3 + $0x3f8] sm:$0xff]
    %v1707 = vld [vmem:[#allocation3 + $0x400] sm:$0xff]
    %v1708 = vld [vmem:[#allocation3 + $0x408] sm:$0xff]
    %v1709 = vld [vmem:[#allocation3 + $0x410] sm:$0xff]
    %v1710 = vld [vmem:[#allocation3 + $0x418] sm:$0xff]
    %v1711 = vld [vmem:[#allocation3 + $0x420] sm:$0xff]
    %v1712 = vld [vmem:[#allocation3 + $0x428] sm:$0xff]
    %v1713 = vld [vmem:[#allocation3 + $0x430] sm:$0xff]
    %v1714 = vld [vmem:[#allocation3 + $0x438] sm:$0xff]
    %v1715 = vld [vmem:[#allocation3 + $0x440] sm:$0xff]
    %v1716 = vld [vmem:[#allocation3 + $0x448] sm:$0xff]
    %v1717 = vld [vmem:[#allocation3 + $0x450] sm:$0xff]
    %v1718 = vld [vmem:[#allocation3 + $0x458] sm:$0xff]
    %v1719 = vld [vmem:[#allocation3 + $0x460] sm:$0xff]
    %v1720 = vld [vmem:[#allocation3 + $0x468] sm:$0xff]
    %v1721 = vld [vmem:[#allocation3 + $0x470] sm:$0xff]
    %v1722 = vld [vmem:[#allocation3 + $0x478] sm:$0xff]
    %v1723 = vld [vmem:[#allocation3 + $0x480] sm:$0xff]
    %v1724 = vld [vmem:[#allocation3 + $0x488] sm:$0xff]
    %v1725 = vld [vmem:[#allocation3 + $0x490] sm:$0xff]
    %v1726 = vld [vmem:[#allocation3 + $0x498] sm:$0xff]
    %v1727 = vld [vmem:[#allocation3 + $0x4a0] sm:$0xff]
    %v1728 = vld [vmem:[#allocation3 + $0x4a8] sm:$0xff]
    %v1729 = vld [vmem:[#allocation3 + $0x4b0] sm:$0xff]
    %v1730 = vld [vmem:[#allocation3 + $0x4b8] sm:$0xff]
    %v1731 = vld [vmem:[#allocation3 + $0x4c0] sm:$0xff]
    %v1732 = vld [vmem:[#allocation3 + $0x4c8] sm:$0xff]
    %v1733 = vld [vmem:[#allocation3 + $0x4d0] sm:$0xff]
    %v1734 = vld [vmem:[#allocation3 + $0x4d8] sm:$0xff]
    %v1735 = vld [vmem:[#allocation3 + $0x4e0] sm:$0xff]
    %v1736 = vld [vmem:[#allocation3 + $0x4e8] sm:$0xff]
    %v1737 = vld [vmem:[#allocation3 + $0x4f0] sm:$0xff]
    %v1738 = vld [vmem:[#allocation3 + $0x4f8] sm:$0xff]
    %v1739 = vld [vmem:[#allocation3 + $0x500] sm:$0xff]
    %v1740 = vld [vmem:[#allocation3 + $0x508] sm:$0xff]
    %v1741 = vld [vmem:[#allocation3 + $0x510] sm:$0xff]
    %v1742 = vld [vmem:[#allocation3 + $0x518] sm:$0xff]
    %v1743 = vld [vmem:[#allocation3 + $0x520] sm:$0xff]
    %v1744 = vld [vmem:[#allocation3 + $0x528] sm:$0xff]
    %v1745 = vld [vmem:[#allocation3 + $0x530] sm:$0xff]
    %v1746 = vld [vmem:[#allocation3 + $0x538] sm:$0xff]
    %v1747 = vld [vmem:[#allocation3 + $0x540] sm:$0xff]
    %v1748 = vld [vmem:[#allocation3 + $0x548] sm:$0xff]
    %v1749 = vld [vmem:[#allocation3 + $0x550] sm:$0xff]
    %v1750 = vld [vmem:[#allocation3 + $0x558] sm:$0xff]
    %v1751 = vld [vmem:[#allocation3 + $0x560] sm:$0xff]
    %v1752 = vld [vmem:[#allocation3 + $0x568] sm:$0xff]
    %v1753 = vld [vmem:[#allocation3 + $0x570] sm:$0xff]
    %v1754 = vld [vmem:[#allocation3 + $0x578] sm:$0xff]
    %v1755 = vld [vmem:[#allocation3 + $0x580] sm:$0xff]
    %v1756 = vld [vmem:[#allocation3 + $0x588] sm:$0xff]
    %v1757 = vld [vmem:[#allocation3 + $0x590] sm:$0xff]
    %v1758 = vld [vmem:[#allocation3 + $0x598] sm:$0xff]
    %v1759 = vld [vmem:[#allocation3 + $0x5a0] sm:$0xff]
    %v1760 = vld [vmem:[#allocation3 + $0x5a8] sm:$0xff]
    %v1761 = vld [vmem:[#allocation3 + $0x5b0] sm:$0xff]
    %v1762 = vld [vmem:[#allocation3 + $0x5b8] sm:$0xff]
    %v1763 = vld [vmem:[#allocation3 + $0x5c0] sm:$0xff]
    %v1764 = vld [vmem:[#allocation3 + $0x5c8] sm:$0xff]
    %v1765 = vld [vmem:[#allocation3 + $0x5d0] sm:$0xff]
    %v1766 = vld [vmem:[#allocation3 + $0x5d8] sm:$0xff]
    %v1767 = vld [vmem:[#allocation3 + $0x5e0] sm:$0xff]
    %v1768 = vld [vmem:[#allocation3 + $0x5e8] sm:$0xff]
    %v1769 = vld [vmem:[#allocation3 + $0x5f0] sm:$0xff]
    %v1770 = vld [vmem:[#allocation3 + $0x5f8] sm:$0xff]
    %v1771 = vld [vmem:[#allocation3 + $0x600] sm:$0xff]
    %v1772 = vld [vmem:[#allocation3 + $0x608] sm:$0xff]
    %v1773 = vld [vmem:[#allocation3 + $0x610] sm:$0xff]
    %v1774 = vld [vmem:[#allocation3 + $0x618] sm:$0xff]
    %v1775 = vld [vmem:[#allocation3 + $0x620] sm:$0xff]
    %v1776 = vld [vmem:[#allocation3 + $0x628] sm:$0xff]
    %v1777 = vld [vmem:[#allocation3 + $0x630] sm:$0xff]
    %v1778 = vld [vmem:[#allocation3 + $0x638] sm:$0xff]
    %v1779 = vld [vmem:[#allocation3 + $0x640] sm:$0xff]
    %v1780 = vld [vmem:[#allocation3 + $0x648] sm:$0xff]
    %v1781 = vld [vmem:[#allocation3 + $0x650] sm:$0xff]
    %v1782 = vld [vmem:[#allocation3 + $0x658] sm:$0xff]
    %v1783 = vld [vmem:[#allocation3 + $0x660] sm:$0xff]
    %v1784 = vld [vmem:[#allocation3 + $0x668] sm:$0xff]
    %v1785 = vld [vmem:[#allocation3 + $0x670] sm:$0xff]
    %v1786 = vld [vmem:[#allocation3 + $0x678] sm:$0xff]
    %v1787 = vld [vmem:[#allocation3 + $0x680] sm:$0xff]
    %v1788 = vld [vmem:[#allocation3 + $0x688] sm:$0xff]
    %v1789 = vld [vmem:[#allocation3 + $0x690] sm:$0xff]
    %v1790 = vld [vmem:[#allocation3 + $0x698] sm:$0xff]
    %v1791 = vld [vmem:[#allocation3 + $0x6a0] sm:$0xff]
    %v1792 = vld [vmem:[#allocation3 + $0x6a8] sm:$0xff]
    %v1793 = vld [vmem:[#allocation3 + $0x6b0] sm:$0xff]
    %v1794 = vld [vmem:[#allocation3 + $0x6b8] sm:$0xff]
    %v1795 = vld [vmem:[#allocation3 + $0x6c0] sm:$0xff]
    %v1796 = vld [vmem:[#allocation3 + $0x6c8] sm:$0xff]
    %v1797 = vld [vmem:[#allocation3 + $0x6d0] sm:$0xff]
    %v1798 = vld [vmem:[#allocation3 + $0x6d8] sm:$0xff]
    %v1799 = vld [vmem:[#allocation3 + $0x6e0] sm:$0xff]
    %v1800 = vld [vmem:[#allocation3 + $0x6e8] sm:$0xff]
    %v1801 = vld [vmem:[#allocation3 + $0x6f0] sm:$0xff]
    %v1802 = vld [vmem:[#allocation3 + $0x6f8] sm:$0xff]
    %v1803 = vld [vmem:[#allocation3 + $0x700] sm:$0xff]
    %v1804 = vld [vmem:[#allocation3 + $0x708] sm:$0xff]
    %v1805 = vld [vmem:[#allocation3 + $0x710] sm:$0xff]
    %v1806 = vld [vmem:[#allocation3 + $0x718] sm:$0xff]
    %v1807 = vld [vmem:[#allocation3 + $0x720] sm:$0xff]
    %v1808 = vld [vmem:[#allocation3 + $0x728] sm:$0xff]
    %v1809 = vld [vmem:[#allocation3 + $0x730] sm:$0xff]
    %v1810 = vld [vmem:[#allocation3 + $0x738] sm:$0xff]
    %v1811 = vld [vmem:[#allocation3 + $0x740] sm:$0xff]
    %v1812 = vld [vmem:[#allocation3 + $0x748] sm:$0xff]
    %v1813 = vld [vmem:[#allocation3 + $0x750] sm:$0xff]
    %v1814 = vld [vmem:[#allocation3 + $0x758] sm:$0xff]
    %v1815 = vld [vmem:[#allocation3 + $0x760] sm:$0xff]
    %v1816 = vld [vmem:[#allocation3 + $0x768] sm:$0xff]
    %v1817 = vld [vmem:[#allocation3 + $0x770] sm:$0xff]
    %v1818 = vld [vmem:[#allocation3 + $0x778] sm:$0xff]
    %v1819 = vld [vmem:[#allocation3 + $0x780] sm:$0xff]
    %v1820 = vld [vmem:[#allocation3 + $0x788] sm:$0xff]
    %v1821 = vld [vmem:[#allocation3 + $0x790] sm:$0xff]
    %v1822 = vld [vmem:[#allocation3 + $0x798] sm:$0xff]
    %v1823 = vld [vmem:[#allocation3 + $0x7a0] sm:$0xff]
    %v1824 = vld [vmem:[#allocation3 + $0x7a8] sm:$0xff]
    %v1825 = vld [vmem:[#allocation3 + $0x7b0] sm:$0xff]
    %v1826 = vld [vmem:[#allocation3 + $0x7b8] sm:$0xff]
    %v1827 = vld [vmem:[#allocation3 + $0x7c0] sm:$0xff]
    %v1828 = vld [vmem:[#allocation3 + $0x7c8] sm:$0xff]
    %v1829 = vld [vmem:[#allocation3 + $0x7d0] sm:$0xff]
    %v1830 = vld [vmem:[#allocation3 + $0x7d8] sm:$0xff]
    %v1831 = vld [vmem:[#allocation3 + $0x7e0] sm:$0xff]
    %v1832 = vld [vmem:[#allocation3 + $0x7e8] sm:$0xff]
    %v1833 = vld [vmem:[#allocation3 + $0x7f0] sm:$0xff]
    %v1834 = vld [vmem:[#allocation3 + $0x7f8] sm:$0xff]
    %v1835 = vld [vmem:[#allocation3 + $0x800] sm:$0xff]
    %v1836 = vld [vmem:[#allocation3 + $0x808] sm:$0xff]
    %v1837 = vld [vmem:[#allocation3 + $0x810] sm:$0xff]
    %v1838 = vld [vmem:[#allocation3 + $0x818] sm:$0xff]
    %v1839 = vld [vmem:[#allocation3 + $0x820] sm:$0xff]
    %v1840 = vld [vmem:[#allocation3 + $0x828] sm:$0xff]
    %v1841 = vld [vmem:[#allocation3 + $0x830] sm:$0xff]
    %v1842 = vld [vmem:[#allocation3 + $0x838] sm:$0xff]
    %v1843 = vld [vmem:[#allocation3 + $0x840] sm:$0xff]
    %v1844 = vld [vmem:[#allocation3 + $0x848] sm:$0xff]
    %v1845 = vld [vmem:[#allocation3 + $0x850] sm:$0xff]
    %v1846 = vld [vmem:[#allocation3 + $0x858] sm:$0xff]
    %v1847 = vld [vmem:[#allocation3 + $0x860] sm:$0xff]
    %v1848 = vld [vmem:[#allocation3 + $0x868] sm:$0xff]
    %v1849 = vld [vmem:[#allocation3 + $0x870] sm:$0xff]
    %v1850 = vld [vmem:[#allocation3 + $0x878] sm:$0xff]
    %v1851 = vld [vmem:[#allocation3 + $0x880] sm:$0xff]
    %v1852 = vld [vmem:[#allocation3 + $0x888] sm:$0xff]
    %v1853 = vld [vmem:[#allocation3 + $0x890] sm:$0xff]
    %v1854 = vld [vmem:[#allocation3 + $0x898] sm:$0xff]
    %v1855 = vld [vmem:[#allocation3 + $0x8a0] sm:$0xff]
    %v1856 = vld [vmem:[#allocation3 + $0x8a8] sm:$0xff]
    %v1857 = vld [vmem:[#allocation3 + $0x8b0] sm:$0xff]
    %v1858 = vld [vmem:[#allocation3 + $0x8b8] sm:$0xff]
    %v1859 = vld [vmem:[#allocation3 + $0x8c0] sm:$0xff]
    %v1860 = vld [vmem:[#allocation3 + $0x8c8] sm:$0xff]
    %v1861 = vld [vmem:[#allocation3 + $0x8d0] sm:$0xff]
    %v1862 = vld [vmem:[#allocation3 + $0x8d8] sm:$0xff]
    %v1863 = vld [vmem:[#allocation3 + $0x8e0] sm:$0xff]
    %v1864 = vld [vmem:[#allocation3 + $0x8e8] sm:$0xff]
    %v1865 = vld [vmem:[#allocation3 + $0x8f0] sm:$0xff]
    %v1866 = vld [vmem:[#allocation3 + $0x8f8] sm:$0xff]
    %v1867 = vld [vmem:[#allocation3 + $0x900] sm:$0xff]
    %v1868 = vld [vmem:[#allocation3 + $0x908] sm:$0xff]
    %v1869 = vld [vmem:[#allocation3 + $0x910] sm:$0xff]
    %v1870 = vld [vmem:[#allocation3 + $0x918] sm:$0xff]
    %v1871 = vld [vmem:[#allocation3 + $0x920] sm:$0xff]
    %v1872 = vld [vmem:[#allocation3 + $0x928] sm:$0xff]
    %v1873 = vld [vmem:[#allocation3 + $0x930] sm:$0xff]
    %v1874 = vld [vmem:[#allocation3 + $0x938] sm:$0xff]
    %v1875 = vld [vmem:[#allocation3 + $0x940] sm:$0xff]
    %v1876 = vld [vmem:[#allocation3 + $0x948] sm:$0xff]
    %v1877 = vld [vmem:[#allocation3 + $0x950] sm:$0xff]
    %v1878 = vld [vmem:[#allocation3 + $0x958] sm:$0xff]
    %v1879 = vld [vmem:[#allocation3 + $0x960] sm:$0xff]
    %v1880 = vld [vmem:[#allocation3 + $0x968] sm:$0xff]
    %v1881 = vld [vmem:[#allocation3 + $0x970] sm:$0xff]
    %v1882 = vld [vmem:[#allocation3 + $0x978] sm:$0xff]
    %v1883 = vld [vmem:[#allocation3 + $0x980] sm:$0xff]
    %v1884 = vld [vmem:[#allocation3 + $0x988] sm:$0xff]
    %v1885 = vld [vmem:[#allocation3 + $0x990] sm:$0xff]
    %v1886 = vld [vmem:[#allocation3 + $0x998] sm:$0xff]
    %v1887 = vld [vmem:[#allocation3 + $0x9a0] sm:$0xff]
    %v1888 = vld [vmem:[#allocation3 + $0x9a8] sm:$0xff]
    %v1889 = vld [vmem:[#allocation3 + $0x9b0] sm:$0xff]
    %v1890 = vld [vmem:[#allocation3 + $0x9b8] sm:$0xff]
    %v1891 = vld [vmem:[#allocation3 + $0x9c0] sm:$0xff]
    %v1892 = vld [vmem:[#allocation3 + $0x9c8] sm:$0xff]
    %v1893 = vld [vmem:[#allocation3 + $0x9d0] sm:$0xff]
    %v1894 = vld [vmem:[#allocation3 + $0x9d8] sm:$0xff]
    %v1895 = vld [vmem:[#allocation3 + $0x9e0] sm:$0xff]
    %v1896 = vld [vmem:[#allocation3 + $0x9e8] sm:$0xff]
    %v1897 = vld [vmem:[#allocation3 + $0x9f0] sm:$0xff]
    %v1898 = vld [vmem:[#allocation3 + $0x9f8] sm:$0xff]
    %v1899 = vld [vmem:[#allocation3 + $0xa00] sm:$0xff]
    %v1900 = vld [vmem:[#allocation3 + $0xa08] sm:$0xff]
    %v1901 = vld [vmem:[#allocation3 + $0xa10] sm:$0xff]
    %v1902 = vld [vmem:[#allocation3 + $0xa18] sm:$0xff]
    %v1903 = vld [vmem:[#allocation3 + $0xa20] sm:$0xff]
    %v1904 = vld [vmem:[#allocation3 + $0xa28] sm:$0xff]
    %v1905 = vld [vmem:[#allocation3 + $0xa30] sm:$0xff]
    %v1906 = vld [vmem:[#allocation3 + $0xa38] sm:$0xff]
    %v1907 = vld [vmem:[#allocation3 + $0xa40] sm:$0xff]
    %v1908 = vld [vmem:[#allocation3 + $0xa48] sm:$0xff]
    %v1909 = vld [vmem:[#allocation3 + $0xa50] sm:$0xff]
    %v1910 = vld [vmem:[#allocation3 + $0xa58] sm:$0xff]
    %v1911 = vld [vmem:[#allocation3 + $0xa60] sm:$0xff]
    %v1912 = vld [vmem:[#allocation3 + $0xa68] sm:$0xff]
    %v1913 = vld [vmem:[#allocation3 + $0xa70] sm:$0xff]
    %v1914 = vld [vmem:[#allocation3 + $0xa78] sm:$0xff]
    %v1915 = vld [vmem:[#allocation3 + $0xa80] sm:$0xff]
    %v1916 = vld [vmem:[#allocation3 + $0xa88] sm:$0xff]
    %v1917 = vld [vmem:[#allocation3 + $0xa90] sm:$0xff]
    %v1918 = vld [vmem:[#allocation3 + $0xa98] sm:$0xff]
    %v1919 = vld [vmem:[#allocation3 + $0xaa0] sm:$0xff]
    %v1920 = vld [vmem:[#allocation3 + $0xaa8] sm:$0xff]
    %v1921 = vld [vmem:[#allocation3 + $0xab0] sm:$0xff]
    %v1922 = vld [vmem:[#allocation3 + $0xab8] sm:$0xff]
    %v1923 = vld [vmem:[#allocation3 + $0xac0] sm:$0xff]
    %v1924 = vld [vmem:[#allocation3 + $0xac8] sm:$0xff]
    %v1925 = vld [vmem:[#allocation3 + $0xad0] sm:$0xff]
    %v1926 = vld [vmem:[#allocation3 + $0xad8] sm:$0xff]
    %v1927 = vld [vmem:[#allocation3 + $0xae0] sm:$0xff]
    %v1928 = vld [vmem:[#allocation3 + $0xae8] sm:$0xff]
    %v1929 = vld [vmem:[#allocation3 + $0xaf0] sm:$0xff]
    %v1930 = vld [vmem:[#allocation3 + $0xaf8] sm:$0xff]
    %v1931 = vld [vmem:[#allocation3 + $0xb00] sm:$0xff]
    %v1932 = vld [vmem:[#allocation3 + $0xb08] sm:$0xff]
    %v1933 = vld [vmem:[#allocation3 + $0xb10] sm:$0xff]
    %v1934 = vld [vmem:[#allocation3 + $0xb18] sm:$0xff]
    %v1935 = vld [vmem:[#allocation3 + $0xb20] sm:$0xff]
    %v1936 = vld [vmem:[#allocation3 + $0xb28] sm:$0xff]
    %v1937 = vld [vmem:[#allocation3 + $0xb30] sm:$0xff]
    %v1938 = vld [vmem:[#allocation3 + $0xb38] sm:$0xff]
    %v1939 = vld [vmem:[#allocation3 + $0xb40] sm:$0xff]
    %v1940 = vld [vmem:[#allocation3 + $0xb48] sm:$0xff]
    %v1941 = vld [vmem:[#allocation3 + $0xb50] sm:$0xff]
    %v1942 = vld [vmem:[#allocation3 + $0xb58] sm:$0xff]
    %v1943 = vld [vmem:[#allocation3 + $0xb60] sm:$0xff]
    %v1944 = vld [vmem:[#allocation3 + $0xb68] sm:$0xff]
    %v1945 = vld [vmem:[#allocation3 + $0xb70] sm:$0xff]
    %v1946 = vld [vmem:[#allocation3 + $0xb78] sm:$0xff]
    %v1947 = vld [vmem:[#allocation3 + $0xb80] sm:$0xff]
    %v1948 = vld [vmem:[#allocation3 + $0xb88] sm:$0xff]
    %v1949 = vld [vmem:[#allocation3 + $0xb90] sm:$0xff]
    %v1950 = vld [vmem:[#allocation3 + $0xb98] sm:$0xff]
    %v1951 = vld [vmem:[#allocation3 + $0xba0] sm:$0xff]
    %v1952 = vld [vmem:[#allocation3 + $0xba8] sm:$0xff]
    %v1953 = vld [vmem:[#allocation3 + $0xbb0] sm:$0xff]
    %v1954 = vld [vmem:[#allocation3 + $0xbb8] sm:$0xff]
    %v1955 = vld [vmem:[#allocation3 + $0xbc0] sm:$0xff]
    %v1956 = vld [vmem:[#allocation3 + $0xbc8] sm:$0xff]
    %v1957 = vld [vmem:[#allocation3 + $0xbd0] sm:$0xff]
    %v1958 = vld [vmem:[#allocation3 + $0xbd8] sm:$0xff]
    %v1959 = vld [vmem:[#allocation3 + $0xbe0] sm:$0xff]
    %v1960 = vld [vmem:[#allocation3 + $0xbe8] sm:$0xff]
    %v1961 = vld [vmem:[#allocation3 + $0xbf0] sm:$0xff]
    %v1962 = vld [vmem:[#allocation3 + $0xbf8] sm:$0xff]
    %v1963 = vld [vmem:[#allocation3 + $0xc00] sm:$0xff]
    %v1964 = vld [vmem:[#allocation3 + $0xc08] sm:$0xff]
    %v1965 = vld [vmem:[#allocation3 + $0xc10] sm:$0xff]
    %v1966 = vld [vmem:[#allocation3 + $0xc18] sm:$0xff]
    %v1967 = vld [vmem:[#allocation3 + $0xc20] sm:$0xff]
    %v1968 = vld [vmem:[#allocation3 + $0xc28] sm:$0xff]
    %v1969 = vld [vmem:[#allocation3 + $0xc30] sm:$0xff]
    %v1970 = vld [vmem:[#allocation3 + $0xc38] sm:$0xff]
    %v1971 = vld [vmem:[#allocation3 + $0xc40] sm:$0xff]
    %v1972 = vld [vmem:[#allocation3 + $0xc48] sm:$0xff]
    %v1973 = vld [vmem:[#allocation3 + $0xc50] sm:$0xff]
    %v1974 = vld [vmem:[#allocation3 + $0xc58] sm:$0xff]
    %v1975 = vld [vmem:[#allocation3 + $0xc60] sm:$0xff]
    %v1976 = vld [vmem:[#allocation3 + $0xc68] sm:$0xff]
    %v1977 = vld [vmem:[#allocation3 + $0xc70] sm:$0xff]
    %v1978 = vld [vmem:[#allocation3 + $0xc78] sm:$0xff]
    %v1979 = vld [vmem:[#allocation3 + $0xc80] sm:$0xff]
    %v1980 = vld [vmem:[#allocation3 + $0xc88] sm:$0xff]
    %v1981 = vld [vmem:[#allocation3 + $0xc90] sm:$0xff]
    %v1982 = vld [vmem:[#allocation3 + $0xc98] sm:$0xff]
    %v1983 = vld [vmem:[#allocation3 + $0xca0] sm:$0xff]
    %v1984 = vld [vmem:[#allocation3 + $0xca8] sm:$0xff]
    %v1985 = vld [vmem:[#allocation3 + $0xcb0] sm:$0xff]
    %v1986 = vld [vmem:[#allocation3 + $0xcb8] sm:$0xff]
    %v1987 = vld [vmem:[#allocation3 + $0xcc0] sm:$0xff]
    %v1988 = vld [vmem:[#allocation3 + $0xcc8] sm:$0xff]
    %v1989 = vld [vmem:[#allocation3 + $0xcd0] sm:$0xff]
    %v1990 = vld [vmem:[#allocation3 + $0xcd8] sm:$0xff]
    %v1991 = vld [vmem:[#allocation3 + $0xce0] sm:$0xff]
    %v1992 = vld [vmem:[#allocation3 + $0xce8] sm:$0xff]
    %v1993 = vld [vmem:[#allocation3 + $0xcf0] sm:$0xff]
    %v1994 = vld [vmem:[#allocation3 + $0xcf8] sm:$0xff]
    %v1995 = vld [vmem:[#allocation3 + $0xd00] sm:$0xff]
    %v1996 = vld [vmem:[#allocation3 + $0xd08] sm:$0xff]
    %v1997 = vld [vmem:[#allocation3 + $0xd10] sm:$0xff]
    %v1998 = vld [vmem:[#allocation3 + $0xd18] sm:$0xff]
    %v1999 = vld [vmem:[#allocation3 + $0xd20] sm:$0xff]
    %v2000 = vld [vmem:[#allocation3 + $0xd28] sm:$0xff]
    %v2001 = vld [vmem:[#allocation3 + $0xd30] sm:$0xff]
    %v2002 = vld [vmem:[#allocation3 + $0xd38] sm:$0xff]
    %v2003 = vld [vmem:[#allocation3 + $0xd40] sm:$0xff]
    %v2004 = vld [vmem:[#allocation3 + $0xd48] sm:$0xff]
    %v2005 = vld [vmem:[#allocation3 + $0xd50] sm:$0xff]
    %v2006 = vld [vmem:[#allocation3 + $0xd58] sm:$0xff]
    %v2007 = vld [vmem:[#allocation3 + $0xd60] sm:$0xff]
    %v2008 = vld [vmem:[#allocation3 + $0xd68] sm:$0xff]
    %v2009 = vld [vmem:[#allocation3 + $0xd70] sm:$0xff]
    %v2010 = vld [vmem:[#allocation3 + $0xd78] sm:$0xff]
    %v2011 = vld [vmem:[#allocation3 + $0xd80] sm:$0xff]
    %v2012 = vld [vmem:[#allocation3 + $0xd88] sm:$0xff]
    %v2013 = vld [vmem:[#allocation3 + $0xd90] sm:$0xff]
    %v2014 = vld [vmem:[#allocation3 + $0xd98] sm:$0xff]
    %v2015 = vld [vmem:[#allocation3 + $0xda0] sm:$0xff]
    %v2016 = vld [vmem:[#allocation3 + $0xda8] sm:$0xff]
    %v2017 = vld [vmem:[#allocation3 + $0xdb0] sm:$0xff]
    %v2018 = vld [vmem:[#allocation3 + $0xdb8] sm:$0xff]
    %v2019 = vld [vmem:[#allocation3 + $0xdc0] sm:$0xff]
    %v2020 = vld [vmem:[#allocation3 + $0xdc8] sm:$0xff]
    %v2021 = vld [vmem:[#allocation3 + $0xdd0] sm:$0xff]
    %v2022 = vld [vmem:[#allocation3 + $0xdd8] sm:$0xff]
    %v2023 = vld [vmem:[#allocation3 + $0xde0] sm:$0xff]
    %v2024 = vld [vmem:[#allocation3 + $0xde8] sm:$0xff]
    %v2025 = vld [vmem:[#allocation3 + $0xdf0] sm:$0xff]
    %v2026 = vld [vmem:[#allocation3 + $0xdf8] sm:$0xff]
    %v2027 = vld [vmem:[#allocation3 + $0xe00] sm:$0xff]
    %v2028 = vld [vmem:[#allocation3 + $0xe08] sm:$0xff]
    %v2029 = vld [vmem:[#allocation3 + $0xe10] sm:$0xff]
    %v2030 = vld [vmem:[#allocation3 + $0xe18] sm:$0xff]
    %v2031 = vld [vmem:[#allocation3 + $0xe20] sm:$0xff]
    %v2032 = vld [vmem:[#allocation3 + $0xe28] sm:$0xff]
    %v2033 = vld [vmem:[#allocation3 + $0xe30] sm:$0xff]
    %v2034 = vld [vmem:[#allocation3 + $0xe38] sm:$0xff]
    %v2035 = vld [vmem:[#allocation3 + $0xe40] sm:$0xff]
    %v2036 = vld [vmem:[#allocation3 + $0xe48] sm:$0xff]
    %v2037 = vld [vmem:[#allocation3 + $0xe50] sm:$0xff]
    %v2038 = vld [vmem:[#allocation3 + $0xe58] sm:$0xff]
    %v2039 = vld [vmem:[#allocation3 + $0xe60] sm:$0xff]
    %v2040 = vld [vmem:[#allocation3 + $0xe68] sm:$0xff]
    %v2041 = vld [vmem:[#allocation3 + $0xe70] sm:$0xff]
    %v2042 = vld [vmem:[#allocation3 + $0xe78] sm:$0xff]
    %v2043 = vld [vmem:[#allocation3 + $0xe80] sm:$0xff]
    %v2044 = vld [vmem:[#allocation3 + $0xe88] sm:$0xff]
    %v2045 = vld [vmem:[#allocation3 + $0xe90] sm:$0xff]
    %v2046 = vld [vmem:[#allocation3 + $0xe98] sm:$0xff]
    %v2047 = vld [vmem:[#allocation3 + $0xea0] sm:$0xff]
    %v2048 = vld [vmem:[#allocation3 + $0xea8] sm:$0xff]
    %v2049 = vld [vmem:[#allocation3 + $0xeb0] sm:$0xff]
    %v2050 = vld [vmem:[#allocation3 + $0xeb8] sm:$0xff]
    %v2051 = vld [vmem:[#allocation3 + $0xec0] sm:$0xff]
    %v2052 = vld [vmem:[#allocation3 + $0xec8] sm:$0xff]
    %v2053 = vld [vmem:[#allocation3 + $0xed0] sm:$0xff]
    %v2054 = vld [vmem:[#allocation3 + $0xed8] sm:$0xff]
    %v2055 = vld [vmem:[#allocation3 + $0xee0] sm:$0xff]
    %v2056 = vld [vmem:[#allocation3 + $0xee8] sm:$0xff]
    %v2057 = vld [vmem:[#allocation3 + $0xef0] sm:$0xff]
    %v2058 = vld [vmem:[#allocation3 + $0xef8] sm:$0xff]
    %v2059 = vld [vmem:[#allocation3 + $0xf00] sm:$0xff]
    %v2060 = vld [vmem:[#allocation3 + $0xf08] sm:$0xff]
    %v2061 = vld [vmem:[#allocation3 + $0xf10] sm:$0xff]
    %v2062 = vld [vmem:[#allocation3 + $0xf18] sm:$0xff]
    %v2063 = vld [vmem:[#allocation3 + $0xf20] sm:$0xff]
    %v2064 = vld [vmem:[#allocation3 + $0xf28] sm:$0xff]
    %v2065 = vld [vmem:[#allocation3 + $0xf30] sm:$0xff]
    %v2066 = vld [vmem:[#allocation3 + $0xf38] sm:$0xff]
    %v2067 = vld [vmem:[#allocation3 + $0xf40] sm:$0xff]
    %v2068 = vld [vmem:[#allocation3 + $0xf48] sm:$0xff]
    %v2069 = vld [vmem:[#allocation3 + $0xf50] sm:$0xff]
    %v2070 = vld [vmem:[#allocation3 + $0xf58] sm:$0xff]
    %v2071 = vld [vmem:[#allocation3 + $0xf60] sm:$0xff]
    %v2072 = vld [vmem:[#allocation3 + $0xf68] sm:$0xff]
    %v2073 = vld [vmem:[#allocation3 + $0xf70] sm:$0xff]
    %v2074 = vld [vmem:[#allocation3 + $0xf78] sm:$0xff]
    %v2075 = vld [vmem:[#allocation3 + $0xf80] sm:$0xff]
    %v2076 = vld [vmem:[#allocation3 + $0xf88] sm:$0xff]
    %v2077 = vld [vmem:[#allocation3 + $0xf90] sm:$0xff]
    %v2078 = vld [vmem:[#allocation3 + $0xf98] sm:$0xff]
    %v2079 = vld [vmem:[#allocation3 + $0xfa0] sm:$0xff]
    %v2080 = vld [vmem:[#allocation3 + $0xfa8] sm:$0xff]
    %v2081 = vld [vmem:[#allocation3 + $0xfb0] sm:$0xff]
    %v2082 = vld [vmem:[#allocation3 + $0xfb8] sm:$0xff]
    %v2083 = vld [vmem:[#allocation3 + $0xfc0] sm:$0xff]
    %v2084 = vld [vmem:[#allocation3 + $0xfc8] sm:$0xff]
    %v2085 = vld [vmem:[#allocation3 + $0xfd0] sm:$0xff]
    %v2086 = vld [vmem:[#allocation3 + $0xfd8] sm:$0xff]
    %v2087 = vld [vmem:[#allocation3 + $0xfe0] sm:$0xff]
    %v2088 = vld [vmem:[#allocation3 + $0xfe8] sm:$0xff]
    %v2089 = vld [vmem:[#allocation3 + $0xff0] sm:$0xff]
    %v2090 = vld [vmem:[#allocation3 + $0xff8] sm:$0xff]
    %v2091 = vld [vmem:[#allocation3 + $0x1000] sm:$0xff]
    %v2092 = vld [vmem:[#allocation3 + $0x1008] sm:$0xff]
    %v2093 = vld [vmem:[#allocation3 + $0x1010] sm:$0xff]
    %v2094 = vld [vmem:[#allocation3 + $0x1018] sm:$0xff]
    %v2095 = vld [vmem:[#allocation3 + $0x1020] sm:$0xff]
    %v2096 = vld [vmem:[#allocation3 + $0x1028] sm:$0xff]
    %v2097 = vld [vmem:[#allocation3 + $0x1030] sm:$0xff]
    %v2098 = vld [vmem:[#allocation3 + $0x1038] sm:$0xff]
    %v2099 = vld [vmem:[#allocation3 + $0x1040] sm:$0xff]
    %v2100 = vld [vmem:[#allocation3 + $0x1048] sm:$0xff]
    %v2101 = vld [vmem:[#allocation3 + $0x1050] sm:$0xff]
    %v2102 = vld [vmem:[#allocation3 + $0x1058] sm:$0xff]
    %v2103 = vld [vmem:[#allocation3 + $0x1060] sm:$0xff]
    %v2104 = vld [vmem:[#allocation3 + $0x1068] sm:$0xff]
    %v2105 = vld [vmem:[#allocation3 + $0x1070] sm:$0xff]
    %v2106 = vld [vmem:[#allocation3 + $0x1078] sm:$0xff]
    %v2107 = vld [vmem:[#allocation3 + $0x1080] sm:$0xff]
    %v2108 = vld [vmem:[#allocation3 + $0x1088] sm:$0xff]
    %v2109 = vld [vmem:[#allocation3 + $0x1090] sm:$0xff]
    %v2110 = vld [vmem:[#allocation3 + $0x1098] sm:$0xff]
    %v2111 = vld [vmem:[#allocation3 + $0x10a0] sm:$0xff]
    %v2112 = vld [vmem:[#allocation3 + $0x10a8] sm:$0xff]
    %v2113 = vld [vmem:[#allocation3 + $0x10b0] sm:$0xff]
    %v2114 = vld [vmem:[#allocation3 + $0x10b8] sm:$0xff]
    %v2115 = vld [vmem:[#allocation3 + $0x10c0] sm:$0xff]
    %v2116 = vld [vmem:[#allocation3 + $0x10c8] sm:$0xff]
    %v2117 = vld [vmem:[#allocation3 + $0x10d0] sm:$0xff]
    %v2118 = vld [vmem:[#allocation3 + $0x10d8] sm:$0xff]
    %v2119 = vld [vmem:[#allocation3 + $0x10e0] sm:$0xff]
    %v2120 = vld [vmem:[#allocation3 + $0x10e8] sm:$0xff]
    %v2121 = vld [vmem:[#allocation3 + $0x10f0] sm:$0xff]
    %v2122 = vld [vmem:[#allocation3 + $0x10f8] sm:$0xff]
    %v2123 = vld [vmem:[#allocation3 + $0x1100] sm:$0xff]
    %v2124 = vld [vmem:[#allocation3 + $0x1108] sm:$0xff]
    %v2125 = vld [vmem:[#allocation3 + $0x1110] sm:$0xff]
    %v2126 = vld [vmem:[#allocation3 + $0x1118] sm:$0xff]
    %v2127 = vld [vmem:[#allocation3 + $0x1120] sm:$0xff]
    %v2128 = vld [vmem:[#allocation3 + $0x1128] sm:$0xff]
    %v2129 = vld [vmem:[#allocation3 + $0x1130] sm:$0xff]
    %v2130 = vld [vmem:[#allocation3 + $0x1138] sm:$0xff]
    %v2131 = vld [vmem:[#allocation3 + $0x1140] sm:$0xff]
    %v2132 = vld [vmem:[#allocation3 + $0x1148] sm:$0xff]
    %v2133 = vld [vmem:[#allocation3 + $0x1150] sm:$0xff]
    %v2134 = vld [vmem:[#allocation3 + $0x1158] sm:$0xff]
    %v2135 = vld [vmem:[#allocation3 + $0x1160] sm:$0xff]
    %v2136 = vld [vmem:[#allocation3 + $0x1168] sm:$0xff]
    %v2137 = vld [vmem:[#allocation3 + $0x1170] sm:$0xff]
    %v2138 = vld [vmem:[#allocation3 + $0x1178] sm:$0xff]
    %v2139 = vld [vmem:[#allocation3 + $0x1180] sm:$0xff]
    %v2140 = vld [vmem:[#allocation3 + $0x1188] sm:$0xff]
    %v2141 = vld [vmem:[#allocation3 + $0x1190] sm:$0xff]
    %v2142 = vld [vmem:[#allocation3 + $0x1198] sm:$0xff]
    %v2143 = vld [vmem:[#allocation3 + $0x11a0] sm:$0xff]
    %v2144 = vld [vmem:[#allocation3 + $0x11a8] sm:$0xff]
    %v2145 = vld [vmem:[#allocation3 + $0x11b0] sm:$0xff]
    %v2146 = vld [vmem:[#allocation3 + $0x11b8] sm:$0xff]
    %v2147 = vld [vmem:[#allocation3 + $0x11c0] sm:$0xff]
    %v2148 = vld [vmem:[#allocation3 + $0x11c8] sm:$0xff]
    %v2149 = vld [vmem:[#allocation3 + $0x11d0] sm:$0xff]
    %v2150 = vld [vmem:[#allocation3 + $0x11d8] sm:$0xff]
    %v2151 = vld [vmem:[#allocation3 + $0x11e0] sm:$0xff]
    %v2152 = vld [vmem:[#allocation3 + $0x11e8] sm:$0xff]
    %v2153 = vld [vmem:[#allocation3 + $0x11f0] sm:$0xff]
    %v2154 = vld [vmem:[#allocation3 + $0x11f8] sm:$0xff]
    %2155 = vmatprep.subr.mxu0 0.0
    %2156 = vmatpush1.msra.mxu0 %v297
    %2157 = vmatprep.subr.mxu0 0.0
    %2158 = vmatpush1.msra.mxu0 %v296
    %2159 = vmatprep.subr.mxu0 0.0
    %2160 = vmatpush1.msra.mxu0 %v295
    %2161 = vmatprep.subr.mxu0 0.0
    %2162 = vmatpush1.msra.mxu0 %v294
    %2163 = vmatprep.subr.mxu0 0.0
    %2164 = vmatpush1.msra.mxu0 %v293
    %2165 = vmatprep.subr.mxu0 0.0
    %2166 = vmatpush1.msra.mxu0 %v292
    %2167 = vmatprep.subr.mxu0 0.0
    %2168 = vmatpush1.msra.mxu0 %v291
    %2169 = vmatprep.subr.mxu0 0.0
    %2170 = vmatpush1.msra.mxu0 %v290
    %2171 = vmatprep.subr.mxu0 0.0
    %2172 = vmatpush1.msra.mxu0 %v289
    %2173 = vmatprep.subr.mxu0 0.0
    %2174 = vmatpush1.msra.mxu0 %v288
    %2175 = vmatprep.subr.mxu0 0.0
    %2176 = vmatpush1.msra.mxu0 %v287
    %2177 = vmatprep.subr.mxu0 0.0
    %2178 = vmatpush1.msra.mxu0 %v286
    %2179 = vmatprep.subr.mxu0 0.0
    %2180 = vmatpush1.msra.mxu0 %v285
    %2181 = vmatprep.subr.mxu0 0.0
    %2182 = vmatpush1.msra.mxu0 %v284
    %2183 = vmatprep.subr.mxu0 0.0
    %2184 = vmatpush1.msra.mxu0 %v283
    %2185 = vmatprep.subr.mxu0 0.0
    %2186 = vmatpush1.msra.mxu0 %v282
    %2187 = vmatprep.subr.mxu0 0.0
    %2188 = vmatpush2.msra.mxu0 %v313
    %2189 = vmatprep.subr.mxu0 0.0
    %2190 = vmatpush2.msra.mxu0 %v312
    %2191 = vmatprep.subr.mxu0 0.0
    %2192 = vmatpush2.msra.mxu0 %v311
    %2193 = vmatprep.subr.mxu0 0.0
    %2194 = vmatpush2.msra.mxu0 %v310
    %2195 = vmatprep.subr.mxu0 0.0
    %2196 = vmatpush2.msra.mxu0 %v309
    %2197 = vmatprep.subr.mxu0 0.0
    %2198 = vmatpush2.msra.mxu0 %v308
    %2199 = vmatprep.subr.mxu0 0.0
    %2200 = vmatpush2.msra.mxu0 %v307
    %2201 = vmatprep.subr.mxu0 0.0
    %2202 = vmatpush2.msra.mxu0 %v306
    %2203 = vmatprep.subr.mxu0 0.0
    %2204 = vmatpush2.msra.mxu0 %v305
    %2205 = vmatprep.subr.mxu0 0.0
    %2206 = vmatpush2.msra.mxu0 %v304
    %2207 = vmatprep.subr.mxu0 0.0
    %2208 = vmatpush2.msra.mxu0 %v303
    %2209 = vmatprep.subr.mxu0 0.0
    %2210 = vmatpush2.msra.mxu0 %v302
    %2211 = vmatprep.subr.mxu0 0.0
    %2212 = vmatpush2.msra.mxu0 %v301
    %2213 = vmatprep.subr.mxu0 0.0
    %2214 = vmatpush2.msra.mxu0 %v300
    %2215 = vmatprep.subr.mxu0 0.0
    %2216 = vmatpush2.msra.mxu0 %v299
    %2217 = vmatprep.subr.mxu0 0.0
    %2218 = vmatpush2.msra.mxu0 %v298
    %2219 = vmatprep.mubr.f32.mxu0 %v1580
    %2220 = vmatmul.mubr.f32.gmra.mxu0 %v1579
    %v2221 = vpop.f32.mrf.mxu0
    %v2222 = vadd.f32 0.0, %v2221
    %v2223 = vpop.f32.mrf.mxu0
    %2224 = vmatprep.mubr.f32.mxu0 %v1589
    %2225 = vmatmul.mubr.f32.gmra.mxu0 %v1588
    %v2226 = vpop.f32.mrf.mxu0
    %v2227 = vadd.f32 0.0, %v2226
    %v2228 = vpop.f32.mrf.mxu0
    %2229 = vmatprep.mubr.f32.mxu0 %v1598
    %2230 = vmatmul.mubr.f32.gmra.mxu0 %v1597
    %v2231 = vpop.f32.mrf.mxu0
    %v2232 = vadd.f32 0.0, %v2231
    %v2233 = vpop.f32.mrf.mxu0
    %2234 = vmatprep.mubr.f32.mxu0 %v1607
    %2235 = vmatmul.mubr.f32.gmra.mxu0 %v1606
    %v2236 = vpop.f32.mrf.mxu0
    %v2237 = vadd.f32 0.0, %v2236
    %v2238 = vpop.f32.mrf.mxu0
    %2239 = vmatprep.mubr.f32.mxu0 %v1616
    %2240 = vmatmul.mubr.f32.gmra.mxu0 %v1615
    %v2241 = vpop.f32.mrf.mxu0
    %v2242 = vadd.f32 0.0, %v2241
    %v2243 = vpop.f32.mrf.mxu0
    %2244 = vmatprep.mubr.f32.mxu0 %v1625
    %2245 = vmatmul.mubr.f32.gmra.mxu0 %v1624
    %v2246 = vpop.f32.mrf.mxu0
    %v2247 = vadd.f32 0.0, %v2246
    %v2248 = vpop.f32.mrf.mxu0
    %2249 = vmatprep.mubr.f32.mxu0 %v1634
    %2250 = vmatmul.mubr.f32.gmra.mxu0 %v1633
    %v2251 = vpop.f32.mrf.mxu0
    %v2252 = vadd.f32 0.0, %v2251
    %v2253 = vpop.f32.mrf.mxu0
    %2254 = vmatprep.mubr.f32.mxu0 %v1643
    %2255 = vmatmul.mubr.f32.gmra.mxu0 %v1642
    %v2256 = vpop.f32.mrf.mxu0
    %v2257 = vadd.f32 0.0, %v2256
    %v2258 = vpop.f32.mrf.mxu0
    %2259 = vmatprep.mubr.f32.mxu0 %v1652
    %2260 = vmatmul.mubr.f32.gmra.mxu0 %v1651
    %v2261 = vpop.f32.mrf.mxu0
    %v2262 = vadd.f32 0.0, %v2261
    %v2263 = vpop.f32.mrf.mxu0
    %2264 = vmatprep.mubr.f32.mxu0 %v1661
    %2265 = vmatmul.mubr.f32.gmra.mxu0 %v1660
    %v2266 = vpop.f32.mrf.mxu0
    %v2267 = vadd.f32 0.0, %v2266
    %v2268 = vpop.f32.mrf.mxu0
    %2269 = vmatprep.mubr.f32.mxu0 %v1670
    %2270 = vmatmul.mubr.f32.gmra.mxu0 %v1669
    %v2271 = vpop.f32.mrf.mxu0
    %v2272 = vadd.f32 0.0, %v2271
    %v2273 = vpop.f32.mrf.mxu0
    %2274 = vmatprep.mubr.f32.mxu0 %v1679
    %2275 = vmatmul.mubr.f32.gmra.mxu0 %v1678
    %v2276 = vpop.f32.mrf.mxu0
    %v2277 = vadd.f32 0.0, %v2276
    %v2278 = vpop.f32.mrf.mxu0
    %2279 = vmatprep.mubr.f32.mxu0 %v1688
    %2280 = vmatmul.mubr.f32.gmra.mxu0 %v1687
    %v2281 = vpop.f32.mrf.mxu0
    %v2282 = vadd.f32 0.0, %v2281
    %v2283 = vpop.f32.mrf.mxu0
    %2284 = vmatprep.mubr.f32.mxu0 %v1697
    %2285 = vmatmul.mubr.f32.gmra.mxu0 %v1696
    %v2286 = vpop.f32.mrf.mxu0
    %v2287 = vadd.f32 0.0, %v2286
    %v2288 = vpop.f32.mrf.mxu0
    %2289 = vmatprep.mubr.f32.mxu0 %v1706
    %2290 = vmatmul.mubr.f32.gmra.mxu0 %v1705
    %v2291 = vpop.f32.mrf.mxu0
    %v2292 = vadd.f32 0.0, %v2291
    %v2293 = vpop.f32.mrf.mxu0
    %2294 = vmatprep.mubr.f32.mxu0 %v1715
    %2295 = vmatmul.mubr.f32.gmra.mxu0 %v1714
    %v2296 = vpop.f32.mrf.mxu0
    %v2297 = vadd.f32 0.0, %v2296
    %v2298 = vpop.f32.mrf.mxu0
    %2299 = vmatprep.mubr.f32.mxu0 %v1724
    %2300 = vmatmul.mubr.f32.gmra.mxu0 %v1723
    %v2301 = vpop.f32.mrf.mxu0
    %v2302 = vadd.f32 0.0, %v2301
    %v2303 = vpop.f32.mrf.mxu0
    %2304 = vmatprep.mubr.f32.mxu0 %v1733
    %2305 = vmatmul.mubr.f32.gmra.mxu0 %v1732
    %v2306 = vpop.f32.mrf.mxu0
    %v2307 = vadd.f32 0.0, %v2306
    %v2308 = vpop.f32.mrf.mxu0
    %2309 = vmatprep.mubr.f32.mxu0 %v1742
    %2310 = vmatmul.mubr.f32.gmra.mxu0 %v1741
    %v2311 = vpop.f32.mrf.mxu0
    %v2312 = vadd.f32 0.0, %v2311
    %v2313 = vpop.f32.mrf.mxu0
    %2314 = vmatprep.mubr.f32.mxu0 %v1751
    %2315 = vmatmul.mubr.f32.gmra.mxu0 %v1750
    %v2316 = vpop.f32.mrf.mxu0
    %v2317 = vadd.f32 0.0, %v2316
    %v2318 = vpop.f32.mrf.mxu0
    %2319 = vmatprep.mubr.f32.mxu0 %v1760
    %2320 = vmatmul.mubr.f32.gmra.mxu0 %v1759
    %v2321 = vpop.f32.mrf.mxu0
    %v2322 = vadd.f32 0.0, %v2321
    %v2323 = vpop.f32.mrf.mxu0
    %2324 = vmatprep.mubr.f32.mxu0 %v1769
    %2325 = vmatmul.mubr.f32.gmra.mxu0 %v1768
    %v2326 = vpop.f32.mrf.mxu0
    %v2327 = vadd.f32 0.0, %v2326
    %v2328 = vpop.f32.mrf.mxu0
    %2329 = vmatprep.mubr.f32.mxu0 %v1778
    %2330 = vmatmul.mubr.f32.gmra.mxu0 %v1777
    %v2331 = vpop.f32.mrf.mxu0
    %v2332 = vadd.f32 0.0, %v2331
    %v2333 = vpop.f32.mrf.mxu0
    %2334 = vmatprep.mubr.f32.mxu0 %v1787
    %2335 = vmatmul.mubr.f32.gmra.mxu0 %v1786
    %v2336 = vpop.f32.mrf.mxu0
    %v2337 = vadd.f32 0.0, %v2336
    %v2338 = vpop.f32.mrf.mxu0
    %2339 = vmatprep.mubr.f32.mxu0 %v1796
    %2340 = vmatmul.mubr.f32.gmra.mxu0 %v1795
    %v2341 = vpop.f32.mrf.mxu0
    %v2342 = vadd.f32 0.0, %v2341
    %v2343 = vpop.f32.mrf.mxu0
    %2344 = vmatprep.mubr.f32.mxu0 %v1805
    %2345 = vmatmul.mubr.f32.gmra.mxu0 %v1804
    %v2346 = vpop.f32.mrf.mxu0
    %v2347 = vadd.f32 0.0, %v2346
    %v2348 = vpop.f32.mrf.mxu0
    %2349 = vmatprep.mubr.f32.mxu0 %v1814
    %2350 = vmatmul.mubr.f32.gmra.mxu0 %v1813
    %v2351 = vpop.f32.mrf.mxu0
    %v2352 = vadd.f32 0.0, %v2351
    %v2353 = vpop.f32.mrf.mxu0
    %2354 = vmatprep.mubr.f32.mxu0 %v1823
    %2355 = vmatmul.mubr.f32.gmra.mxu0 %v1822
    %v2356 = vpop.f32.mrf.mxu0
    %v2357 = vadd.f32 0.0, %v2356
    %v2358 = vpop.f32.mrf.mxu0
    %2359 = vmatprep.mubr.f32.mxu0 %v1832
    %2360 = vmatmul.mubr.f32.gmra.mxu0 %v1831
    %v2361 = vpop.f32.mrf.mxu0
    %v2362 = vadd.f32 0.0, %v2361
    %v2363 = vpop.f32.mrf.mxu0
    %2364 = vmatprep.mubr.f32.mxu0 %v1841
    %2365 = vmatmul.mubr.f32.gmra.mxu0 %v1840
    %v2366 = vpop.f32.mrf.mxu0
    %v2367 = vadd.f32 0.0, %v2366
    %v2368 = vpop.f32.mrf.mxu0
    %2369 = vmatprep.mubr.f32.mxu0 %v1850
    %2370 = vmatmul.mubr.f32.gmra.mxu0 %v1849
    %v2371 = vpop.f32.mrf.mxu0
    %v2372 = vadd.f32 0.0, %v2371
    %v2373 = vpop.f32.mrf.mxu0
    %2374 = vmatprep.mubr.f32.mxu0 %v1859
    %2375 = vmatmul.mubr.f32.gmra.mxu0 %v1858
    %v2376 = vpop.f32.mrf.mxu0
    %v2377 = vadd.f32 0.0, %v2376
    %v2378 = vpop.f32.mrf.mxu0
    %2379 = vmatprep.mubr.f32.mxu0 %v1868
    %2380 = vmatmul.mubr.f32.gmra.mxu0 %v1867
    %v2381 = vpop.f32.mrf.mxu0
    %v2382 = vadd.f32 0.0, %v2381
    %v2383 = vpop.f32.mrf.mxu0
    %2384 = vmatprep.mubr.f32.mxu0 %v1877
    %2385 = vmatmul.mubr.f32.gmra.mxu0 %v1876
    %v2386 = vpop.f32.mrf.mxu0
    %v2387 = vadd.f32 0.0, %v2386
    %v2388 = vpop.f32.mrf.mxu0
    %2389 = vmatprep.mubr.f32.mxu0 %v1886
    %2390 = vmatmul.mubr.f32.gmra.mxu0 %v1885
    %v2391 = vpop.f32.mrf.mxu0
    %v2392 = vadd.f32 0.0, %v2391
    %v2393 = vpop.f32.mrf.mxu0
    %2394 = vmatprep.mubr.f32.mxu0 %v1895
    %2395 = vmatmul.mubr.f32.gmra.mxu0 %v1894
    %v2396 = vpop.f32.mrf.mxu0
    %v2397 = vadd.f32 0.0, %v2396
    %v2398 = vpop.f32.mrf.mxu0
    %2399 = vmatprep.mubr.f32.mxu0 %v1904
    %2400 = vmatmul.mubr.f32.gmra.mxu0 %v1903
    %v2401 = vpop.f32.mrf.mxu0
    %v2402 = vadd.f32 0.0, %v2401
    %v2403 = vpop.f32.mrf.mxu0
    %2404 = vmatprep.mubr.f32.mxu0 %v1913
    %2405 = vmatmul.mubr.f32.gmra.mxu0 %v1912
    %v2406 = vpop.f32.mrf.mxu0
    %v2407 = vadd.f32 0.0, %v2406
    %v2408 = vpop.f32.mrf.mxu0
    %2409 = vmatprep.mubr.f32.mxu0 %v1922
    %2410 = vmatmul.mubr.f32.gmra.mxu0 %v1921
    %v2411 = vpop.f32.mrf.mxu0
    %v2412 = vadd.f32 0.0, %v2411
    %v2413 = vpop.f32.mrf.mxu0
    %2414 = vmatprep.mubr.f32.mxu0 %v1931
    %2415 = vmatmul.mubr.f32.gmra.mxu0 %v1930
    %v2416 = vpop.f32.mrf.mxu0
    %v2417 = vadd.f32 0.0, %v2416
    %v2418 = vpop.f32.mrf.mxu0
    %2419 = vmatprep.mubr.f32.mxu0 %v1940
    %2420 = vmatmul.mubr.f32.gmra.mxu0 %v1939
    %v2421 = vpop.f32.mrf.mxu0
    %v2422 = vadd.f32 0.0, %v2421
    %v2423 = vpop.f32.mrf.mxu0
    %2424 = vmatprep.mubr.f32.mxu0 %v1949
    %2425 = vmatmul.mubr.f32.gmra.mxu0 %v1948
    %v2426 = vpop.f32.mrf.mxu0
    %v2427 = vadd.f32 0.0, %v2426
    %v2428 = vpop.f32.mrf.mxu0
    %2429 = vmatprep.mubr.f32.mxu0 %v1958
    %2430 = vmatmul.mubr.f32.gmra.mxu0 %v1957
    %v2431 = vpop.f32.mrf.mxu0
    %v2432 = vadd.f32 0.0, %v2431
    %v2433 = vpop.f32.mrf.mxu0
    %2434 = vmatprep.mubr.f32.mxu0 %v1967
    %2435 = vmatmul.mubr.f32.gmra.mxu0 %v1966
    %v2436 = vpop.f32.mrf.mxu0
    %v2437 = vadd.f32 0.0, %v2436
    %v2438 = vpop.f32.mrf.mxu0
    %2439 = vmatprep.mubr.f32.mxu0 %v1976
    %2440 = vmatmul.mubr.f32.gmra.mxu0 %v1975
    %v2441 = vpop.f32.mrf.mxu0
    %v2442 = vadd.f32 0.0, %v2441
    %v2443 = vpop.f32.mrf.mxu0
    %2444 = vmatprep.mubr.f32.mxu0 %v1985
    %2445 = vmatmul.mubr.f32.gmra.mxu0 %v1984
    %v2446 = vpop.f32.mrf.mxu0
    %v2447 = vadd.f32 0.0, %v2446
    %v2448 = vpop.f32.mrf.mxu0
    %2449 = vmatprep.mubr.f32.mxu0 %v1994
    %2450 = vmatmul.mubr.f32.gmra.mxu0 %v1993
    %v2451 = vpop.f32.mrf.mxu0
    %v2452 = vadd.f32 0.0, %v2451
    %v2453 = vpop.f32.mrf.mxu0
    %2454 = vmatprep.mubr.f32.mxu0 %v2003
    %2455 = vmatmul.mubr.f32.gmra.mxu0 %v2002
    %v2456 = vpop.f32.mrf.mxu0
    %v2457 = vadd.f32 0.0, %v2456
    %v2458 = vpop.f32.mrf.mxu0
    %2459 = vmatprep.mubr.f32.mxu0 %v2012
    %2460 = vmatmul.mubr.f32.gmra.mxu0 %v2011
    %v2461 = vpop.f32.mrf.mxu0
    %v2462 = vadd.f32 0.0, %v2461
    %v2463 = vpop.f32.mrf.mxu0
    %2464 = vmatprep.mubr.f32.mxu0 %v2021
    %2465 = vmatmul.mubr.f32.gmra.mxu0 %v2020
    %v2466 = vpop.f32.mrf.mxu0
    %v2467 = vadd.f32 0.0, %v2466
    %v2468 = vpop.f32.mrf.mxu0
    %2469 = vmatprep.mubr.f32.mxu0 %v2030
    %2470 = vmatmul.mubr.f32.gmra.mxu0 %v2029
    %v2471 = vpop.f32.mrf.mxu0
    %v2472 = vadd.f32 0.0, %v2471
    %v2473 = vpop.f32.mrf.mxu0
    %2474 = vmatprep.mubr.f32.mxu0 %v2039
    %2475 = vmatmul.mubr.f32.gmra.mxu0 %v2038
    %v2476 = vpop.f32.mrf.mxu0
    %v2477 = vadd.f32 0.0, %v2476
    %v2478 = vpop.f32.mrf.mxu0
    %2479 = vmatprep.mubr.f32.mxu0 %v2048
    %2480 = vmatmul.mubr.f32.gmra.mxu0 %v2047
    %v2481 = vpop.f32.mrf.mxu0
    %v2482 = vadd.f32 0.0, %v2481
    %v2483 = vpop.f32.mrf.mxu0
    %2484 = vmatprep.mubr.f32.mxu0 %v2057
    %2485 = vmatmul.mubr.f32.gmra.mxu0 %v2056
    %v2486 = vpop.f32.mrf.mxu0
    %v2487 = vadd.f32 0.0, %v2486
    %v2488 = vpop.f32.mrf.mxu0
    %2489 = vmatprep.mubr.f32.mxu0 %v2066
    %2490 = vmatmul.mubr.f32.gmra.mxu0 %v2065
    %v2491 = vpop.f32.mrf.mxu0
    %v2492 = vadd.f32 0.0, %v2491
    %v2493 = vpop.f32.mrf.mxu0
    %2494 = vmatprep.mubr.f32.mxu0 %v2075
    %2495 = vmatmul.mubr.f32.gmra.mxu0 %v2074
    %v2496 = vpop.f32.mrf.mxu0
    %v2497 = vadd.f32 0.0, %v2496
    %v2498 = vpop.f32.mrf.mxu0
    %2499 = vmatprep.mubr.f32.mxu0 %v2084
    %2500 = vmatmul.mubr.f32.gmra.mxu0 %v2083
    %v2501 = vpop.f32.mrf.mxu0
    %v2502 = vadd.f32 0.0, %v2501
    %v2503 = vpop.f32.mrf.mxu0
    %2504 = vmatprep.mubr.f32.mxu0 %v2093
    %2505 = vmatmul.mubr.f32.gmra.mxu0 %v2092
    %v2506 = vpop.f32.mrf.mxu0
    %v2507 = vadd.f32 0.0, %v2506
    %v2508 = vpop.f32.mrf.mxu0
    %2509 = vmatprep.mubr.f32.mxu0 %v2102
    %2510 = vmatmul.mubr.f32.gmra.mxu0 %v2101
    %v2511 = vpop.f32.mrf.mxu0
    %v2512 = vadd.f32 0.0, %v2511
    %v2513 = vpop.f32.mrf.mxu0
    %2514 = vmatprep.mubr.f32.mxu0 %v2111
    %2515 = vmatmul.mubr.f32.gmra.mxu0 %v2110
    %v2516 = vpop.f32.mrf.mxu0
    %v2517 = vadd.f32 0.0, %v2516
    %v2518 = vpop.f32.mrf.mxu0
    %2519 = vmatprep.mubr.f32.mxu0 %v2120
    %2520 = vmatmul.mubr.f32.gmra.mxu0 %v2119
    %v2521 = vpop.f32.mrf.mxu0
    %v2522 = vadd.f32 0.0, %v2521
    %v2523 = vpop.f32.mrf.mxu0
    %2524 = vmatprep.mubr.f32.mxu0 %v2129
    %2525 = vmatmul.mubr.f32.gmra.mxu0 %v2128
    %v2526 = vpop.f32.mrf.mxu0
    %v2527 = vadd.f32 0.0, %v2526
    %v2528 = vpop.f32.mrf.mxu0
    %2529 = vmatprep.mubr.f32.mxu0 %v2138
    %2530 = vmatmul.mubr.f32.gmra.mxu0 %v2137
    %v2531 = vpop.f32.mrf.mxu0
    %v2532 = vadd.f32 0.0, %v2531
    %v2533 = vpop.f32.mrf.mxu0
    %2534 = vmatprep.mubr.f32.mxu0 %v2147
    %2535 = vmatmul.mubr.f32.gmra.mxu0 %v2146
    %v2536 = vpop.f32.mrf.mxu0
    %v2537 = vadd.f32 0.0, %v2536
    %v2538 = vpop.f32.mrf.mxu0
    %2539 = vdwg.mxu0
    %2540 = vmatprep.subr.mxu0 0.0
    %2541 = vmatpush1.msra.mxu0 %v329
    %2542 = vmatprep.subr.mxu0 0.0
    %2543 = vmatpush1.msra.mxu0 %v328
    %2544 = vmatprep.subr.mxu0 0.0
    %2545 = vmatpush1.msra.mxu0 %v327
    %2546 = vmatprep.subr.mxu0 0.0
    %2547 = vmatpush1.msra.mxu0 %v326
    %2548 = vmatprep.subr.mxu0 0.0
    %2549 = vmatpush1.msra.mxu0 %v325
    %2550 = vmatprep.subr.mxu0 0.0
    %2551 = vmatpush1.msra.mxu0 %v324
    %2552 = vmatprep.subr.mxu0 0.0
    %2553 = vmatpush1.msra.mxu0 %v323
    %2554 = vmatprep.subr.mxu0 0.0
    %2555 = vmatpush1.msra.mxu0 %v322
    %2556 = vmatprep.subr.mxu0 0.0
    %2557 = vmatpush1.msra.mxu0 %v321
    %2558 = vmatprep.subr.mxu0 0.0
    %2559 = vmatpush1.msra.mxu0 %v320
    %2560 = vmatprep.subr.mxu0 0.0
    %2561 = vmatpush1.msra.mxu0 %v319
    %2562 = vmatprep.subr.mxu0 0.0
    %2563 = vmatpush1.msra.mxu0 %v318
    %2564 = vmatprep.subr.mxu0 0.0
    %2565 = vmatpush1.msra.mxu0 %v317
    %2566 = vmatprep.subr.mxu0 0.0
    %2567 = vmatpush1.msra.mxu0 %v316
    %2568 = vmatprep.subr.mxu0 0.0
    %2569 = vmatpush1.msra.mxu0 %v315
    %2570 = vmatprep.subr.mxu0 0.0
    %2571 = vmatpush1.msra.mxu0 %v314
    %2572 = vmatprep.subr.mxu0 0.0
    %2573 = vmatpush2.msra.mxu0 %v345
    %2574 = vmatprep.subr.mxu0 0.0
    %2575 = vmatpush2.msra.mxu0 %v344
    %2576 = vmatprep.subr.mxu0 0.0
    %2577 = vmatpush2.msra.mxu0 %v343
    %2578 = vmatprep.subr.mxu0 0.0
    %2579 = vmatpush2.msra.mxu0 %v342
    %2580 = vmatprep.subr.mxu0 0.0
    %2581 = vmatpush2.msra.mxu0 %v341
    %2582 = vmatprep.subr.mxu0 0.0
    %2583 = vmatpush2.msra.mxu0 %v340
    %2584 = vmatprep.subr.mxu0 0.0
    %2585 = vmatpush2.msra.mxu0 %v339
    %2586 = vmatprep.subr.mxu0 0.0
    %2587 = vmatpush2.msra.mxu0 %v338
    %2588 = vmatprep.subr.mxu0 0.0
    %2589 = vmatpush2.msra.mxu0 %v337
    %2590 = vmatprep.subr.mxu0 0.0
    %2591 = vmatpush2.msra.mxu0 %v336
    %2592 = vmatprep.subr.mxu0 0.0
    %2593 = vmatpush2.msra.mxu0 %v335
    %2594 = vmatprep.subr.mxu0 0.0
    %2595 = vmatpush2.msra.mxu0 %v334
    %2596 = vmatprep.subr.mxu0 0.0
    %2597 = vmatpush2.msra.mxu0 %v333
    %2598 = vmatprep.subr.mxu0 0.0
    %2599 = vmatpush2.msra.mxu0 %v332
    %2600 = vmatprep.subr.mxu0 0.0
    %2601 = vmatpush2.msra.mxu0 %v331
    %2602 = vmatprep.subr.mxu0 0.0
    %2603 = vmatpush2.msra.mxu0 %v330
    %2604 = vmatprep.mubr.f32.mxu0 %v1582
    %2605 = vmatmul.mubr.f32.gmra.mxu0 %v1581
    %v2606 = vpop.f32.mrf.mxu0
    %v2607 = vadd.f32 %v2222, %v2606
    %v2608 = vpop.f32.mrf.mxu0
    %2609 = vmatprep.mubr.f32.mxu0 %v1591
    %2610 = vmatmul.mubr.f32.gmra.mxu0 %v1590
    %v2611 = vpop.f32.mrf.mxu0
    %v2612 = vadd.f32 %v2227, %v2611
    %v2613 = vpop.f32.mrf.mxu0
    %2614 = vmatprep.mubr.f32.mxu0 %v1600
    %2615 = vmatmul.mubr.f32.gmra.mxu0 %v1599
    %v2616 = vpop.f32.mrf.mxu0
    %v2617 = vadd.f32 %v2232, %v2616
    %v2618 = vpop.f32.mrf.mxu0
    %2619 = vmatprep.mubr.f32.mxu0 %v1609
    %2620 = vmatmul.mubr.f32.gmra.mxu0 %v1608
    %v2621 = vpop.f32.mrf.mxu0
    %v2622 = vadd.f32 %v2237, %v2621
    %v2623 = vpop.f32.mrf.mxu0
    %2624 = vmatprep.mubr.f32.mxu0 %v1618
    %2625 = vmatmul.mubr.f32.gmra.mxu0 %v1617
    %v2626 = vpop.f32.mrf.mxu0
    %v2627 = vadd.f32 %v2242, %v2626
    %v2628 = vpop.f32.mrf.mxu0
    %2629 = vmatprep.mubr.f32.mxu0 %v1627
    %2630 = vmatmul.mubr.f32.gmra.mxu0 %v1626
    %v2631 = vpop.f32.mrf.mxu0
    %v2632 = vadd.f32 %v2247, %v2631
    %v2633 = vpop.f32.mrf.mxu0
    %2634 = vmatprep.mubr.f32.mxu0 %v1636
    %2635 = vmatmul.mubr.f32.gmra.mxu0 %v1635
    %v2636 = vpop.f32.mrf.mxu0
    %v2637 = vadd.f32 %v2252, %v2636
    %v2638 = vpop.f32.mrf.mxu0
    %2639 = vmatprep.mubr.f32.mxu0 %v1645
    %2640 = vmatmul.mubr.f32.gmra.mxu0 %v1644
    %v2641 = vpop.f32.mrf.mxu0
    %v2642 = vadd.f32 %v2257, %v2641
    %v2643 = vpop.f32.mrf.mxu0
    %2644 = vmatprep.mubr.f32.mxu0 %v1654
    %2645 = vmatmul.mubr.f32.gmra.mxu0 %v1653
    %v2646 = vpop.f32.mrf.mxu0
    %v2647 = vadd.f32 %v2262, %v2646
    %v2648 = vpop.f32.mrf.mxu0
    %2649 = vmatprep.mubr.f32.mxu0 %v1663
    %2650 = vmatmul.mubr.f32.gmra.mxu0 %v1662
    %v2651 = vpop.f32.mrf.mxu0
    %v2652 = vadd.f32 %v2267, %v2651
    %v2653 = vpop.f32.mrf.mxu0
    %2654 = vmatprep.mubr.f32.mxu0 %v1672
    %2655 = vmatmul.mubr.f32.gmra.mxu0 %v1671
    %v2656 = vpop.f32.mrf.mxu0
    %v2657 = vadd.f32 %v2272, %v2656
    %v2658 = vpop.f32.mrf.mxu0
    %2659 = vmatprep.mubr.f32.mxu0 %v1681
    %2660 = vmatmul.mubr.f32.gmra.mxu0 %v1680
    %v2661 = vpop.f32.mrf.mxu0
    %v2662 = vadd.f32 %v2277, %v2661
    %v2663 = vpop.f32.mrf.mxu0
    %2664 = vmatprep.mubr.f32.mxu0 %v1690
    %2665 = vmatmul.mubr.f32.gmra.mxu0 %v1689
    %v2666 = vpop.f32.mrf.mxu0
    %v2667 = vadd.f32 %v2282, %v2666
    %v2668 = vpop.f32.mrf.mxu0
    %2669 = vmatprep.mubr.f32.mxu0 %v1699
    %2670 = vmatmul.mubr.f32.gmra.mxu0 %v1698
    %v2671 = vpop.f32.mrf.mxu0
    %v2672 = vadd.f32 %v2287, %v2671
    %v2673 = vpop.f32.mrf.mxu0
    %2674 = vmatprep.mubr.f32.mxu0 %v1708
    %2675 = vmatmul.mubr.f32.gmra.mxu0 %v1707
    %v2676 = vpop.f32.mrf.mxu0
    %v2677 = vadd.f32 %v2292, %v2676
    %v2678 = vpop.f32.mrf.mxu0
    %2679 = vmatprep.mubr.f32.mxu0 %v1717
    %2680 = vmatmul.mubr.f32.gmra.mxu0 %v1716
    %v2681 = vpop.f32.mrf.mxu0
    %v2682 = vadd.f32 %v2297, %v2681
    %v2683 = vpop.f32.mrf.mxu0
    %2684 = vmatprep.mubr.f32.mxu0 %v1726
    %2685 = vmatmul.mubr.f32.gmra.mxu0 %v1725
    %v2686 = vpop.f32.mrf.mxu0
    %v2687 = vadd.f32 %v2302, %v2686
    %v2688 = vpop.f32.mrf.mxu0
    %2689 = vmatprep.mubr.f32.mxu0 %v1735
    %2690 = vmatmul.mubr.f32.gmra.mxu0 %v1734
    %v2691 = vpop.f32.mrf.mxu0
    %v2692 = vadd.f32 %v2307, %v2691
    %v2693 = vpop.f32.mrf.mxu0
    %2694 = vmatprep.mubr.f32.mxu0 %v1744
    %2695 = vmatmul.mubr.f32.gmra.mxu0 %v1743
    %v2696 = vpop.f32.mrf.mxu0
    %v2697 = vadd.f32 %v2312, %v2696
    %v2698 = vpop.f32.mrf.mxu0
    %2699 = vmatprep.mubr.f32.mxu0 %v1753
    %2700 = vmatmul.mubr.f32.gmra.mxu0 %v1752
    %v2701 = vpop.f32.mrf.mxu0
    %v2702 = vadd.f32 %v2317, %v2701
    %v2703 = vpop.f32.mrf.mxu0
    %2704 = vmatprep.mubr.f32.mxu0 %v1762
    %2705 = vmatmul.mubr.f32.gmra.mxu0 %v1761
    %v2706 = vpop.f32.mrf.mxu0
    %v2707 = vadd.f32 %v2322, %v2706
    %v2708 = vpop.f32.mrf.mxu0
    %2709 = vmatprep.mubr.f32.mxu0 %v1771
    %2710 = vmatmul.mubr.f32.gmra.mxu0 %v1770
    %v2711 = vpop.f32.mrf.mxu0
    %v2712 = vadd.f32 %v2327, %v2711
    %v2713 = vpop.f32.mrf.mxu0
    %2714 = vmatprep.mubr.f32.mxu0 %v1780
    %2715 = vmatmul.mubr.f32.gmra.mxu0 %v1779
    %v2716 = vpop.f32.mrf.mxu0
    %v2717 = vadd.f32 %v2332, %v2716
    %v2718 = vpop.f32.mrf.mxu0
    %2719 = vmatprep.mubr.f32.mxu0 %v1789
    %2720 = vmatmul.mubr.f32.gmra.mxu0 %v1788
    %v2721 = vpop.f32.mrf.mxu0
    %v2722 = vadd.f32 %v2337, %v2721
    %v2723 = vpop.f32.mrf.mxu0
    %2724 = vmatprep.mubr.f32.mxu0 %v1798
    %2725 = vmatmul.mubr.f32.gmra.mxu0 %v1797
    %v2726 = vpop.f32.mrf.mxu0
    %v2727 = vadd.f32 %v2342, %v2726
    %v2728 = vpop.f32.mrf.mxu0
    %2729 = vmatprep.mubr.f32.mxu0 %v1807
    %2730 = vmatmul.mubr.f32.gmra.mxu0 %v1806
    %v2731 = vpop.f32.mrf.mxu0
    %v2732 = vadd.f32 %v2347, %v2731
    %v2733 = vpop.f32.mrf.mxu0
    %2734 = vmatprep.mubr.f32.mxu0 %v1816
    %2735 = vmatmul.mubr.f32.gmra.mxu0 %v1815
    %v2736 = vpop.f32.mrf.mxu0
    %v2737 = vadd.f32 %v2352, %v2736
    %v2738 = vpop.f32.mrf.mxu0
    %2739 = vmatprep.mubr.f32.mxu0 %v1825
    %2740 = vmatmul.mubr.f32.gmra.mxu0 %v1824
    %v2741 = vpop.f32.mrf.mxu0
    %v2742 = vadd.f32 %v2357, %v2741
    %v2743 = vpop.f32.mrf.mxu0
    %2744 = vmatprep.mubr.f32.mxu0 %v1834
    %2745 = vmatmul.mubr.f32.gmra.mxu0 %v1833
    %v2746 = vpop.f32.mrf.mxu0
    %v2747 = vadd.f32 %v2362, %v2746
    %v2748 = vpop.f32.mrf.mxu0
    %2749 = vmatprep.mubr.f32.mxu0 %v1843
    %2750 = vmatmul.mubr.f32.gmra.mxu0 %v1842
    %v2751 = vpop.f32.mrf.mxu0
    %v2752 = vadd.f32 %v2367, %v2751
    %v2753 = vpop.f32.mrf.mxu0
    %2754 = vmatprep.mubr.f32.mxu0 %v1852
    %2755 = vmatmul.mubr.f32.gmra.mxu0 %v1851
    %v2756 = vpop.f32.mrf.mxu0
    %v2757 = vadd.f32 %v2372, %v2756
    %v2758 = vpop.f32.mrf.mxu0
    %2759 = vmatprep.mubr.f32.mxu0 %v1861
    %2760 = vmatmul.mubr.f32.gmra.mxu0 %v1860
    %v2761 = vpop.f32.mrf.mxu0
    %v2762 = vadd.f32 %v2377, %v2761
    %v2763 = vpop.f32.mrf.mxu0
    %2764 = vmatprep.mubr.f32.mxu0 %v1870
    %2765 = vmatmul.mubr.f32.gmra.mxu0 %v1869
    %v2766 = vpop.f32.mrf.mxu0
    %v2767 = vadd.f32 %v2382, %v2766
    %v2768 = vpop.f32.mrf.mxu0
    %2769 = vmatprep.mubr.f32.mxu0 %v1879
    %2770 = vmatmul.mubr.f32.gmra.mxu0 %v1878
    %v2771 = vpop.f32.mrf.mxu0
    %v2772 = vadd.f32 %v2387, %v2771
    %v2773 = vpop.f32.mrf.mxu0
    %2774 = vmatprep.mubr.f32.mxu0 %v1888
    %2775 = vmatmul.mubr.f32.gmra.mxu0 %v1887
    %v2776 = vpop.f32.mrf.mxu0
    %v2777 = vadd.f32 %v2392, %v2776
    %v2778 = vpop.f32.mrf.mxu0
    %2779 = vmatprep.mubr.f32.mxu0 %v1897
    %2780 = vmatmul.mubr.f32.gmra.mxu0 %v1896
    %v2781 = vpop.f32.mrf.mxu0
    %v2782 = vadd.f32 %v2397, %v2781
    %v2783 = vpop.f32.mrf.mxu0
    %2784 = vmatprep.mubr.f32.mxu0 %v1906
    %2785 = vmatmul.mubr.f32.gmra.mxu0 %v1905
    %v2786 = vpop.f32.mrf.mxu0
    %v2787 = vadd.f32 %v2402, %v2786
    %v2788 = vpop.f32.mrf.mxu0
    %2789 = vmatprep.mubr.f32.mxu0 %v1915
    %2790 = vmatmul.mubr.f32.gmra.mxu0 %v1914
    %v2791 = vpop.f32.mrf.mxu0
    %v2792 = vadd.f32 %v2407, %v2791
    %v2793 = vpop.f32.mrf.mxu0
    %2794 = vmatprep.mubr.f32.mxu0 %v1924
    %2795 = vmatmul.mubr.f32.gmra.mxu0 %v1923
    %v2796 = vpop.f32.mrf.mxu0
    %v2797 = vadd.f32 %v2412, %v2796
    %v2798 = vpop.f32.mrf.mxu0
    %2799 = vmatprep.mubr.f32.mxu0 %v1933
    %2800 = vmatmul.mubr.f32.gmra.mxu0 %v1932
    %v2801 = vpop.f32.mrf.mxu0
    %v2802 = vadd.f32 %v2417, %v2801
    %v2803 = vpop.f32.mrf.mxu0
    %2804 = vmatprep.mubr.f32.mxu0 %v1942
    %2805 = vmatmul.mubr.f32.gmra.mxu0 %v1941
    %v2806 = vpop.f32.mrf.mxu0
    %v2807 = vadd.f32 %v2422, %v2806
    %v2808 = vpop.f32.mrf.mxu0
    %2809 = vmatprep.mubr.f32.mxu0 %v1951
    %2810 = vmatmul.mubr.f32.gmra.mxu0 %v1950
    %v2811 = vpop.f32.mrf.mxu0
    %v2812 = vadd.f32 %v2427, %v2811
    %v2813 = vpop.f32.mrf.mxu0
    %2814 = vmatprep.mubr.f32.mxu0 %v1960
    %2815 = vmatmul.mubr.f32.gmra.mxu0 %v1959
    %v2816 = vpop.f32.mrf.mxu0
    %v2817 = vadd.f32 %v2432, %v2816
    %v2818 = vpop.f32.mrf.mxu0
    %2819 = vmatprep.mubr.f32.mxu0 %v1969
    %2820 = vmatmul.mubr.f32.gmra.mxu0 %v1968
    %v2821 = vpop.f32.mrf.mxu0
    %v2822 = vadd.f32 %v2437, %v2821
    %v2823 = vpop.f32.mrf.mxu0
    %2824 = vmatprep.mubr.f32.mxu0 %v1978
    %2825 = vmatmul.mubr.f32.gmra.mxu0 %v1977
    %v2826 = vpop.f32.mrf.mxu0
    %v2827 = vadd.f32 %v2442, %v2826
    %v2828 = vpop.f32.mrf.mxu0
    %2829 = vmatprep.mubr.f32.mxu0 %v1987
    %2830 = vmatmul.mubr.f32.gmra.mxu0 %v1986
    %v2831 = vpop.f32.mrf.mxu0
    %v2832 = vadd.f32 %v2447, %v2831
    %v2833 = vpop.f32.mrf.mxu0
    %2834 = vmatprep.mubr.f32.mxu0 %v1996
    %2835 = vmatmul.mubr.f32.gmra.mxu0 %v1995
    %v2836 = vpop.f32.mrf.mxu0
    %v2837 = vadd.f32 %v2452, %v2836
    %v2838 = vpop.f32.mrf.mxu0
    %2839 = vmatprep.mubr.f32.mxu0 %v2005
    %2840 = vmatmul.mubr.f32.gmra.mxu0 %v2004
    %v2841 = vpop.f32.mrf.mxu0
    %v2842 = vadd.f32 %v2457, %v2841
    %v2843 = vpop.f32.mrf.mxu0
    %2844 = vmatprep.mubr.f32.mxu0 %v2014
    %2845 = vmatmul.mubr.f32.gmra.mxu0 %v2013
    %v2846 = vpop.f32.mrf.mxu0
    %v2847 = vadd.f32 %v2462, %v2846
    %v2848 = vpop.f32.mrf.mxu0
    %2849 = vmatprep.mubr.f32.mxu0 %v2023
    %2850 = vmatmul.mubr.f32.gmra.mxu0 %v2022
    %v2851 = vpop.f32.mrf.mxu0
    %v2852 = vadd.f32 %v2467, %v2851
    %v2853 = vpop.f32.mrf.mxu0
    %2854 = vmatprep.mubr.f32.mxu0 %v2032
    %2855 = vmatmul.mubr.f32.gmra.mxu0 %v2031
    %v2856 = vpop.f32.mrf.mxu0
    %v2857 = vadd.f32 %v2472, %v2856
    %v2858 = vpop.f32.mrf.mxu0
    %2859 = vmatprep.mubr.f32.mxu0 %v2041
    %2860 = vmatmul.mubr.f32.gmra.mxu0 %v2040
    %v2861 = vpop.f32.mrf.mxu0
    %v2862 = vadd.f32 %v2477, %v2861
    %v2863 = vpop.f32.mrf.mxu0
    %2864 = vmatprep.mubr.f32.mxu0 %v2050
    %2865 = vmatmul.mubr.f32.gmra.mxu0 %v2049
    %v2866 = vpop.f32.mrf.mxu0
    %v2867 = vadd.f32 %v2482, %v2866
    %v2868 = vpop.f32.mrf.mxu0
    %2869 = vmatprep.mubr.f32.mxu0 %v2059
    %2870 = vmatmul.mubr.f32.gmra.mxu0 %v2058
    %v2871 = vpop.f32.mrf.mxu0
    %v2872 = vadd.f32 %v2487, %v2871
    %v2873 = vpop.f32.mrf.mxu0
    %2874 = vmatprep.mubr.f32.mxu0 %v2068
    %2875 = vmatmul.mubr.f32.gmra.mxu0 %v2067
    %v2876 = vpop.f32.mrf.mxu0
    %v2877 = vadd.f32 %v2492, %v2876
    %v2878 = vpop.f32.mrf.mxu0
    %2879 = vmatprep.mubr.f32.mxu0 %v2077
    %2880 = vmatmul.mubr.f32.gmra.mxu0 %v2076
    %v2881 = vpop.f32.mrf.mxu0
    %v2882 = vadd.f32 %v2497, %v2881
    %v2883 = vpop.f32.mrf.mxu0
    %2884 = vmatprep.mubr.f32.mxu0 %v2086
    %2885 = vmatmul.mubr.f32.gmra.mxu0 %v2085
    %v2886 = vpop.f32.mrf.mxu0
    %v2887 = vadd.f32 %v2502, %v2886
    %v2888 = vpop.f32.mrf.mxu0
    %2889 = vmatprep.mubr.f32.mxu0 %v2095
    %2890 = vmatmul.mubr.f32.gmra.mxu0 %v2094
    %v2891 = vpop.f32.mrf.mxu0
    %v2892 = vadd.f32 %v2507, %v2891
    %v2893 = vpop.f32.mrf.mxu0
    %2894 = vmatprep.mubr.f32.mxu0 %v2104
    %2895 = vmatmul.mubr.f32.gmra.mxu0 %v2103
    %v2896 = vpop.f32.mrf.mxu0
    %v2897 = vadd.f32 %v2512, %v2896
    %v2898 = vpop.f32.mrf.mxu0
    %2899 = vmatprep.mubr.f32.mxu0 %v2113
    %2900 = vmatmul.mubr.f32.gmra.mxu0 %v2112
    %v2901 = vpop.f32.mrf.mxu0
    %v2902 = vadd.f32 %v2517, %v2901
    %v2903 = vpop.f32.mrf.mxu0
    %2904 = vmatprep.mubr.f32.mxu0 %v2122
    %2905 = vmatmul.mubr.f32.gmra.mxu0 %v2121
    %v2906 = vpop.f32.mrf.mxu0
    %v2907 = vadd.f32 %v2522, %v2906
    %v2908 = vpop.f32.mrf.mxu0
    %2909 = vmatprep.mubr.f32.mxu0 %v2131
    %2910 = vmatmul.mubr.f32.gmra.mxu0 %v2130
    %v2911 = vpop.f32.mrf.mxu0
    %v2912 = vadd.f32 %v2527, %v2911
    %v2913 = vpop.f32.mrf.mxu0
    %2914 = vmatprep.mubr.f32.mxu0 %v2140
    %2915 = vmatmul.mubr.f32.gmra.mxu0 %v2139
    %v2916 = vpop.f32.mrf.mxu0
    %v2917 = vadd.f32 %v2532, %v2916
    %v2918 = vpop.f32.mrf.mxu0
    %2919 = vmatprep.mubr.f32.mxu0 %v2149
    %2920 = vmatmul.mubr.f32.gmra.mxu0 %v2148
    %v2921 = vpop.f32.mrf.mxu0
    %v2922 = vadd.f32 %v2537, %v2921
    %v2923 = vpop.f32.mrf.mxu0
    %2924 = vdwg.mxu0
    %2925 = vmatprep.subr.mxu0 0.0
    %2926 = vmatpush1.msra.mxu0 %v361
    %2927 = vmatprep.subr.mxu0 0.0
    %2928 = vmatpush1.msra.mxu0 %v360
    %2929 = vmatprep.subr.mxu0 0.0
    %2930 = vmatpush1.msra.mxu0 %v359
    %2931 = vmatprep.subr.mxu0 0.0
    %2932 = vmatpush1.msra.mxu0 %v358
    %2933 = vmatprep.subr.mxu0 0.0
    %2934 = vmatpush1.msra.mxu0 %v357
    %2935 = vmatprep.subr.mxu0 0.0
    %2936 = vmatpush1.msra.mxu0 %v356
    %2937 = vmatprep.subr.mxu0 0.0
    %2938 = vmatpush1.msra.mxu0 %v355
    %2939 = vmatprep.subr.mxu0 0.0
    %2940 = vmatpush1.msra.mxu0 %v354
    %2941 = vmatprep.subr.mxu0 0.0
    %2942 = vmatpush1.msra.mxu0 %v353
    %2943 = vmatprep.subr.mxu0 0.0
    %2944 = vmatpush1.msra.mxu0 %v352
    %2945 = vmatprep.subr.mxu0 0.0
    %2946 = vmatpush1.msra.mxu0 %v351
    %2947 = vmatprep.subr.mxu0 0.0
    %2948 = vmatpush1.msra.mxu0 %v350
    %2949 = vmatprep.subr.mxu0 0.0
    %2950 = vmatpush1.msra.mxu0 %v349
    %2951 = vmatprep.subr.mxu0 0.0
    %2952 = vmatpush1.msra.mxu0 %v348
    %2953 = vmatprep.subr.mxu0 0.0
    %2954 = vmatpush1.msra.mxu0 %v347
    %2955 = vmatprep.subr.mxu0 0.0
    %2956 = vmatpush1.msra.mxu0 %v346
    %2957 = vmatprep.subr.mxu0 0.0
    %2958 = vmatpush2.msra.mxu0 %v377
    %2959 = vmatprep.subr.mxu0 0.0
    %2960 = vmatpush2.msra.mxu0 %v376
    %2961 = vmatprep.subr.mxu0 0.0
    %2962 = vmatpush2.msra.mxu0 %v375
    %2963 = vmatprep.subr.mxu0 0.0
    %2964 = vmatpush2.msra.mxu0 %v374
    %2965 = vmatprep.subr.mxu0 0.0
    %2966 = vmatpush2.msra.mxu0 %v373
    %2967 = vmatprep.subr.mxu0 0.0
    %2968 = vmatpush2.msra.mxu0 %v372
    %2969 = vmatprep.subr.mxu0 0.0
    %2970 = vmatpush2.msra.mxu0 %v371
    %2971 = vmatprep.subr.mxu0 0.0
    %2972 = vmatpush2.msra.mxu0 %v370
    %2973 = vmatprep.subr.mxu0 0.0
    %2974 = vmatpush2.msra.mxu0 %v369
    %2975 = vmatprep.subr.mxu0 0.0
    %2976 = vmatpush2.msra.mxu0 %v368
    %2977 = vmatprep.subr.mxu0 0.0
    %2978 = vmatpush2.msra.mxu0 %v367
    %2979 = vmatprep.subr.mxu0 0.0
    %2980 = vmatpush2.msra.mxu0 %v366
    %2981 = vmatprep.subr.mxu0 0.0
    %2982 = vmatpush2.msra.mxu0 %v365
    %2983 = vmatprep.subr.mxu0 0.0
    %2984 = vmatpush2.msra.mxu0 %v364
    %2985 = vmatprep.subr.mxu0 0.0
    %2986 = vmatpush2.msra.mxu0 %v363
    %2987 = vmatprep.subr.mxu0 0.0
    %2988 = vmatpush2.msra.mxu0 %v362
    %2989 = vmatprep.mubr.f32.mxu0 %v1584
    %2990 = vmatmul.mubr.f32.gmra.mxu0 %v1583
    %v2991 = vpop.f32.mrf.mxu0
    %v2992 = vadd.f32 %v2607, %v2991
    %v2993 = vpop.f32.mrf.mxu0
    %2994 = vmatprep.mubr.f32.mxu0 %v1593
    %2995 = vmatmul.mubr.f32.gmra.mxu0 %v1592
    %v2996 = vpop.f32.mrf.mxu0
    %v2997 = vadd.f32 %v2612, %v2996
    %v2998 = vpop.f32.mrf.mxu0
    %2999 = vmatprep.mubr.f32.mxu0 %v1602
    %3000 = vmatmul.mubr.f32.gmra.mxu0 %v1601
    %v3001 = vpop.f32.mrf.mxu0
    %v3002 = vadd.f32 %v2617, %v3001
    %v3003 = vpop.f32.mrf.mxu0
    %3004 = vmatprep.mubr.f32.mxu0 %v1611
    %3005 = vmatmul.mubr.f32.gmra.mxu0 %v1610
    %v3006 = vpop.f32.mrf.mxu0
    %v3007 = vadd.f32 %v2622, %v3006
    %v3008 = vpop.f32.mrf.mxu0
    %3009 = vmatprep.mubr.f32.mxu0 %v1620
    %3010 = vmatmul.mubr.f32.gmra.mxu0 %v1619
    %v3011 = vpop.f32.mrf.mxu0
    %v3012 = vadd.f32 %v2627, %v3011
    %v3013 = vpop.f32.mrf.mxu0
    %3014 = vmatprep.mubr.f32.mxu0 %v1629
    %3015 = vmatmul.mubr.f32.gmra.mxu0 %v1628
    %v3016 = vpop.f32.mrf.mxu0
    %v3017 = vadd.f32 %v2632, %v3016
    %v3018 = vpop.f32.mrf.mxu0
    %3019 = vmatprep.mubr.f32.mxu0 %v1638
    %3020 = vmatmul.mubr.f32.gmra.mxu0 %v1637
    %v3021 = vpop.f32.mrf.mxu0
    %v3022 = vadd.f32 %v2637, %v3021
    %v3023 = vpop.f32.mrf.mxu0
    %3024 = vmatprep.mubr.f32.mxu0 %v1647
    %3025 = vmatmul.mubr.f32.gmra.mxu0 %v1646
    %v3026 = vpop.f32.mrf.mxu0
    %v3027 = vadd.f32 %v2642, %v3026
    %v3028 = vpop.f32.mrf.mxu0
    %3029 = vmatprep.mubr.f32.mxu0 %v1656
    %3030 = vmatmul.mubr.f32.gmra.mxu0 %v1655
    %v3031 = vpop.f32.mrf.mxu0
    %v3032 = vadd.f32 %v2647, %v3031
    %v3033 = vpop.f32.mrf.mxu0
    %3034 = vmatprep.mubr.f32.mxu0 %v1665
    %3035 = vmatmul.mubr.f32.gmra.mxu0 %v1664
    %v3036 = vpop.f32.mrf.mxu0
    %v3037 = vadd.f32 %v2652, %v3036
    %v3038 = vpop.f32.mrf.mxu0
    %3039 = vmatprep.mubr.f32.mxu0 %v1674
    %3040 = vmatmul.mubr.f32.gmra.mxu0 %v1673
    %v3041 = vpop.f32.mrf.mxu0
    %v3042 = vadd.f32 %v2657, %v3041
    %v3043 = vpop.f32.mrf.mxu0
    %3044 = vmatprep.mubr.f32.mxu0 %v1683
    %3045 = vmatmul.mubr.f32.gmra.mxu0 %v1682
    %v3046 = vpop.f32.mrf.mxu0
    %v3047 = vadd.f32 %v2662, %v3046
    %v3048 = vpop.f32.mrf.mxu0
    %3049 = vmatprep.mubr.f32.mxu0 %v1692
    %3050 = vmatmul.mubr.f32.gmra.mxu0 %v1691
    %v3051 = vpop.f32.mrf.mxu0
    %v3052 = vadd.f32 %v2667, %v3051
    %v3053 = vpop.f32.mrf.mxu0
    %3054 = vmatprep.mubr.f32.mxu0 %v1701
    %3055 = vmatmul.mubr.f32.gmra.mxu0 %v1700
    %v3056 = vpop.f32.mrf.mxu0
    %v3057 = vadd.f32 %v2672, %v3056
    %v3058 = vpop.f32.mrf.mxu0
    %3059 = vmatprep.mubr.f32.mxu0 %v1710
    %3060 = vmatmul.mubr.f32.gmra.mxu0 %v1709
    %v3061 = vpop.f32.mrf.mxu0
    %v3062 = vadd.f32 %v2677, %v3061
    %v3063 = vpop.f32.mrf.mxu0
    %3064 = vmatprep.mubr.f32.mxu0 %v1719
    %3065 = vmatmul.mubr.f32.gmra.mxu0 %v1718
    %v3066 = vpop.f32.mrf.mxu0
    %v3067 = vadd.f32 %v2682, %v3066
    %v3068 = vpop.f32.mrf.mxu0
    %3069 = vmatprep.mubr.f32.mxu0 %v1728
    %3070 = vmatmul.mubr.f32.gmra.mxu0 %v1727
    %v3071 = vpop.f32.mrf.mxu0
    %v3072 = vadd.f32 %v2687, %v3071
    %v3073 = vpop.f32.mrf.mxu0
    %3074 = vmatprep.mubr.f32.mxu0 %v1737
    %3075 = vmatmul.mubr.f32.gmra.mxu0 %v1736
    %v3076 = vpop.f32.mrf.mxu0
    %v3077 = vadd.f32 %v2692, %v3076
    %v3078 = vpop.f32.mrf.mxu0
    %3079 = vmatprep.mubr.f32.mxu0 %v1746
    %3080 = vmatmul.mubr.f32.gmra.mxu0 %v1745
    %v3081 = vpop.f32.mrf.mxu0
    %v3082 = vadd.f32 %v2697, %v3081
    %v3083 = vpop.f32.mrf.mxu0
    %3084 = vmatprep.mubr.f32.mxu0 %v1755
    %3085 = vmatmul.mubr.f32.gmra.mxu0 %v1754
    %v3086 = vpop.f32.mrf.mxu0
    %v3087 = vadd.f32 %v2702, %v3086
    %v3088 = vpop.f32.mrf.mxu0
    %3089 = vmatprep.mubr.f32.mxu0 %v1764
    %3090 = vmatmul.mubr.f32.gmra.mxu0 %v1763
    %v3091 = vpop.f32.mrf.mxu0
    %v3092 = vadd.f32 %v2707, %v3091
    %v3093 = vpop.f32.mrf.mxu0
    %3094 = vmatprep.mubr.f32.mxu0 %v1773
    %3095 = vmatmul.mubr.f32.gmra.mxu0 %v1772
    %v3096 = vpop.f32.mrf.mxu0
    %v3097 = vadd.f32 %v2712, %v3096
    %v3098 = vpop.f32.mrf.mxu0
    %3099 = vmatprep.mubr.f32.mxu0 %v1782
    %3100 = vmatmul.mubr.f32.gmra.mxu0 %v1781
    %v3101 = vpop.f32.mrf.mxu0
    %v3102 = vadd.f32 %v2717, %v3101
    %v3103 = vpop.f32.mrf.mxu0
    %3104 = vmatprep.mubr.f32.mxu0 %v1791
    %3105 = vmatmul.mubr.f32.gmra.mxu0 %v1790
    %v3106 = vpop.f32.mrf.mxu0
    %v3107 = vadd.f32 %v2722, %v3106
    %v3108 = vpop.f32.mrf.mxu0
    %3109 = vmatprep.mubr.f32.mxu0 %v1800
    %3110 = vmatmul.mubr.f32.gmra.mxu0 %v1799
    %v3111 = vpop.f32.mrf.mxu0
    %v3112 = vadd.f32 %v2727, %v3111
    %v3113 = vpop.f32.mrf.mxu0
    %3114 = vmatprep.mubr.f32.mxu0 %v1809
    %3115 = vmatmul.mubr.f32.gmra.mxu0 %v1808
    %v3116 = vpop.f32.mrf.mxu0
    %v3117 = vadd.f32 %v2732, %v3116
    %v3118 = vpop.f32.mrf.mxu0
    %3119 = vmatprep.mubr.f32.mxu0 %v1818
    %3120 = vmatmul.mubr.f32.gmra.mxu0 %v1817
    %v3121 = vpop.f32.mrf.mxu0
    %v3122 = vadd.f32 %v2737, %v3121
    %v3123 = vpop.f32.mrf.mxu0
    %3124 = vmatprep.mubr.f32.mxu0 %v1827
    %3125 = vmatmul.mubr.f32.gmra.mxu0 %v1826
    %v3126 = vpop.f32.mrf.mxu0
    %v3127 = vadd.f32 %v2742, %v3126
    %v3128 = vpop.f32.mrf.mxu0
    %3129 = vmatprep.mubr.f32.mxu0 %v1836
    %3130 = vmatmul.mubr.f32.gmra.mxu0 %v1835
    %v3131 = vpop.f32.mrf.mxu0
    %v3132 = vadd.f32 %v2747, %v3131
    %v3133 = vpop.f32.mrf.mxu0
    %3134 = vmatprep.mubr.f32.mxu0 %v1845
    %3135 = vmatmul.mubr.f32.gmra.mxu0 %v1844
    %v3136 = vpop.f32.mrf.mxu0
    %v3137 = vadd.f32 %v2752, %v3136
    %v3138 = vpop.f32.mrf.mxu0
    %3139 = vmatprep.mubr.f32.mxu0 %v1854
    %3140 = vmatmul.mubr.f32.gmra.mxu0 %v1853
    %v3141 = vpop.f32.mrf.mxu0
    %v3142 = vadd.f32 %v2757, %v3141
    %v3143 = vpop.f32.mrf.mxu0
    %3144 = vmatprep.mubr.f32.mxu0 %v1863
    %3145 = vmatmul.mubr.f32.gmra.mxu0 %v1862
    %v3146 = vpop.f32.mrf.mxu0
    %v3147 = vadd.f32 %v2762, %v3146
    %v3148 = vpop.f32.mrf.mxu0
    %3149 = vmatprep.mubr.f32.mxu0 %v1872
    %3150 = vmatmul.mubr.f32.gmra.mxu0 %v1871
    %v3151 = vpop.f32.mrf.mxu0
    %v3152 = vadd.f32 %v2767, %v3151
    %v3153 = vpop.f32.mrf.mxu0
    %3154 = vmatprep.mubr.f32.mxu0 %v1881
    %3155 = vmatmul.mubr.f32.gmra.mxu0 %v1880
    %v3156 = vpop.f32.mrf.mxu0
    %v3157 = vadd.f32 %v2772, %v3156
    %v3158 = vpop.f32.mrf.mxu0
    %3159 = vmatprep.mubr.f32.mxu0 %v1890
    %3160 = vmatmul.mubr.f32.gmra.mxu0 %v1889
    %v3161 = vpop.f32.mrf.mxu0
    %v3162 = vadd.f32 %v2777, %v3161
    %v3163 = vpop.f32.mrf.mxu0
    %3164 = vmatprep.mubr.f32.mxu0 %v1899
    %3165 = vmatmul.mubr.f32.gmra.mxu0 %v1898
    %v3166 = vpop.f32.mrf.mxu0
    %v3167 = vadd.f32 %v2782, %v3166
    %v3168 = vpop.f32.mrf.mxu0
    %3169 = vmatprep.mubr.f32.mxu0 %v1908
    %3170 = vmatmul.mubr.f32.gmra.mxu0 %v1907
    %v3171 = vpop.f32.mrf.mxu0
    %v3172 = vadd.f32 %v2787, %v3171
    %v3173 = vpop.f32.mrf.mxu0
    %3174 = vmatprep.mubr.f32.mxu0 %v1917
    %3175 = vmatmul.mubr.f32.gmra.mxu0 %v1916
    %v3176 = vpop.f32.mrf.mxu0
    %v3177 = vadd.f32 %v2792, %v3176
    %v3178 = vpop.f32.mrf.mxu0
    %3179 = vmatprep.mubr.f32.mxu0 %v1926
    %3180 = vmatmul.mubr.f32.gmra.mxu0 %v1925
    %v3181 = vpop.f32.mrf.mxu0
    %v3182 = vadd.f32 %v2797, %v3181
    %v3183 = vpop.f32.mrf.mxu0
    %3184 = vmatprep.mubr.f32.mxu0 %v1935
    %3185 = vmatmul.mubr.f32.gmra.mxu0 %v1934
    %v3186 = vpop.f32.mrf.mxu0
    %v3187 = vadd.f32 %v2802, %v3186
    %v3188 = vpop.f32.mrf.mxu0
    %3189 = vmatprep.mubr.f32.mxu0 %v1944
    %3190 = vmatmul.mubr.f32.gmra.mxu0 %v1943
    %v3191 = vpop.f32.mrf.mxu0
    %v3192 = vadd.f32 %v2807, %v3191
    %v3193 = vpop.f32.mrf.mxu0
    %3194 = vmatprep.mubr.f32.mxu0 %v1953
    %3195 = vmatmul.mubr.f32.gmra.mxu0 %v1952
    %v3196 = vpop.f32.mrf.mxu0
    %v3197 = vadd.f32 %v2812, %v3196
    %v3198 = vpop.f32.mrf.mxu0
    %3199 = vmatprep.mubr.f32.mxu0 %v1962
    %3200 = vmatmul.mubr.f32.gmra.mxu0 %v1961
    %v3201 = vpop.f32.mrf.mxu0
    %v3202 = vadd.f32 %v2817, %v3201
    %v3203 = vpop.f32.mrf.mxu0
    %3204 = vmatprep.mubr.f32.mxu0 %v1971
    %3205 = vmatmul.mubr.f32.gmra.mxu0 %v1970
    %v3206 = vpop.f32.mrf.mxu0
    %v3207 = vadd.f32 %v2822, %v3206
    %v3208 = vpop.f32.mrf.mxu0
    %3209 = vmatprep.mubr.f32.mxu0 %v1980
    %3210 = vmatmul.mubr.f32.gmra.mxu0 %v1979
    %v3211 = vpop.f32.mrf.mxu0
    %v3212 = vadd.f32 %v2827, %v3211
    %v3213 = vpop.f32.mrf.mxu0
    %3214 = vmatprep.mubr.f32.mxu0 %v1989
    %3215 = vmatmul.mubr.f32.gmra.mxu0 %v1988
    %v3216 = vpop.f32.mrf.mxu0
    %v3217 = vadd.f32 %v2832, %v3216
    %v3218 = vpop.f32.mrf.mxu0
    %3219 = vmatprep.mubr.f32.mxu0 %v1998
    %3220 = vmatmul.mubr.f32.gmra.mxu0 %v1997
    %v3221 = vpop.f32.mrf.mxu0
    %v3222 = vadd.f32 %v2837, %v3221
    %v3223 = vpop.f32.mrf.mxu0
    %3224 = vmatprep.mubr.f32.mxu0 %v2007
    %3225 = vmatmul.mubr.f32.gmra.mxu0 %v2006
    %v3226 = vpop.f32.mrf.mxu0
    %v3227 = vadd.f32 %v2842, %v3226
    %v3228 = vpop.f32.mrf.mxu0
    %3229 = vmatprep.mubr.f32.mxu0 %v2016
    %3230 = vmatmul.mubr.f32.gmra.mxu0 %v2015
    %v3231 = vpop.f32.mrf.mxu0
    %v3232 = vadd.f32 %v2847, %v3231
    %v3233 = vpop.f32.mrf.mxu0
    %3234 = vmatprep.mubr.f32.mxu0 %v2025
    %3235 = vmatmul.mubr.f32.gmra.mxu0 %v2024
    %v3236 = vpop.f32.mrf.mxu0
    %v3237 = vadd.f32 %v2852, %v3236
    %v3238 = vpop.f32.mrf.mxu0
    %3239 = vmatprep.mubr.f32.mxu0 %v2034
    %3240 = vmatmul.mubr.f32.gmra.mxu0 %v2033
    %v3241 = vpop.f32.mrf.mxu0
    %v3242 = vadd.f32 %v2857, %v3241
    %v3243 = vpop.f32.mrf.mxu0
    %3244 = vmatprep.mubr.f32.mxu0 %v2043
    %3245 = vmatmul.mubr.f32.gmra.mxu0 %v2042
    %v3246 = vpop.f32.mrf.mxu0
    %v3247 = vadd.f32 %v2862, %v3246
    %v3248 = vpop.f32.mrf.mxu0
    %3249 = vmatprep.mubr.f32.mxu0 %v2052
    %3250 = vmatmul.mubr.f32.gmra.mxu0 %v2051
    %v3251 = vpop.f32.mrf.mxu0
    %v3252 = vadd.f32 %v2867, %v3251
    %v3253 = vpop.f32.mrf.mxu0
    %3254 = vmatprep.mubr.f32.mxu0 %v2061
    %3255 = vmatmul.mubr.f32.gmra.mxu0 %v2060
    %v3256 = vpop.f32.mrf.mxu0
    %v3257 = vadd.f32 %v2872, %v3256
    %v3258 = vpop.f32.mrf.mxu0
    %3259 = vmatprep.mubr.f32.mxu0 %v2070
    %3260 = vmatmul.mubr.f32.gmra.mxu0 %v2069
    %v3261 = vpop.f32.mrf.mxu0
    %v3262 = vadd.f32 %v2877, %v3261
    %v3263 = vpop.f32.mrf.mxu0
    %3264 = vmatprep.mubr.f32.mxu0 %v2079
    %3265 = vmatmul.mubr.f32.gmra.mxu0 %v2078
    %v3266 = vpop.f32.mrf.mxu0
    %v3267 = vadd.f32 %v2882, %v3266
    %v3268 = vpop.f32.mrf.mxu0
    %3269 = vmatprep.mubr.f32.mxu0 %v2088
    %3270 = vmatmul.mubr.f32.gmra.mxu0 %v2087
    %v3271 = vpop.f32.mrf.mxu0
    %v3272 = vadd.f32 %v2887, %v3271
    %v3273 = vpop.f32.mrf.mxu0
    %3274 = vmatprep.mubr.f32.mxu0 %v2097
    %3275 = vmatmul.mubr.f32.gmra.mxu0 %v2096
    %v3276 = vpop.f32.mrf.mxu0
    %v3277 = vadd.f32 %v2892, %v3276
    %v3278 = vpop.f32.mrf.mxu0
    %3279 = vmatprep.mubr.f32.mxu0 %v2106
    %3280 = vmatmul.mubr.f32.gmra.mxu0 %v2105
    %v3281 = vpop.f32.mrf.mxu0
    %v3282 = vadd.f32 %v2897, %v3281
    %v3283 = vpop.f32.mrf.mxu0
    %3284 = vmatprep.mubr.f32.mxu0 %v2115
    %3285 = vmatmul.mubr.f32.gmra.mxu0 %v2114
    %v3286 = vpop.f32.mrf.mxu0
    %v3287 = vadd.f32 %v2902, %v3286
    %v3288 = vpop.f32.mrf.mxu0
    %3289 = vmatprep.mubr.f32.mxu0 %v2124
    %3290 = vmatmul.mubr.f32.gmra.mxu0 %v2123
    %v3291 = vpop.f32.mrf.mxu0
    %v3292 = vadd.f32 %v2907, %v3291
    %v3293 = vpop.f32.mrf.mxu0
    %3294 = vmatprep.mubr.f32.mxu0 %v2133
    %3295 = vmatmul.mubr.f32.gmra.mxu0 %v2132
    %v3296 = vpop.f32.mrf.mxu0
    %v3297 = vadd.f32 %v2912, %v3296
    %v3298 = vpop.f32.mrf.mxu0
    %3299 = vmatprep.mubr.f32.mxu0 %v2142
    %3300 = vmatmul.mubr.f32.gmra.mxu0 %v2141
    %v3301 = vpop.f32.mrf.mxu0
    %v3302 = vadd.f32 %v2917, %v3301
    %v3303 = vpop.f32.mrf.mxu0
    %3304 = vmatprep.mubr.f32.mxu0 %v2151
    %3305 = vmatmul.mubr.f32.gmra.mxu0 %v2150
    %v3306 = vpop.f32.mrf.mxu0
    %v3307 = vadd.f32 %v2922, %v3306
    %v3308 = vpop.f32.mrf.mxu0
    %3309 = vdwg.mxu0
    %3310 = vmatprep.subr.mxu0 0.0
    %3311 = vmatpush1.msra.mxu0 %v393
    %3312 = vmatprep.subr.mxu0 0.0
    %3313 = vmatpush1.msra.mxu0 %v392
    %3314 = vmatprep.subr.mxu0 0.0
    %3315 = vmatpush1.msra.mxu0 %v391
    %3316 = vmatprep.subr.mxu0 0.0
    %3317 = vmatpush1.msra.mxu0 %v390
    %3318 = vmatprep.subr.mxu0 0.0
    %3319 = vmatpush1.msra.mxu0 %v389
    %3320 = vmatprep.subr.mxu0 0.0
    %3321 = vmatpush1.msra.mxu0 %v388
    %3322 = vmatprep.subr.mxu0 0.0
    %3323 = vmatpush1.msra.mxu0 %v387
    %3324 = vmatprep.subr.mxu0 0.0
    %3325 = vmatpush1.msra.mxu0 %v386
    %3326 = vmatprep.subr.mxu0 0.0
    %3327 = vmatpush1.msra.mxu0 %v385
    %3328 = vmatprep.subr.mxu0 0.0
    %3329 = vmatpush1.msra.mxu0 %v384
    %3330 = vmatprep.subr.mxu0 0.0
    %3331 = vmatpush1.msra.mxu0 %v383
    %3332 = vmatprep.subr.mxu0 0.0
    %3333 = vmatpush1.msra.mxu0 %v382
    %3334 = vmatprep.subr.mxu0 0.0
    %3335 = vmatpush1.msra.mxu0 %v381
    %3336 = vmatprep.subr.mxu0 0.0
    %3337 = vmatpush1.msra.mxu0 %v380
    %3338 = vmatprep.subr.mxu0 0.0
    %3339 = vmatpush1.msra.mxu0 %v379
    %3340 = vmatprep.subr.mxu0 0.0
    %3341 = vmatpush1.msra.mxu0 %v378
    %3342 = vmatprep.subr.mxu0 0.0
    %3343 = vmatpush2.msra.mxu0 %v409
    %3344 = vmatprep.subr.mxu0 0.0
    %3345 = vmatpush2.msra.mxu0 %v408
    %3346 = vmatprep.subr.mxu0 0.0
    %3347 = vmatpush2.msra.mxu0 %v407
    %3348 = vmatprep.subr.mxu0 0.0
    %3349 = vmatpush2.msra.mxu0 %v406
    %3350 = vmatprep.subr.mxu0 0.0
    %3351 = vmatpush2.msra.mxu0 %v405
    %3352 = vmatprep.subr.mxu0 0.0
    %3353 = vmatpush2.msra.mxu0 %v404
    %3354 = vmatprep.subr.mxu0 0.0
    %3355 = vmatpush2.msra.mxu0 %v403
    %3356 = vmatprep.subr.mxu0 0.0
    %3357 = vmatpush2.msra.mxu0 %v402
    %3358 = vmatprep.subr.mxu0 0.0
    %3359 = vmatpush2.msra.mxu0 %v401
    %3360 = vmatprep.subr.mxu0 0.0
    %3361 = vmatpush2.msra.mxu0 %v400
    %3362 = vmatprep.subr.mxu0 0.0
    %3363 = vmatpush2.msra.mxu0 %v399
    %3364 = vmatprep.subr.mxu0 0.0
    %3365 = vmatpush2.msra.mxu0 %v398
    %3366 = vmatprep.subr.mxu0 0.0
    %3367 = vmatpush2.msra.mxu0 %v397
    %3368 = vmatprep.subr.mxu0 0.0
    %3369 = vmatpush2.msra.mxu0 %v396
    %3370 = vmatprep.subr.mxu0 0.0
    %3371 = vmatpush2.msra.mxu0 %v395
    %3372 = vmatprep.subr.mxu0 0.0
    %3373 = vmatpush2.msra.mxu0 %v394
    %3374 = vmatprep.mubr.f32.mxu0 %v1586
    %3375 = vmatmul.mubr.f32.gmra.mxu0 %v1585
    %v3376 = vpop.f32.mrf.mxu0
    %v3377 = vadd.f32 %v2992, %v3376
    %v3378 = vpop.f32.mrf.mxu0
    %3379 = vmatprep.mubr.f32.mxu0 %v1595
    %3380 = vmatmul.mubr.f32.gmra.mxu0 %v1594
    %v3381 = vpop.f32.mrf.mxu0
    %v3382 = vadd.f32 %v2997, %v3381
    %v3383 = vpop.f32.mrf.mxu0
    %3384 = vmatprep.mubr.f32.mxu0 %v1604
    %3385 = vmatmul.mubr.f32.gmra.mxu0 %v1603
    %v3386 = vpop.f32.mrf.mxu0
    %v3387 = vadd.f32 %v3002, %v3386
    %v3388 = vpop.f32.mrf.mxu0
    %3389 = vmatprep.mubr.f32.mxu0 %v1613
    %3390 = vmatmul.mubr.f32.gmra.mxu0 %v1612
    %v3391 = vpop.f32.mrf.mxu0
    %v3392 = vadd.f32 %v3007, %v3391
    %v3393 = vpop.f32.mrf.mxu0
    %3394 = vmatprep.mubr.f32.mxu0 %v1622
    %3395 = vmatmul.mubr.f32.gmra.mxu0 %v1621
    %v3396 = vpop.f32.mrf.mxu0
    %v3397 = vadd.f32 %v3012, %v3396
    %v3398 = vpop.f32.mrf.mxu0
    %3399 = vmatprep.mubr.f32.mxu0 %v1631
    %3400 = vmatmul.mubr.f32.gmra.mxu0 %v1630
    %v3401 = vpop.f32.mrf.mxu0
    %v3402 = vadd.f32 %v3017, %v3401
    %v3403 = vpop.f32.mrf.mxu0
    %3404 = vmatprep.mubr.f32.mxu0 %v1640
    %3405 = vmatmul.mubr.f32.gmra.mxu0 %v1639
    %v3406 = vpop.f32.mrf.mxu0
    %v3407 = vadd.f32 %v3022, %v3406
    %v3408 = vpop.f32.mrf.mxu0
    %3409 = vmatprep.mubr.f32.mxu0 %v1649
    %3410 = vmatmul.mubr.f32.gmra.mxu0 %v1648
    %v3411 = vpop.f32.mrf.mxu0
    %v3412 = vadd.f32 %v3027, %v3411
    %v3413 = vpop.f32.mrf.mxu0
    %3414 = vmatprep.mubr.f32.mxu0 %v1658
    %3415 = vmatmul.mubr.f32.gmra.mxu0 %v1657
    %v3416 = vpop.f32.mrf.mxu0
    %v3417 = vadd.f32 %v3032, %v3416
    %v3418 = vpop.f32.mrf.mxu0
    %3419 = vmatprep.mubr.f32.mxu0 %v1667
    %3420 = vmatmul.mubr.f32.gmra.mxu0 %v1666
    %v3421 = vpop.f32.mrf.mxu0
    %v3422 = vadd.f32 %v3037, %v3421
    %v3423 = vpop.f32.mrf.mxu0
    %3424 = vmatprep.mubr.f32.mxu0 %v1676
    %3425 = vmatmul.mubr.f32.gmra.mxu0 %v1675
    %v3426 = vpop.f32.mrf.mxu0
    %v3427 = vadd.f32 %v3042, %v3426
    %v3428 = vpop.f32.mrf.mxu0
    %3429 = vmatprep.mubr.f32.mxu0 %v1685
    %3430 = vmatmul.mubr.f32.gmra.mxu0 %v1684
    %v3431 = vpop.f32.mrf.mxu0
    %v3432 = vadd.f32 %v3047, %v3431
    %v3433 = vpop.f32.mrf.mxu0
    %3434 = vmatprep.mubr.f32.mxu0 %v1694
    %3435 = vmatmul.mubr.f32.gmra.mxu0 %v1693
    %v3436 = vpop.f32.mrf.mxu0
    %v3437 = vadd.f32 %v3052, %v3436
    %v3438 = vpop.f32.mrf.mxu0
    %3439 = vmatprep.mubr.f32.mxu0 %v1703
    %3440 = vmatmul.mubr.f32.gmra.mxu0 %v1702
    %v3441 = vpop.f32.mrf.mxu0
    %v3442 = vadd.f32 %v3057, %v3441
    %v3443 = vpop.f32.mrf.mxu0
    %3444 = vmatprep.mubr.f32.mxu0 %v1712
    %3445 = vmatmul.mubr.f32.gmra.mxu0 %v1711
    %v3446 = vpop.f32.mrf.mxu0
    %v3447 = vadd.f32 %v3062, %v3446
    %v3448 = vpop.f32.mrf.mxu0
    %3449 = vmatprep.mubr.f32.mxu0 %v1721
    %3450 = vmatmul.mubr.f32.gmra.mxu0 %v1720
    %v3451 = vpop.f32.mrf.mxu0
    %v3452 = vadd.f32 %v3067, %v3451
    %v3453 = vpop.f32.mrf.mxu0
    %3454 = vmatprep.mubr.f32.mxu0 %v1730
    %3455 = vmatmul.mubr.f32.gmra.mxu0 %v1729
    %v3456 = vpop.f32.mrf.mxu0
    %v3457 = vadd.f32 %v3072, %v3456
    %v3458 = vpop.f32.mrf.mxu0
    %3459 = vmatprep.mubr.f32.mxu0 %v1739
    %3460 = vmatmul.mubr.f32.gmra.mxu0 %v1738
    %v3461 = vpop.f32.mrf.mxu0
    %v3462 = vadd.f32 %v3077, %v3461
    %v3463 = vpop.f32.mrf.mxu0
    %3464 = vmatprep.mubr.f32.mxu0 %v1748
    %3465 = vmatmul.mubr.f32.gmra.mxu0 %v1747
    %v3466 = vpop.f32.mrf.mxu0
    %v3467 = vadd.f32 %v3082, %v3466
    %v3468 = vpop.f32.mrf.mxu0
    %3469 = vmatprep.mubr.f32.mxu0 %v1757
    %3470 = vmatmul.mubr.f32.gmra.mxu0 %v1756
    %v3471 = vpop.f32.mrf.mxu0
    %v3472 = vadd.f32 %v3087, %v3471
    %v3473 = vpop.f32.mrf.mxu0
    %3474 = vmatprep.mubr.f32.mxu0 %v1766
    %3475 = vmatmul.mubr.f32.gmra.mxu0 %v1765
    %v3476 = vpop.f32.mrf.mxu0
    %v3477 = vadd.f32 %v3092, %v3476
    %v3478 = vpop.f32.mrf.mxu0
    %3479 = vmatprep.mubr.f32.mxu0 %v1775
    %3480 = vmatmul.mubr.f32.gmra.mxu0 %v1774
    %v3481 = vpop.f32.mrf.mxu0
    %v3482 = vadd.f32 %v3097, %v3481
    %v3483 = vpop.f32.mrf.mxu0
    %3484 = vmatprep.mubr.f32.mxu0 %v1784
    %3485 = vmatmul.mubr.f32.gmra.mxu0 %v1783
    %v3486 = vpop.f32.mrf.mxu0
    %v3487 = vadd.f32 %v3102, %v3486
    %v3488 = vpop.f32.mrf.mxu0
    %3489 = vmatprep.mubr.f32.mxu0 %v1793
    %3490 = vmatmul.mubr.f32.gmra.mxu0 %v1792
    %v3491 = vpop.f32.mrf.mxu0
    %v3492 = vadd.f32 %v3107, %v3491
    %v3493 = vpop.f32.mrf.mxu0
    %3494 = vmatprep.mubr.f32.mxu0 %v1802
    %3495 = vmatmul.mubr.f32.gmra.mxu0 %v1801
    %v3496 = vpop.f32.mrf.mxu0
    %v3497 = vadd.f32 %v3112, %v3496
    %v3498 = vpop.f32.mrf.mxu0
    %3499 = vmatprep.mubr.f32.mxu0 %v1811
    %3500 = vmatmul.mubr.f32.gmra.mxu0 %v1810
    %v3501 = vpop.f32.mrf.mxu0
    %v3502 = vadd.f32 %v3117, %v3501
    %v3503 = vpop.f32.mrf.mxu0
    %3504 = vmatprep.mubr.f32.mxu0 %v1820
    %3505 = vmatmul.mubr.f32.gmra.mxu0 %v1819
    %v3506 = vpop.f32.mrf.mxu0
    %v3507 = vadd.f32 %v3122, %v3506
    %v3508 = vpop.f32.mrf.mxu0
    %3509 = vmatprep.mubr.f32.mxu0 %v1829
    %3510 = vmatmul.mubr.f32.gmra.mxu0 %v1828
    %v3511 = vpop.f32.mrf.mxu0
    %v3512 = vadd.f32 %v3127, %v3511
    %v3513 = vpop.f32.mrf.mxu0
    %3514 = vmatprep.mubr.f32.mxu0 %v1838
    %3515 = vmatmul.mubr.f32.gmra.mxu0 %v1837
    %v3516 = vpop.f32.mrf.mxu0
    %v3517 = vadd.f32 %v3132, %v3516
    %v3518 = vpop.f32.mrf.mxu0
    %3519 = vmatprep.mubr.f32.mxu0 %v1847
    %3520 = vmatmul.mubr.f32.gmra.mxu0 %v1846
    %v3521 = vpop.f32.mrf.mxu0
    %v3522 = vadd.f32 %v3137, %v3521
    %v3523 = vpop.f32.mrf.mxu0
    %3524 = vmatprep.mubr.f32.mxu0 %v1856
    %3525 = vmatmul.mubr.f32.gmra.mxu0 %v1855
    %v3526 = vpop.f32.mrf.mxu0
    %v3527 = vadd.f32 %v3142, %v3526
    %v3528 = vpop.f32.mrf.mxu0
    %3529 = vmatprep.mubr.f32.mxu0 %v1865
    %3530 = vmatmul.mubr.f32.gmra.mxu0 %v1864
    %v3531 = vpop.f32.mrf.mxu0
    %v3532 = vadd.f32 %v3147, %v3531
    %v3533 = vpop.f32.mrf.mxu0
    %3534 = vmatprep.mubr.f32.mxu0 %v1874
    %3535 = vmatmul.mubr.f32.gmra.mxu0 %v1873
    %v3536 = vpop.f32.mrf.mxu0
    %v3537 = vadd.f32 %v3152, %v3536
    %v3538 = vpop.f32.mrf.mxu0
    %3539 = vmatprep.mubr.f32.mxu0 %v1883
    %3540 = vmatmul.mubr.f32.gmra.mxu0 %v1882
    %v3541 = vpop.f32.mrf.mxu0
    %v3542 = vadd.f32 %v3157, %v3541
    %v3543 = vpop.f32.mrf.mxu0
    %3544 = vmatprep.mubr.f32.mxu0 %v1892
    %3545 = vmatmul.mubr.f32.gmra.mxu0 %v1891
    %v3546 = vpop.f32.mrf.mxu0
    %v3547 = vadd.f32 %v3162, %v3546
    %v3548 = vpop.f32.mrf.mxu0
    %3549 = vmatprep.mubr.f32.mxu0 %v1901
    %3550 = vmatmul.mubr.f32.gmra.mxu0 %v1900
    %v3551 = vpop.f32.mrf.mxu0
    %v3552 = vadd.f32 %v3167, %v3551
    %v3553 = vpop.f32.mrf.mxu0
    %3554 = vmatprep.mubr.f32.mxu0 %v1910
    %3555 = vmatmul.mubr.f32.gmra.mxu0 %v1909
    %v3556 = vpop.f32.mrf.mxu0
    %v3557 = vadd.f32 %v3172, %v3556
    %v3558 = vpop.f32.mrf.mxu0
    %3559 = vmatprep.mubr.f32.mxu0 %v1919
    %3560 = vmatmul.mubr.f32.gmra.mxu0 %v1918
    %v3561 = vpop.f32.mrf.mxu0
    %v3562 = vadd.f32 %v3177, %v3561
    %v3563 = vpop.f32.mrf.mxu0
    %3564 = vmatprep.mubr.f32.mxu0 %v1928
    %3565 = vmatmul.mubr.f32.gmra.mxu0 %v1927
    %v3566 = vpop.f32.mrf.mxu0
    %v3567 = vadd.f32 %v3182, %v3566
    %v3568 = vpop.f32.mrf.mxu0
    %3569 = vmatprep.mubr.f32.mxu0 %v1937
    %3570 = vmatmul.mubr.f32.gmra.mxu0 %v1936
    %v3571 = vpop.f32.mrf.mxu0
    %v3572 = vadd.f32 %v3187, %v3571
    %v3573 = vpop.f32.mrf.mxu0
    %3574 = vmatprep.mubr.f32.mxu0 %v1946
    %3575 = vmatmul.mubr.f32.gmra.mxu0 %v1945
    %v3576 = vpop.f32.mrf.mxu0
    %v3577 = vadd.f32 %v3192, %v3576
    %v3578 = vpop.f32.mrf.mxu0
    %3579 = vmatprep.mubr.f32.mxu0 %v1955
    %3580 = vmatmul.mubr.f32.gmra.mxu0 %v1954
    %v3581 = vpop.f32.mrf.mxu0
    %v3582 = vadd.f32 %v3197, %v3581
    %v3583 = vpop.f32.mrf.mxu0
    %3584 = vmatprep.mubr.f32.mxu0 %v1964
    %3585 = vmatmul.mubr.f32.gmra.mxu0 %v1963
    %v3586 = vpop.f32.mrf.mxu0
    %v3587 = vadd.f32 %v3202, %v3586
    %v3588 = vpop.f32.mrf.mxu0
    %3589 = vmatprep.mubr.f32.mxu0 %v1973
    %3590 = vmatmul.mubr.f32.gmra.mxu0 %v1972
    %v3591 = vpop.f32.mrf.mxu0
    %v3592 = vadd.f32 %v3207, %v3591
    %v3593 = vpop.f32.mrf.mxu0
    %3594 = vmatprep.mubr.f32.mxu0 %v1982
    %3595 = vmatmul.mubr.f32.gmra.mxu0 %v1981
    %v3596 = vpop.f32.mrf.mxu0
    %v3597 = vadd.f32 %v3212, %v3596
    %v3598 = vpop.f32.mrf.mxu0
    %3599 = vmatprep.mubr.f32.mxu0 %v1991
    %3600 = vmatmul.mubr.f32.gmra.mxu0 %v1990
    %v3601 = vpop.f32.mrf.mxu0
    %v3602 = vadd.f32 %v3217, %v3601
    %v3603 = vpop.f32.mrf.mxu0
    %3604 = vmatprep.mubr.f32.mxu0 %v2000
    %3605 = vmatmul.mubr.f32.gmra.mxu0 %v1999
    %v3606 = vpop.f32.mrf.mxu0
    %v3607 = vadd.f32 %v3222, %v3606
    %v3608 = vpop.f32.mrf.mxu0
    %3609 = vmatprep.mubr.f32.mxu0 %v2009
    %3610 = vmatmul.mubr.f32.gmra.mxu0 %v2008
    %v3611 = vpop.f32.mrf.mxu0
    %v3612 = vadd.f32 %v3227, %v3611
    %v3613 = vpop.f32.mrf.mxu0
    %3614 = vmatprep.mubr.f32.mxu0 %v2018
    %3615 = vmatmul.mubr.f32.gmra.mxu0 %v2017
    %v3616 = vpop.f32.mrf.mxu0
    %v3617 = vadd.f32 %v3232, %v3616
    %v3618 = vpop.f32.mrf.mxu0
    %3619 = vmatprep.mubr.f32.mxu0 %v2027
    %3620 = vmatmul.mubr.f32.gmra.mxu0 %v2026
    %v3621 = vpop.f32.mrf.mxu0
    %v3622 = vadd.f32 %v3237, %v3621
    %v3623 = vpop.f32.mrf.mxu0
    %3624 = vmatprep.mubr.f32.mxu0 %v2036
    %3625 = vmatmul.mubr.f32.gmra.mxu0 %v2035
    %v3626 = vpop.f32.mrf.mxu0
    %v3627 = vadd.f32 %v3242, %v3626
    %v3628 = vpop.f32.mrf.mxu0
    %3629 = vmatprep.mubr.f32.mxu0 %v2045
    %3630 = vmatmul.mubr.f32.gmra.mxu0 %v2044
    %v3631 = vpop.f32.mrf.mxu0
    %v3632 = vadd.f32 %v3247, %v3631
    %v3633 = vpop.f32.mrf.mxu0
    %3634 = vmatprep.mubr.f32.mxu0 %v2054
    %3635 = vmatmul.mubr.f32.gmra.mxu0 %v2053
    %v3636 = vpop.f32.mrf.mxu0
    %v3637 = vadd.f32 %v3252, %v3636
    %v3638 = vpop.f32.mrf.mxu0
    %3639 = vmatprep.mubr.f32.mxu0 %v2063
    %3640 = vmatmul.mubr.f32.gmra.mxu0 %v2062
    %v3641 = vpop.f32.mrf.mxu0
    %v3642 = vadd.f32 %v3257, %v3641
    %v3643 = vpop.f32.mrf.mxu0
    %3644 = vmatprep.mubr.f32.mxu0 %v2072
    %3645 = vmatmul.mubr.f32.gmra.mxu0 %v2071
    %v3646 = vpop.f32.mrf.mxu0
    %v3647 = vadd.f32 %v3262, %v3646
    %v3648 = vpop.f32.mrf.mxu0
    %3649 = vmatprep.mubr.f32.mxu0 %v2081
    %3650 = vmatmul.mubr.f32.gmra.mxu0 %v2080
    %v3651 = vpop.f32.mrf.mxu0
    %v3652 = vadd.f32 %v3267, %v3651
    %v3653 = vpop.f32.mrf.mxu0
    %3654 = vmatprep.mubr.f32.mxu0 %v2090
    %3655 = vmatmul.mubr.f32.gmra.mxu0 %v2089
    %v3656 = vpop.f32.mrf.mxu0
    %v3657 = vadd.f32 %v3272, %v3656
    %v3658 = vpop.f32.mrf.mxu0
    %3659 = vmatprep.mubr.f32.mxu0 %v2099
    %3660 = vmatmul.mubr.f32.gmra.mxu0 %v2098
    %v3661 = vpop.f32.mrf.mxu0
    %v3662 = vadd.f32 %v3277, %v3661
    %v3663 = vpop.f32.mrf.mxu0
    %3664 = vmatprep.mubr.f32.mxu0 %v2108
    %3665 = vmatmul.mubr.f32.gmra.mxu0 %v2107
    %v3666 = vpop.f32.mrf.mxu0
    %v3667 = vadd.f32 %v3282, %v3666
    %v3668 = vpop.f32.mrf.mxu0
    %3669 = vmatprep.mubr.f32.mxu0 %v2117
    %3670 = vmatmul.mubr.f32.gmra.mxu0 %v2116
    %v3671 = vpop.f32.mrf.mxu0
    %v3672 = vadd.f32 %v3287, %v3671
    %v3673 = vpop.f32.mrf.mxu0
    %3674 = vmatprep.mubr.f32.mxu0 %v2126
    %3675 = vmatmul.mubr.f32.gmra.mxu0 %v2125
    %v3676 = vpop.f32.mrf.mxu0
    %v3677 = vadd.f32 %v3292, %v3676
    %v3678 = vpop.f32.mrf.mxu0
    %3679 = vmatprep.mubr.f32.mxu0 %v2135
    %3680 = vmatmul.mubr.f32.gmra.mxu0 %v2134
    %v3681 = vpop.f32.mrf.mxu0
    %v3682 = vadd.f32 %v3297, %v3681
    %v3683 = vpop.f32.mrf.mxu0
    %3684 = vmatprep.mubr.f32.mxu0 %v2144
    %3685 = vmatmul.mubr.f32.gmra.mxu0 %v2143
    %v3686 = vpop.f32.mrf.mxu0
    %v3687 = vadd.f32 %v3302, %v3686
    %v3688 = vpop.f32.mrf.mxu0
    %3689 = vmatprep.mubr.f32.mxu0 %v2153
    %3690 = vmatmul.mubr.f32.gmra.mxu0 %v2152
    %v3691 = vpop.f32.mrf.mxu0
    %v3692 = vadd.f32 %v3307, %v3691
    %v3693 = vpop.f32.mrf.mxu0
    %3694 = vdwg.mxu0
    %3695 = vmatprep.subr.mxu0 0.0
    %3696 = vmatpush1.msra.mxu0 %v425
    %3697 = vmatprep.subr.mxu0 0.0
    %3698 = vmatpush1.msra.mxu0 %v424
    %3699 = vmatprep.subr.mxu0 0.0
    %3700 = vmatpush1.msra.mxu0 %v423
    %3701 = vmatprep.subr.mxu0 0.0
    %3702 = vmatpush1.msra.mxu0 %v422
    %3703 = vmatprep.subr.mxu0 0.0
    %3704 = vmatpush1.msra.mxu0 %v421
    %3705 = vmatprep.subr.mxu0 0.0
    %3706 = vmatpush1.msra.mxu0 %v420
    %3707 = vmatprep.subr.mxu0 0.0
    %3708 = vmatpush1.msra.mxu0 %v419
    %3709 = vmatprep.subr.mxu0 0.0
    %3710 = vmatpush1.msra.mxu0 %v418
    %3711 = vmatprep.subr.mxu0 0.0
    %3712 = vmatpush1.msra.mxu0 %v417
    %3713 = vmatprep.subr.mxu0 0.0
    %3714 = vmatpush1.msra.mxu0 %v416
    %3715 = vmatprep.subr.mxu0 0.0
    %3716 = vmatpush1.msra.mxu0 %v415
    %3717 = vmatprep.subr.mxu0 0.0
    %3718 = vmatpush1.msra.mxu0 %v414
    %3719 = vmatprep.subr.mxu0 0.0
    %3720 = vmatpush1.msra.mxu0 %v413
    %3721 = vmatprep.subr.mxu0 0.0
    %3722 = vmatpush1.msra.mxu0 %v412
    %3723 = vmatprep.subr.mxu0 0.0
    %3724 = vmatpush1.msra.mxu0 %v411
    %3725 = vmatprep.subr.mxu0 0.0
    %3726 = vmatpush1.msra.mxu0 %v410
    %3727 = vmatprep.subr.mxu0 0.0
    %3728 = vmatpush2.msra.mxu0 0.0
    %3729 = vmatprep.subr.mxu0 0.0
    %3730 = vmatpush2.msra.mxu0 0.0
    %3731 = vmatprep.subr.mxu0 0.0
    %3732 = vmatpush2.msra.mxu0 0.0
    %3733 = vmatprep.subr.mxu0 0.0
    %3734 = vmatpush2.msra.mxu0 0.0
    %3735 = vmatprep.subr.mxu0 0.0
    %3736 = vmatpush2.msra.mxu0 0.0
    %3737 = vmatprep.subr.mxu0 0.0
    %3738 = vmatpush2.msra.mxu0 0.0
    %3739 = vmatprep.subr.mxu0 0.0
    %3740 = vmatpush2.msra.mxu0 0.0
    %3741 = vmatprep.subr.mxu0 0.0
    %3742 = vmatpush2.msra.mxu0 0.0
    %3743 = vmatprep.subr.mxu0 0.0
    %3744 = vmatpush2.msra.mxu0 0.0
    %3745 = vmatprep.subr.mxu0 0.0
    %3746 = vmatpush2.msra.mxu0 0.0
    %3747 = vmatprep.subr.mxu0 0.0
    %3748 = vmatpush2.msra.mxu0 0.0
    %3749 = vmatprep.subr.mxu0 0.0
    %3750 = vmatpush2.msra.mxu0 0.0
    %3751 = vmatprep.subr.mxu0 0.0
    %3752 = vmatpush2.msra.mxu0 0.0
    %3753 = vmatprep.subr.mxu0 0.0
    %3754 = vmatpush2.msra.mxu0 0.0
    %3755 = vmatprep.subr.mxu0 0.0
    %3756 = vmatpush2.msra.mxu0 0.0
    %3757 = vmatprep.subr.mxu0 0.0
    %3758 = vmatpush2.msra.mxu0 0.0
    %3759 = vmatprep.mubr.f32.mxu0 0.0
    %3760 = vmatmul.mubr.f32.gmra.mxu0 %v1587
    %v3761 = vpop.f32.mrf.mxu0
    %v3762 = vadd.f32 %v3377, %v3761
    %v3763 = vpop.f32.mrf.mxu0
    %3764 = vmatprep.mubr.f32.mxu0 0.0
    %3765 = vmatmul.mubr.f32.gmra.mxu0 %v1596
    %v3766 = vpop.f32.mrf.mxu0
    %v3767 = vadd.f32 %v3382, %v3766
    %v3768 = vpop.f32.mrf.mxu0
    %3769 = vmatprep.mubr.f32.mxu0 0.0
    %3770 = vmatmul.mubr.f32.gmra.mxu0 %v1605
    %v3771 = vpop.f32.mrf.mxu0
    %v3772 = vadd.f32 %v3387, %v3771
    %v3773 = vpop.f32.mrf.mxu0
    %3774 = vmatprep.mubr.f32.mxu0 0.0
    %3775 = vmatmul.mubr.f32.gmra.mxu0 %v1614
    %v3776 = vpop.f32.mrf.mxu0
    %v3777 = vadd.f32 %v3392, %v3776
    %v3778 = vpop.f32.mrf.mxu0
    %3779 = vmatprep.mubr.f32.mxu0 0.0
    %3780 = vmatmul.mubr.f32.gmra.mxu0 %v1623
    %v3781 = vpop.f32.mrf.mxu0
    %v3782 = vadd.f32 %v3397, %v3781
    %v3783 = vpop.f32.mrf.mxu0
    %3784 = vmatprep.mubr.f32.mxu0 0.0
    %3785 = vmatmul.mubr.f32.gmra.mxu0 %v1632
    %v3786 = vpop.f32.mrf.mxu0
    %v3787 = vadd.f32 %v3402, %v3786
    %v3788 = vpop.f32.mrf.mxu0
    %3789 = vmatprep.mubr.f32.mxu0 0.0
    %3790 = vmatmul.mubr.f32.gmra.mxu0 %v1641
    %v3791 = vpop.f32.mrf.mxu0
    %v3792 = vadd.f32 %v3407, %v3791
    %v3793 = vpop.f32.mrf.mxu0
    %3794 = vmatprep.mubr.f32.mxu0 0.0
    %3795 = vmatmul.mubr.f32.gmra.mxu0 %v1650
    %v3796 = vpop.f32.mrf.mxu0
    %v3797 = vadd.f32 %v3412, %v3796
    %v3798 = vpop.f32.mrf.mxu0
    %3799 = vmatprep.mubr.f32.mxu0 0.0
    %3800 = vmatmul.mubr.f32.gmra.mxu0 %v1659
    %v3801 = vpop.f32.mrf.mxu0
    %v3802 = vadd.f32 %v3417, %v3801
    %v3803 = vpop.f32.mrf.mxu0
    %3804 = vmatprep.mubr.f32.mxu0 0.0
    %3805 = vmatmul.mubr.f32.gmra.mxu0 %v1668
    %v3806 = vpop.f32.mrf.mxu0
    %v3807 = vadd.f32 %v3422, %v3806
    %v3808 = vpop.f32.mrf.mxu0
    %3809 = vmatprep.mubr.f32.mxu0 0.0
    %3810 = vmatmul.mubr.f32.gmra.mxu0 %v1677
    %v3811 = vpop.f32.mrf.mxu0
    %v3812 = vadd.f32 %v3427, %v3811
    %v3813 = vpop.f32.mrf.mxu0
    %3814 = vmatprep.mubr.f32.mxu0 0.0
    %3815 = vmatmul.mubr.f32.gmra.mxu0 %v1686
    %v3816 = vpop.f32.mrf.mxu0
    %v3817 = vadd.f32 %v3432, %v3816
    %v3818 = vpop.f32.mrf.mxu0
    %3819 = vmatprep.mubr.f32.mxu0 0.0
    %3820 = vmatmul.mubr.f32.gmra.mxu0 %v1695
    %v3821 = vpop.f32.mrf.mxu0
    %v3822 = vadd.f32 %v3437, %v3821
    %v3823 = vpop.f32.mrf.mxu0
    %3824 = vmatprep.mubr.f32.mxu0 0.0
    %3825 = vmatmul.mubr.f32.gmra.mxu0 %v1704
    %v3826 = vpop.f32.mrf.mxu0
    %v3827 = vadd.f32 %v3442, %v3826
    %v3828 = vpop.f32.mrf.mxu0
    %3829 = vmatprep.mubr.f32.mxu0 0.0
    %3830 = vmatmul.mubr.f32.gmra.mxu0 %v1713
    %v3831 = vpop.f32.mrf.mxu0
    %v3832 = vadd.f32 %v3447, %v3831
    %v3833 = vpop.f32.mrf.mxu0
    %3834 = vmatprep.mubr.f32.mxu0 0.0
    %3835 = vmatmul.mubr.f32.gmra.mxu0 %v1722
    %v3836 = vpop.f32.mrf.mxu0
    %v3837 = vadd.f32 %v3452, %v3836
    %v3838 = vpop.f32.mrf.mxu0
    %3839 = vmatprep.mubr.f32.mxu0 0.0
    %3840 = vmatmul.mubr.f32.gmra.mxu0 %v1731
    %v3841 = vpop.f32.mrf.mxu0
    %v3842 = vadd.f32 %v3457, %v3841
    %v3843 = vpop.f32.mrf.mxu0
    %3844 = vmatprep.mubr.f32.mxu0 0.0
    %3845 = vmatmul.mubr.f32.gmra.mxu0 %v1740
    %v3846 = vpop.f32.mrf.mxu0
    %v3847 = vadd.f32 %v3462, %v3846
    %v3848 = vpop.f32.mrf.mxu0
    %3849 = vmatprep.mubr.f32.mxu0 0.0
    %3850 = vmatmul.mubr.f32.gmra.mxu0 %v1749
    %v3851 = vpop.f32.mrf.mxu0
    %v3852 = vadd.f32 %v3467, %v3851
    %v3853 = vpop.f32.mrf.mxu0
    %3854 = vmatprep.mubr.f32.mxu0 0.0
    %3855 = vmatmul.mubr.f32.gmra.mxu0 %v1758
    %v3856 = vpop.f32.mrf.mxu0
    %v3857 = vadd.f32 %v3472, %v3856
    %v3858 = vpop.f32.mrf.mxu0
    %3859 = vmatprep.mubr.f32.mxu0 0.0
    %3860 = vmatmul.mubr.f32.gmra.mxu0 %v1767
    %v3861 = vpop.f32.mrf.mxu0
    %v3862 = vadd.f32 %v3477, %v3861
    %v3863 = vpop.f32.mrf.mxu0
    %3864 = vmatprep.mubr.f32.mxu0 0.0
    %3865 = vmatmul.mubr.f32.gmra.mxu0 %v1776
    %v3866 = vpop.f32.mrf.mxu0
    %v3867 = vadd.f32 %v3482, %v3866
    %v3868 = vpop.f32.mrf.mxu0
    %3869 = vmatprep.mubr.f32.mxu0 0.0
    %3870 = vmatmul.mubr.f32.gmra.mxu0 %v1785
    %v3871 = vpop.f32.mrf.mxu0
    %v3872 = vadd.f32 %v3487, %v3871
    %v3873 = vpop.f32.mrf.mxu0
    %3874 = vmatprep.mubr.f32.mxu0 0.0
    %3875 = vmatmul.mubr.f32.gmra.mxu0 %v1794
    %v3876 = vpop.f32.mrf.mxu0
    %v3877 = vadd.f32 %v3492, %v3876
    %v3878 = vpop.f32.mrf.mxu0
    %3879 = vmatprep.mubr.f32.mxu0 0.0
    %3880 = vmatmul.mubr.f32.gmra.mxu0 %v1803
    %v3881 = vpop.f32.mrf.mxu0
    %v3882 = vadd.f32 %v3497, %v3881
    %v3883 = vpop.f32.mrf.mxu0
    %3884 = vmatprep.mubr.f32.mxu0 0.0
    %3885 = vmatmul.mubr.f32.gmra.mxu0 %v1812
    %v3886 = vpop.f32.mrf.mxu0
    %v3887 = vadd.f32 %v3502, %v3886
    %v3888 = vpop.f32.mrf.mxu0
    %3889 = vmatprep.mubr.f32.mxu0 0.0
    %3890 = vmatmul.mubr.f32.gmra.mxu0 %v1821
    %v3891 = vpop.f32.mrf.mxu0
    %v3892 = vadd.f32 %v3507, %v3891
    %v3893 = vpop.f32.mrf.mxu0
    %3894 = vmatprep.mubr.f32.mxu0 0.0
    %3895 = vmatmul.mubr.f32.gmra.mxu0 %v1830
    %v3896 = vpop.f32.mrf.mxu0
    %v3897 = vadd.f32 %v3512, %v3896
    %v3898 = vpop.f32.mrf.mxu0
    %3899 = vmatprep.mubr.f32.mxu0 0.0
    %3900 = vmatmul.mubr.f32.gmra.mxu0 %v1839
    %v3901 = vpop.f32.mrf.mxu0
    %v3902 = vadd.f32 %v3517, %v3901
    %v3903 = vpop.f32.mrf.mxu0
    %3904 = vmatprep.mubr.f32.mxu0 0.0
    %3905 = vmatmul.mubr.f32.gmra.mxu0 %v1848
    %v3906 = vpop.f32.mrf.mxu0
    %v3907 = vadd.f32 %v3522, %v3906
    %v3908 = vpop.f32.mrf.mxu0
    %3909 = vmatprep.mubr.f32.mxu0 0.0
    %3910 = vmatmul.mubr.f32.gmra.mxu0 %v1857
    %v3911 = vpop.f32.mrf.mxu0
    %v3912 = vadd.f32 %v3527, %v3911
    %v3913 = vpop.f32.mrf.mxu0
    %3914 = vmatprep.mubr.f32.mxu0 0.0
    %3915 = vmatmul.mubr.f32.gmra.mxu0 %v1866
    %v3916 = vpop.f32.mrf.mxu0
    %v3917 = vadd.f32 %v3532, %v3916
    %v3918 = vpop.f32.mrf.mxu0
    %3919 = vmatprep.mubr.f32.mxu0 0.0
    %3920 = vmatmul.mubr.f32.gmra.mxu0 %v1875
    %v3921 = vpop.f32.mrf.mxu0
    %v3922 = vadd.f32 %v3537, %v3921
    %v3923 = vpop.f32.mrf.mxu0
    %3924 = vmatprep.mubr.f32.mxu0 0.0
    %3925 = vmatmul.mubr.f32.gmra.mxu0 %v1884
    %v3926 = vpop.f32.mrf.mxu0
    %v3927 = vadd.f32 %v3542, %v3926
    %v3928 = vpop.f32.mrf.mxu0
    %3929 = vmatprep.mubr.f32.mxu0 0.0
    %3930 = vmatmul.mubr.f32.gmra.mxu0 %v1893
    %v3931 = vpop.f32.mrf.mxu0
    %v3932 = vadd.f32 %v3547, %v3931
    %v3933 = vpop.f32.mrf.mxu0
    %3934 = vmatprep.mubr.f32.mxu0 0.0
    %3935 = vmatmul.mubr.f32.gmra.mxu0 %v1902
    %v3936 = vpop.f32.mrf.mxu0
    %v3937 = vadd.f32 %v3552, %v3936
    %v3938 = vpop.f32.mrf.mxu0
    %3939 = vmatprep.mubr.f32.mxu0 0.0
    %3940 = vmatmul.mubr.f32.gmra.mxu0 %v1911
    %v3941 = vpop.f32.mrf.mxu0
    %v3942 = vadd.f32 %v3557, %v3941
    %v3943 = vpop.f32.mrf.mxu0
    %3944 = vmatprep.mubr.f32.mxu0 0.0
    %3945 = vmatmul.mubr.f32.gmra.mxu0 %v1920
    %v3946 = vpop.f32.mrf.mxu0
    %v3947 = vadd.f32 %v3562, %v3946
    %v3948 = vpop.f32.mrf.mxu0
    %3949 = vmatprep.mubr.f32.mxu0 0.0
    %3950 = vmatmul.mubr.f32.gmra.mxu0 %v1929
    %v3951 = vpop.f32.mrf.mxu0
    %v3952 = vadd.f32 %v3567, %v3951
    %v3953 = vpop.f32.mrf.mxu0
    %3954 = vmatprep.mubr.f32.mxu0 0.0
    %3955 = vmatmul.mubr.f32.gmra.mxu0 %v1938
    %v3956 = vpop.f32.mrf.mxu0
    %v3957 = vadd.f32 %v3572, %v3956
    %v3958 = vpop.f32.mrf.mxu0
    %3959 = vmatprep.mubr.f32.mxu0 0.0
    %3960 = vmatmul.mubr.f32.gmra.mxu0 %v1947
    %v3961 = vpop.f32.mrf.mxu0
    %v3962 = vadd.f32 %v3577, %v3961
    %v3963 = vpop.f32.mrf.mxu0
    %3964 = vmatprep.mubr.f32.mxu0 0.0
    %3965 = vmatmul.mubr.f32.gmra.mxu0 %v1956
    %v3966 = vpop.f32.mrf.mxu0
    %v3967 = vadd.f32 %v3582, %v3966
    %v3968 = vpop.f32.mrf.mxu0
    %3969 = vmatprep.mubr.f32.mxu0 0.0
    %3970 = vmatmul.mubr.f32.gmra.mxu0 %v1965
    %v3971 = vpop.f32.mrf.mxu0
    %v3972 = vadd.f32 %v3587, %v3971
    %v3973 = vpop.f32.mrf.mxu0
    %3974 = vmatprep.mubr.f32.mxu0 0.0
    %3975 = vmatmul.mubr.f32.gmra.mxu0 %v1974
    %v3976 = vpop.f32.mrf.mxu0
    %v3977 = vadd.f32 %v3592, %v3976
    %v3978 = vpop.f32.mrf.mxu0
    %3979 = vmatprep.mubr.f32.mxu0 0.0
    %3980 = vmatmul.mubr.f32.gmra.mxu0 %v1983
    %v3981 = vpop.f32.mrf.mxu0
    %v3982 = vadd.f32 %v3597, %v3981
    %v3983 = vpop.f32.mrf.mxu0
    %3984 = vmatprep.mubr.f32.mxu0 0.0
    %3985 = vmatmul.mubr.f32.gmra.mxu0 %v1992
    %v3986 = vpop.f32.mrf.mxu0
    %v3987 = vadd.f32 %v3602, %v3986
    %v3988 = vpop.f32.mrf.mxu0
    %3989 = vmatprep.mubr.f32.mxu0 0.0
    %3990 = vmatmul.mubr.f32.gmra.mxu0 %v2001
    %v3991 = vpop.f32.mrf.mxu0
    %v3992 = vadd.f32 %v3607, %v3991
    %v3993 = vpop.f32.mrf.mxu0
    %3994 = vmatprep.mubr.f32.mxu0 0.0
    %3995 = vmatmul.mubr.f32.gmra.mxu0 %v2010
    %v3996 = vpop.f32.mrf.mxu0
    %v3997 = vadd.f32 %v3612, %v3996
    %v3998 = vpop.f32.mrf.mxu0
    %3999 = vmatprep.mubr.f32.mxu0 0.0
    %4000 = vmatmul.mubr.f32.gmra.mxu0 %v2019
    %v4001 = vpop.f32.mrf.mxu0
    %v4002 = vadd.f32 %v3617, %v4001
    %v4003 = vpop.f32.mrf.mxu0
    %4004 = vmatprep.mubr.f32.mxu0 0.0
    %4005 = vmatmul.mubr.f32.gmra.mxu0 %v2028
    %v4006 = vpop.f32.mrf.mxu0
    %v4007 = vadd.f32 %v3622, %v4006
    %v4008 = vpop.f32.mrf.mxu0
    %4009 = vmatprep.mubr.f32.mxu0 0.0
    %4010 = vmatmul.mubr.f32.gmra.mxu0 %v2037
    %v4011 = vpop.f32.mrf.mxu0
    %v4012 = vadd.f32 %v3627, %v4011
    %v4013 = vpop.f32.mrf.mxu0
    %4014 = vmatprep.mubr.f32.mxu0 0.0
    %4015 = vmatmul.mubr.f32.gmra.mxu0 %v2046
    %v4016 = vpop.f32.mrf.mxu0
    %v4017 = vadd.f32 %v3632, %v4016
    %v4018 = vpop.f32.mrf.mxu0
    %4019 = vmatprep.mubr.f32.mxu0 0.0
    %4020 = vmatmul.mubr.f32.gmra.mxu0 %v2055
    %v4021 = vpop.f32.mrf.mxu0
    %v4022 = vadd.f32 %v3637, %v4021
    %v4023 = vpop.f32.mrf.mxu0
    %4024 = vmatprep.mubr.f32.mxu0 0.0
    %4025 = vmatmul.mubr.f32.gmra.mxu0 %v2064
    %v4026 = vpop.f32.mrf.mxu0
    %v4027 = vadd.f32 %v3642, %v4026
    %v4028 = vpop.f32.mrf.mxu0
    %4029 = vmatprep.mubr.f32.mxu0 0.0
    %4030 = vmatmul.mubr.f32.gmra.mxu0 %v2073
    %v4031 = vpop.f32.mrf.mxu0
    %v4032 = vadd.f32 %v3647, %v4031
    %v4033 = vpop.f32.mrf.mxu0
    %4034 = vmatprep.mubr.f32.mxu0 0.0
    %4035 = vmatmul.mubr.f32.gmra.mxu0 %v2082
    %v4036 = vpop.f32.mrf.mxu0
    %v4037 = vadd.f32 %v3652, %v4036
    %v4038 = vpop.f32.mrf.mxu0
    %4039 = vmatprep.mubr.f32.mxu0 0.0
    %4040 = vmatmul.mubr.f32.gmra.mxu0 %v2091
    %v4041 = vpop.f32.mrf.mxu0
    %v4042 = vadd.f32 %v3657, %v4041
    %v4043 = vpop.f32.mrf.mxu0
    %4044 = vmatprep.mubr.f32.mxu0 0.0
    %4045 = vmatmul.mubr.f32.gmra.mxu0 %v2100
    %v4046 = vpop.f32.mrf.mxu0
    %v4047 = vadd.f32 %v3662, %v4046
    %v4048 = vpop.f32.mrf.mxu0
    %4049 = vmatprep.mubr.f32.mxu0 0.0
    %4050 = vmatmul.mubr.f32.gmra.mxu0 %v2109
    %v4051 = vpop.f32.mrf.mxu0
    %v4052 = vadd.f32 %v3667, %v4051
    %v4053 = vpop.f32.mrf.mxu0
    %4054 = vmatprep.mubr.f32.mxu0 0.0
    %4055 = vmatmul.mubr.f32.gmra.mxu0 %v2118
    %v4056 = vpop.f32.mrf.mxu0
    %v4057 = vadd.f32 %v3672, %v4056
    %v4058 = vpop.f32.mrf.mxu0
    %4059 = vmatprep.mubr.f32.mxu0 0.0
    %4060 = vmatmul.mubr.f32.gmra.mxu0 %v2127
    %v4061 = vpop.f32.mrf.mxu0
    %v4062 = vadd.f32 %v3677, %v4061
    %v4063 = vpop.f32.mrf.mxu0
    %4064 = vmatprep.mubr.f32.mxu0 0.0
    %4065 = vmatmul.mubr.f32.gmra.mxu0 %v2136
    %v4066 = vpop.f32.mrf.mxu0
    %v4067 = vadd.f32 %v3682, %v4066
    %v4068 = vpop.f32.mrf.mxu0
    %4069 = vmatprep.mubr.f32.mxu0 0.0
    %4070 = vmatmul.mubr.f32.gmra.mxu0 %v2145
    %v4071 = vpop.f32.mrf.mxu0
    %v4072 = vadd.f32 %v3687, %v4071
    %v4073 = vpop.f32.mrf.mxu0
    %4074 = vmatprep.mubr.f32.mxu0 0.0
    %4075 = vmatmul.mubr.f32.gmra.mxu0 %v2154
    %v4076 = vpop.f32.mrf.mxu0
    %v4077 = vadd.f32 %v3692, %v4076
    %v4078 = vpop.f32.mrf.mxu0
    %4079 = vdwg.mxu0
    %v4080 = vld [vmem:[%s2] sm:$0x1]
    %v4081 = vld [vmem:[%s3] sm:$0x1]
    %v4082 = vadd.f32 %v3762, %v3767
    %v4083 = vadd.f32 %v4082, %v3772
    %v4084 = vadd.f32 %v4083, %v3777
    %v4085 = vadd.f32 %v4084, %v3782
    %v4086 = vadd.f32 %v4085, %v3787
    %v4087 = vadd.f32 %v4086, %v3792
    %v4088 = vadd.f32 %v4087, %v3797
    %v4089 = vadd.f32 %v4088, %v3802
    %v4090 = vadd.f32 %v4089, %v3807
    %v4091 = vadd.f32 %v4090, %v3812
    %v4092 = vadd.f32 %v4091, %v3817
    %v4093 = vadd.f32 %v4092, %v3822
    %v4094 = vadd.f32 %v4093, %v3827
    %v4095 = vadd.f32 %v4094, %v3832
    %v4096 = vadd.f32 %v4095, %v3837
    %v4097 = vadd.f32 %v4096, %v3842
    %v4098 = vadd.f32 %v4097, %v3847
    %v4099 = vadd.f32 %v4098, %v3852
    %v4100 = vadd.f32 %v4099, %v3857
    %v4101 = vadd.f32 %v4100, %v3862
    %v4102 = vadd.f32 %v4101, %v3867
    %v4103 = vadd.f32 %v4102, %v3872
    %v4104 = vadd.f32 %v4103, %v3877
    %v4105 = vadd.f32 %v4104, %v3882
    %v4106 = vadd.f32 %v4105, %v3887
    %v4107 = vadd.f32 %v4106, %v3892
    %v4108 = vadd.f32 %v4107, %v3897
    %v4109 = vadd.f32 %v4108, %v3902
    %v4110 = vadd.f32 %v4109, %v3907
    %v4111 = vadd.f32 %v4110, %v3912
    %v4112 = vadd.f32 %v4111, %v3917
    %v4113 = vadd.f32 %v4112, %v3922
    %v4114 = vadd.f32 %v4113, %v3927
    %v4115 = vadd.f32 %v4114, %v3932
    %v4116 = vadd.f32 %v4115, %v3937
    %v4117 = vadd.f32 %v4116, %v3942
    %v4118 = vadd.f32 %v4117, %v3947
    %v4119 = vadd.f32 %v4118, %v3952
    %v4120 = vadd.f32 %v4119, %v3957
    %v4121 = vadd.f32 %v4120, %v3962
    %v4122 = vadd.f32 %v4121, %v3967
    %v4123 = vadd.f32 %v4122, %v3972
    %v4124 = vadd.f32 %v4123, %v3977
    %v4125 = vadd.f32 %v4124, %v3982
    %v4126 = vadd.f32 %v4125, %v3987
    %v4127 = vadd.f32 %v4126, %v3992
    %v4128 = vadd.f32 %v4127, %v3997
    %v4129 = vadd.f32 %v4128, %v4002
    %v4130 = vadd.f32 %v4129, %v4007
    %v4131 = vadd.f32 %v4130, %v4012
    %v4132 = vadd.f32 %v4131, %v4017
    %v4133 = vadd.f32 %v4132, %v4022
    %v4134 = vadd.f32 %v4133, %v4027
    %v4135 = vadd.f32 %v4134, %v4032
    %v4136 = vadd.f32 %v4135, %v4037
    %v4137 = vadd.f32 %v4136, %v4042
    %v4138 = vadd.f32 %v4137, %v4047
    %v4139 = vadd.f32 %v4138, %v4052
    %v4140 = vadd.f32 %v4139, %v4057
    %v4141 = vadd.f32 %v4140, %v4062
    %v4142 = vadd.f32 %v4141, %v4067
    %v4143 = vadd.f32 %v4142, %v4072
    %v4144 = vadd.f32 %v4143, %v4077
    %v4145 = vrot.slane %v4144, 4
    %v4146 = vadd.f32 %v4144, %v4145
    %v4147 = vrot.slane %v4146, 2
    %v4148 = vadd.f32 %v4146, %v4147
    %v4149 = vrot.slane %v4148, 1
    %v4150 = vadd.f32 %v4148, %v4149
    %v4151 = vmul.f32 %v3762, %v3762
    %v4152 = vmul.f32 %v3767, %v3767
    %v4153 = vmul.f32 %v3772, %v3772
    %v4154 = vmul.f32 %v3777, %v3777
    %v4155 = vmul.f32 %v3782, %v3782
    %v4156 = vmul.f32 %v3787, %v3787
    %v4157 = vmul.f32 %v3792, %v3792
    %v4158 = vmul.f32 %v3797, %v3797
    %v4159 = vmul.f32 %v3802, %v3802
    %v4160 = vmul.f32 %v3807, %v3807
    %v4161 = vmul.f32 %v3812, %v3812
    %v4162 = vmul.f32 %v3817, %v3817
    %v4163 = vmul.f32 %v3822, %v3822
    %v4164 = vmul.f32 %v3827, %v3827
    %v4165 = vmul.f32 %v3832, %v3832
    %v4166 = vmul.f32 %v3837, %v3837
    %v4167 = vmul.f32 %v3842, %v3842
    %v4168 = vmul.f32 %v3847, %v3847
    %v4169 = vmul.f32 %v3852, %v3852
    %v4170 = vmul.f32 %v3857, %v3857
    %v4171 = vmul.f32 %v3862, %v3862
    %v4172 = vmul.f32 %v3867, %v3867
    %v4173 = vmul.f32 %v3872, %v3872
    %v4174 = vmul.f32 %v3877, %v3877
    %v4175 = vmul.f32 %v3882, %v3882
    %v4176 = vmul.f32 %v3887, %v3887
    %v4177 = vmul.f32 %v3892, %v3892
    %v4178 = vmul.f32 %v3897, %v3897
    %v4179 = vmul.f32 %v3902, %v3902
    %v4180 = vmul.f32 %v3907, %v3907
    %v4181 = vmul.f32 %v3912, %v3912
    %v4182 = vmul.f32 %v3917, %v3917
    %v4183 = vmul.f32 %v3922, %v3922
    %v4184 = vmul.f32 %v3927, %v3927
    %v4185 = vmul.f32 %v3932, %v3932
    %v4186 = vmul.f32 %v3937, %v3937
    %v4187 = vmul.f32 %v3942, %v3942
    %v4188 = vmul.f32 %v3947, %v3947
    %v4189 = vmul.f32 %v3952, %v3952
    %v4190 = vmul.f32 %v3957, %v3957
    %v4191 = vmul.f32 %v3962, %v3962
    %v4192 = vmul.f32 %v3967, %v3967
    %v4193 = vmul.f32 %v3972, %v3972
    %v4194 = vmul.f32 %v3977, %v3977
    %v4195 = vmul.f32 %v3982, %v3982
    %v4196 = vmul.f32 %v3987, %v3987
    %v4197 = vmul.f32 %v3992, %v3992
    %v4198 = vmul.f32 %v3997, %v3997
    %v4199 = vmul.f32 %v4002, %v4002
    %v4200 = vmul.f32 %v4007, %v4007
    %v4201 = vmul.f32 %v4012, %v4012
    %v4202 = vmul.f32 %v4017, %v4017
    %v4203 = vmul.f32 %v4022, %v4022
    %v4204 = vmul.f32 %v4027, %v4027
    %v4205 = vmul.f32 %v4032, %v4032
    %v4206 = vmul.f32 %v4037, %v4037
    %v4207 = vmul.f32 %v4042, %v4042
    %v4208 = vmul.f32 %v4047, %v4047
    %v4209 = vmul.f32 %v4052, %v4052
    %v4210 = vmul.f32 %v4057, %v4057
    %v4211 = vmul.f32 %v4062, %v4062
    %v4212 = vmul.f32 %v4067, %v4067
    %v4213 = vmul.f32 %v4072, %v4072
    %v4214 = vmul.f32 %v4077, %v4077
    %v4215 = vadd.f32 %v4151, %v4152
    %v4216 = vadd.f32 %v4215, %v4153
    %v4217 = vadd.f32 %v4216, %v4154
    %v4218 = vadd.f32 %v4217, %v4155
    %v4219 = vadd.f32 %v4218, %v4156
    %v4220 = vadd.f32 %v4219, %v4157
    %v4221 = vadd.f32 %v4220, %v4158
    %v4222 = vadd.f32 %v4221, %v4159
    %v4223 = vadd.f32 %v4222, %v4160
    %v4224 = vadd.f32 %v4223, %v4161
    %v4225 = vadd.f32 %v4224, %v4162
    %v4226 = vadd.f32 %v4225, %v4163
    %v4227 = vadd.f32 %v4226, %v4164
    %v4228 = vadd.f32 %v4227, %v4165
    %v4229 = vadd.f32 %v4228, %v4166
    %v4230 = vadd.f32 %v4229, %v4167
    %v4231 = vadd.f32 %v4230, %v4168
    %v4232 = vadd.f32 %v4231, %v4169
    %v4233 = vadd.f32 %v4232, %v4170
    %v4234 = vadd.f32 %v4233, %v4171
    %v4235 = vadd.f32 %v4234, %v4172
    %v4236 = vadd.f32 %v4235, %v4173
    %v4237 = vadd.f32 %v4236, %v4174
    %v4238 = vadd.f32 %v4237, %v4175
    %v4239 = vadd.f32 %v4238, %v4176
    %v4240 = vadd.f32 %v4239, %v4177
    %v4241 = vadd.f32 %v4240, %v4178
    %v4242 = vadd.f32 %v4241, %v4179
    %v4243 = vadd.f32 %v4242, %v4180
    %v4244 = vadd.f32 %v4243, %v4181
    %v4245 = vadd.f32 %v4244, %v4182
    %v4246 = vadd.f32 %v4245, %v4183
    %v4247 = vadd.f32 %v4246, %v4184
    %v4248 = vadd.f32 %v4247, %v4185
    %v4249 = vadd.f32 %v4248, %v4186
    %v4250 = vadd.f32 %v4249, %v4187
    %v4251 = vadd.f32 %v4250, %v4188
    %v4252 = vadd.f32 %v4251, %v4189
    %v4253 = vadd.f32 %v4252, %v4190
    %v4254 = vadd.f32 %v4253, %v4191
    %v4255 = vadd.f32 %v4254, %v4192
    %v4256 = vadd.f32 %v4255, %v4193
    %v4257 = vadd.f32 %v4256, %v4194
    %v4258 = vadd.f32 %v4257, %v4195
    %v4259 = vadd.f32 %v4258, %v4196
    %v4260 = vadd.f32 %v4259, %v4197
    %v4261 = vadd.f32 %v4260, %v4198
    %v4262 = vadd.f32 %v4261, %v4199
    %v4263 = vadd.f32 %v4262, %v4200
    %v4264 = vadd.f32 %v4263, %v4201
    %v4265 = vadd.f32 %v4264, %v4202
    %v4266 = vadd.f32 %v4265, %v4203
    %v4267 = vadd.f32 %v4266, %v4204
    %v4268 = vadd.f32 %v4267, %v4205
    %v4269 = vadd.f32 %v4268, %v4206
    %v4270 = vadd.f32 %v4269, %v4207
    %v4271 = vadd.f32 %v4270, %v4208
    %v4272 = vadd.f32 %v4271, %v4209
    %v4273 = vadd.f32 %v4272, %v4210
    %v4274 = vadd.f32 %v4273, %v4211
    %v4275 = vadd.f32 %v4274, %v4212
    %v4276 = vadd.f32 %v4275, %v4213
    %v4277 = vadd.f32 %v4276, %v4214
    %v4278 = vrot.slane %v4277, 4
    %v4279 = vadd.f32 %v4277, %v4278
    %v4280 = vrot.slane %v4279, 2
    %v4281 = vadd.f32 %v4279, %v4280
    %v4282 = vrot.slane %v4281, 1
    %v4283 = vadd.f32 %v4281, %v4282
    %v4284 = vmul.f32 %v4150, 0.001953125
    %v4285 = vmul.f32 %v4283, 0.001953125
    %v4286 = vmul.f32 %v4284, %v4284
    %v4287 = vsub.f32 %v4285, %v4286
    %v4288 = vmax.f32 %v4287, 0.0
    %v4289 = vadd.f32 %v4288, 1e-05
    %v4290 = vrsqrt.pop %v4289
    %v4291 = vmul.f32 %v4080, %v4290
    %v4292 = vmul.f32 %v4284, %v4291
    %v4293 = vsub.f32 %v4081, %v4292
    %v4295 = vlaneseq
    %v4296 = vshrl.u32 %v4295, 7
    %v4297 = vsub.s32 0, %v4296
    %v4298 = vrot.slane %v4291, %v4297
    %v4300 = vmul.f32 %v3762, %v4298
    %v4301 = vmul.f32 %v3767, %v4298
    %v4302 = vmul.f32 %v3772, %v4298
    %v4303 = vmul.f32 %v3777, %v4298
    %v4304 = vmul.f32 %v3782, %v4298
    %v4305 = vmul.f32 %v3787, %v4298
    %v4306 = vmul.f32 %v3792, %v4298
    %v4307 = vmul.f32 %v3797, %v4298
    %v4308 = vmul.f32 %v3802, %v4298
    %v4309 = vmul.f32 %v3807, %v4298
    %v4310 = vmul.f32 %v3812, %v4298
    %v4311 = vmul.f32 %v3817, %v4298
    %v4312 = vmul.f32 %v3822, %v4298
    %v4313 = vmul.f32 %v3827, %v4298
    %v4314 = vmul.f32 %v3832, %v4298
    %v4315 = vmul.f32 %v3837, %v4298
    %v4316 = vmul.f32 %v3842, %v4298
    %v4317 = vmul.f32 %v3847, %v4298
    %v4318 = vmul.f32 %v3852, %v4298
    %v4319 = vmul.f32 %v3857, %v4298
    %v4320 = vmul.f32 %v3862, %v4298
    %v4321 = vmul.f32 %v3867, %v4298
    %v4322 = vmul.f32 %v3872, %v4298
    %v4323 = vmul.f32 %v3877, %v4298
    %v4324 = vmul.f32 %v3882, %v4298
    %v4325 = vmul.f32 %v3887, %v4298
    %v4326 = vmul.f32 %v3892, %v4298
    %v4327 = vmul.f32 %v3897, %v4298
    %v4328 = vmul.f32 %v3902, %v4298
    %v4329 = vmul.f32 %v3907, %v4298
    %v4330 = vmul.f32 %v3912, %v4298
    %v4331 = vmul.f32 %v3917, %v4298
    %v4332 = vmul.f32 %v3922, %v4298
    %v4333 = vmul.f32 %v3927, %v4298
    %v4334 = vmul.f32 %v3932, %v4298
    %v4335 = vmul.f32 %v3937, %v4298
    %v4336 = vmul.f32 %v3942, %v4298
    %v4337 = vmul.f32 %v3947, %v4298
    %v4338 = vmul.f32 %v3952, %v4298
    %v4339 = vmul.f32 %v3957, %v4298
    %v4340 = vmul.f32 %v3962, %v4298
    %v4341 = vmul.f32 %v3967, %v4298
    %v4342 = vmul.f32 %v3972, %v4298
    %v4343 = vmul.f32 %v3977, %v4298
    %v4344 = vmul.f32 %v3982, %v4298
    %v4345 = vmul.f32 %v3987, %v4298
    %v4346 = vmul.f32 %v3992, %v4298
    %v4347 = vmul.f32 %v3997, %v4298
    %v4348 = vmul.f32 %v4002, %v4298
    %v4349 = vmul.f32 %v4007, %v4298
    %v4350 = vmul.f32 %v4012, %v4298
    %v4351 = vmul.f32 %v4017, %v4298
    %v4352 = vmul.f32 %v4022, %v4298
    %v4353 = vmul.f32 %v4027, %v4298
    %v4354 = vmul.f32 %v4032, %v4298
    %v4355 = vmul.f32 %v4037, %v4298
    %v4356 = vmul.f32 %v4042, %v4298
    %v4357 = vmul.f32 %v4047, %v4298
    %v4358 = vmul.f32 %v4052, %v4298
    %v4359 = vmul.f32 %v4057, %v4298
    %v4360 = vmul.f32 %v4062, %v4298
    %v4361 = vmul.f32 %v4067, %v4298
    %v4362 = vmul.f32 %v4072, %v4298
    %v4363 = vmul.f32 %v4077, %v4298
    %v4365 = vlaneseq
    %v4366 = vshrl.u32 %v4365, 7
    %v4367 = vsub.s32 0, %v4366
    %v4368 = vrot.slane %v4293, %v4367
    %v4370 = vadd.f32 %v4300, %v4368
    %v4371 = vadd.f32 %v4301, %v4368
    %v4372 = vadd.f32 %v4302, %v4368
    %v4373 = vadd.f32 %v4303, %v4368
    %v4374 = vadd.f32 %v4304, %v4368
    %v4375 = vadd.f32 %v4305, %v4368
    %v4376 = vadd.f32 %v4306, %v4368
    %v4377 = vadd.f32 %v4307, %v4368
    %v4378 = vadd.f32 %v4308, %v4368
    %v4379 = vadd.f32 %v4309, %v4368
    %v4380 = vadd.f32 %v4310, %v4368
    %v4381 = vadd.f32 %v4311, %v4368
    %v4382 = vadd.f32 %v4312, %v4368
    %v4383 = vadd.f32 %v4313, %v4368
    %v4384 = vadd.f32 %v4314, %v4368
    %v4385 = vadd.f32 %v4315, %v4368
    %v4386 = vadd.f32 %v4316, %v4368
    %v4387 = vadd.f32 %v4317, %v4368
    %v4388 = vadd.f32 %v4318, %v4368
    %v4389 = vadd.f32 %v4319, %v4368
    %v4390 = vadd.f32 %v4320, %v4368
    %v4391 = vadd.f32 %v4321, %v4368
    %v4392 = vadd.f32 %v4322, %v4368
    %v4393 = vadd.f32 %v4323, %v4368
    %v4394 = vadd.f32 %v4324, %v4368
    %v4395 = vadd.f32 %v4325, %v4368
    %v4396 = vadd.f32 %v4326, %v4368
    %v4397 = vadd.f32 %v4327, %v4368
    %v4398 = vadd.f32 %v4328, %v4368
    %v4399 = vadd.f32 %v4329, %v4368
    %v4400 = vadd.f32 %v4330, %v4368
    %v4401 = vadd.f32 %v4331, %v4368
    %v4402 = vadd.f32 %v4332, %v4368
    %v4403 = vadd.f32 %v4333, %v4368
    %v4404 = vadd.f32 %v4334, %v4368
    %v4405 = vadd.f32 %v4335, %v4368
    %v4406 = vadd.f32 %v4336, %v4368
    %v4407 = vadd.f32 %v4337, %v4368
    %v4408 = vadd.f32 %v4338, %v4368
    %v4409 = vadd.f32 %v4339, %v4368
    %v4410 = vadd.f32 %v4340, %v4368
    %v4411 = vadd.f32 %v4341, %v4368
    %v4412 = vadd.f32 %v4342, %v4368
    %v4413 = vadd.f32 %v4343, %v4368
    %v4414 = vadd.f32 %v4344, %v4368
    %v4415 = vadd.f32 %v4345, %v4368
    %v4416 = vadd.f32 %v4346, %v4368
    %v4417 = vadd.f32 %v4347, %v4368
    %v4418 = vadd.f32 %v4348, %v4368
    %v4419 = vadd.f32 %v4349, %v4368
    %v4420 = vadd.f32 %v4350, %v4368
    %v4421 = vadd.f32 %v4351, %v4368
    %v4422 = vadd.f32 %v4352, %v4368
    %v4423 = vadd.f32 %v4353, %v4368
    %v4424 = vadd.f32 %v4354, %v4368
    %v4425 = vadd.f32 %v4355, %v4368
    %v4426 = vadd.f32 %v4356, %v4368
    %v4427 = vadd.f32 %v4357, %v4368
    %v4428 = vadd.f32 %v4358, %v4368
    %v4429 = vadd.f32 %v4359, %v4368
    %v4430 = vadd.f32 %v4360, %v4368
    %v4431 = vadd.f32 %v4361, %v4368
    %v4432 = vadd.f32 %v4362, %v4368
    %v4433 = vadd.f32 %v4363, %v4368
    %v4434 = vmax.f32 %v4370, 0.0
    %v4435 = vmax.f32 %v4371, 0.0
    %v4436 = vmax.f32 %v4372, 0.0
    %v4437 = vmax.f32 %v4373, 0.0
    %v4438 = vmax.f32 %v4374, 0.0
    %v4439 = vmax.f32 %v4375, 0.0
    %v4440 = vmax.f32 %v4376, 0.0
    %v4441 = vmax.f32 %v4377, 0.0
    %v4442 = vmax.f32 %v4378, 0.0
    %v4443 = vmax.f32 %v4379, 0.0
    %v4444 = vmax.f32 %v4380, 0.0
    %v4445 = vmax.f32 %v4381, 0.0
    %v4446 = vmax.f32 %v4382, 0.0
    %v4447 = vmax.f32 %v4383, 0.0
    %v4448 = vmax.f32 %v4384, 0.0
    %v4449 = vmax.f32 %v4385, 0.0
    %v4450 = vmax.f32 %v4386, 0.0
    %v4451 = vmax.f32 %v4387, 0.0
    %v4452 = vmax.f32 %v4388, 0.0
    %v4453 = vmax.f32 %v4389, 0.0
    %v4454 = vmax.f32 %v4390, 0.0
    %v4455 = vmax.f32 %v4391, 0.0
    %v4456 = vmax.f32 %v4392, 0.0
    %v4457 = vmax.f32 %v4393, 0.0
    %v4458 = vmax.f32 %v4394, 0.0
    %v4459 = vmax.f32 %v4395, 0.0
    %v4460 = vmax.f32 %v4396, 0.0
    %v4461 = vmax.f32 %v4397, 0.0
    %v4462 = vmax.f32 %v4398, 0.0
    %v4463 = vmax.f32 %v4399, 0.0
    %v4464 = vmax.f32 %v4400, 0.0
    %v4465 = vmax.f32 %v4401, 0.0
    %v4466 = vmax.f32 %v4402, 0.0
    %v4467 = vmax.f32 %v4403, 0.0
    %v4468 = vmax.f32 %v4404, 0.0
    %v4469 = vmax.f32 %v4405, 0.0
    %v4470 = vmax.f32 %v4406, 0.0
    %v4471 = vmax.f32 %v4407, 0.0
    %v4472 = vmax.f32 %v4408, 0.0
    %v4473 = vmax.f32 %v4409, 0.0
    %v4474 = vmax.f32 %v4410, 0.0
    %v4475 = vmax.f32 %v4411, 0.0
    %v4476 = vmax.f32 %v4412, 0.0
    %v4477 = vmax.f32 %v4413, 0.0
    %v4478 = vmax.f32 %v4414, 0.0
    %v4479 = vmax.f32 %v4415, 0.0
    %v4480 = vmax.f32 %v4416, 0.0
    %v4481 = vmax.f32 %v4417, 0.0
    %v4482 = vmax.f32 %v4418, 0.0
    %v4483 = vmax.f32 %v4419, 0.0
    %v4484 = vmax.f32 %v4420, 0.0
    %v4485 = vmax.f32 %v4421, 0.0
    %v4486 = vmax.f32 %v4422, 0.0
    %v4487 = vmax.f32 %v4423, 0.0
    %v4488 = vmax.f32 %v4424, 0.0
    %v4489 = vmax.f32 %v4425, 0.0
    %v4490 = vmax.f32 %v4426, 0.0
    %v4491 = vmax.f32 %v4427, 0.0
    %v4492 = vmax.f32 %v4428, 0.0
    %v4493 = vmax.f32 %v4429, 0.0
    %v4494 = vmax.f32 %v4430, 0.0
    %v4495 = vmax.f32 %v4431, 0.0
    %v4496 = vmax.f32 %v4432, 0.0
    %v4497 = vmax.f32 %v4433, 0.0
    %4498 = vst [vmem:[%s217 + $0x1] sm:$0xff] %v4434
    %4499 = vst [vmem:[%s217 + $0x9] sm:$0xff] %v4435
    %4500 = vst [vmem:[%s217 + $0x19] sm:$0xff] %v4436
    %4501 = vst [vmem:[%s217 + $0x21] sm:$0xff] %v4437
    %4502 = vst [vmem:[%s217 + $0x31] sm:$0xff] %v4438
    %4503 = vst [vmem:[%s217 + $0x39] sm:$0xff] %v4439
    %4504 = vst [vmem:[%s217 + $0x49] sm:$0xff] %v4440
    %4505 = vst [vmem:[%s217 + $0x51] sm:$0xff] %v4441
    %4506 = vst [vmem:[%s217 + $0x61] sm:$0xff] %v4442
    %4507 = vst [vmem:[%s217 + $0x69] sm:$0xff] %v4443
    %4508 = vst [vmem:[%s217 + $0x79] sm:$0xff] %v4444
    %4509 = vst [vmem:[%s217 + $0x81] sm:$0xff] %v4445
    %4510 = vst [vmem:[%s217 + $0x91] sm:$0xff] %v4446
    %4511 = vst [vmem:[%s217 + $0x99] sm:$0xff] %v4447
    %4512 = vst [vmem:[%s217 + $0xa9] sm:$0xff] %v4448
    %4513 = vst [vmem:[%s217 + $0xb1] sm:$0xff] %v4449
    %4514 = vst [vmem:[%s217 + $0xc1] sm:$0xff] %v4450
    %4515 = vst [vmem:[%s217 + $0xc9] sm:$0xff] %v4451
    %4516 = vst [vmem:[%s217 + $0xd9] sm:$0xff] %v4452
    %4517 = vst [vmem:[%s217 + $0xe1] sm:$0xff] %v4453
    %4518 = vst [vmem:[%s217 + $0xf1] sm:$0xff] %v4454
    %4519 = vst [vmem:[%s217 + $0xf9] sm:$0xff] %v4455
    %4520 = vst [vmem:[%s217 + $0x109] sm:$0xff] %v4456
    %4521 = vst [vmem:[%s217 + $0x111] sm:$0xff] %v4457
    %4522 = vst [vmem:[%s217 + $0x121] sm:$0xff] %v4458
    %4523 = vst [vmem:[%s217 + $0x129] sm:$0xff] %v4459
    %4524 = vst [vmem:[%s217 + $0x139] sm:$0xff] %v4460
    %4525 = vst [vmem:[%s217 + $0x141] sm:$0xff] %v4461
    %4526 = vst [vmem:[%s217 + $0x151] sm:$0xff] %v4462
    %4527 = vst [vmem:[%s217 + $0x159] sm:$0xff] %v4463
    %4528 = vst [vmem:[%s217 + $0x169] sm:$0xff] %v4464
    %4529 = vst [vmem:[%s217 + $0x171] sm:$0xff] %v4465
    %4530 = vst [vmem:[%s217 + $0x1b1] sm:$0xff] %v4466
    %4531 = vst [vmem:[%s217 + $0x1b9] sm:$0xff] %v4467
    %4532 = vst [vmem:[%s217 + $0x1c9] sm:$0xff] %v4468
    %4533 = vst [vmem:[%s217 + $0x1d1] sm:$0xff] %v4469
    %4534 = vst [vmem:[%s217 + $0x1e1] sm:$0xff] %v4470
    %4535 = vst [vmem:[%s217 + $0x1e9] sm:$0xff] %v4471
    %4536 = vst [vmem:[%s217 + $0x1f9] sm:$0xff] %v4472
    %4537 = vst [vmem:[%s217 + $0x201] sm:$0xff] %v4473
    %4538 = vst [vmem:[%s217 + $0x211] sm:$0xff] %v4474
    %4539 = vst [vmem:[%s217 + $0x219] sm:$0xff] %v4475
    %4540 = vst [vmem:[%s217 + $0x229] sm:$0xff] %v4476
    %4541 = vst [vmem:[%s217 + $0x231] sm:$0xff] %v4477
    %4542 = vst [vmem:[%s217 + $0x241] sm:$0xff] %v4478
    %4543 = vst [vmem:[%s217 + $0x249] sm:$0xff] %v4479
    %4544 = vst [vmem:[%s217 + $0x259] sm:$0xff] %v4480
    %4545 = vst [vmem:[%s217 + $0x261] sm:$0xff] %v4481
    %4546 = vst [vmem:[%s217 + $0x271] sm:$0xff] %v4482
    %4547 = vst [vmem:[%s217 + $0x279] sm:$0xff] %v4483
    %4548 = vst [vmem:[%s217 + $0x289] sm:$0xff] %v4484
    %4549 = vst [vmem:[%s217 + $0x291] sm:$0xff] %v4485
    %4550 = vst [vmem:[%s217 + $0x2a1] sm:$0xff] %v4486
    %4551 = vst [vmem:[%s217 + $0x2a9] sm:$0xff] %v4487
    %4552 = vst [vmem:[%s217 + $0x2b9] sm:$0xff] %v4488
    %4553 = vst [vmem:[%s217 + $0x2c1] sm:$0xff] %v4489
    %4554 = vst [vmem:[%s217 + $0x2d1] sm:$0xff] %v4490
    %4555 = vst [vmem:[%s217 + $0x2d9] sm:$0xff] %v4491
    %4556 = vst [vmem:[%s217 + $0x2e9] sm:$0xff] %v4492
    %4557 = vst [vmem:[%s217 + $0x2f1] sm:$0xff] %v4493
    %4558 = vst [vmem:[%s217 + $0x301] sm:$0xff] %v4494
    %4559 = vst [vmem:[%s217 + $0x309] sm:$0xff] %v4495
    %4560 = vst [vmem:[%s217 + $0x319] sm:$0xff] %v4496
    %4561 = vst [vmem:[%s217 + $0x321] sm:$0xff] %v4497
    %v4562 = vld [vmem:[#allocation9] sm:$0xff]
    %v4563 = vld [vmem:[#allocation9 + $0x8] sm:$0xff]
    %v4564 = vld [vmem:[#allocation9 + $0x10] sm:$0xff]
    %v4565 = vld [vmem:[#allocation9 + $0x18] sm:$0xff]
    %v4566 = vld [vmem:[#allocation9 + $0x20] sm:$0xff]
    %v4567 = vld [vmem:[#allocation9 + $0x28] sm:$0xff]
    %v4568 = vld [vmem:[#allocation9 + $0x30] sm:$0xff]
    %v4569 = vld [vmem:[#allocation9 + $0x38] sm:$0xff]
    %v4570 = vld [vmem:[#allocation9 + $0x40] sm:$0xff]
    %v4571 = vld [vmem:[#allocation9 + $0x48] sm:$0xff]
    %v4572 = vld [vmem:[#allocation9 + $0x50] sm:$0xff]
    %v4573 = vld [vmem:[#allocation9 + $0x58] sm:$0xff]
    %v4574 = vld [vmem:[#allocation9 + $0x60] sm:$0xff]
    %v4575 = vld [vmem:[#allocation9 + $0x68] sm:$0xff]
    %v4576 = vld [vmem:[#allocation9 + $0x70] sm:$0xff]
    %v4577 = vld [vmem:[#allocation9 + $0x78] sm:$0xff]
    %v4578 = vld [vmem:[#allocation9 + $0x80] sm:$0xff]
    %v4579 = vld [vmem:[#allocation9 + $0x88] sm:$0xff]
    %v4580 = vld [vmem:[#allocation9 + $0x90] sm:$0xff]
    %v4581 = vld [vmem:[#allocation9 + $0x98] sm:$0xff]
    %v4582 = vld [vmem:[#allocation9 + $0xa0] sm:$0xff]
    %v4583 = vld [vmem:[#allocation9 + $0xa8] sm:$0xff]
    %v4584 = vld [vmem:[#allocation9 + $0xb0] sm:$0xff]
    %v4585 = vld [vmem:[#allocation9 + $0xb8] sm:$0xff]
    %v4586 = vld [vmem:[#allocation9 + $0xc0] sm:$0xff]
    %v4587 = vld [vmem:[#allocation9 + $0xc8] sm:$0xff]
    %v4588 = vld [vmem:[#allocation9 + $0xd0] sm:$0xff]
    %v4589 = vld [vmem:[#allocation9 + $0xd8] sm:$0xff]
    %v4590 = vld [vmem:[#allocation9 + $0xe0] sm:$0xff]
    %v4591 = vld [vmem:[#allocation9 + $0xe8] sm:$0xff]
    %v4592 = vld [vmem:[#allocation9 + $0xf0] sm:$0xff]
    %v4593 = vld [vmem:[#allocation9 + $0xf8] sm:$0xff]
    %v4594 = vld [vmem:[#allocation9 + $0x100] sm:$0xff]
    %v4595 = vld [vmem:[#allocation9 + $0x108] sm:$0xff]
    %v4596 = vld [vmem:[#allocation9 + $0x110] sm:$0xff]
    %v4597 = vld [vmem:[#allocation9 + $0x118] sm:$0xff]
    %v4598 = vld [vmem:[#allocation9 + $0x120] sm:$0xff]
    %v4599 = vld [vmem:[#allocation9 + $0x128] sm:$0xff]
    %v4600 = vld [vmem:[#allocation9 + $0x130] sm:$0xff]
    %v4601 = vld [vmem:[#allocation9 + $0x138] sm:$0xff]
    %v4602 = vld [vmem:[#allocation9 + $0x140] sm:$0xff]
    %v4603 = vld [vmem:[#allocation9 + $0x148] sm:$0xff]
    %v4604 = vld [vmem:[#allocation9 + $0x150] sm:$0xff]
    %v4605 = vld [vmem:[#allocation9 + $0x158] sm:$0xff]
    %v4606 = vld [vmem:[#allocation9 + $0x160] sm:$0xff]
    %v4607 = vld [vmem:[#allocation9 + $0x168] sm:$0xff]
    %v4608 = vld [vmem:[#allocation9 + $0x170] sm:$0xff]
    %v4609 = vld [vmem:[#allocation9 + $0x178] sm:$0xff]
    %v4610 = vld [vmem:[#allocation9 + $0x180] sm:$0xff]
    %v4611 = vld [vmem:[#allocation9 + $0x188] sm:$0xff]
    %v4612 = vld [vmem:[#allocation9 + $0x190] sm:$0xff]
    %v4613 = vld [vmem:[#allocation9 + $0x198] sm:$0xff]
    %v4614 = vld [vmem:[#allocation9 + $0x1a0] sm:$0xff]
    %v4615 = vld [vmem:[#allocation9 + $0x1a8] sm:$0xff]
    %v4616 = vld [vmem:[#allocation9 + $0x1b0] sm:$0xff]
    %v4617 = vld [vmem:[#allocation9 + $0x1b8] sm:$0xff]
    %v4618 = vld [vmem:[#allocation9 + $0x1c0] sm:$0xff]
    %v4619 = vld [vmem:[#allocation9 + $0x1c8] sm:$0xff]
    %v4620 = vld [vmem:[#allocation9 + $0x1d0] sm:$0xff]
    %v4621 = vld [vmem:[#allocation9 + $0x1d8] sm:$0xff]
    %v4622 = vld [vmem:[#allocation9 + $0x1e0] sm:$0xff]
    %v4623 = vld [vmem:[#allocation9 + $0x1e8] sm:$0xff]
    %v4624 = vld [vmem:[#allocation9 + $0x1f0] sm:$0xff]
    %v4625 = vld [vmem:[#allocation9 + $0x1f8] sm:$0xff]
    %v4626 = vld [vmem:[#allocation9 + $0x200] sm:$0xff]
    %v4627 = vld [vmem:[#allocation9 + $0x208] sm:$0xff]
    %v4628 = vld [vmem:[#allocation9 + $0x210] sm:$0xff]
    %v4629 = vld [vmem:[#allocation9 + $0x218] sm:$0xff]
    %v4630 = vld [vmem:[#allocation9 + $0x220] sm:$0xff]
    %v4631 = vld [vmem:[#allocation9 + $0x228] sm:$0xff]
    %v4632 = vld [vmem:[#allocation9 + $0x230] sm:$0xff]
    %v4633 = vld [vmem:[#allocation9 + $0x238] sm:$0xff]
    %v4634 = vld [vmem:[#allocation9 + $0x240] sm:$0xff]
    %v4635 = vld [vmem:[#allocation9 + $0x248] sm:$0xff]
    %v4636 = vld [vmem:[#allocation9 + $0x250] sm:$0xff]
    %v4637 = vld [vmem:[#allocation9 + $0x258] sm:$0xff]
    %v4638 = vld [vmem:[#allocation9 + $0x260] sm:$0xff]
    %v4639 = vld [vmem:[#allocation9 + $0x268] sm:$0xff]
    %v4640 = vld [vmem:[#allocation9 + $0x270] sm:$0xff]
    %v4641 = vld [vmem:[#allocation9 + $0x278] sm:$0xff]
    %v4642 = vld [vmem:[#allocation9 + $0x280] sm:$0xff]
    %v4643 = vld [vmem:[#allocation9 + $0x288] sm:$0xff]
    %v4644 = vld [vmem:[#allocation9 + $0x290] sm:$0xff]
    %v4645 = vld [vmem:[#allocation9 + $0x298] sm:$0xff]
    %v4646 = vld [vmem:[#allocation9 + $0x2a0] sm:$0xff]
    %v4647 = vld [vmem:[#allocation9 + $0x2a8] sm:$0xff]
    %v4648 = vld [vmem:[#allocation9 + $0x2b0] sm:$0xff]
    %v4649 = vld [vmem:[#allocation9 + $0x2b8] sm:$0xff]
    %v4650 = vld [vmem:[#allocation9 + $0x2c0] sm:$0xff]
    %v4651 = vld [vmem:[#allocation9 + $0x2c8] sm:$0xff]
    %v4652 = vld [vmem:[#allocation9 + $0x2d0] sm:$0xff]
    %v4653 = vld [vmem:[#allocation9 + $0x2d8] sm:$0xff]
    %v4654 = vld [vmem:[#allocation9 + $0x2e0] sm:$0xff]
    %v4655 = vld [vmem:[#allocation9 + $0x2e8] sm:$0xff]
    %v4656 = vld [vmem:[#allocation9 + $0x2f0] sm:$0xff]
    %v4657 = vld [vmem:[#allocation9 + $0x2f8] sm:$0xff]
    %v4658 = vld [vmem:[#allocation9 + $0x300] sm:$0xff]
    %v4659 = vld [vmem:[#allocation9 + $0x308] sm:$0xff]
    %v4660 = vld [vmem:[#allocation9 + $0x310] sm:$0xff]
    %v4661 = vld [vmem:[#allocation9 + $0x318] sm:$0xff]
    %v4662 = vld [vmem:[#allocation9 + $0x320] sm:$0xff]
    %v4663 = vld [vmem:[#allocation9 + $0x328] sm:$0xff]
    %v4664 = vld [vmem:[#allocation9 + $0x330] sm:$0xff]
    %v4665 = vld [vmem:[#allocation9 + $0x338] sm:$0xff]
    %v4666 = vld [vmem:[#allocation9 + $0x340] sm:$0xff]
    %v4667 = vld [vmem:[#allocation9 + $0x348] sm:$0xff]
    %v4668 = vld [vmem:[#allocation9 + $0x350] sm:$0xff]
    %v4669 = vld [vmem:[#allocation9 + $0x358] sm:$0xff]
    %v4670 = vld [vmem:[#allocation9 + $0x360] sm:$0xff]
    %v4671 = vld [vmem:[#allocation9 + $0x368] sm:$0xff]
    %v4672 = vld [vmem:[#allocation9 + $0x370] sm:$0xff]
    %v4673 = vld [vmem:[#allocation9 + $0x378] sm:$0xff]
    %v4674 = vld [vmem:[#allocation9 + $0x380] sm:$0xff]
    %v4675 = vld [vmem:[#allocation9 + $0x388] sm:$0xff]
    %v4676 = vld [vmem:[#allocation9 + $0x390] sm:$0xff]
    %v4677 = vld [vmem:[#allocation9 + $0x398] sm:$0xff]
    %v4678 = vld [vmem:[#allocation9 + $0x3a0] sm:$0xff]
    %v4679 = vld [vmem:[#allocation9 + $0x3a8] sm:$0xff]
    %v4680 = vld [vmem:[#allocation9 + $0x3b0] sm:$0xff]
    %v4681 = vld [vmem:[#allocation9 + $0x3b8] sm:$0xff]
    %v4682 = vld [vmem:[#allocation9 + $0x3c0] sm:$0xff]
    %v4683 = vld [vmem:[#allocation9 + $0x3c8] sm:$0xff]
    %v4684 = vld [vmem:[#allocation9 + $0x3d0] sm:$0xff]
    %v4685 = vld [vmem:[#allocation9 + $0x3d8] sm:$0xff]
    %v4686 = vld [vmem:[#allocation9 + $0x3e0] sm:$0xff]
    %v4687 = vld [vmem:[#allocation9 + $0x3e8] sm:$0xff]
    %v4688 = vld [vmem:[#allocation9 + $0x3f0] sm:$0xff]
    %v4689 = vld [vmem:[#allocation9 + $0x3f8] sm:$0xff]
    %v4690 = vld [vmem:[#allocation9 + $0x400] sm:$0xff]
    %v4691 = vld [vmem:[#allocation9 + $0x408] sm:$0xff]
    %v4692 = vld [vmem:[#allocation9 + $0x410] sm:$0xff]
    %v4693 = vld [vmem:[#allocation9 + $0x418] sm:$0xff]
    %v4694 = vld [vmem:[#allocation9 + $0x420] sm:$0xff]
    %v4695 = vld [vmem:[#allocation9 + $0x428] sm:$0xff]
    %v4696 = vld [vmem:[#allocation9 + $0x430] sm:$0xff]
    %v4697 = vld [vmem:[#allocation9 + $0x438] sm:$0xff]
    %v4698 = vld [vmem:[#allocation9 + $0x440] sm:$0xff]
    %v4699 = vld [vmem:[#allocation9 + $0x448] sm:$0xff]
    %v4700 = vld [vmem:[#allocation9 + $0x450] sm:$0xff]
    %v4701 = vld [vmem:[#allocation9 + $0x458] sm:$0xff]
    %v4702 = vld [vmem:[#allocation9 + $0x460] sm:$0xff]
    %v4703 = vld [vmem:[#allocation9 + $0x468] sm:$0xff]
    %v4704 = vld [vmem:[#allocation9 + $0x470] sm:$0xff]
    %v4705 = vld [vmem:[#allocation9 + $0x478] sm:$0xff]
    %v4706 = vld [vmem:[#allocation2] sm:$0xff]
    %v4707 = vld [vmem:[#allocation2 + $0x8] sm:$0xff]
    %v4708 = vld [vmem:[#allocation2 + $0x18] sm:$0xff]
    %v4709 = vld [vmem:[#allocation2 + $0x20] sm:$0xff]
    %v4710 = vld [vmem:[#allocation2 + $0x30] sm:$0xff]
    %v4711 = vld [vmem:[#allocation2 + $0x38] sm:$0xff]
    %v4712 = vld [vmem:[#allocation2 + $0x48] sm:$0xff]
    %v4713 = vld [vmem:[#allocation2 + $0x50] sm:$0xff]
    %v4714 = vld [vmem:[#allocation2 + $0x60] sm:$0xff]
    %v4715 = vld [vmem:[#allocation2 + $0x68] sm:$0xff]
    %v4716 = vld [vmem:[#allocation2 + $0x78] sm:$0xff]
    %v4717 = vld [vmem:[#allocation2 + $0x80] sm:$0xff]
    %v4718 = vld [vmem:[#allocation2 + $0x90] sm:$0xff]
    %v4719 = vld [vmem:[#allocation2 + $0x98] sm:$0xff]
    %v4720 = vld [vmem:[#allocation2 + $0xa8] sm:$0xff]
    %v4721 = vld [vmem:[#allocation2 + $0xb0] sm:$0xff]
    %v4722 = vld [vmem:[#allocation2 + $0xc0] sm:$0xff]
    %v4723 = vld [vmem:[#allocation2 + $0xc8] sm:$0xff]
    %v4724 = vld [vmem:[#allocation2 + $0xd8] sm:$0xff]
    %v4725 = vld [vmem:[#allocation2 + $0xe0] sm:$0xff]
    %v4726 = vld [vmem:[#allocation2 + $0xf0] sm:$0xff]
    %v4727 = vld [vmem:[#allocation2 + $0xf8] sm:$0xff]
    %v4728 = vld [vmem:[#allocation2 + $0x108] sm:$0xff]
    %v4729 = vld [vmem:[#allocation2 + $0x110] sm:$0xff]
    %v4730 = vld [vmem:[#allocation2 + $0x120] sm:$0xff]
    %v4731 = vld [vmem:[#allocation2 + $0x128] sm:$0xff]
    %v4732 = vld [vmem:[#allocation2 + $0x138] sm:$0xff]
    %v4733 = vld [vmem:[#allocation2 + $0x140] sm:$0xff]
    %v4734 = vld [vmem:[#allocation2 + $0x150] sm:$0xff]
    %v4735 = vld [vmem:[#allocation2 + $0x158] sm:$0xff]
    %v4736 = vld [vmem:[#allocation2 + $0x168] sm:$0xff]
    %v4737 = vld [vmem:[#allocation2 + $0x170] sm:$0xff]
    %v4738 = vld [vmem:[#allocation2 + $0x1b0] sm:$0xff]
    %v4739 = vld [vmem:[#allocation2 + $0x1b8] sm:$0xff]
    %v4740 = vld [vmem:[#allocation2 + $0x1c8] sm:$0xff]
    %v4741 = vld [vmem:[#allocation2 + $0x1d0] sm:$0xff]
    %v4742 = vld [vmem:[#allocation2 + $0x1e0] sm:$0xff]
    %v4743 = vld [vmem:[#allocation2 + $0x1e8] sm:$0xff]
    %v4744 = vld [vmem:[#allocation2 + $0x1f8] sm:$0xff]
    %v4745 = vld [vmem:[#allocation2 + $0x200] sm:$0xff]
    %v4746 = vld [vmem:[#allocation2 + $0x210] sm:$0xff]
    %v4747 = vld [vmem:[#allocation2 + $0x218] sm:$0xff]
    %v4748 = vld [vmem:[#allocation2 + $0x228] sm:$0xff]
    %v4749 = vld [vmem:[#allocation2 + $0x230] sm:$0xff]
    %v4750 = vld [vmem:[#allocation2 + $0x240] sm:$0xff]
    %v4751 = vld [vmem:[#allocation2 + $0x248] sm:$0xff]
    %v4752 = vld [vmem:[#allocation2 + $0x258] sm:$0xff]
    %v4753 = vld [vmem:[#allocation2 + $0x260] sm:$0xff]
    %v4754 = vld [vmem:[#allocation2 + $0x270] sm:$0xff]
    %v4755 = vld [vmem:[#allocation2 + $0x278] sm:$0xff]
    %v4756 = vld [vmem:[#allocation2 + $0x288] sm:$0xff]
    %v4757 = vld [vmem:[#allocation2 + $0x290] sm:$0xff]
    %v4758 = vld [vmem:[#allocation2 + $0x2a0] sm:$0xff]
    %v4759 = vld [vmem:[#allocation2 + $0x2a8] sm:$0xff]
    %v4760 = vld [vmem:[#allocation2 + $0x2b8] sm:$0xff]
    %v4761 = vld [vmem:[#allocation2 + $0x2c0] sm:$0xff]
    %v4762 = vld [vmem:[#allocation2 + $0x2d0] sm:$0xff]
    %v4763 = vld [vmem:[#allocation2 + $0x2d8] sm:$0xff]
    %v4764 = vld [vmem:[#allocation2 + $0x2e8] sm:$0xff]
    %v4765 = vld [vmem:[#allocation2 + $0x2f0] sm:$0xff]
    %v4766 = vld [vmem:[#allocation2 + $0x300] sm:$0xff]
    %v4767 = vld [vmem:[#allocation2 + $0x308] sm:$0xff]
    %v4768 = vld [vmem:[#allocation2 + $0x318] sm:$0xff]
    %v4769 = vld [vmem:[#allocation2 + $0x320] sm:$0xff]
    %4770 = vst [vmem:[#allocation3] sm:$0xff] %v4706
    %4771 = vst [vmem:[#allocation3 + $0x48] sm:$0xff] %v4707
    %4772 = vst [vmem:[#allocation3 + $0x90] sm:$0xff] %v4708
    %4773 = vst [vmem:[#allocation3 + $0xd8] sm:$0xff] %v4709
    %4774 = vst [vmem:[#allocation3 + $0x120] sm:$0xff] %v4710
    %4775 = vst [vmem:[#allocation3 + $0x168] sm:$0xff] %v4711
    %4776 = vst [vmem:[#allocation3 + $0x1b0] sm:$0xff] %v4712
    %4777 = vst [vmem:[#allocation3 + $0x1f8] sm:$0xff] %v4713
    %4778 = vst [vmem:[#allocation3 + $0x240] sm:$0xff] %v4714
    %4779 = vst [vmem:[#allocation3 + $0x288] sm:$0xff] %v4715
    %4780 = vst [vmem:[#allocation3 + $0x2d0] sm:$0xff] %v4716
    %4781 = vst [vmem:[#allocation3 + $0x318] sm:$0xff] %v4717
    %4782 = vst [vmem:[#allocation3 + $0x360] sm:$0xff] %v4718
    %4783 = vst [vmem:[#allocation3 + $0x3a8] sm:$0xff] %v4719
    %4784 = vst [vmem:[#allocation3 + $0x3f0] sm:$0xff] %v4720
    %4785 = vst [vmem:[#allocation3 + $0x438] sm:$0xff] %v4721
    %4786 = vst [vmem:[#allocation3 + $0x480] sm:$0xff] %v4722
    %4787 = vst [vmem:[#allocation3 + $0x4c8] sm:$0xff] %v4723
    %4788 = vst [vmem:[#allocation3 + $0x510] sm:$0xff] %v4724
    %4789 = vst [vmem:[#allocation3 + $0x558] sm:$0xff] %v4725
    %4790 = vst [vmem:[#allocation3 + $0x5a0] sm:$0xff] %v4726
    %4791 = vst [vmem:[#allocation3 + $0x5e8] sm:$0xff] %v4727
    %4792 = vst [vmem:[#allocation3 + $0x630] sm:$0xff] %v4728
    %4793 = vst [vmem:[#allocation3 + $0x678] sm:$0xff] %v4729
    %4794 = vst [vmem:[#allocation3 + $0x6c0] sm:$0xff] %v4730
    %4795 = vst [vmem:[#allocation3 + $0x708] sm:$0xff] %v4731
    %4796 = vst [vmem:[#allocation3 + $0x750] sm:$0xff] %v4732
    %4797 = vst [vmem:[#allocation3 + $0x798] sm:$0xff] %v4733
    %4798 = vst [vmem:[#allocation3 + $0x7e0] sm:$0xff] %v4734
    %4799 = vst [vmem:[#allocation3 + $0x828] sm:$0xff] %v4735
    %4800 = vst [vmem:[#allocation3 + $0x870] sm:$0xff] %v4736
    %4801 = vst [vmem:[#allocation3 + $0x8b8] sm:$0xff] %v4737
    %4802 = vst [vmem:[#allocation3 + $0x900] sm:$0xff] %v4738
    %4803 = vst [vmem:[#allocation3 + $0x948] sm:$0xff] %v4739
    %4804 = vst [vmem:[#allocation3 + $0x990] sm:$0xff] %v4740
    %4805 = vst [vmem:[#allocation3 + $0x9d8] sm:$0xff] %v4741
    %4806 = vst [vmem:[#allocation3 + $0xa20] sm:$0xff] %v4742
    %4807 = vst [vmem:[#allocation3 + $0xa68] sm:$0xff] %v4743
    %4808 = vst [vmem:[#allocation3 + $0xab0] sm:$0xff] %v4744
    %4809 = vst [vmem:[#allocation3 + $0xaf8] sm:$0xff] %v4745
    %4810 = vst [vmem:[#allocation3 + $0xb40] sm:$0xff] %v4746
    %4811 = vst [vmem:[#allocation3 + $0xb88] sm:$0xff] %v4747
    %4812 = vst [vmem:[#allocation3 + $0xbd0] sm:$0xff] %v4748
    %4813 = vst [vmem:[#allocation3 + $0xc18] sm:$0xff] %v4749
    %4814 = vst [vmem:[#allocation3 + $0xc60] sm:$0xff] %v4750
    %4815 = vst [vmem:[#allocation3 + $0xca8] sm:$0xff] %v4751
    %4816 = vst [vmem:[#allocation3 + $0xcf0] sm:$0xff] %v4752
    %4817 = vst [vmem:[#allocation3 + $0xd38] sm:$0xff] %v4753
    %4818 = vst [vmem:[#allocation3 + $0xd80] sm:$0xff] %v4754
    %4819 = vst [vmem:[#allocation3 + $0xdc8] sm:$0xff] %v4755
    %4820 = vst [vmem:[#allocation3 + $0xe10] sm:$0xff] %v4756
    %4821 = vst [vmem:[#allocation3 + $0xe58] sm:$0xff] %v4757
    %4822 = vst [vmem:[#allocation3 + $0xea0] sm:$0xff] %v4758
    %4823 = vst [vmem:[#allocation3 + $0xee8] sm:$0xff] %v4759
    %4824 = vst [vmem:[#allocation3 + $0xf30] sm:$0xff] %v4760
    %4825 = vst [vmem:[#allocation3 + $0xf78] sm:$0xff] %v4761
    %4826 = vst [vmem:[#allocation3 + $0xfc0] sm:$0xff] %v4762
    %4827 = vst [vmem:[#allocation3 + $0x1008] sm:$0xff] %v4763
    %4828 = vst [vmem:[#allocation3 + $0x1050] sm:$0xff] %v4764
    %4829 = vst [vmem:[#allocation3 + $0x1098] sm:$0xff] %v4765
    %4830 = vst [vmem:[#allocation3 + $0x10e0] sm:$0xff] %v4766
    %4831 = vst [vmem:[#allocation3 + $0x1128] sm:$0xff] %v4767
    %4832 = vst [vmem:[#allocation3 + $0x1170] sm:$0xff] %v4768
    %4833 = vst [vmem:[#allocation3 + $0x11b8] sm:$0xff] %v4769
    %v4834 = vld [vmem:[#allocation2 + $0x1] sm:$0xff]
    %v4835 = vld [vmem:[#allocation2 + $0x9] sm:$0xff]
    %v4836 = vld [vmem:[#allocation2 + $0x19] sm:$0xff]
    %v4837 = vld [vmem:[#allocation2 + $0x21] sm:$0xff]
    %v4838 = vld [vmem:[#allocation2 + $0x31] sm:$0xff]
    %v4839 = vld [vmem:[#allocation2 + $0x39] sm:$0xff]
    %v4840 = vld [vmem:[#allocation2 + $0x49] sm:$0xff]
    %v4841 = vld [vmem:[#allocation2 + $0x51] sm:$0xff]
    %v4842 = vld [vmem:[#allocation2 + $0x61] sm:$0xff]
    %v4843 = vld [vmem:[#allocation2 + $0x69] sm:$0xff]
    %v4844 = vld [vmem:[#allocation2 + $0x79] sm:$0xff]
    %v4845 = vld [vmem:[#allocation2 + $0x81] sm:$0xff]
    %v4846 = vld [vmem:[#allocation2 + $0x91] sm:$0xff]
    %v4847 = vld [vmem:[#allocation2 + $0x99] sm:$0xff]
    %v4848 = vld [vmem:[#allocation2 + $0xa9] sm:$0xff]
    %v4849 = vld [vmem:[#allocation2 + $0xb1] sm:$0xff]
    %v4850 = vld [vmem:[#allocation2 + $0xc1] sm:$0xff]
    %v4851 = vld [vmem:[#allocation2 + $0xc9] sm:$0xff]
    %v4852 = vld [vmem:[#allocation2 + $0xd9] sm:$0xff]
    %v4853 = vld [vmem:[#allocation2 + $0xe1] sm:$0xff]
    %v4854 = vld [vmem:[#allocation2 + $0xf1] sm:$0xff]
    %v4855 = vld [vmem:[#allocation2 + $0xf9] sm:$0xff]
    %v4856 = vld [vmem:[#allocation2 + $0x109] sm:$0xff]
    %v4857 = vld [vmem:[#allocation2 + $0x111] sm:$0xff]
    %v4858 = vld [vmem:[#allocation2 + $0x121] sm:$0xff]
    %v4859 = vld [vmem:[#allocation2 + $0x129] sm:$0xff]
    %v4860 = vld [vmem:[#allocation2 + $0x139] sm:$0xff]
    %v4861 = vld [vmem:[#allocation2 + $0x141] sm:$0xff]
    %v4862 = vld [vmem:[#allocation2 + $0x151] sm:$0xff]
    %v4863 = vld [vmem:[#allocation2 + $0x159] sm:$0xff]
    %v4864 = vld [vmem:[#allocation2 + $0x169] sm:$0xff]
    %v4865 = vld [vmem:[#allocation2 + $0x171] sm:$0xff]
    %v4866 = vld [vmem:[#allocation2 + $0x1b1] sm:$0xff]
    %v4867 = vld [vmem:[#allocation2 + $0x1b9] sm:$0xff]
    %v4868 = vld [vmem:[#allocation2 + $0x1c9] sm:$0xff]
    %v4869 = vld [vmem:[#allocation2 + $0x1d1] sm:$0xff]
    %v4870 = vld [vmem:[#allocation2 + $0x1e1] sm:$0xff]
    %v4871 = vld [vmem:[#allocation2 + $0x1e9] sm:$0xff]
    %v4872 = vld [vmem:[#allocation2 + $0x1f9] sm:$0xff]
    %v4873 = vld [vmem:[#allocation2 + $0x201] sm:$0xff]
    %v4874 = vld [vmem:[#allocation2 + $0x211] sm:$0xff]
    %v4875 = vld [vmem:[#allocation2 + $0x219] sm:$0xff]
    %v4876 = vld [vmem:[#allocation2 + $0x229] sm:$0xff]
    %v4877 = vld [vmem:[#allocation2 + $0x231] sm:$0xff]
    %v4878 = vld [vmem:[#allocation2 + $0x241] sm:$0xff]
    %v4879 = vld [vmem:[#allocation2 + $0x249] sm:$0xff]
    %v4880 = vld [vmem:[#allocation2 + $0x259] sm:$0xff]
    %v4881 = vld [vmem:[#allocation2 + $0x261] sm:$0xff]
    %v4882 = vld [vmem:[#allocation2 + $0x271] sm:$0xff]
    %v4883 = vld [vmem:[#allocation2 + $0x279] sm:$0xff]
    %v4884 = vld [vmem:[#allocation2 + $0x289] sm:$0xff]
    %v4885 = vld [vmem:[#allocation2 + $0x291] sm:$0xff]
    %v4886 = vld [vmem:[#allocation2 + $0x2a1] sm:$0xff]
    %v4887 = vld [vmem:[#allocation2 + $0x2a9] sm:$0xff]
    %v4888 = vld [vmem:[#allocation2 + $0x2b9] sm:$0xff]
    %v4889 = vld [vmem:[#allocation2 + $0x2c1] sm:$0xff]
    %v4890 = vld [vmem:[#allocation2 + $0x2d1] sm:$0xff]
    %v4891 = vld [vmem:[#allocation2 + $0x2d9] sm:$0xff]
    %v4892 = vld [vmem:[#allocation2 + $0x2e9] sm:$0xff]
    %v4893 = vld [vmem:[#allocation2 + $0x2f1] sm:$0xff]
    %v4894 = vld [vmem:[#allocation2 + $0x301] sm:$0xff]
    %v4895 = vld [vmem:[#allocation2 + $0x309] sm:$0xff]
    %v4896 = vld [vmem:[#allocation2 + $0x319] sm:$0xff]
    %v4897 = vld [vmem:[#allocation2 + $0x321] sm:$0xff]
    %4898 = vst [vmem:[#allocation3 + $0x8] sm:$0xff] %v4834
    %4899 = vst [vmem:[#allocation3 + $0x50] sm:$0xff] %v4835
    %4900 = vst [vmem:[#allocation3 + $0x98] sm:$0xff] %v4836
    %4901 = vst [vmem:[#allocation3 + $0xe0] sm:$0xff] %v4837
    %4902 = vst [vmem:[#allocation3 + $0x128] sm:$0xff] %v4838
    %4903 = vst [vmem:[#allocation3 + $0x170] sm:$0xff] %v4839
    %4904 = vst [vmem:[#allocation3 + $0x1b8] sm:$0xff] %v4840
    %4905 = vst [vmem:[#allocation3 + $0x200] sm:$0xff] %v4841
    %4906 = vst [vmem:[#allocation3 + $0x248] sm:$0xff] %v4842
    %4907 = vst [vmem:[#allocation3 + $0x290] sm:$0xff] %v4843
    %4908 = vst [vmem:[#allocation3 + $0x2d8] sm:$0xff] %v4844
    %4909 = vst [vmem:[#allocation3 + $0x320] sm:$0xff] %v4845
    %4910 = vst [vmem:[#allocation3 + $0x368] sm:$0xff] %v4846
    %4911 = vst [vmem:[#allocation3 + $0x3b0] sm:$0xff] %v4847
    %4912 = vst [vmem:[#allocation3 + $0x3f8] sm:$0xff] %v4848
    %4913 = vst [vmem:[#allocation3 + $0x440] sm:$0xff] %v4849
    %4914 = vst [vmem:[#allocation3 + $0x488] sm:$0xff] %v4850
    %4915 = vst [vmem:[#allocation3 + $0x4d0] sm:$0xff] %v4851
    %4916 = vst [vmem:[#allocation3 + $0x518] sm:$0xff] %v4852
    %4917 = vst [vmem:[#allocation3 + $0x560] sm:$0xff] %v4853
    %4918 = vst [vmem:[#allocation3 + $0x5a8] sm:$0xff] %v4854
    %4919 = vst [vmem:[#allocation3 + $0x5f0] sm:$0xff] %v4855
    %4920 = vst [vmem:[#allocation3 + $0x638] sm:$0xff] %v4856
    %4921 = vst [vmem:[#allocation3 + $0x680] sm:$0xff] %v4857
    %4922 = vst [vmem:[#allocation3 + $0x6c8] sm:$0xff] %v4858
    %4923 = vst [vmem:[#allocation3 + $0x710] sm:$0xff] %v4859
    %4924 = vst [vmem:[#allocation3 + $0x758] sm:$0xff] %v4860
    %4925 = vst [vmem:[#allocation3 + $0x7a0] sm:$0xff] %v4861
    %4926 = vst [vmem:[#allocation3 + $0x7e8] sm:$0xff] %v4862
    %4927 = vst [vmem:[#allocation3 + $0x830] sm:$0xff] %v4863
    %4928 = vst [vmem:[#allocation3 + $0x878] sm:$0xff] %v4864
    %4929 = vst [vmem:[#allocation3 + $0x8c0] sm:$0xff] %v4865
    %4930 = vst [vmem:[#allocation3 + $0x908] sm:$0xff] %v4866
    %4931 = vst [vmem:[#allocation3 + $0x950] sm:$0xff] %v4867
    %4932 = vst [vmem:[#allocation3 + $0x998] sm:$0xff] %v4868
    %4933 = vst [vmem:[#allocation3 + $0x9e0] sm:$0xff] %v4869
    %4934 = vst [vmem:[#allocation3 + $0xa28] sm:$0xff] %v4870
    %4935 = vst [vmem:[#allocation3 + $0xa70] sm:$0xff] %v4871
    %4936 = vst [vmem:[#allocation3 + $0xab8] sm:$0xff] %v4872
    %4937 = vst [vmem:[#allocation3 + $0xb00] sm:$0xff] %v4873
    %4938 = vst [vmem:[#allocation3 + $0xb48] sm:$0xff] %v4874
    %4939 = vst [vmem:[#allocation3 + $0xb90] sm:$0xff] %v4875
    %4940 = vst [vmem:[#allocation3 + $0xbd8] sm:$0xff] %v4876
    %4941 = vst [vmem:[#allocation3 + $0xc20] sm:$0xff] %v4877
    %4942 = vst [vmem:[#allocation3 + $0xc68] sm:$0xff] %v4878
    %4943 = vst [vmem:[#allocation3 + $0xcb0] sm:$0xff] %v4879
    %4944 = vst [vmem:[#allocation3 + $0xcf8] sm:$0xff] %v4880
    %4945 = vst [vmem:[#allocation3 + $0xd40] sm:$0xff] %v4881
    %4946 = vst [vmem:[#allocation3 + $0xd88] sm:$0xff] %v4882
    %4947 = vst [vmem:[#allocation3 + $0xdd0] sm:$0xff] %v4883
    %4948 = vst [vmem:[#allocation3 + $0xe18] sm:$0xff] %v4884
    %4949 = vst [vmem:[#allocation3 + $0xe60] sm:$0xff] %v4885
    %4950 = vst [vmem:[#allocation3 + $0xea8] sm:$0xff] %v4886
    %4951 = vst [vmem:[#allocation3 + $0xef0] sm:$0xff] %v4887
    %4952 = vst [vmem:[#allocation3 + $0xf38] sm:$0xff] %v4888
    %4953 = vst [vmem:[#allocation3 + $0xf80] sm:$0xff] %v4889
    %4954 = vst [vmem:[#allocation3 + $0xfc8] sm:$0xff] %v4890
    %4955 = vst [vmem:[#allocation3 + $0x1010] sm:$0xff] %v4891
    %4956 = vst [vmem:[#allocation3 + $0x1058] sm:$0xff] %v4892
    %4957 = vst [vmem:[#allocation3 + $0x10a0] sm:$0xff] %v4893
    %4958 = vst [vmem:[#allocation3 + $0x10e8] sm:$0xff] %v4894
    %4959 = vst [vmem:[#allocation3 + $0x1130] sm:$0xff] %v4895
    %4960 = vst [vmem:[#allocation3 + $0x1178] sm:$0xff] %v4896
    %4961 = vst [vmem:[#allocation3 + $0x11c0] sm:$0xff] %v4897
    %v4962 = vld [vmem:[#allocation2 + $0x2] sm:$0xff]
    %v4963 = vld [vmem:[#allocation2 + $0xa] sm:$0xff]
    %v4964 = vld [vmem:[#allocation2 + $0x1a] sm:$0xff]
    %v4965 = vld [vmem:[#allocation2 + $0x22] sm:$0xff]
    %v4966 = vld [vmem:[#allocation2 + $0x32] sm:$0xff]
    %v4967 = vld [vmem:[#allocation2 + $0x3a] sm:$0xff]
    %v4968 = vld [vmem:[#allocation2 + $0x4a] sm:$0xff]
    %v4969 = vld [vmem:[#allocation2 + $0x52] sm:$0xff]
    %v4970 = vld [vmem:[#allocation2 + $0x62] sm:$0xff]
    %v4971 = vld [vmem:[#allocation2 + $0x6a] sm:$0xff]
    %v4972 = vld [vmem:[#allocation2 + $0x7a] sm:$0xff]
    %v4973 = vld [vmem:[#allocation2 + $0x82] sm:$0xff]
    %v4974 = vld [vmem:[#allocation2 + $0x92] sm:$0xff]
    %v4975 = vld [vmem:[#allocation2 + $0x9a] sm:$0xff]
    %v4976 = vld [vmem:[#allocation2 + $0xaa] sm:$0xff]
    %v4977 = vld [vmem:[#allocation2 + $0xb2] sm:$0xff]
    %v4978 = vld [vmem:[#allocation2 + $0xc2] sm:$0xff]
    %v4979 = vld [vmem:[#allocation2 + $0xca] sm:$0xff]
    %v4980 = vld [vmem:[#allocation2 + $0xda] sm:$0xff]
    %v4981 = vld [vmem:[#allocation2 + $0xe2] sm:$0xff]
    %v4982 = vld [vmem:[#allocation2 + $0xf2] sm:$0xff]
    %v4983 = vld [vmem:[#allocation2 + $0xfa] sm:$0xff]
    %v4984 = vld [vmem:[#allocation2 + $0x10a] sm:$0xff]
    %v4985 = vld [vmem:[#allocation2 + $0x112] sm:$0xff]
    %v4986 = vld [vmem:[#allocation2 + $0x122] sm:$0xff]
    %v4987 = vld [vmem:[#allocation2 + $0x12a] sm:$0xff]
    %v4988 = vld [vmem:[#allocation2 + $0x13a] sm:$0xff]
    %v4989 = vld [vmem:[#allocation2 + $0x142] sm:$0xff]
    %v4990 = vld [vmem:[#allocation2 + $0x152] sm:$0xff]
    %v4991 = vld [vmem:[#allocation2 + $0x15a] sm:$0xff]
    %v4992 = vld [vmem:[#allocation2 + $0x16a] sm:$0xff]
    %v4993 = vld [vmem:[#allocation2 + $0x172] sm:$0xff]
    %v4994 = vld [vmem:[#allocation2 + $0x1b2] sm:$0xff]
    %v4995 = vld [vmem:[#allocation2 + $0x1ba] sm:$0xff]
    %v4996 = vld [vmem:[#allocation2 + $0x1ca] sm:$0xff]
    %v4997 = vld [vmem:[#allocation2 + $0x1d2] sm:$0xff]
    %v4998 = vld [vmem:[#allocation2 + $0x1e2] sm:$0xff]
    %v4999 = vld [vmem:[#allocation2 + $0x1ea] sm:$0xff]
    %v5000 = vld [vmem:[#allocation2 + $0x1fa] sm:$0xff]
    %v5001 = vld [vmem:[#allocation2 + $0x202] sm:$0xff]
    %v5002 = vld [vmem:[#allocation2 + $0x212] sm:$0xff]
    %v5003 = vld [vmem:[#allocation2 + $0x21a] sm:$0xff]
    %v5004 = vld [vmem:[#allocation2 + $0x22a] sm:$0xff]
    %v5005 = vld [vmem:[#allocation2 + $0x232] sm:$0xff]
    %v5006 = vld [vmem:[#allocation2 + $0x242] sm:$0xff]
    %v5007 = vld [vmem:[#allocation2 + $0x24a] sm:$0xff]
    %v5008 = vld [vmem:[#allocation2 + $0x25a] sm:$0xff]
    %v5009 = vld [vmem:[#allocation2 + $0x262] sm:$0xff]
    %v5010 = vld [vmem:[#allocation2 + $0x272] sm:$0xff]
    %v5011 = vld [vmem:[#allocation2 + $0x27a] sm:$0xff]
    %v5012 = vld [vmem:[#allocation2 + $0x28a] sm:$0xff]
    %v5013 = vld [vmem:[#allocation2 + $0x292] sm:$0xff]
    %v5014 = vld [vmem:[#allocation2 + $0x2a2] sm:$0xff]
    %v5015 = vld [vmem:[#allocation2 + $0x2aa] sm:$0xff]
    %v5016 = vld [vmem:[#allocation2 + $0x2ba] sm:$0xff]
    %v5017 = vld [vmem:[#allocation2 + $0x2c2] sm:$0xff]
    %v5018 = vld [vmem:[#allocation2 + $0x2d2] sm:$0xff]
    %v5019 = vld [vmem:[#allocation2 + $0x2da] sm:$0xff]
    %v5020 = vld [vmem:[#allocation2 + $0x2ea] sm:$0xff]
    %v5021 = vld [vmem:[#allocation2 + $0x2f2] sm:$0xff]
    %v5022 = vld [vmem:[#allocation2 + $0x302] sm:$0xff]
    %v5023 = vld [vmem:[#allocation2 + $0x30a] sm:$0xff]
    %v5024 = vld [vmem:[#allocation2 + $0x31a] sm:$0xff]
    %v5025 = vld [vmem:[#allocation2 + $0x322] sm:$0xff]
    %5026 = vst [vmem:[#allocation3 + $0x10] sm:$0xff] %v4962
    %5027 = vst [vmem:[#allocation3 + $0x58] sm:$0xff] %v4963
    %5028 = vst [vmem:[#allocation3 + $0xa0] sm:$0xff] %v4964
    %5029 = vst [vmem:[#allocation3 + $0xe8] sm:$0xff] %v4965
    %5030 = vst [vmem:[#allocation3 + $0x130] sm:$0xff] %v4966
    %5031 = vst [vmem:[#allocation3 + $0x178] sm:$0xff] %v4967
    %5032 = vst [vmem:[#allocation3 + $0x1c0] sm:$0xff] %v4968
    %5033 = vst [vmem:[#allocation3 + $0x208] sm:$0xff] %v4969
    %5034 = vst [vmem:[#allocation3 + $0x250] sm:$0xff] %v4970
    %5035 = vst [vmem:[#allocation3 + $0x298] sm:$0xff] %v4971
    %5036 = vst [vmem:[#allocation3 + $0x2e0] sm:$0xff] %v4972
    %5037 = vst [vmem:[#allocation3 + $0x328] sm:$0xff] %v4973
    %5038 = vst [vmem:[#allocation3 + $0x370] sm:$0xff] %v4974
    %5039 = vst [vmem:[#allocation3 + $0x3b8] sm:$0xff] %v4975
    %5040 = vst [vmem:[#allocation3 + $0x400] sm:$0xff] %v4976
    %5041 = vst [vmem:[#allocation3 + $0x448] sm:$0xff] %v4977
    %5042 = vst [vmem:[#allocation3 + $0x490] sm:$0xff] %v4978
    %5043 = vst [vmem:[#allocation3 + $0x4d8] sm:$0xff] %v4979
    %5044 = vst [vmem:[#allocation3 + $0x520] sm:$0xff] %v4980
    %5045 = vst [vmem:[#allocation3 + $0x568] sm:$0xff] %v4981
    %5046 = vst [vmem:[#allocation3 + $0x5b0] sm:$0xff] %v4982
    %5047 = vst [vmem:[#allocation3 + $0x5f8] sm:$0xff] %v4983
    %5048 = vst [vmem:[#allocation3 + $0x640] sm:$0xff] %v4984
    %5049 = vst [vmem:[#allocation3 + $0x688] sm:$0xff] %v4985
    %5050 = vst [vmem:[#allocation3 + $0x6d0] sm:$0xff] %v4986
    %5051 = vst [vmem:[#allocation3 + $0x718] sm:$0xff] %v4987
    %5052 = vst [vmem:[#allocation3 + $0x760] sm:$0xff] %v4988
    %5053 = vst [vmem:[#allocation3 + $0x7a8] sm:$0xff] %v4989
    %5054 = vst [vmem:[#allocation3 + $0x7f0] sm:$0xff] %v4990
    %5055 = vst [vmem:[#allocation3 + $0x838] sm:$0xff] %v4991
    %5056 = vst [vmem:[#allocation3 + $0x880] sm:$0xff] %v4992
    %5057 = vst [vmem:[#allocation3 + $0x8c8] sm:$0xff] %v4993
    %5058 = vst [vmem:[#allocation3 + $0x910] sm:$0xff] %v4994
    %5059 = vst [vmem:[#allocation3 + $0x958] sm:$0xff] %v4995
    %5060 = vst [vmem:[#allocation3 + $0x9a0] sm:$0xff] %v4996
    %5061 = vst [vmem:[#allocation3 + $0x9e8] sm:$0xff] %v4997
    %5062 = vst [vmem:[#allocation3 + $0xa30] sm:$0xff] %v4998
    %5063 = vst [vmem:[#allocation3 + $0xa78] sm:$0xff] %v4999
    %5064 = vst [vmem:[#allocation3 + $0xac0] sm:$0xff] %v5000
    %5065 = vst [vmem:[#allocation3 + $0xb08] sm:$0xff] %v5001
    %5066 = vst [vmem:[#allocation3 + $0xb50] sm:$0xff] %v5002
    %5067 = vst [vmem:[#allocation3 + $0xb98] sm:$0xff] %v5003
    %5068 = vst [vmem:[#allocation3 + $0xbe0] sm:$0xff] %v5004
    %5069 = vst [vmem:[#allocation3 + $0xc28] sm:$0xff] %v5005
    %5070 = vst [vmem:[#allocation3 + $0xc70] sm:$0xff] %v5006
    %5071 = vst [vmem:[#allocation3 + $0xcb8] sm:$0xff] %v5007
    %5072 = vst [vmem:[#allocation3 + $0xd00] sm:$0xff] %v5008
    %5073 = vst [vmem:[#allocation3 + $0xd48] sm:$0xff] %v5009
    %5074 = vst [vmem:[#allocation3 + $0xd90] sm:$0xff] %v5010
    %5075 = vst [vmem:[#allocation3 + $0xdd8] sm:$0xff] %v5011
    %5076 = vst [vmem:[#allocation3 + $0xe20] sm:$0xff] %v5012
    %5077 = vst [vmem:[#allocation3 + $0xe68] sm:$0xff] %v5013
    %5078 = vst [vmem:[#allocation3 + $0xeb0] sm:$0xff] %v5014
    %5079 = vst [vmem:[#allocation3 + $0xef8] sm:$0xff] %v5015
    %5080 = vst [vmem:[#allocation3 + $0xf40] sm:$0xff] %v5016
    %5081 = vst [vmem:[#allocation3 + $0xf88] sm:$0xff] %v5017
    %5082 = vst [vmem:[#allocation3 + $0xfd0] sm:$0xff] %v5018
    %5083 = vst [vmem:[#allocation3 + $0x1018] sm:$0xff] %v5019
    %5084 = vst [vmem:[#allocation3 + $0x1060] sm:$0xff] %v5020
    %5085 = vst [vmem:[#allocation3 + $0x10a8] sm:$0xff] %v5021
    %5086 = vst [vmem:[#allocation3 + $0x10f0] sm:$0xff] %v5022
    %5087 = vst [vmem:[#allocation3 + $0x1138] sm:$0xff] %v5023
    %5088 = vst [vmem:[#allocation3 + $0x1180] sm:$0xff] %v5024
    %5089 = vst [vmem:[#allocation3 + $0x11c8] sm:$0xff] %v5025
    %v5090 = vld [vmem:[%s217] sm:$0xff]
    %v5091 = vld [vmem:[%s217 + $0x8] sm:$0xff]
    %v5092 = vld [vmem:[%s217 + $0x18] sm:$0xff]
    %v5093 = vld [vmem:[%s217 + $0x20] sm:$0xff]
    %v5094 = vld [vmem:[%s217 + $0x30] sm:$0xff]
    %v5095 = vld [vmem:[%s217 + $0x38] sm:$0xff]
    %v5096 = vld [vmem:[%s217 + $0x48] sm:$0xff]
    %v5097 = vld [vmem:[%s217 + $0x50] sm:$0xff]
    %v5098 = vld [vmem:[%s217 + $0x60] sm:$0xff]
    %v5099 = vld [vmem:[%s217 + $0x68] sm:$0xff]
    %v5100 = vld [vmem:[%s217 + $0x78] sm:$0xff]
    %v5101 = vld [vmem:[%s217 + $0x80] sm:$0xff]
    %v5102 = vld [vmem:[%s217 + $0x90] sm:$0xff]
    %v5103 = vld [vmem:[%s217 + $0x98] sm:$0xff]
    %v5104 = vld [vmem:[%s217 + $0xa8] sm:$0xff]
    %v5105 = vld [vmem:[%s217 + $0xb0] sm:$0xff]
    %v5106 = vld [vmem:[%s217 + $0xc0] sm:$0xff]
    %v5107 = vld [vmem:[%s217 + $0xc8] sm:$0xff]
    %v5108 = vld [vmem:[%s217 + $0xd8] sm:$0xff]
    %v5109 = vld [vmem:[%s217 + $0xe0] sm:$0xff]
    %v5110 = vld [vmem:[%s217 + $0xf0] sm:$0xff]
    %v5111 = vld [vmem:[%s217 + $0xf8] sm:$0xff]
    %v5112 = vld [vmem:[%s217 + $0x108] sm:$0xff]
    %v5113 = vld [vmem:[%s217 + $0x110] sm:$0xff]
    %v5114 = vld [vmem:[%s217 + $0x120] sm:$0xff]
    %v5115 = vld [vmem:[%s217 + $0x128] sm:$0xff]
    %v5116 = vld [vmem:[%s217 + $0x138] sm:$0xff]
    %v5117 = vld [vmem:[%s217 + $0x140] sm:$0xff]
    %v5118 = vld [vmem:[%s217 + $0x150] sm:$0xff]
    %v5119 = vld [vmem:[%s217 + $0x158] sm:$0xff]
    %v5120 = vld [vmem:[%s217 + $0x168] sm:$0xff]
    %v5121 = vld [vmem:[%s217 + $0x170] sm:$0xff]
    %v5122 = vld [vmem:[%s217 + $0x1b0] sm:$0xff]
    %v5123 = vld [vmem:[%s217 + $0x1b8] sm:$0xff]
    %v5124 = vld [vmem:[%s217 + $0x1c8] sm:$0xff]
    %v5125 = vld [vmem:[%s217 + $0x1d0] sm:$0xff]
    %v5126 = vld [vmem:[%s217 + $0x1e0] sm:$0xff]
    %v5127 = vld [vmem:[%s217 + $0x1e8] sm:$0xff]
    %v5128 = vld [vmem:[%s217 + $0x1f8] sm:$0xff]
    %v5129 = vld [vmem:[%s217 + $0x200] sm:$0xff]
    %v5130 = vld [vmem:[%s217 + $0x210] sm:$0xff]
    %v5131 = vld [vmem:[%s217 + $0x218] sm:$0xff]
    %v5132 = vld [vmem:[%s217 + $0x228] sm:$0xff]
    %v5133 = vld [vmem:[%s217 + $0x230] sm:$0xff]
    %v5134 = vld [vmem:[%s217 + $0x240] sm:$0xff]
    %v5135 = vld [vmem:[%s217 + $0x248] sm:$0xff]
    %v5136 = vld [vmem:[%s217 + $0x258] sm:$0xff]
    %v5137 = vld [vmem:[%s217 + $0x260] sm:$0xff]
    %v5138 = vld [vmem:[%s217 + $0x270] sm:$0xff]
    %v5139 = vld [vmem:[%s217 + $0x278] sm:$0xff]
    %v5140 = vld [vmem:[%s217 + $0x288] sm:$0xff]
    %v5141 = vld [vmem:[%s217 + $0x290] sm:$0xff]
    %v5142 = vld [vmem:[%s217 + $0x2a0] sm:$0xff]
    %v5143 = vld [vmem:[%s217 + $0x2a8] sm:$0xff]
    %v5144 = vld [vmem:[%s217 + $0x2b8] sm:$0xff]
    %v5145 = vld [vmem:[%s217 + $0x2c0] sm:$0xff]
    %v5146 = vld [vmem:[%s217 + $0x2d0] sm:$0xff]
    %v5147 = vld [vmem:[%s217 + $0x2d8] sm:$0xff]
    %v5148 = vld [vmem:[%s217 + $0x2e8] sm:$0xff]
    %v5149 = vld [vmem:[%s217 + $0x2f0] sm:$0xff]
    %v5150 = vld [vmem:[%s217 + $0x300] sm:$0xff]
    %v5151 = vld [vmem:[%s217 + $0x308] sm:$0xff]
    %v5152 = vld [vmem:[%s217 + $0x318] sm:$0xff]
    %v5153 = vld [vmem:[%s217 + $0x320] sm:$0xff]
    %5154 = vst [vmem:[#allocation3 + $0x18] sm:$0xff] %v5090
    %5155 = vst [vmem:[#allocation3 + $0x60] sm:$0xff] %v5091
    %5156 = vst [vmem:[#allocation3 + $0xa8] sm:$0xff] %v5092
    %5157 = vst [vmem:[#allocation3 + $0xf0] sm:$0xff] %v5093
    %5158 = vst [vmem:[#allocation3 + $0x138] sm:$0xff] %v5094
    %5159 = vst [vmem:[#allocation3 + $0x180] sm:$0xff] %v5095
    %5160 = vst [vmem:[#allocation3 + $0x1c8] sm:$0xff] %v5096
    %5161 = vst [vmem:[#allocation3 + $0x210] sm:$0xff] %v5097
    %5162 = vst [vmem:[#allocation3 + $0x258] sm:$0xff] %v5098
    %5163 = vst [vmem:[#allocation3 + $0x2a0] sm:$0xff] %v5099
    %5164 = vst [vmem:[#allocation3 + $0x2e8] sm:$0xff] %v5100
    %5165 = vst [vmem:[#allocation3 + $0x330] sm:$0xff] %v5101
    %5166 = vst [vmem:[#allocation3 + $0x378] sm:$0xff] %v5102
    %5167 = vst [vmem:[#allocation3 + $0x3c0] sm:$0xff] %v5103
    %5168 = vst [vmem:[#allocation3 + $0x408] sm:$0xff] %v5104
    %5169 = vst [vmem:[#allocation3 + $0x450] sm:$0xff] %v5105
    %5170 = vst [vmem:[#allocation3 + $0x498] sm:$0xff] %v5106
    %5171 = vst [vmem:[#allocation3 + $0x4e0] sm:$0xff] %v5107
    %5172 = vst [vmem:[#allocation3 + $0x528] sm:$0xff] %v5108
    %5173 = vst [vmem:[#allocation3 + $0x570] sm:$0xff] %v5109
    %5174 = vst [vmem:[#allocation3 + $0x5b8] sm:$0xff] %v5110
    %5175 = vst [vmem:[#allocation3 + $0x600] sm:$0xff] %v5111
    %5176 = vst [vmem:[#allocation3 + $0x648] sm:$0xff] %v5112
    %5177 = vst [vmem:[#allocation3 + $0x690] sm:$0xff] %v5113
    %5178 = vst [vmem:[#allocation3 + $0x6d8] sm:$0xff] %v5114
    %5179 = vst [vmem:[#allocation3 + $0x720] sm:$0xff] %v5115
    %5180 = vst [vmem:[#allocation3 + $0x768] sm:$0xff] %v5116
    %5181 = vst [vmem:[#allocation3 + $0x7b0] sm:$0xff] %v5117
    %5182 = vst [vmem:[#allocation3 + $0x7f8] sm:$0xff] %v5118
    %5183 = vst [vmem:[#allocation3 + $0x840] sm:$0xff] %v5119
    %5184 = vst [vmem:[#allocation3 + $0x888] sm:$0xff] %v5120
    %5185 = vst [vmem:[#allocation3 + $0x8d0] sm:$0xff] %v5121
    %5186 = vst [vmem:[#allocation3 + $0x918] sm:$0xff] %v5122
    %5187 = vst [vmem:[#allocation3 + $0x960] sm:$0xff] %v5123
    %5188 = vst [vmem:[#allocation3 + $0x9a8] sm:$0xff] %v5124
    %5189 = vst [vmem:[#allocation3 + $0x9f0] sm:$0xff] %v5125
    %5190 = vst [vmem:[#allocation3 + $0xa38] sm:$0xff] %v5126
    %5191 = vst [vmem:[#allocation3 + $0xa80] sm:$0xff] %v5127
    %5192 = vst [vmem:[#allocation3 + $0xac8] sm:$0xff] %v5128
    %5193 = vst [vmem:[#allocation3 + $0xb10] sm:$0xff] %v5129
    %5194 = vst [vmem:[#allocation3 + $0xb58] sm:$0xff] %v5130
    %5195 = vst [vmem:[#allocation3 + $0xba0] sm:$0xff] %v5131
    %5196 = vst [vmem:[#allocation3 + $0xbe8] sm:$0xff] %v5132
    %5197 = vst [vmem:[#allocation3 + $0xc30] sm:$0xff] %v5133
    %5198 = vst [vmem:[#allocation3 + $0xc78] sm:$0xff] %v5134
    %5199 = vst [vmem:[#allocation3 + $0xcc0] sm:$0xff] %v5135
    %5200 = vst [vmem:[#allocation3 + $0xd08] sm:$0xff] %v5136
    %5201 = vst [vmem:[#allocation3 + $0xd50] sm:$0xff] %v5137
    %5202 = vst [vmem:[#allocation3 + $0xd98] sm:$0xff] %v5138
    %5203 = vst [vmem:[#allocation3 + $0xde0] sm:$0xff] %v5139
    %5204 = vst [vmem:[#allocation3 + $0xe28] sm:$0xff] %v5140
    %5205 = vst [vmem:[#allocation3 + $0xe70] sm:$0xff] %v5141
    %5206 = vst [vmem:[#allocation3 + $0xeb8] sm:$0xff] %v5142
    %5207 = vst [vmem:[#allocation3 + $0xf00] sm:$0xff] %v5143
    %5208 = vst [vmem:[#allocation3 + $0xf48] sm:$0xff] %v5144
    %5209 = vst [vmem:[#allocation3 + $0xf90] sm:$0xff] %v5145
    %5210 = vst [vmem:[#allocation3 + $0xfd8] sm:$0xff] %v5146
    %5211 = vst [vmem:[#allocation3 + $0x1020] sm:$0xff] %v5147
    %5212 = vst [vmem:[#allocation3 + $0x1068] sm:$0xff] %v5148
    %5213 = vst [vmem:[#allocation3 + $0x10b0] sm:$0xff] %v5149
    %5214 = vst [vmem:[#allocation3 + $0x10f8] sm:$0xff] %v5150
    %5215 = vst [vmem:[#allocation3 + $0x1140] sm:$0xff] %v5151
    %5216 = vst [vmem:[#allocation3 + $0x1188] sm:$0xff] %v5152
    %5217 = vst [vmem:[#allocation3 + $0x11d0] sm:$0xff] %v5153
    %v5218 = vld [vmem:[%s217 + $0x1] sm:$0xff]
    %v5219 = vld [vmem:[%s217 + $0x9] sm:$0xff]
    %v5220 = vld [vmem:[%s217 + $0x19] sm:$0xff]
    %v5221 = vld [vmem:[%s217 + $0x21] sm:$0xff]
    %v5222 = vld [vmem:[%s217 + $0x31] sm:$0xff]
    %v5223 = vld [vmem:[%s217 + $0x39] sm:$0xff]
    %v5224 = vld [vmem:[%s217 + $0x49] sm:$0xff]
    %v5225 = vld [vmem:[%s217 + $0x51] sm:$0xff]
    %v5226 = vld [vmem:[%s217 + $0x61] sm:$0xff]
    %v5227 = vld [vmem:[%s217 + $0x69] sm:$0xff]
    %v5228 = vld [vmem:[%s217 + $0x79] sm:$0xff]
    %v5229 = vld [vmem:[%s217 + $0x81] sm:$0xff]
    %v5230 = vld [vmem:[%s217 + $0x91] sm:$0xff]
    %v5231 = vld [vmem:[%s217 + $0x99] sm:$0xff]
    %v5232 = vld [vmem:[%s217 + $0xa9] sm:$0xff]
    %v5233 = vld [vmem:[%s217 + $0xb1] sm:$0xff]
    %v5234 = vld [vmem:[%s217 + $0xc1] sm:$0xff]
    %v5235 = vld [vmem:[%s217 + $0xc9] sm:$0xff]
    %v5236 = vld [vmem:[%s217 + $0xd9] sm:$0xff]
    %v5237 = vld [vmem:[%s217 + $0xe1] sm:$0xff]
    %v5238 = vld [vmem:[%s217 + $0xf1] sm:$0xff]
    %v5239 = vld [vmem:[%s217 + $0xf9] sm:$0xff]
    %v5240 = vld [vmem:[%s217 + $0x109] sm:$0xff]
    %v5241 = vld [vmem:[%s217 + $0x111] sm:$0xff]
    %v5242 = vld [vmem:[%s217 + $0x121] sm:$0xff]
    %v5243 = vld [vmem:[%s217 + $0x129] sm:$0xff]
    %v5244 = vld [vmem:[%s217 + $0x139] sm:$0xff]
    %v5245 = vld [vmem:[%s217 + $0x141] sm:$0xff]
    %v5246 = vld [vmem:[%s217 + $0x151] sm:$0xff]
    %v5247 = vld [vmem:[%s217 + $0x159] sm:$0xff]
    %v5248 = vld [vmem:[%s217 + $0x169] sm:$0xff]
    %v5249 = vld [vmem:[%s217 + $0x171] sm:$0xff]
    %v5250 = vld [vmem:[%s217 + $0x1b1] sm:$0xff]
    %v5251 = vld [vmem:[%s217 + $0x1b9] sm:$0xff]
    %v5252 = vld [vmem:[%s217 + $0x1c9] sm:$0xff]
    %v5253 = vld [vmem:[%s217 + $0x1d1] sm:$0xff]
    %v5254 = vld [vmem:[%s217 + $0x1e1] sm:$0xff]
    %v5255 = vld [vmem:[%s217 + $0x1e9] sm:$0xff]
    %v5256 = vld [vmem:[%s217 + $0x1f9] sm:$0xff]
    %v5257 = vld [vmem:[%s217 + $0x201] sm:$0xff]
    %v5258 = vld [vmem:[%s217 + $0x211] sm:$0xff]
    %v5259 = vld [vmem:[%s217 + $0x219] sm:$0xff]
    %v5260 = vld [vmem:[%s217 + $0x229] sm:$0xff]
    %v5261 = vld [vmem:[%s217 + $0x231] sm:$0xff]
    %v5262 = vld [vmem:[%s217 + $0x241] sm:$0xff]
    %v5263 = vld [vmem:[%s217 + $0x249] sm:$0xff]
    %v5264 = vld [vmem:[%s217 + $0x259] sm:$0xff]
    %v5265 = vld [vmem:[%s217 + $0x261] sm:$0xff]
    %v5266 = vld [vmem:[%s217 + $0x271] sm:$0xff]
    %v5267 = vld [vmem:[%s217 + $0x279] sm:$0xff]
    %v5268 = vld [vmem:[%s217 + $0x289] sm:$0xff]
    %v5269 = vld [vmem:[%s217 + $0x291] sm:$0xff]
    %v5270 = vld [vmem:[%s217 + $0x2a1] sm:$0xff]
    %v5271 = vld [vmem:[%s217 + $0x2a9] sm:$0xff]
    %v5272 = vld [vmem:[%s217 + $0x2b9] sm:$0xff]
    %v5273 = vld [vmem:[%s217 + $0x2c1] sm:$0xff]
    %v5274 = vld [vmem:[%s217 + $0x2d1] sm:$0xff]
    %v5275 = vld [vmem:[%s217 + $0x2d9] sm:$0xff]
    %v5276 = vld [vmem:[%s217 + $0x2e9] sm:$0xff]
    %v5277 = vld [vmem:[%s217 + $0x2f1] sm:$0xff]
    %v5278 = vld [vmem:[%s217 + $0x301] sm:$0xff]
    %v5279 = vld [vmem:[%s217 + $0x309] sm:$0xff]
    %v5280 = vld [vmem:[%s217 + $0x319] sm:$0xff]
    %v5281 = vld [vmem:[%s217 + $0x321] sm:$0xff]
    %5282 = vst [vmem:[#allocation3 + $0x20] sm:$0xff] %v5218
    %5283 = vst [vmem:[#allocation3 + $0x68] sm:$0xff] %v5219
    %5284 = vst [vmem:[#allocation3 + $0xb0] sm:$0xff] %v5220
    %5285 = vst [vmem:[#allocation3 + $0xf8] sm:$0xff] %v5221
    %5286 = vst [vmem:[#allocation3 + $0x140] sm:$0xff] %v5222
    %5287 = vst [vmem:[#allocation3 + $0x188] sm:$0xff] %v5223
    %5288 = vst [vmem:[#allocation3 + $0x1d0] sm:$0xff] %v5224
    %5289 = vst [vmem:[#allocation3 + $0x218] sm:$0xff] %v5225
    %5290 = vst [vmem:[#allocation3 + $0x260] sm:$0xff] %v5226
    %5291 = vst [vmem:[#allocation3 + $0x2a8] sm:$0xff] %v5227
    %5292 = vst [vmem:[#allocation3 + $0x2f0] sm:$0xff] %v5228
    %5293 = vst [vmem:[#allocation3 + $0x338] sm:$0xff] %v5229
    %5294 = vst [vmem:[#allocation3 + $0x380] sm:$0xff] %v5230
    %5295 = vst [vmem:[#allocation3 + $0x3c8] sm:$0xff] %v5231
    %5296 = vst [vmem:[#allocation3 + $0x410] sm:$0xff] %v5232
    %5297 = vst [vmem:[#allocation3 + $0x458] sm:$0xff] %v5233
    %5298 = vst [vmem:[#allocation3 + $0x4a0] sm:$0xff] %v5234
    %5299 = vst [vmem:[#allocation3 + $0x4e8] sm:$0xff] %v5235
    %5300 = vst [vmem:[#allocation3 + $0x530] sm:$0xff] %v5236
    %5301 = vst [vmem:[#allocation3 + $0x578] sm:$0xff] %v5237
    %5302 = vst [vmem:[#allocation3 + $0x5c0] sm:$0xff] %v5238
    %5303 = vst [vmem:[#allocation3 + $0x608] sm:$0xff] %v5239
    %5304 = vst [vmem:[#allocation3 + $0x650] sm:$0xff] %v5240
    %5305 = vst [vmem:[#allocation3 + $0x698] sm:$0xff] %v5241
    %5306 = vst [vmem:[#allocation3 + $0x6e0] sm:$0xff] %v5242
    %5307 = vst [vmem:[#allocation3 + $0x728] sm:$0xff] %v5243
    %5308 = vst [vmem:[#allocation3 + $0x770] sm:$0xff] %v5244
    %5309 = vst [vmem:[#allocation3 + $0x7b8] sm:$0xff] %v5245
    %5310 = vst [vmem:[#allocation3 + $0x800] sm:$0xff] %v5246
    %5311 = vst [vmem:[#allocation3 + $0x848] sm:$0xff] %v5247
    %5312 = vst [vmem:[#allocation3 + $0x890] sm:$0xff] %v5248
    %5313 = vst [vmem:[#allocation3 + $0x8d8] sm:$0xff] %v5249
    %5314 = vst [vmem:[#allocation3 + $0x920] sm:$0xff] %v5250
    %5315 = vst [vmem:[#allocation3 + $0x968] sm:$0xff] %v5251
    %5316 = vst [vmem:[#allocation3 + $0x9b0] sm:$0xff] %v5252
    %5317 = vst [vmem:[#allocation3 + $0x9f8] sm:$0xff] %v5253
    %5318 = vst [vmem:[#allocation3 + $0xa40] sm:$0xff] %v5254
    %5319 = vst [vmem:[#allocation3 + $0xa88] sm:$0xff] %v5255
    %5320 = vst [vmem:[#allocation3 + $0xad0] sm:$0xff] %v5256
    %5321 = vst [vmem:[#allocation3 + $0xb18] sm:$0xff] %v5257
    %5322 = vst [vmem:[#allocation3 + $0xb60] sm:$0xff] %v5258
    %5323 = vst [vmem:[#allocation3 + $0xba8] sm:$0xff] %v5259
    %5324 = vst [vmem:[#allocation3 + $0xbf0] sm:$0xff] %v5260
    %5325 = vst [vmem:[#allocation3 + $0xc38] sm:$0xff] %v5261
    %5326 = vst [vmem:[#allocation3 + $0xc80] sm:$0xff] %v5262
    %5327 = vst [vmem:[#allocation3 + $0xcc8] sm:$0xff] %v5263
    %5328 = vst [vmem:[#allocation3 + $0xd10] sm:$0xff] %v5264
    %5329 = vst [vmem:[#allocation3 + $0xd58] sm:$0xff] %v5265
    %5330 = vst [vmem:[#allocation3 + $0xda0] sm:$0xff] %v5266
    %5331 = vst [vmem:[#allocation3 + $0xde8] sm:$0xff] %v5267
    %5332 = vst [vmem:[#allocation3 + $0xe30] sm:$0xff] %v5268
    %5333 = vst [vmem:[#allocation3 + $0xe78] sm:$0xff] %v5269
    %5334 = vst [vmem:[#allocation3 + $0xec0] sm:$0xff] %v5270
    %5335 = vst [vmem:[#allocation3 + $0xf08] sm:$0xff] %v5271
    %5336 = vst [vmem:[#allocation3 + $0xf50] sm:$0xff] %v5272
    %5337 = vst [vmem:[#allocation3 + $0xf98] sm:$0xff] %v5273
    %5338 = vst [vmem:[#allocation3 + $0xfe0] sm:$0xff] %v5274
    %5339 = vst [vmem:[#allocation3 + $0x1028] sm:$0xff] %v5275
    %5340 = vst [vmem:[#allocation3 + $0x1070] sm:$0xff] %v5276
    %5341 = vst [vmem:[#allocation3 + $0x10b8] sm:$0xff] %v5277
    %5342 = vst [vmem:[#allocation3 + $0x1100] sm:$0xff] %v5278
    %5343 = vst [vmem:[#allocation3 + $0x1148] sm:$0xff] %v5279
    %5344 = vst [vmem:[#allocation3 + $0x1190] sm:$0xff] %v5280
    %5345 = vst [vmem:[#allocation3 + $0x11d8] sm:$0xff] %v5281
    %v5346 = vld [vmem:[%s217 + $0x2] sm:$0xff]
    %v5347 = vld [vmem:[%s217 + $0xa] sm:$0xff]
    %v5348 = vld [vmem:[%s217 + $0x1a] sm:$0xff]
    %v5349 = vld [vmem:[%s217 + $0x22] sm:$0xff]
    %v5350 = vld [vmem:[%s217 + $0x32] sm:$0xff]
    %v5351 = vld [vmem:[%s217 + $0x3a] sm:$0xff]
    %v5352 = vld [vmem:[%s217 + $0x4a] sm:$0xff]
    %v5353 = vld [vmem:[%s217 + $0x52] sm:$0xff]
    %v5354 = vld [vmem:[%s217 + $0x62] sm:$0xff]
    %v5355 = vld [vmem:[%s217 + $0x6a] sm:$0xff]
    %v5356 = vld [vmem:[%s217 + $0x7a] sm:$0xff]
    %v5357 = vld [vmem:[%s217 + $0x82] sm:$0xff]
    %v5358 = vld [vmem:[%s217 + $0x92] sm:$0xff]
    %v5359 = vld [vmem:[%s217 + $0x9a] sm:$0xff]
    %v5360 = vld [vmem:[%s217 + $0xaa] sm:$0xff]
    %v5361 = vld [vmem:[%s217 + $0xb2] sm:$0xff]
    %v5362 = vld [vmem:[%s217 + $0xc2] sm:$0xff]
    %v5363 = vld [vmem:[%s217 + $0xca] sm:$0xff]
    %v5364 = vld [vmem:[%s217 + $0xda] sm:$0xff]
    %v5365 = vld [vmem:[%s217 + $0xe2] sm:$0xff]
    %v5366 = vld [vmem:[%s217 + $0xf2] sm:$0xff]
    %v5367 = vld [vmem:[%s217 + $0xfa] sm:$0xff]
    %v5368 = vld [vmem:[%s217 + $0x10a] sm:$0xff]
    %v5369 = vld [vmem:[%s217 + $0x112] sm:$0xff]
    %v5370 = vld [vmem:[%s217 + $0x122] sm:$0xff]
    %v5371 = vld [vmem:[%s217 + $0x12a] sm:$0xff]
    %v5372 = vld [vmem:[%s217 + $0x13a] sm:$0xff]
    %v5373 = vld [vmem:[%s217 + $0x142] sm:$0xff]
    %v5374 = vld [vmem:[%s217 + $0x152] sm:$0xff]
    %v5375 = vld [vmem:[%s217 + $0x15a] sm:$0xff]
    %v5376 = vld [vmem:[%s217 + $0x16a] sm:$0xff]
    %v5377 = vld [vmem:[%s217 + $0x172] sm:$0xff]
    %v5378 = vld [vmem:[%s217 + $0x1b2] sm:$0xff]
    %v5379 = vld [vmem:[%s217 + $0x1ba] sm:$0xff]
    %v5380 = vld [vmem:[%s217 + $0x1ca] sm:$0xff]
    %v5381 = vld [vmem:[%s217 + $0x1d2] sm:$0xff]
    %v5382 = vld [vmem:[%s217 + $0x1e2] sm:$0xff]
    %v5383 = vld [vmem:[%s217 + $0x1ea] sm:$0xff]
    %v5384 = vld [vmem:[%s217 + $0x1fa] sm:$0xff]
    %v5385 = vld [vmem:[%s217 + $0x202] sm:$0xff]
    %v5386 = vld [vmem:[%s217 + $0x212] sm:$0xff]
    %v5387 = vld [vmem:[%s217 + $0x21a] sm:$0xff]
    %v5388 = vld [vmem:[%s217 + $0x22a] sm:$0xff]
    %v5389 = vld [vmem:[%s217 + $0x232] sm:$0xff]
    %v5390 = vld [vmem:[%s217 + $0x242] sm:$0xff]
    %v5391 = vld [vmem:[%s217 + $0x24a] sm:$0xff]
    %v5392 = vld [vmem:[%s217 + $0x25a] sm:$0xff]
    %v5393 = vld [vmem:[%s217 + $0x262] sm:$0xff]
    %v5394 = vld [vmem:[%s217 + $0x272] sm:$0xff]
    %v5395 = vld [vmem:[%s217 + $0x27a] sm:$0xff]
    %v5396 = vld [vmem:[%s217 + $0x28a] sm:$0xff]
    %v5397 = vld [vmem:[%s217 + $0x292] sm:$0xff]
    %v5398 = vld [vmem:[%s217 + $0x2a2] sm:$0xff]
    %v5399 = vld [vmem:[%s217 + $0x2aa] sm:$0xff]
    %v5400 = vld [vmem:[%s217 + $0x2ba] sm:$0xff]
    %v5401 = vld [vmem:[%s217 + $0x2c2] sm:$0xff]
    %v5402 = vld [vmem:[%s217 + $0x2d2] sm:$0xff]
    %v5403 = vld [vmem:[%s217 + $0x2da] sm:$0xff]
    %v5404 = vld [vmem:[%s217 + $0x2ea] sm:$0xff]
    %v5405 = vld [vmem:[%s217 + $0x2f2] sm:$0xff]
    %v5406 = vld [vmem:[%s217 + $0x302] sm:$0xff]
    %v5407 = vld [vmem:[%s217 + $0x30a] sm:$0xff]
    %v5408 = vld [vmem:[%s217 + $0x31a] sm:$0xff]
    %v5409 = vld [vmem:[%s217 + $0x322] sm:$0xff]
    %5410 = vst [vmem:[#allocation3 + $0x28] sm:$0xff] %v5346
    %5411 = vst [vmem:[#allocation3 + $0x70] sm:$0xff] %v5347
    %5412 = vst [vmem:[#allocation3 + $0xb8] sm:$0xff] %v5348
    %5413 = vst [vmem:[#allocation3 + $0x100] sm:$0xff] %v5349
    %5414 = vst [vmem:[#allocation3 + $0x148] sm:$0xff] %v5350
    %5415 = vst [vmem:[#allocation3 + $0x190] sm:$0xff] %v5351
    %5416 = vst [vmem:[#allocation3 + $0x1d8] sm:$0xff] %v5352
    %5417 = vst [vmem:[#allocation3 + $0x220] sm:$0xff] %v5353
    %5418 = vst [vmem:[#allocation3 + $0x268] sm:$0xff] %v5354
    %5419 = vst [vmem:[#allocation3 + $0x2b0] sm:$0xff] %v5355
    %5420 = vst [vmem:[#allocation3 + $0x2f8] sm:$0xff] %v5356
    %5421 = vst [vmem:[#allocation3 + $0x340] sm:$0xff] %v5357
    %5422 = vst [vmem:[#allocation3 + $0x388] sm:$0xff] %v5358
    %5423 = vst [vmem:[#allocation3 + $0x3d0] sm:$0xff] %v5359
    %5424 = vst [vmem:[#allocation3 + $0x418] sm:$0xff] %v5360
    %5425 = vst [vmem:[#allocation3 + $0x460] sm:$0xff] %v5361
    %5426 = vst [vmem:[#allocation3 + $0x4a8] sm:$0xff] %v5362
    %5427 = vst [vmem:[#allocation3 + $0x4f0] sm:$0xff] %v5363
    %5428 = vst [vmem:[#allocation3 + $0x538] sm:$0xff] %v5364
    %5429 = vst [vmem:[#allocation3 + $0x580] sm:$0xff] %v5365
    %5430 = vst [vmem:[#allocation3 + $0x5c8] sm:$0xff] %v5366
    %5431 = vst [vmem:[#allocation3 + $0x610] sm:$0xff] %v5367
    %5432 = vst [vmem:[#allocation3 + $0x658] sm:$0xff] %v5368
    %5433 = vst [vmem:[#allocation3 + $0x6a0] sm:$0xff] %v5369
    %5434 = vst [vmem:[#allocation3 + $0x6e8] sm:$0xff] %v5370
    %5435 = vst [vmem:[#allocation3 + $0x730] sm:$0xff] %v5371
    %5436 = vst [vmem:[#allocation3 + $0x778] sm:$0xff] %v5372
    %5437 = vst [vmem:[#allocation3 + $0x7c0] sm:$0xff] %v5373
    %5438 = vst [vmem:[#allocation3 + $0x808] sm:$0xff] %v5374
    %5439 = vst [vmem:[#allocation3 + $0x850] sm:$0xff] %v5375
    %5440 = vst [vmem:[#allocation3 + $0x898] sm:$0xff] %v5376
    %5441 = vst [vmem:[#allocation3 + $0x8e0] sm:$0xff] %v5377
    %5442 = vst [vmem:[#allocation3 + $0x928] sm:$0xff] %v5378
    %5443 = vst [vmem:[#allocation3 + $0x970] sm:$0xff] %v5379
    %5444 = vst [vmem:[#allocation3 + $0x9b8] sm:$0xff] %v5380
    %5445 = vst [vmem:[#allocation3 + $0xa00] sm:$0xff] %v5381
    %5446 = vst [vmem:[#allocation3 + $0xa48] sm:$0xff] %v5382
    %5447 = vst [vmem:[#allocation3 + $0xa90] sm:$0xff] %v5383
    %5448 = vst [vmem:[#allocation3 + $0xad8] sm:$0xff] %v5384
    %5449 = vst [vmem:[#allocation3 + $0xb20] sm:$0xff] %v5385
    %5450 = vst [vmem:[#allocation3 + $0xb68] sm:$0xff] %v5386
    %5451 = vst [vmem:[#allocation3 + $0xbb0] sm:$0xff] %v5387
    %5452 = vst [vmem:[#allocation3 + $0xbf8] sm:$0xff] %v5388
    %5453 = vst [vmem:[#allocation3 + $0xc40] sm:$0xff] %v5389
    %5454 = vst [vmem:[#allocation3 + $0xc88] sm:$0xff] %v5390
    %5455 = vst [vmem:[#allocation3 + $0xcd0] sm:$0xff] %v5391
    %5456 = vst [vmem:[#allocation3 + $0xd18] sm:$0xff] %v5392
    %5457 = vst [vmem:[#allocation3 + $0xd60] sm:$0xff] %v5393
    %5458 = vst [vmem:[#allocation3 + $0xda8] sm:$0xff] %v5394
    %5459 = vst [vmem:[#allocation3 + $0xdf0] sm:$0xff] %v5395
    %5460 = vst [vmem:[#allocation3 + $0xe38] sm:$0xff] %v5396
    %5461 = vst [vmem:[#allocation3 + $0xe80] sm:$0xff] %v5397
    %5462 = vst [vmem:[#allocation3 + $0xec8] sm:$0xff] %v5398
    %5463 = vst [vmem:[#allocation3 + $0xf10] sm:$0xff] %v5399
    %5464 = vst [vmem:[#allocation3 + $0xf58] sm:$0xff] %v5400
    %5465 = vst [vmem:[#allocation3 + $0xfa0] sm:$0xff] %v5401
    %5466 = vst [vmem:[#allocation3 + $0xfe8] sm:$0xff] %v5402
    %5467 = vst [vmem:[#allocation3 + $0x1030] sm:$0xff] %v5403
    %5468 = vst [vmem:[#allocation3 + $0x1078] sm:$0xff] %v5404
    %5469 = vst [vmem:[#allocation3 + $0x10c0] sm:$0xff] %v5405
    %5470 = vst [vmem:[#allocation3 + $0x1108] sm:$0xff] %v5406
    %5471 = vst [vmem:[#allocation3 + $0x1150] sm:$0xff] %v5407
    %5472 = vst [vmem:[#allocation3 + $0x1198] sm:$0xff] %v5408
    %5473 = vst [vmem:[#allocation3 + $0x11e0] sm:$0xff] %v5409
    %v5474 = vld [vmem:[%s1194] sm:$0xff]
    %v5475 = vld [vmem:[%s1194 + $0x8] sm:$0xff]
    %v5476 = vld [vmem:[%s1194 + $0x18] sm:$0xff]
    %v5477 = vld [vmem:[%s1194 + $0x20] sm:$0xff]
    %v5478 = vld [vmem:[%s1194 + $0x30] sm:$0xff]
    %v5479 = vld [vmem:[%s1194 + $0x38] sm:$0xff]
    %v5480 = vld [vmem:[%s1194 + $0x48] sm:$0xff]
    %v5481 = vld [vmem:[%s1194 + $0x50] sm:$0xff]
    %v5482 = vld [vmem:[%s1194 + $0x60] sm:$0xff]
    %v5483 = vld [vmem:[%s1194 + $0x68] sm:$0xff]
    %v5484 = vld [vmem:[%s1194 + $0x78] sm:$0xff]
    %v5485 = vld [vmem:[%s1194 + $0x80] sm:$0xff]
    %v5486 = vld [vmem:[%s1194 + $0x90] sm:$0xff]
    %v5487 = vld [vmem:[%s1194 + $0x98] sm:$0xff]
    %v5488 = vld [vmem:[%s1194 + $0xa8] sm:$0xff]
    %v5489 = vld [vmem:[%s1194 + $0xb0] sm:$0xff]
    %v5490 = vld [vmem:[%s1194 + $0xc0] sm:$0xff]
    %v5491 = vld [vmem:[%s1194 + $0xc8] sm:$0xff]
    %v5492 = vld [vmem:[%s1194 + $0xd8] sm:$0xff]
    %v5493 = vld [vmem:[%s1194 + $0xe0] sm:$0xff]
    %v5494 = vld [vmem:[%s1194 + $0xf0] sm:$0xff]
    %v5495 = vld [vmem:[%s1194 + $0xf8] sm:$0xff]
    %v5496 = vld [vmem:[%s1194 + $0x108] sm:$0xff]
    %v5497 = vld [vmem:[%s1194 + $0x110] sm:$0xff]
    %v5498 = vld [vmem:[%s1194 + $0x120] sm:$0xff]
    %v5499 = vld [vmem:[%s1194 + $0x128] sm:$0xff]
    %v5500 = vld [vmem:[%s1194 + $0x138] sm:$0xff]
    %v5501 = vld [vmem:[%s1194 + $0x140] sm:$0xff]
    %v5502 = vld [vmem:[%s1194 + $0x150] sm:$0xff]
    %v5503 = vld [vmem:[%s1194 + $0x158] sm:$0xff]
    %v5504 = vld [vmem:[%s1194 + $0x168] sm:$0xff]
    %v5505 = vld [vmem:[%s1194 + $0x170] sm:$0xff]
    %v5506 = vld [vmem:[%s1194 + $0x1b0] sm:$0xff]
    %v5507 = vld [vmem:[%s1194 + $0x1b8] sm:$0xff]
    %v5508 = vld [vmem:[%s1194 + $0x1c8] sm:$0xff]
    %v5509 = vld [vmem:[%s1194 + $0x1d0] sm:$0xff]
    %v5510 = vld [vmem:[%s1194 + $0x1e0] sm:$0xff]
    %v5511 = vld [vmem:[%s1194 + $0x1e8] sm:$0xff]
    %v5512 = vld [vmem:[%s1194 + $0x1f8] sm:$0xff]
    %v5513 = vld [vmem:[%s1194 + $0x200] sm:$0xff]
    %v5514 = vld [vmem:[%s1194 + $0x210] sm:$0xff]
    %v5515 = vld [vmem:[%s1194 + $0x218] sm:$0xff]
    %v5516 = vld [vmem:[%s1194 + $0x228] sm:$0xff]
    %v5517 = vld [vmem:[%s1194 + $0x230] sm:$0xff]
    %v5518 = vld [vmem:[%s1194 + $0x240] sm:$0xff]
    %v5519 = vld [vmem:[%s1194 + $0x248] sm:$0xff]
    %v5520 = vld [vmem:[%s1194 + $0x258] sm:$0xff]
    %v5521 = vld [vmem:[%s1194 + $0x260] sm:$0xff]
    %v5522 = vld [vmem:[%s1194 + $0x270] sm:$0xff]
    %v5523 = vld [vmem:[%s1194 + $0x278] sm:$0xff]
    %v5524 = vld [vmem:[%s1194 + $0x288] sm:$0xff]
    %v5525 = vld [vmem:[%s1194 + $0x290] sm:$0xff]
    %v5526 = vld [vmem:[%s1194 + $0x2a0] sm:$0xff]
    %v5527 = vld [vmem:[%s1194 + $0x2a8] sm:$0xff]
    %v5528 = vld [vmem:[%s1194 + $0x2b8] sm:$0xff]
    %v5529 = vld [vmem:[%s1194 + $0x2c0] sm:$0xff]
    %v5530 = vld [vmem:[%s1194 + $0x2d0] sm:$0xff]
    %v5531 = vld [vmem:[%s1194 + $0x2d8] sm:$0xff]
    %v5532 = vld [vmem:[%s1194 + $0x2e8] sm:$0xff]
    %v5533 = vld [vmem:[%s1194 + $0x2f0] sm:$0xff]
    %v5534 = vld [vmem:[%s1194 + $0x300] sm:$0xff]
    %v5535 = vld [vmem:[%s1194 + $0x308] sm:$0xff]
    %v5536 = vld [vmem:[%s1194 + $0x318] sm:$0xff]
    %v5537 = vld [vmem:[%s1194 + $0x320] sm:$0xff]
    %5538 = vst [vmem:[#allocation3 + $0x30] sm:$0xff] %v5474
    %5539 = vst [vmem:[#allocation3 + $0x78] sm:$0xff] %v5475
    %5540 = vst [vmem:[#allocation3 + $0xc0] sm:$0xff] %v5476
    %5541 = vst [vmem:[#allocation3 + $0x108] sm:$0xff] %v5477
    %5542 = vst [vmem:[#allocation3 + $0x150] sm:$0xff] %v5478
    %5543 = vst [vmem:[#allocation3 + $0x198] sm:$0xff] %v5479
    %5544 = vst [vmem:[#allocation3 + $0x1e0] sm:$0xff] %v5480
    %5545 = vst [vmem:[#allocation3 + $0x228] sm:$0xff] %v5481
    %5546 = vst [vmem:[#allocation3 + $0x270] sm:$0xff] %v5482
    %5547 = vst [vmem:[#allocation3 + $0x2b8] sm:$0xff] %v5483
    %5548 = vst [vmem:[#allocation3 + $0x300] sm:$0xff] %v5484
    %5549 = vst [vmem:[#allocation3 + $0x348] sm:$0xff] %v5485
    %5550 = vst [vmem:[#allocation3 + $0x390] sm:$0xff] %v5486
    %5551 = vst [vmem:[#allocation3 + $0x3d8] sm:$0xff] %v5487
    %5552 = vst [vmem:[#allocation3 + $0x420] sm:$0xff] %v5488
    %5553 = vst [vmem:[#allocation3 + $0x468] sm:$0xff] %v5489
    %5554 = vst [vmem:[#allocation3 + $0x4b0] sm:$0xff] %v5490
    %5555 = vst [vmem:[#allocation3 + $0x4f8] sm:$0xff] %v5491
    %5556 = vst [vmem:[#allocation3 + $0x540] sm:$0xff] %v5492
    %5557 = vst [vmem:[#allocation3 + $0x588] sm:$0xff] %v5493
    %5558 = vst [vmem:[#allocation3 + $0x5d0] sm:$0xff] %v5494
    %5559 = vst [vmem:[#allocation3 + $0x618] sm:$0xff] %v5495
    %5560 = vst [vmem:[#allocation3 + $0x660] sm:$0xff] %v5496
    %5561 = vst [vmem:[#allocation3 + $0x6a8] sm:$0xff] %v5497
    %5562 = vst [vmem:[#allocation3 + $0x6f0] sm:$0xff] %v5498
    %5563 = vst [vmem:[#allocation3 + $0x738] sm:$0xff] %v5499
    %5564 = vst [vmem:[#allocation3 + $0x780] sm:$0xff] %v5500
    %5565 = vst [vmem:[#allocation3 + $0x7c8] sm:$0xff] %v5501
    %5566 = vst [vmem:[#allocation3 + $0x810] sm:$0xff] %v5502
    %5567 = vst [vmem:[#allocation3 + $0x858] sm:$0xff] %v5503
    %5568 = vst [vmem:[#allocation3 + $0x8a0] sm:$0xff] %v5504
    %5569 = vst [vmem:[#allocation3 + $0x8e8] sm:$0xff] %v5505
    %5570 = vst [vmem:[#allocation3 + $0x930] sm:$0xff] %v5506
    %5571 = vst [vmem:[#allocation3 + $0x978] sm:$0xff] %v5507
    %5572 = vst [vmem:[#allocation3 + $0x9c0] sm:$0xff] %v5508
    %5573 = vst [vmem:[#allocation3 + $0xa08] sm:$0xff] %v5509
    %5574 = vst [vmem:[#allocation3 + $0xa50] sm:$0xff] %v5510
    %5575 = vst [vmem:[#allocation3 + $0xa98] sm:$0xff] %v5511
    %5576 = vst [vmem:[#allocation3 + $0xae0] sm:$0xff] %v5512
    %5577 = vst [vmem:[#allocation3 + $0xb28] sm:$0xff] %v5513
    %5578 = vst [vmem:[#allocation3 + $0xb70] sm:$0xff] %v5514
    %5579 = vst [vmem:[#allocation3 + $0xbb8] sm:$0xff] %v5515
    %5580 = vst [vmem:[#allocation3 + $0xc00] sm:$0xff] %v5516
    %5581 = vst [vmem:[#allocation3 + $0xc48] sm:$0xff] %v5517
    %5582 = vst [vmem:[#allocation3 + $0xc90] sm:$0xff] %v5518
    %5583 = vst [vmem:[#allocation3 + $0xcd8] sm:$0xff] %v5519
    %5584 = vst [vmem:[#allocation3 + $0xd20] sm:$0xff] %v5520
    %5585 = vst [vmem:[#allocation3 + $0xd68] sm:$0xff] %v5521
    %5586 = vst [vmem:[#allocation3 + $0xdb0] sm:$0xff] %v5522
    %5587 = vst [vmem:[#allocation3 + $0xdf8] sm:$0xff] %v5523
    %5588 = vst [vmem:[#allocation3 + $0xe40] sm:$0xff] %v5524
    %5589 = vst [vmem:[#allocation3 + $0xe88] sm:$0xff] %v5525
    %5590 = vst [vmem:[#allocation3 + $0xed0] sm:$0xff] %v5526
    %5591 = vst [vmem:[#allocation3 + $0xf18] sm:$0xff] %v5527
    %5592 = vst [vmem:[#allocation3 + $0xf60] sm:$0xff] %v5528
    %5593 = vst [vmem:[#allocation3 + $0xfa8] sm:$0xff] %v5529
    %5594 = vst [vmem:[#allocation3 + $0xff0] sm:$0xff] %v5530
    %5595 = vst [vmem:[#allocation3 + $0x1038] sm:$0xff] %v5531
    %5596 = vst [vmem:[#allocation3 + $0x1080] sm:$0xff] %v5532
    %5597 = vst [vmem:[#allocation3 + $0x10c8] sm:$0xff] %v5533
    %5598 = vst [vmem:[#allocation3 + $0x1110] sm:$0xff] %v5534
    %5599 = vst [vmem:[#allocation3 + $0x1158] sm:$0xff] %v5535
    %5600 = vst [vmem:[#allocation3 + $0x11a0] sm:$0xff] %v5536
    %5601 = vst [vmem:[#allocation3 + $0x11e8] sm:$0xff] %v5537
    %v5602 = vld [vmem:[%s1194 + $0x1] sm:$0xff]
    %v5603 = vld [vmem:[%s1194 + $0x9] sm:$0xff]
    %v5604 = vld [vmem:[%s1194 + $0x19] sm:$0xff]
    %v5605 = vld [vmem:[%s1194 + $0x21] sm:$0xff]
    %v5606 = vld [vmem:[%s1194 + $0x31] sm:$0xff]
    %v5607 = vld [vmem:[%s1194 + $0x39] sm:$0xff]
    %v5608 = vld [vmem:[%s1194 + $0x49] sm:$0xff]
    %v5609 = vld [vmem:[%s1194 + $0x51] sm:$0xff]
    %v5610 = vld [vmem:[%s1194 + $0x61] sm:$0xff]
    %v5611 = vld [vmem:[%s1194 + $0x69] sm:$0xff]
    %v5612 = vld [vmem:[%s1194 + $0x79] sm:$0xff]
    %v5613 = vld [vmem:[%s1194 + $0x81] sm:$0xff]
    %v5614 = vld [vmem:[%s1194 + $0x91] sm:$0xff]
    %v5615 = vld [vmem:[%s1194 + $0x99] sm:$0xff]
    %v5616 = vld [vmem:[%s1194 + $0xa9] sm:$0xff]
    %v5617 = vld [vmem:[%s1194 + $0xb1] sm:$0xff]
    %v5618 = vld [vmem:[%s1194 + $0xc1] sm:$0xff]
    %v5619 = vld [vmem:[%s1194 + $0xc9] sm:$0xff]
    %v5620 = vld [vmem:[%s1194 + $0xd9] sm:$0xff]
    %v5621 = vld [vmem:[%s1194 + $0xe1] sm:$0xff]
    %v5622 = vld [vmem:[%s1194 + $0xf1] sm:$0xff]
    %v5623 = vld [vmem:[%s1194 + $0xf9] sm:$0xff]
    %v5624 = vld [vmem:[%s1194 + $0x109] sm:$0xff]
    %v5625 = vld [vmem:[%s1194 + $0x111] sm:$0xff]
    %v5626 = vld [vmem:[%s1194 + $0x121] sm:$0xff]
    %v5627 = vld [vmem:[%s1194 + $0x129] sm:$0xff]
    %v5628 = vld [vmem:[%s1194 + $0x139] sm:$0xff]
    %v5629 = vld [vmem:[%s1194 + $0x141] sm:$0xff]
    %v5630 = vld [vmem:[%s1194 + $0x151] sm:$0xff]
    %v5631 = vld [vmem:[%s1194 + $0x159] sm:$0xff]
    %v5632 = vld [vmem:[%s1194 + $0x169] sm:$0xff]
    %v5633 = vld [vmem:[%s1194 + $0x171] sm:$0xff]
    %v5634 = vld [vmem:[%s1194 + $0x1b1] sm:$0xff]
    %v5635 = vld [vmem:[%s1194 + $0x1b9] sm:$0xff]
    %v5636 = vld [vmem:[%s1194 + $0x1c9] sm:$0xff]
    %v5637 = vld [vmem:[%s1194 + $0x1d1] sm:$0xff]
    %v5638 = vld [vmem:[%s1194 + $0x1e1] sm:$0xff]
    %v5639 = vld [vmem:[%s1194 + $0x1e9] sm:$0xff]
    %v5640 = vld [vmem:[%s1194 + $0x1f9] sm:$0xff]
    %v5641 = vld [vmem:[%s1194 + $0x201] sm:$0xff]
    %v5642 = vld [vmem:[%s1194 + $0x211] sm:$0xff]
    %v5643 = vld [vmem:[%s1194 + $0x219] sm:$0xff]
    %v5644 = vld [vmem:[%s1194 + $0x229] sm:$0xff]
    %v5645 = vld [vmem:[%s1194 + $0x231] sm:$0xff]
    %v5646 = vld [vmem:[%s1194 + $0x241] sm:$0xff]
    %v5647 = vld [vmem:[%s1194 + $0x249] sm:$0xff]
    %v5648 = vld [vmem:[%s1194 + $0x259] sm:$0xff]
    %v5649 = vld [vmem:[%s1194 + $0x261] sm:$0xff]
    %v5650 = vld [vmem:[%s1194 + $0x271] sm:$0xff]
    %v5651 = vld [vmem:[%s1194 + $0x279] sm:$0xff]
    %v5652 = vld [vmem:[%s1194 + $0x289] sm:$0xff]
    %v5653 = vld [vmem:[%s1194 + $0x291] sm:$0xff]
    %v5654 = vld [vmem:[%s1194 + $0x2a1] sm:$0xff]
    %v5655 = vld [vmem:[%s1194 + $0x2a9] sm:$0xff]
    %v5656 = vld [vmem:[%s1194 + $0x2b9] sm:$0xff]
    %v5657 = vld [vmem:[%s1194 + $0x2c1] sm:$0xff]
    %v5658 = vld [vmem:[%s1194 + $0x2d1] sm:$0xff]
    %v5659 = vld [vmem:[%s1194 + $0x2d9] sm:$0xff]
    %v5660 = vld [vmem:[%s1194 + $0x2e9] sm:$0xff]
    %v5661 = vld [vmem:[%s1194 + $0x2f1] sm:$0xff]
    %v5662 = vld [vmem:[%s1194 + $0x301] sm:$0xff]
    %v5663 = vld [vmem:[%s1194 + $0x309] sm:$0xff]
    %v5664 = vld [vmem:[%s1194 + $0x319] sm:$0xff]
    %v5665 = vld [vmem:[%s1194 + $0x321] sm:$0xff]
    %5666 = vst [vmem:[#allocation3 + $0x38] sm:$0xff] %v5602
    %5667 = vst [vmem:[#allocation3 + $0x80] sm:$0xff] %v5603
    %5668 = vst [vmem:[#allocation3 + $0xc8] sm:$0xff] %v5604
    %5669 = vst [vmem:[#allocation3 + $0x110] sm:$0xff] %v5605
    %5670 = vst [vmem:[#allocation3 + $0x158] sm:$0xff] %v5606
    %5671 = vst [vmem:[#allocation3 + $0x1a0] sm:$0xff] %v5607
    %5672 = vst [vmem:[#allocation3 + $0x1e8] sm:$0xff] %v5608
    %5673 = vst [vmem:[#allocation3 + $0x230] sm:$0xff] %v5609
    %5674 = vst [vmem:[#allocation3 + $0x278] sm:$0xff] %v5610
    %5675 = vst [vmem:[#allocation3 + $0x2c0] sm:$0xff] %v5611
    %5676 = vst [vmem:[#allocation3 + $0x308] sm:$0xff] %v5612
    %5677 = vst [vmem:[#allocation3 + $0x350] sm:$0xff] %v5613
    %5678 = vst [vmem:[#allocation3 + $0x398] sm:$0xff] %v5614
    %5679 = vst [vmem:[#allocation3 + $0x3e0] sm:$0xff] %v5615
    %5680 = vst [vmem:[#allocation3 + $0x428] sm:$0xff] %v5616
    %5681 = vst [vmem:[#allocation3 + $0x470] sm:$0xff] %v5617
    %5682 = vst [vmem:[#allocation3 + $0x4b8] sm:$0xff] %v5618
    %5683 = vst [vmem:[#allocation3 + $0x500] sm:$0xff] %v5619
    %5684 = vst [vmem:[#allocation3 + $0x548] sm:$0xff] %v5620
    %5685 = vst [vmem:[#allocation3 + $0x590] sm:$0xff] %v5621
    %5686 = vst [vmem:[#allocation3 + $0x5d8] sm:$0xff] %v5622
    %5687 = vst [vmem:[#allocation3 + $0x620] sm:$0xff] %v5623
    %5688 = vst [vmem:[#allocation3 + $0x668] sm:$0xff] %v5624
    %5689 = vst [vmem:[#allocation3 + $0x6b0] sm:$0xff] %v5625
    %5690 = vst [vmem:[#allocation3 + $0x6f8] sm:$0xff] %v5626
    %5691 = vst [vmem:[#allocation3 + $0x740] sm:$0xff] %v5627
    %5692 = vst [vmem:[#allocation3 + $0x788] sm:$0xff] %v5628
    %5693 = vst [vmem:[#allocation3 + $0x7d0] sm:$0xff] %v5629
    %5694 = vst [vmem:[#allocation3 + $0x818] sm:$0xff] %v5630
    %5695 = vst [vmem:[#allocation3 + $0x860] sm:$0xff] %v5631
    %5696 = vst [vmem:[#allocation3 + $0x8a8] sm:$0xff] %v5632
    %5697 = vst [vmem:[#allocation3 + $0x8f0] sm:$0xff] %v5633
    %5698 = vst [vmem:[#allocation3 + $0x938] sm:$0xff] %v5634
    %5699 = vst [vmem:[#allocation3 + $0x980] sm:$0xff] %v5635
    %5700 = vst [vmem:[#allocation3 + $0x9c8] sm:$0xff] %v5636
    %5701 = vst [vmem:[#allocation3 + $0xa10] sm:$0xff] %v5637
    %5702 = vst [vmem:[#allocation3 + $0xa58] sm:$0xff] %v5638
    %5703 = vst [vmem:[#allocation3 + $0xaa0] sm:$0xff] %v5639
    %5704 = vst [vmem:[#allocation3 + $0xae8] sm:$0xff] %v5640
    %5705 = vst [vmem:[#allocation3 + $0xb30] sm:$0xff] %v5641
    %5706 = vst [vmem:[#allocation3 + $0xb78] sm:$0xff] %v5642
    %5707 = vst [vmem:[#allocation3 + $0xbc0] sm:$0xff] %v5643
    %5708 = vst [vmem:[#allocation3 + $0xc08] sm:$0xff] %v5644
    %5709 = vst [vmem:[#allocation3 + $0xc50] sm:$0xff] %v5645
    %5710 = vst [vmem:[#allocation3 + $0xc98] sm:$0xff] %v5646
    %5711 = vst [vmem:[#allocation3 + $0xce0] sm:$0xff] %v5647
    %5712 = vst [vmem:[#allocation3 + $0xd28] sm:$0xff] %v5648
    %5713 = vst [vmem:[#allocation3 + $0xd70] sm:$0xff] %v5649
    %5714 = vst [vmem:[#allocation3 + $0xdb8] sm:$0xff] %v5650
    %5715 = vst [vmem:[#allocation3 + $0xe00] sm:$0xff] %v5651
    %5716 = vst [vmem:[#allocation3 + $0xe48] sm:$0xff] %v5652
    %5717 = vst [vmem:[#allocation3 + $0xe90] sm:$0xff] %v5653
    %5718 = vst [vmem:[#allocation3 + $0xed8] sm:$0xff] %v5654
    %5719 = vst [vmem:[#allocation3 + $0xf20] sm:$0xff] %v5655
    %5720 = vst [vmem:[#allocation3 + $0xf68] sm:$0xff] %v5656
    %5721 = vst [vmem:[#allocation3 + $0xfb0] sm:$0xff] %v5657
    %5722 = vst [vmem:[#allocation3 + $0xff8] sm:$0xff] %v5658
    %5723 = vst [vmem:[#allocation3 + $0x1040] sm:$0xff] %v5659
    %5724 = vst [vmem:[#allocation3 + $0x1088] sm:$0xff] %v5660
    %5725 = vst [vmem:[#allocation3 + $0x10d0] sm:$0xff] %v5661
    %5726 = vst [vmem:[#allocation3 + $0x1118] sm:$0xff] %v5662
    %5727 = vst [vmem:[#allocation3 + $0x1160] sm:$0xff] %v5663
    %5728 = vst [vmem:[#allocation3 + $0x11a8] sm:$0xff] %v5664
    %5729 = vst [vmem:[#allocation3 + $0x11f0] sm:$0xff] %v5665
    %v5730 = vld [vmem:[%s1194 + $0x2] sm:$0xff]
    %v5731 = vld [vmem:[%s1194 + $0xa] sm:$0xff]
    %v5732 = vld [vmem:[%s1194 + $0x1a] sm:$0xff]
    %v5733 = vld [vmem:[%s1194 + $0x22] sm:$0xff]
    %v5734 = vld [vmem:[%s1194 + $0x32] sm:$0xff]
    %v5735 = vld [vmem:[%s1194 + $0x3a] sm:$0xff]
    %v5736 = vld [vmem:[%s1194 + $0x4a] sm:$0xff]
    %v5737 = vld [vmem:[%s1194 + $0x52] sm:$0xff]
    %v5738 = vld [vmem:[%s1194 + $0x62] sm:$0xff]
    %v5739 = vld [vmem:[%s1194 + $0x6a] sm:$0xff]
    %v5740 = vld [vmem:[%s1194 + $0x7a] sm:$0xff]
    %v5741 = vld [vmem:[%s1194 + $0x82] sm:$0xff]
    %v5742 = vld [vmem:[%s1194 + $0x92] sm:$0xff]
    %v5743 = vld [vmem:[%s1194 + $0x9a] sm:$0xff]
    %v5744 = vld [vmem:[%s1194 + $0xaa] sm:$0xff]
    %v5745 = vld [vmem:[%s1194 + $0xb2] sm:$0xff]
    %v5746 = vld [vmem:[%s1194 + $0xc2] sm:$0xff]
    %v5747 = vld [vmem:[%s1194 + $0xca] sm:$0xff]
    %v5748 = vld [vmem:[%s1194 + $0xda] sm:$0xff]
    %v5749 = vld [vmem:[%s1194 + $0xe2] sm:$0xff]
    %v5750 = vld [vmem:[%s1194 + $0xf2] sm:$0xff]
    %v5751 = vld [vmem:[%s1194 + $0xfa] sm:$0xff]
    %v5752 = vld [vmem:[%s1194 + $0x10a] sm:$0xff]
    %v5753 = vld [vmem:[%s1194 + $0x112] sm:$0xff]
    %v5754 = vld [vmem:[%s1194 + $0x122] sm:$0xff]
    %v5755 = vld [vmem:[%s1194 + $0x12a] sm:$0xff]
    %v5756 = vld [vmem:[%s1194 + $0x13a] sm:$0xff]
    %v5757 = vld [vmem:[%s1194 + $0x142] sm:$0xff]
    %v5758 = vld [vmem:[%s1194 + $0x152] sm:$0xff]
    %v5759 = vld [vmem:[%s1194 + $0x15a] sm:$0xff]
    %v5760 = vld [vmem:[%s1194 + $0x16a] sm:$0xff]
    %v5761 = vld [vmem:[%s1194 + $0x172] sm:$0xff]
    %v5762 = vld [vmem:[%s1194 + $0x1b2] sm:$0xff]
    %v5763 = vld [vmem:[%s1194 + $0x1ba] sm:$0xff]
    %v5764 = vld [vmem:[%s1194 + $0x1ca] sm:$0xff]
    %v5765 = vld [vmem:[%s1194 + $0x1d2] sm:$0xff]
    %v5766 = vld [vmem:[%s1194 + $0x1e2] sm:$0xff]
    %v5767 = vld [vmem:[%s1194 + $0x1ea] sm:$0xff]
    %v5768 = vld [vmem:[%s1194 + $0x1fa] sm:$0xff]
    %v5769 = vld [vmem:[%s1194 + $0x202] sm:$0xff]
    %v5770 = vld [vmem:[%s1194 + $0x212] sm:$0xff]
    %v5771 = vld [vmem:[%s1194 + $0x21a] sm:$0xff]
    %v5772 = vld [vmem:[%s1194 + $0x22a] sm:$0xff]
    %v5773 = vld [vmem:[%s1194 + $0x232] sm:$0xff]
    %v5774 = vld [vmem:[%s1194 + $0x242] sm:$0xff]
    %v5775 = vld [vmem:[%s1194 + $0x24a] sm:$0xff]
    %v5776 = vld [vmem:[%s1194 + $0x25a] sm:$0xff]
    %v5777 = vld [vmem:[%s1194 + $0x262] sm:$0xff]
    %v5778 = vld [vmem:[%s1194 + $0x272] sm:$0xff]
    %v5779 = vld [vmem:[%s1194 + $0x27a] sm:$0xff]
    %v5780 = vld [vmem:[%s1194 + $0x28a] sm:$0xff]
    %v5781 = vld [vmem:[%s1194 + $0x292] sm:$0xff]
    %v5782 = vld [vmem:[%s1194 + $0x2a2] sm:$0xff]
    %v5783 = vld [vmem:[%s1194 + $0x2aa] sm:$0xff]
    %v5784 = vld [vmem:[%s1194 + $0x2ba] sm:$0xff]
    %v5785 = vld [vmem:[%s1194 + $0x2c2] sm:$0xff]
    %v5786 = vld [vmem:[%s1194 + $0x2d2] sm:$0xff]
    %v5787 = vld [vmem:[%s1194 + $0x2da] sm:$0xff]
    %v5788 = vld [vmem:[%s1194 + $0x2ea] sm:$0xff]
    %v5789 = vld [vmem:[%s1194 + $0x2f2] sm:$0xff]
    %v5790 = vld [vmem:[%s1194 + $0x302] sm:$0xff]
    %v5791 = vld [vmem:[%s1194 + $0x30a] sm:$0xff]
    %v5792 = vld [vmem:[%s1194 + $0x31a] sm:$0xff]
    %v5793 = vld [vmem:[%s1194 + $0x322] sm:$0xff]
    %5794 = vst [vmem:[#allocation3 + $0x40] sm:$0xff] %v5730
    %5795 = vst [vmem:[#allocation3 + $0x88] sm:$0xff] %v5731
    %5796 = vst [vmem:[#allocation3 + $0xd0] sm:$0xff] %v5732
    %5797 = vst [vmem:[#allocation3 + $0x118] sm:$0xff] %v5733
    %5798 = vst [vmem:[#allocation3 + $0x160] sm:$0xff] %v5734
    %5799 = vst [vmem:[#allocation3 + $0x1a8] sm:$0xff] %v5735
    %5800 = vst [vmem:[#allocation3 + $0x1f0] sm:$0xff] %v5736
    %5801 = vst [vmem:[#allocation3 + $0x238] sm:$0xff] %v5737
    %5802 = vst [vmem:[#allocation3 + $0x280] sm:$0xff] %v5738
    %5803 = vst [vmem:[#allocation3 + $0x2c8] sm:$0xff] %v5739
    %5804 = vst [vmem:[#allocation3 + $0x310] sm:$0xff] %v5740
    %5805 = vst [vmem:[#allocation3 + $0x358] sm:$0xff] %v5741
    %5806 = vst [vmem:[#allocation3 + $0x3a0] sm:$0xff] %v5742
    %5807 = vst [vmem:[#allocation3 + $0x3e8] sm:$0xff] %v5743
    %5808 = vst [vmem:[#allocation3 + $0x430] sm:$0xff] %v5744
    %5809 = vst [vmem:[#allocation3 + $0x478] sm:$0xff] %v5745
    %5810 = vst [vmem:[#allocation3 + $0x4c0] sm:$0xff] %v5746
    %5811 = vst [vmem:[#allocation3 + $0x508] sm:$0xff] %v5747
    %5812 = vst [vmem:[#allocation3 + $0x550] sm:$0xff] %v5748
    %5813 = vst [vmem:[#allocation3 + $0x598] sm:$0xff] %v5749
    %5814 = vst [vmem:[#allocation3 + $0x5e0] sm:$0xff] %v5750
    %5815 = vst [vmem:[#allocation3 + $0x628] sm:$0xff] %v5751
    %5816 = vst [vmem:[#allocation3 + $0x670] sm:$0xff] %v5752
    %5817 = vst [vmem:[#allocation3 + $0x6b8] sm:$0xff] %v5753
    %5818 = vst [vmem:[#allocation3 + $0x700] sm:$0xff] %v5754
    %5819 = vst [vmem:[#allocation3 + $0x748] sm:$0xff] %v5755
    %5820 = vst [vmem:[#allocation3 + $0x790] sm:$0xff] %v5756
    %5821 = vst [vmem:[#allocation3 + $0x7d8] sm:$0xff] %v5757
    %5822 = vst [vmem:[#allocation3 + $0x820] sm:$0xff] %v5758
    %5823 = vst [vmem:[#allocation3 + $0x868] sm:$0xff] %v5759
    %5824 = vst [vmem:[#allocation3 + $0x8b0] sm:$0xff] %v5760
    %5825 = vst [vmem:[#allocation3 + $0x8f8] sm:$0xff] %v5761
    %5826 = vst [vmem:[#allocation3 + $0x940] sm:$0xff] %v5762
    %5827 = vst [vmem:[#allocation3 + $0x988] sm:$0xff] %v5763
    %5828 = vst [vmem:[#allocation3 + $0x9d0] sm:$0xff] %v5764
    %5829 = vst [vmem:[#allocation3 + $0xa18] sm:$0xff] %v5765
    %5830 = vst [vmem:[#allocation3 + $0xa60] sm:$0xff] %v5766
    %5831 = vst [vmem:[#allocation3 + $0xaa8] sm:$0xff] %v5767
    %5832 = vst [vmem:[#allocation3 + $0xaf0] sm:$0xff] %v5768
    %5833 = vst [vmem:[#allocation3 + $0xb38] sm:$0xff] %v5769
    %5834 = vst [vmem:[#allocation3 + $0xb80] sm:$0xff] %v5770
    %5835 = vst [vmem:[#allocation3 + $0xbc8] sm:$0xff] %v5771
    %5836 = vst [vmem:[#allocation3 + $0xc10] sm:$0xff] %v5772
    %5837 = vst [vmem:[#allocation3 + $0xc58] sm:$0xff] %v5773
    %5838 = vst [vmem:[#allocation3 + $0xca0] sm:$0xff] %v5774
    %5839 = vst [vmem:[#allocation3 + $0xce8] sm:$0xff] %v5775
    %5840 = vst [vmem:[#allocation3 + $0xd30] sm:$0xff] %v5776
    %5841 = vst [vmem:[#allocation3 + $0xd78] sm:$0xff] %v5777
    %5842 = vst [vmem:[#allocation3 + $0xdc0] sm:$0xff] %v5778
    %5843 = vst [vmem:[#allocation3 + $0xe08] sm:$0xff] %v5779
    %5844 = vst [vmem:[#allocation3 + $0xe50] sm:$0xff] %v5780
    %5845 = vst [vmem:[#allocation3 + $0xe98] sm:$0xff] %v5781
    %5846 = vst [vmem:[#allocation3 + $0xee0] sm:$0xff] %v5782
    %5847 = vst [vmem:[#allocation3 + $0xf28] sm:$0xff] %v5783
    %5848 = vst [vmem:[#allocation3 + $0xf70] sm:$0xff] %v5784
    %5849 = vst [vmem:[#allocation3 + $0xfb8] sm:$0xff] %v5785
    %5850 = vst [vmem:[#allocation3 + $0x1000] sm:$0xff] %v5786
    %5851 = vst [vmem:[#allocation3 + $0x1048] sm:$0xff] %v5787
    %5852 = vst [vmem:[#allocation3 + $0x1090] sm:$0xff] %v5788
    %5853 = vst [vmem:[#allocation3 + $0x10d8] sm:$0xff] %v5789
    %5854 = vst [vmem:[#allocation3 + $0x1120] sm:$0xff] %v5790
    %5855 = vst [vmem:[#allocation3 + $0x1168] sm:$0xff] %v5791
    %5856 = vst [vmem:[#allocation3 + $0x11b0] sm:$0xff] %v5792
    %5857 = vst [vmem:[#allocation3 + $0x11f8] sm:$0xff] %v5793
    %v5858 = vld [vmem:[#allocation3] sm:$0xff]
    %v5859 = vld [vmem:[#allocation3 + $0x8] sm:$0xff]
    %v5860 = vld [vmem:[#allocation3 + $0x10] sm:$0xff]
    %v5861 = vld [vmem:[#allocation3 + $0x18] sm:$0xff]
    %v5862 = vld [vmem:[#allocation3 + $0x20] sm:$0xff]
    %v5863 = vld [vmem:[#allocation3 + $0x28] sm:$0xff]
    %v5864 = vld [vmem:[#allocation3 + $0x30] sm:$0xff]
    %v5865 = vld [vmem:[#allocation3 + $0x38] sm:$0xff]
    %v5866 = vld [vmem:[#allocation3 + $0x40] sm:$0xff]
    %v5867 = vld [vmem:[#allocation3 + $0x48] sm:$0xff]
    %v5868 = vld [vmem:[#allocation3 + $0x50] sm:$0xff]
    %v5869 = vld [vmem:[#allocation3 + $0x58] sm:$0xff]
    %v5870 = vld [vmem:[#allocation3 + $0x60] sm:$0xff]
    %v5871 = vld [vmem:[#allocation3 + $0x68] sm:$0xff]
    %v5872 = vld [vmem:[#allocation3 + $0x70] sm:$0xff]
    %v5873 = vld [vmem:[#allocation3 + $0x78] sm:$0xff]
    %v5874 = vld [vmem:[#allocation3 + $0x80] sm:$0xff]
    %v5875 = vld [vmem:[#allocation3 + $0x88] sm:$0xff]
    %v5876 = vld [vmem:[#allocation3 + $0x90] sm:$0xff]
    %v5877 = vld [vmem:[#allocation3 + $0x98] sm:$0xff]
    %v5878 = vld [vmem:[#allocation3 + $0xa0] sm:$0xff]
    %v5879 = vld [vmem:[#allocation3 + $0xa8] sm:$0xff]
    %v5880 = vld [vmem:[#allocation3 + $0xb0] sm:$0xff]
    %v5881 = vld [vmem:[#allocation3 + $0xb8] sm:$0xff]
    %v5882 = vld [vmem:[#allocation3 + $0xc0] sm:$0xff]
    %v5883 = vld [vmem:[#allocation3 + $0xc8] sm:$0xff]
    %v5884 = vld [vmem:[#allocation3 + $0xd0] sm:$0xff]
    %v5885 = vld [vmem:[#allocation3 + $0xd8] sm:$0xff]
    %v5886 = vld [vmem:[#allocation3 + $0xe0] sm:$0xff]
    %v5887 = vld [vmem:[#allocation3 + $0xe8] sm:$0xff]
    %v5888 = vld [vmem:[#allocation3 + $0xf0] sm:$0xff]
    %v5889 = vld [vmem:[#allocation3 + $0xf8] sm:$0xff]
    %v5890 = vld [vmem:[#allocation3 + $0x100] sm:$0xff]
    %v5891 = vld [vmem:[#allocation3 + $0x108] sm:$0xff]
    %v5892 = vld [vmem:[#allocation3 + $0x110] sm:$0xff]
    %v5893 = vld [vmem:[#allocation3 + $0x118] sm:$0xff]
    %v5894 = vld [vmem:[#allocation3 + $0x120] sm:$0xff]
    %v5895 = vld [vmem:[#allocation3 + $0x128] sm:$0xff]
    %v5896 = vld [vmem:[#allocation3 + $0x130] sm:$0xff]
    %v5897 = vld [vmem:[#allocation3 + $0x138] sm:$0xff]
    %v5898 = vld [vmem:[#allocation3 + $0x140] sm:$0xff]
    %v5899 = vld [vmem:[#allocation3 + $0x148] sm:$0xff]
    %v5900 = vld [vmem:[#allocation3 + $0x150] sm:$0xff]
    %v5901 = vld [vmem:[#allocation3 + $0x158] sm:$0xff]
    %v5902 = vld [vmem:[#allocation3 + $0x160] sm:$0xff]
    %v5903 = vld [vmem:[#allocation3 + $0x168] sm:$0xff]
    %v5904 = vld [vmem:[#allocation3 + $0x170] sm:$0xff]
    %v5905 = vld [vmem:[#allocation3 + $0x178] sm:$0xff]
    %v5906 = vld [vmem:[#allocation3 + $0x180] sm:$0xff]
    %v5907 = vld [vmem:[#allocation3 + $0x188] sm:$0xff]
    %v5908 = vld [vmem:[#allocation3 + $0x190] sm:$0xff]
    %v5909 = vld [vmem:[#allocation3 + $0x198] sm:$0xff]
    %v5910 = vld [vmem:[#allocation3 + $0x1a0] sm:$0xff]
    %v5911 = vld [vmem:[#allocation3 + $0x1a8] sm:$0xff]
    %v5912 = vld [vmem:[#allocation3 + $0x1b0] sm:$0xff]
    %v5913 = vld [vmem:[#allocation3 + $0x1b8] sm:$0xff]
    %v5914 = vld [vmem:[#allocation3 + $0x1c0] sm:$0xff]
    %v5915 = vld [vmem:[#allocation3 + $0x1c8] sm:$0xff]
    %v5916 = vld [vmem:[#allocation3 + $0x1d0] sm:$0xff]
    %v5917 = vld [vmem:[#allocation3 + $0x1d8] sm:$0xff]
    %v5918 = vld [vmem:[#allocation3 + $0x1e0] sm:$0xff]
    %v5919 = vld [vmem:[#allocation3 + $0x1e8] sm:$0xff]
    %v5920 = vld [vmem:[#allocation3 + $0x1f0] sm:$0xff]
    %v5921 = vld [vmem:[#allocation3 + $0x1f8] sm:$0xff]
    %v5922 = vld [vmem:[#allocation3 + $0x200] sm:$0xff]
    %v5923 = vld [vmem:[#allocation3 + $0x208] sm:$0xff]
    %v5924 = vld [vmem:[#allocation3 + $0x210] sm:$0xff]
    %v5925 = vld [vmem:[#allocation3 + $0x218] sm:$0xff]
    %v5926 = vld [vmem:[#allocation3 + $0x220] sm:$0xff]
    %v5927 = vld [vmem:[#allocation3 + $0x228] sm:$0xff]
    %v5928 = vld [vmem:[#allocation3 + $0x230] sm:$0xff]
    %v5929 = vld [vmem:[#allocation3 + $0x238] sm:$0xff]
    %v5930 = vld [vmem:[#allocation3 + $0x240] sm:$0xff]
    %v5931 = vld [vmem:[#allocation3 + $0x248] sm:$0xff]
    %v5932 = vld [vmem:[#allocation3 + $0x250] sm:$0xff]
    %v5933 = vld [vmem:[#allocation3 + $0x258] sm:$0xff]
    %v5934 = vld [vmem:[#allocation3 + $0x260] sm:$0xff]
    %v5935 = vld [vmem:[#allocation3 + $0x268] sm:$0xff]
    %v5936 = vld [vmem:[#allocation3 + $0x270] sm:$0xff]
    %v5937 = vld [vmem:[#allocation3 + $0x278] sm:$0xff]
    %v5938 = vld [vmem:[#allocation3 + $0x280] sm:$0xff]
    %v5939 = vld [vmem:[#allocation3 + $0x288] sm:$0xff]
    %v5940 = vld [vmem:[#allocation3 + $0x290] sm:$0xff]
    %v5941 = vld [vmem:[#allocation3 + $0x298] sm:$0xff]
    %v5942 = vld [vmem:[#allocation3 + $0x2a0] sm:$0xff]
    %v5943 = vld [vmem:[#allocation3 + $0x2a8] sm:$0xff]
    %v5944 = vld [vmem:[#allocation3 + $0x2b0] sm:$0xff]
    %v5945 = vld [vmem:[#allocation3 + $0x2b8] sm:$0xff]
    %v5946 = vld [vmem:[#allocation3 + $0x2c0] sm:$0xff]
    %v5947 = vld [vmem:[#allocation3 + $0x2c8] sm:$0xff]
    %v5948 = vld [vmem:[#allocation3 + $0x2d0] sm:$0xff]
    %v5949 = vld [vmem:[#allocation3 + $0x2d8] sm:$0xff]
    %v5950 = vld [vmem:[#allocation3 + $0x2e0] sm:$0xff]
    %v5951 = vld [vmem:[#allocation3 + $0x2e8] sm:$0xff]
    %v5952 = vld [vmem:[#allocation3 + $0x2f0] sm:$0xff]
    %v5953 = vld [vmem:[#allocation3 + $0x2f8] sm:$0xff]
    %v5954 = vld [vmem:[#allocation3 + $0x300] sm:$0xff]
    %v5955 = vld [vmem:[#allocation3 + $0x308] sm:$0xff]
    %v5956 = vld [vmem:[#allocation3 + $0x310] sm:$0xff]
    %v5957 = vld [vmem:[#allocation3 + $0x318] sm:$0xff]
    %v5958 = vld [vmem:[#allocation3 + $0x320] sm:$0xff]
    %v5959 = vld [vmem:[#allocation3 + $0x328] sm:$0xff]
    %v5960 = vld [vmem:[#allocation3 + $0x330] sm:$0xff]
    %v5961 = vld [vmem:[#allocation3 + $0x338] sm:$0xff]
    %v5962 = vld [vmem:[#allocation3 + $0x340] sm:$0xff]
    %v5963 = vld [vmem:[#allocation3 + $0x348] sm:$0xff]
    %v5964 = vld [vmem:[#allocation3 + $0x350] sm:$0xff]
    %v5965 = vld [vmem:[#allocation3 + $0x358] sm:$0xff]
    %v5966 = vld [vmem:[#allocation3 + $0x360] sm:$0xff]
    %v5967 = vld [vmem:[#allocation3 + $0x368] sm:$0xff]
    %v5968 = vld [vmem:[#allocation3 + $0x370] sm:$0xff]
    %v5969 = vld [vmem:[#allocation3 + $0x378] sm:$0xff]
    %v5970 = vld [vmem:[#allocation3 + $0x380] sm:$0xff]
    %v5971 = vld [vmem:[#allocation3 + $0x388] sm:$0xff]
    %v5972 = vld [vmem:[#allocation3 + $0x390] sm:$0xff]
    %v5973 = vld [vmem:[#allocation3 + $0x398] sm:$0xff]
    %v5974 = vld [vmem:[#allocation3 + $0x3a0] sm:$0xff]
    %v5975 = vld [vmem:[#allocation3 + $0x3a8] sm:$0xff]
    %v5976 = vld [vmem:[#allocation3 + $0x3b0] sm:$0xff]
    %v5977 = vld [vmem:[#allocation3 + $0x3b8] sm:$0xff]
    %v5978 = vld [vmem:[#allocation3 + $0x3c0] sm:$0xff]
    %v5979 = vld [vmem:[#allocation3 + $0x3c8] sm:$0xff]
    %v5980 = vld [vmem:[#allocation3 + $0x3d0] sm:$0xff]
    %v5981 = vld [vmem:[#allocation3 + $0x3d8] sm:$0xff]
    %v5982 = vld [vmem:[#allocation3 + $0x3e0] sm:$0xff]
    %v5983 = vld [vmem:[#allocation3 + $0x3e8] sm:$0xff]
    %v5984 = vld [vmem:[#allocation3 + $0x3f0] sm:$0xff]
    %v5985 = vld [vmem:[#allocation3 + $0x3f8] sm:$0xff]
    %v5986 = vld [vmem:[#allocation3 + $0x400] sm:$0xff]
    %v5987 = vld [vmem:[#allocation3 + $0x408] sm:$0xff]
    %v5988 = vld [vmem:[#allocation3 + $0x410] sm:$0xff]
    %v5989 = vld [vmem:[#allocation3 + $0x418] sm:$0xff]
    %v5990 = vld [vmem:[#allocation3 + $0x420] sm:$0xff]
    %v5991 = vld [vmem:[#allocation3 + $0x428] sm:$0xff]
    %v5992 = vld [vmem:[#allocation3 + $0x430] sm:$0xff]
    %v5993 = vld [vmem:[#allocation3 + $0x438] sm:$0xff]
    %v5994 = vld [vmem:[#allocation3 + $0x440] sm:$0xff]
    %v5995 = vld [vmem:[#allocation3 + $0x448] sm:$0xff]
    %v5996 = vld [vmem:[#allocation3 + $0x450] sm:$0xff]
    %v5997 = vld [vmem:[#allocation3 + $0x458] sm:$0xff]
    %v5998 = vld [vmem:[#allocation3 + $0x460] sm:$0xff]
    %v5999 = vld [vmem:[#allocation3 + $0x468] sm:$0xff]
    %v6000 = vld [vmem:[#allocation3 + $0x470] sm:$0xff]
    %v6001 = vld [vmem:[#allocation3 + $0x478] sm:$0xff]
    %v6002 = vld [vmem:[#allocation3 + $0x480] sm:$0xff]
    %v6003 = vld [vmem:[#allocation3 + $0x488] sm:$0xff]
    %v6004 = vld [vmem:[#allocation3 + $0x490] sm:$0xff]
    %v6005 = vld [vmem:[#allocation3 + $0x498] sm:$0xff]
    %v6006 = vld [vmem:[#allocation3 + $0x4a0] sm:$0xff]
    %v6007 = vld [vmem:[#allocation3 + $0x4a8] sm:$0xff]
    %v6008 = vld [vmem:[#allocation3 + $0x4b0] sm:$0xff]
    %v6009 = vld [vmem:[#allocation3 + $0x4b8] sm:$0xff]
    %v6010 = vld [vmem:[#allocation3 + $0x4c0] sm:$0xff]
    %v6011 = vld [vmem:[#allocation3 + $0x4c8] sm:$0xff]
    %v6012 = vld [vmem:[#allocation3 + $0x4d0] sm:$0xff]
    %v6013 = vld [vmem:[#allocation3 + $0x4d8] sm:$0xff]
    %v6014 = vld [vmem:[#allocation3 + $0x4e0] sm:$0xff]
    %v6015 = vld [vmem:[#allocation3 + $0x4e8] sm:$0xff]
    %v6016 = vld [vmem:[#allocation3 + $0x4f0] sm:$0xff]
    %v6017 = vld [vmem:[#allocation3 + $0x4f8] sm:$0xff]
    %v6018 = vld [vmem:[#allocation3 + $0x500] sm:$0xff]
    %v6019 = vld [vmem:[#allocation3 + $0x508] sm:$0xff]
    %v6020 = vld [vmem:[#allocation3 + $0x510] sm:$0xff]
    %v6021 = vld [vmem:[#allocation3 + $0x518] sm:$0xff]
    %v6022 = vld [vmem:[#allocation3 + $0x520] sm:$0xff]
    %v6023 = vld [vmem:[#allocation3 + $0x528] sm:$0xff]
    %v6024 = vld [vmem:[#allocation3 + $0x530] sm:$0xff]
    %v6025 = vld [vmem:[#allocation3 + $0x538] sm:$0xff]
    %v6026 = vld [vmem:[#allocation3 + $0x540] sm:$0xff]
    %v6027 = vld [vmem:[#allocation3 + $0x548] sm:$0xff]
    %v6028 = vld [vmem:[#allocation3 + $0x550] sm:$0xff]
    %v6029 = vld [vmem:[#allocation3 + $0x558] sm:$0xff]
    %v6030 = vld [vmem:[#allocation3 + $0x560] sm:$0xff]
    %v6031 = vld [vmem:[#allocation3 + $0x568] sm:$0xff]
    %v6032 = vld [vmem:[#allocation3 + $0x570] sm:$0xff]
    %v6033 = vld [vmem:[#allocation3 + $0x578] sm:$0xff]
    %v6034 = vld [vmem:[#allocation3 + $0x580] sm:$0xff]
    %v6035 = vld [vmem:[#allocation3 + $0x588] sm:$0xff]
    %v6036 = vld [vmem:[#allocation3 + $0x590] sm:$0xff]
    %v6037 = vld [vmem:[#allocation3 + $0x598] sm:$0xff]
    %v6038 = vld [vmem:[#allocation3 + $0x5a0] sm:$0xff]
    %v6039 = vld [vmem:[#allocation3 + $0x5a8] sm:$0xff]
    %v6040 = vld [vmem:[#allocation3 + $0x5b0] sm:$0xff]
    %v6041 = vld [vmem:[#allocation3 + $0x5b8] sm:$0xff]
    %v6042 = vld [vmem:[#allocation3 + $0x5c0] sm:$0xff]
    %v6043 = vld [vmem:[#allocation3 + $0x5c8] sm:$0xff]
    %v6044 = vld [vmem:[#allocation3 + $0x5d0] sm:$0xff]
    %v6045 = vld [vmem:[#allocation3 + $0x5d8] sm:$0xff]
    %v6046 = vld [vmem:[#allocation3 + $0x5e0] sm:$0xff]
    %v6047 = vld [vmem:[#allocation3 + $0x5e8] sm:$0xff]
    %v6048 = vld [vmem:[#allocation3 + $0x5f0] sm:$0xff]
    %v6049 = vld [vmem:[#allocation3 + $0x5f8] sm:$0xff]
    %v6050 = vld [vmem:[#allocation3 + $0x600] sm:$0xff]
    %v6051 = vld [vmem:[#allocation3 + $0x608] sm:$0xff]
    %v6052 = vld [vmem:[#allocation3 + $0x610] sm:$0xff]
    %v6053 = vld [vmem:[#allocation3 + $0x618] sm:$0xff]
    %v6054 = vld [vmem:[#allocation3 + $0x620] sm:$0xff]
    %v6055 = vld [vmem:[#allocation3 + $0x628] sm:$0xff]
    %v6056 = vld [vmem:[#allocation3 + $0x630] sm:$0xff]
    %v6057 = vld [vmem:[#allocation3 + $0x638] sm:$0xff]
    %v6058 = vld [vmem:[#allocation3 + $0x640] sm:$0xff]
    %v6059 = vld [vmem:[#allocation3 + $0x648] sm:$0xff]
    %v6060 = vld [vmem:[#allocation3 + $0x650] sm:$0xff]
    %v6061 = vld [vmem:[#allocation3 + $0x658] sm:$0xff]
    %v6062 = vld [vmem:[#allocation3 + $0x660] sm:$0xff]
    %v6063 = vld [vmem:[#allocation3 + $0x668] sm:$0xff]
    %v6064 = vld [vmem:[#allocation3 + $0x670] sm:$0xff]
    %v6065 = vld [vmem:[#allocation3 + $0x678] sm:$0xff]
    %v6066 = vld [vmem:[#allocation3 + $0x680] sm:$0xff]
    %v6067 = vld [vmem:[#allocation3 + $0x688] sm:$0xff]
    %v6068 = vld [vmem:[#allocation3 + $0x690] sm:$0xff]
    %v6069 = vld [vmem:[#allocation3 + $0x698] sm:$0xff]
    %v6070 = vld [vmem:[#allocation3 + $0x6a0] sm:$0xff]
    %v6071 = vld [vmem:[#allocation3 + $0x6a8] sm:$0xff]
    %v6072 = vld [vmem:[#allocation3 + $0x6b0] sm:$0xff]
    %v6073 = vld [vmem:[#allocation3 + $0x6b8] sm:$0xff]
    %v6074 = vld [vmem:[#allocation3 + $0x6c0] sm:$0xff]
    %v6075 = vld [vmem:[#allocation3 + $0x6c8] sm:$0xff]
    %v6076 = vld [vmem:[#allocation3 + $0x6d0] sm:$0xff]
    %v6077 = vld [vmem:[#allocation3 + $0x6d8] sm:$0xff]
    %v6078 = vld [vmem:[#allocation3 + $0x6e0] sm:$0xff]
    %v6079 = vld [vmem:[#allocation3 + $0x6e8] sm:$0xff]
    %v6080 = vld [vmem:[#allocation3 + $0x6f0] sm:$0xff]
    %v6081 = vld [vmem:[#allocation3 + $0x6f8] sm:$0xff]
    %v6082 = vld [vmem:[#allocation3 + $0x700] sm:$0xff]
    %v6083 = vld [vmem:[#allocation3 + $0x708] sm:$0xff]
    %v6084 = vld [vmem:[#allocation3 + $0x710] sm:$0xff]
    %v6085 = vld [vmem:[#allocation3 + $0x718] sm:$0xff]
    %v6086 = vld [vmem:[#allocation3 + $0x720] sm:$0xff]
    %v6087 = vld [vmem:[#allocation3 + $0x728] sm:$0xff]
    %v6088 = vld [vmem:[#allocation3 + $0x730] sm:$0xff]
    %v6089 = vld [vmem:[#allocation3 + $0x738] sm:$0xff]
    %v6090 = vld [vmem:[#allocation3 + $0x740] sm:$0xff]
    %v6091 = vld [vmem:[#allocation3 + $0x748] sm:$0xff]
    %v6092 = vld [vmem:[#allocation3 + $0x750] sm:$0xff]
    %v6093 = vld [vmem:[#allocation3 + $0x758] sm:$0xff]
    %v6094 = vld [vmem:[#allocation3 + $0x760] sm:$0xff]
    %v6095 = vld [vmem:[#allocation3 + $0x768] sm:$0xff]
    %v6096 = vld [vmem:[#allocation3 + $0x770] sm:$0xff]
    %v6097 = vld [vmem:[#allocation3 + $0x778] sm:$0xff]
    %v6098 = vld [vmem:[#allocation3 + $0x780] sm:$0xff]
    %v6099 = vld [vmem:[#allocation3 + $0x788] sm:$0xff]
    %v6100 = vld [vmem:[#allocation3 + $0x790] sm:$0xff]
    %v6101 = vld [vmem:[#allocation3 + $0x798] sm:$0xff]
    %v6102 = vld [vmem:[#allocation3 + $0x7a0] sm:$0xff]
    %v6103 = vld [vmem:[#allocation3 + $0x7a8] sm:$0xff]
    %v6104 = vld [vmem:[#allocation3 + $0x7b0] sm:$0xff]
    %v6105 = vld [vmem:[#allocation3 + $0x7b8] sm:$0xff]
    %v6106 = vld [vmem:[#allocation3 + $0x7c0] sm:$0xff]
    %v6107 = vld [vmem:[#allocation3 + $0x7c8] sm:$0xff]
    %v6108 = vld [vmem:[#allocation3 + $0x7d0] sm:$0xff]
    %v6109 = vld [vmem:[#allocation3 + $0x7d8] sm:$0xff]
    %v6110 = vld [vmem:[#allocation3 + $0x7e0] sm:$0xff]
    %v6111 = vld [vmem:[#allocation3 + $0x7e8] sm:$0xff]
    %v6112 = vld [vmem:[#allocation3 + $0x7f0] sm:$0xff]
    %v6113 = vld [vmem:[#allocation3 + $0x7f8] sm:$0xff]
    %v6114 = vld [vmem:[#allocation3 + $0x800] sm:$0xff]
    %v6115 = vld [vmem:[#allocation3 + $0x808] sm:$0xff]
    %v6116 = vld [vmem:[#allocation3 + $0x810] sm:$0xff]
    %v6117 = vld [vmem:[#allocation3 + $0x818] sm:$0xff]
    %v6118 = vld [vmem:[#allocation3 + $0x820] sm:$0xff]
    %v6119 = vld [vmem:[#allocation3 + $0x828] sm:$0xff]
    %v6120 = vld [vmem:[#allocation3 + $0x830] sm:$0xff]
    %v6121 = vld [vmem:[#allocation3 + $0x838] sm:$0xff]
    %v6122 = vld [vmem:[#allocation3 + $0x840] sm:$0xff]
    %v6123 = vld [vmem:[#allocation3 + $0x848] sm:$0xff]
    %v6124 = vld [vmem:[#allocation3 + $0x850] sm:$0xff]
    %v6125 = vld [vmem:[#allocation3 + $0x858] sm:$0xff]
    %v6126 = vld [vmem:[#allocation3 + $0x860] sm:$0xff]
    %v6127 = vld [vmem:[#allocation3 + $0x868] sm:$0xff]
    %v6128 = vld [vmem:[#allocation3 + $0x870] sm:$0xff]
    %v6129 = vld [vmem:[#allocation3 + $0x878] sm:$0xff]
    %v6130 = vld [vmem:[#allocation3 + $0x880] sm:$0xff]
    %v6131 = vld [vmem:[#allocation3 + $0x888] sm:$0xff]
    %v6132 = vld [vmem:[#allocation3 + $0x890] sm:$0xff]
    %v6133 = vld [vmem:[#allocation3 + $0x898] sm:$0xff]
    %v6134 = vld [vmem:[#allocation3 + $0x8a0] sm:$0xff]
    %v6135 = vld [vmem:[#allocation3 + $0x8a8] sm:$0xff]
    %v6136 = vld [vmem:[#allocation3 + $0x8b0] sm:$0xff]
    %v6137 = vld [vmem:[#allocation3 + $0x8b8] sm:$0xff]
    %v6138 = vld [vmem:[#allocation3 + $0x8c0] sm:$0xff]
    %v6139 = vld [vmem:[#allocation3 + $0x8c8] sm:$0xff]
    %v6140 = vld [vmem:[#allocation3 + $0x8d0] sm:$0xff]
    %v6141 = vld [vmem:[#allocation3 + $0x8d8] sm:$0xff]
    %v6142 = vld [vmem:[#allocation3 + $0x8e0] sm:$0xff]
    %v6143 = vld [vmem:[#allocation3 + $0x8e8] sm:$0xff]
    %v6144 = vld [vmem:[#allocation3 + $0x8f0] sm:$0xff]
    %v6145 = vld [vmem:[#allocation3 + $0x8f8] sm:$0xff]
    %v6146 = vld [vmem:[#allocation3 + $0x900] sm:$0xff]
    %v6147 = vld [vmem:[#allocation3 + $0x908] sm:$0xff]
    %v6148 = vld [vmem:[#allocation3 + $0x910] sm:$0xff]
    %v6149 = vld [vmem:[#allocation3 + $0x918] sm:$0xff]
    %v6150 = vld [vmem:[#allocation3 + $0x920] sm:$0xff]
    %v6151 = vld [vmem:[#allocation3 + $0x928] sm:$0xff]
    %v6152 = vld [vmem:[#allocation3 + $0x930] sm:$0xff]
    %v6153 = vld [vmem:[#allocation3 + $0x938] sm:$0xff]
    %v6154 = vld [vmem:[#allocation3 + $0x940] sm:$0xff]
    %v6155 = vld [vmem:[#allocation3 + $0x948] sm:$0xff]
    %v6156 = vld [vmem:[#allocation3 + $0x950] sm:$0xff]
    %v6157 = vld [vmem:[#allocation3 + $0x958] sm:$0xff]
    %v6158 = vld [vmem:[#allocation3 + $0x960] sm:$0xff]
    %v6159 = vld [vmem:[#allocation3 + $0x968] sm:$0xff]
    %v6160 = vld [vmem:[#allocation3 + $0x970] sm:$0xff]
    %v6161 = vld [vmem:[#allocation3 + $0x978] sm:$0xff]
    %v6162 = vld [vmem:[#allocation3 + $0x980] sm:$0xff]
    %v6163 = vld [vmem:[#allocation3 + $0x988] sm:$0xff]
    %v6164 = vld [vmem:[#allocation3 + $0x990] sm:$0xff]
    %v6165 = vld [vmem:[#allocation3 + $0x998] sm:$0xff]
    %v6166 = vld [vmem:[#allocation3 + $0x9a0] sm:$0xff]
    %v6167 = vld [vmem:[#allocation3 + $0x9a8] sm:$0xff]
    %v6168 = vld [vmem:[#allocation3 + $0x9b0] sm:$0xff]
    %v6169 = vld [vmem:[#allocation3 + $0x9b8] sm:$0xff]
    %v6170 = vld [vmem:[#allocation3 + $0x9c0] sm:$0xff]
    %v6171 = vld [vmem:[#allocation3 + $0x9c8] sm:$0xff]
    %v6172 = vld [vmem:[#allocation3 + $0x9d0] sm:$0xff]
    %v6173 = vld [vmem:[#allocation3 + $0x9d8] sm:$0xff]
    %v6174 = vld [vmem:[#allocation3 + $0x9e0] sm:$0xff]
    %v6175 = vld [vmem:[#allocation3 + $0x9e8] sm:$0xff]
    %v6176 = vld [vmem:[#allocation3 + $0x9f0] sm:$0xff]
    %v6177 = vld [vmem:[#allocation3 + $0x9f8] sm:$0xff]
    %v6178 = vld [vmem:[#allocation3 + $0xa00] sm:$0xff]
    %v6179 = vld [vmem:[#allocation3 + $0xa08] sm:$0xff]
    %v6180 = vld [vmem:[#allocation3 + $0xa10] sm:$0xff]
    %v6181 = vld [vmem:[#allocation3 + $0xa18] sm:$0xff]
    %v6182 = vld [vmem:[#allocation3 + $0xa20] sm:$0xff]
    %v6183 = vld [vmem:[#allocation3 + $0xa28] sm:$0xff]
    %v6184 = vld [vmem:[#allocation3 + $0xa30] sm:$0xff]
    %v6185 = vld [vmem:[#allocation3 + $0xa38] sm:$0xff]
    %v6186 = vld [vmem:[#allocation3 + $0xa40] sm:$0xff]
    %v6187 = vld [vmem:[#allocation3 + $0xa48] sm:$0xff]
    %v6188 = vld [vmem:[#allocation3 + $0xa50] sm:$0xff]
    %v6189 = vld [vmem:[#allocation3 + $0xa58] sm:$0xff]
    %v6190 = vld [vmem:[#allocation3 + $0xa60] sm:$0xff]
    %v6191 = vld [vmem:[#allocation3 + $0xa68] sm:$0xff]
    %v6192 = vld [vmem:[#allocation3 + $0xa70] sm:$0xff]
    %v6193 = vld [vmem:[#allocation3 + $0xa78] sm:$0xff]
    %v6194 = vld [vmem:[#allocation3 + $0xa80] sm:$0xff]
    %v6195 = vld [vmem:[#allocation3 + $0xa88] sm:$0xff]
    %v6196 = vld [vmem:[#allocation3 + $0xa90] sm:$0xff]
    %v6197 = vld [vmem:[#allocation3 + $0xa98] sm:$0xff]
    %v6198 = vld [vmem:[#allocation3 + $0xaa0] sm:$0xff]
    %v6199 = vld [vmem:[#allocation3 + $0xaa8] sm:$0xff]
    %v6200 = vld [vmem:[#allocation3 + $0xab0] sm:$0xff]
    %v6201 = vld [vmem:[#allocation3 + $0xab8] sm:$0xff]
    %v6202 = vld [vmem:[#allocation3 + $0xac0] sm:$0xff]
    %v6203 = vld [vmem:[#allocation3 + $0xac8] sm:$0xff]
    %v6204 = vld [vmem:[#allocation3 + $0xad0] sm:$0xff]
    %v6205 = vld [vmem:[#allocation3 + $0xad8] sm:$0xff]
    %v6206 = vld [vmem:[#allocation3 + $0xae0] sm:$0xff]
    %v6207 = vld [vmem:[#allocation3 + $0xae8] sm:$0xff]
    %v6208 = vld [vmem:[#allocation3 + $0xaf0] sm:$0xff]
    %v6209 = vld [vmem:[#allocation3 + $0xaf8] sm:$0xff]
    %v6210 = vld [vmem:[#allocation3 + $0xb00] sm:$0xff]
    %v6211 = vld [vmem:[#allocation3 + $0xb08] sm:$0xff]
    %v6212 = vld [vmem:[#allocation3 + $0xb10] sm:$0xff]
    %v6213 = vld [vmem:[#allocation3 + $0xb18] sm:$0xff]
    %v6214 = vld [vmem:[#allocation3 + $0xb20] sm:$0xff]
    %v6215 = vld [vmem:[#allocation3 + $0xb28] sm:$0xff]
    %v6216 = vld [vmem:[#allocation3 + $0xb30] sm:$0xff]
    %v6217 = vld [vmem:[#allocation3 + $0xb38] sm:$0xff]
    %v6218 = vld [vmem:[#allocation3 + $0xb40] sm:$0xff]
    %v6219 = vld [vmem:[#allocation3 + $0xb48] sm:$0xff]
    %v6220 = vld [vmem:[#allocation3 + $0xb50] sm:$0xff]
    %v6221 = vld [vmem:[#allocation3 + $0xb58] sm:$0xff]
    %v6222 = vld [vmem:[#allocation3 + $0xb60] sm:$0xff]
    %v6223 = vld [vmem:[#allocation3 + $0xb68] sm:$0xff]
    %v6224 = vld [vmem:[#allocation3 + $0xb70] sm:$0xff]
    %v6225 = vld [vmem:[#allocation3 + $0xb78] sm:$0xff]
    %v6226 = vld [vmem:[#allocation3 + $0xb80] sm:$0xff]
    %v6227 = vld [vmem:[#allocation3 + $0xb88] sm:$0xff]
    %v6228 = vld [vmem:[#allocation3 + $0xb90] sm:$0xff]
    %v6229 = vld [vmem:[#allocation3 + $0xb98] sm:$0xff]
    %v6230 = vld [vmem:[#allocation3 + $0xba0] sm:$0xff]
    %v6231 = vld [vmem:[#allocation3 + $0xba8] sm:$0xff]
    %v6232 = vld [vmem:[#allocation3 + $0xbb0] sm:$0xff]
    %v6233 = vld [vmem:[#allocation3 + $0xbb8] sm:$0xff]
    %v6234 = vld [vmem:[#allocation3 + $0xbc0] sm:$0xff]
    %v6235 = vld [vmem:[#allocation3 + $0xbc8] sm:$0xff]
    %v6236 = vld [vmem:[#allocation3 + $0xbd0] sm:$0xff]
    %v6237 = vld [vmem:[#allocation3 + $0xbd8] sm:$0xff]
    %v6238 = vld [vmem:[#allocation3 + $0xbe0] sm:$0xff]
    %v6239 = vld [vmem:[#allocation3 + $0xbe8] sm:$0xff]
    %v6240 = vld [vmem:[#allocation3 + $0xbf0] sm:$0xff]
    %v6241 = vld [vmem:[#allocation3 + $0xbf8] sm:$0xff]
    %v6242 = vld [vmem:[#allocation3 + $0xc00] sm:$0xff]
    %v6243 = vld [vmem:[#allocation3 + $0xc08] sm:$0xff]
    %v6244 = vld [vmem:[#allocation3 + $0xc10] sm:$0xff]
    %v6245 = vld [vmem:[#allocation3 + $0xc18] sm:$0xff]
    %v6246 = vld [vmem:[#allocation3 + $0xc20] sm:$0xff]
    %v6247 = vld [vmem:[#allocation3 + $0xc28] sm:$0xff]
    %v6248 = vld [vmem:[#allocation3 + $0xc30] sm:$0xff]
    %v6249 = vld [vmem:[#allocation3 + $0xc38] sm:$0xff]
    %v6250 = vld [vmem:[#allocation3 + $0xc40] sm:$0xff]
    %v6251 = vld [vmem:[#allocation3 + $0xc48] sm:$0xff]
    %v6252 = vld [vmem:[#allocation3 + $0xc50] sm:$0xff]
    %v6253 = vld [vmem:[#allocation3 + $0xc58] sm:$0xff]
    %v6254 = vld [vmem:[#allocation3 + $0xc60] sm:$0xff]
    %v6255 = vld [vmem:[#allocation3 + $0xc68] sm:$0xff]
    %v6256 = vld [vmem:[#allocation3 + $0xc70] sm:$0xff]
    %v6257 = vld [vmem:[#allocation3 + $0xc78] sm:$0xff]
    %v6258 = vld [vmem:[#allocation3 + $0xc80] sm:$0xff]
    %v6259 = vld [vmem:[#allocation3 + $0xc88] sm:$0xff]
    %v6260 = vld [vmem:[#allocation3 + $0xc90] sm:$0xff]
    %v6261 = vld [vmem:[#allocation3 + $0xc98] sm:$0xff]
    %v6262 = vld [vmem:[#allocation3 + $0xca0] sm:$0xff]
    %v6263 = vld [vmem:[#allocation3 + $0xca8] sm:$0xff]
    %v6264 = vld [vmem:[#allocation3 + $0xcb0] sm:$0xff]
    %v6265 = vld [vmem:[#allocation3 + $0xcb8] sm:$0xff]
    %v6266 = vld [vmem:[#allocation3 + $0xcc0] sm:$0xff]
    %v6267 = vld [vmem:[#allocation3 + $0xcc8] sm:$0xff]
    %v6268 = vld [vmem:[#allocation3 + $0xcd0] sm:$0xff]
    %v6269 = vld [vmem:[#allocation3 + $0xcd8] sm:$0xff]
    %v6270 = vld [vmem:[#allocation3 + $0xce0] sm:$0xff]
    %v6271 = vld [vmem:[#allocation3 + $0xce8] sm:$0xff]
    %v6272 = vld [vmem:[#allocation3 + $0xcf0] sm:$0xff]
    %v6273 = vld [vmem:[#allocation3 + $0xcf8] sm:$0xff]
    %v6274 = vld [vmem:[#allocation3 + $0xd00] sm:$0xff]
    %v6275 = vld [vmem:[#allocation3 + $0xd08] sm:$0xff]
    %v6276 = vld [vmem:[#allocation3 + $0xd10] sm:$0xff]
    %v6277 = vld [vmem:[#allocation3 + $0xd18] sm:$0xff]
    %v6278 = vld [vmem:[#allocation3 + $0xd20] sm:$0xff]
    %v6279 = vld [vmem:[#allocation3 + $0xd28] sm:$0xff]
    %v6280 = vld [vmem:[#allocation3 + $0xd30] sm:$0xff]
    %v6281 = vld [vmem:[#allocation3 + $0xd38] sm:$0xff]
    %v6282 = vld [vmem:[#allocation3 + $0xd40] sm:$0xff]
    %v6283 = vld [vmem:[#allocation3 + $0xd48] sm:$0xff]
    %v6284 = vld [vmem:[#allocation3 + $0xd50] sm:$0xff]
    %v6285 = vld [vmem:[#allocation3 + $0xd58] sm:$0xff]
    %v6286 = vld [vmem:[#allocation3 + $0xd60] sm:$0xff]
    %v6287 = vld [vmem:[#allocation3 + $0xd68] sm:$0xff]
    %v6288 = vld [vmem:[#allocation3 + $0xd70] sm:$0xff]
    %v6289 = vld [vmem:[#allocation3 + $0xd78] sm:$0xff]
    %v6290 = vld [vmem:[#allocation3 + $0xd80] sm:$0xff]
    %v6291 = vld [vmem:[#allocation3 + $0xd88] sm:$0xff]
    %v6292 = vld [vmem:[#allocation3 + $0xd90] sm:$0xff]
    %v6293 = vld [vmem:[#allocation3 + $0xd98] sm:$0xff]
    %v6294 = vld [vmem:[#allocation3 + $0xda0] sm:$0xff]
    %v6295 = vld [vmem:[#allocation3 + $0xda8] sm:$0xff]
    %v6296 = vld [vmem:[#allocation3 + $0xdb0] sm:$0xff]
    %v6297 = vld [vmem:[#allocation3 + $0xdb8] sm:$0xff]
    %v6298 = vld [vmem:[#allocation3 + $0xdc0] sm:$0xff]
    %v6299 = vld [vmem:[#allocation3 + $0xdc8] sm:$0xff]
    %v6300 = vld [vmem:[#allocation3 + $0xdd0] sm:$0xff]
    %v6301 = vld [vmem:[#allocation3 + $0xdd8] sm:$0xff]
    %v6302 = vld [vmem:[#allocation3 + $0xde0] sm:$0xff]
    %v6303 = vld [vmem:[#allocation3 + $0xde8] sm:$0xff]
    %v6304 = vld [vmem:[#allocation3 + $0xdf0] sm:$0xff]
    %v6305 = vld [vmem:[#allocation3 + $0xdf8] sm:$0xff]
    %v6306 = vld [vmem:[#allocation3 + $0xe00] sm:$0xff]
    %v6307 = vld [vmem:[#allocation3 + $0xe08] sm:$0xff]
    %v6308 = vld [vmem:[#allocation3 + $0xe10] sm:$0xff]
    %v6309 = vld [vmem:[#allocation3 + $0xe18] sm:$0xff]
    %v6310 = vld [vmem:[#allocation3 + $0xe20] sm:$0xff]
    %v6311 = vld [vmem:[#allocation3 + $0xe28] sm:$0xff]
    %v6312 = vld [vmem:[#allocation3 + $0xe30] sm:$0xff]
    %v6313 = vld [vmem:[#allocation3 + $0xe38] sm:$0xff]
    %v6314 = vld [vmem:[#allocation3 + $0xe40] sm:$0xff]
    %v6315 = vld [vmem:[#allocation3 + $0xe48] sm:$0xff]
    %v6316 = vld [vmem:[#allocation3 + $0xe50] sm:$0xff]
    %v6317 = vld [vmem:[#allocation3 + $0xe58] sm:$0xff]
    %v6318 = vld [vmem:[#allocation3 + $0xe60] sm:$0xff]
    %v6319 = vld [vmem:[#allocation3 + $0xe68] sm:$0xff]
    %v6320 = vld [vmem:[#allocation3 + $0xe70] sm:$0xff]
    %v6321 = vld [vmem:[#allocation3 + $0xe78] sm:$0xff]
    %v6322 = vld [vmem:[#allocation3 + $0xe80] sm:$0xff]
    %v6323 = vld [vmem:[#allocation3 + $0xe88] sm:$0xff]
    %v6324 = vld [vmem:[#allocation3 + $0xe90] sm:$0xff]
    %v6325 = vld [vmem:[#allocation3 + $0xe98] sm:$0xff]
    %v6326 = vld [vmem:[#allocation3 + $0xea0] sm:$0xff]
    %v6327 = vld [vmem:[#allocation3 + $0xea8] sm:$0xff]
    %v6328 = vld [vmem:[#allocation3 + $0xeb0] sm:$0xff]
    %v6329 = vld [vmem:[#allocation3 + $0xeb8] sm:$0xff]
    %v6330 = vld [vmem:[#allocation3 + $0xec0] sm:$0xff]
    %v6331 = vld [vmem:[#allocation3 + $0xec8] sm:$0xff]
    %v6332 = vld [vmem:[#allocation3 + $0xed0] sm:$0xff]
    %v6333 = vld [vmem:[#allocation3 + $0xed8] sm:$0xff]
    %v6334 = vld [vmem:[#allocation3 + $0xee0] sm:$0xff]
    %v6335 = vld [vmem:[#allocation3 + $0xee8] sm:$0xff]
    %v6336 = vld [vmem:[#allocation3 + $0xef0] sm:$0xff]
    %v6337 = vld [vmem:[#allocation3 + $0xef8] sm:$0xff]
    %v6338 = vld [vmem:[#allocation3 + $0xf00] sm:$0xff]
    %v6339 = vld [vmem:[#allocation3 + $0xf08] sm:$0xff]
    %v6340 = vld [vmem:[#allocation3 + $0xf10] sm:$0xff]
    %v6341 = vld [vmem:[#allocation3 + $0xf18] sm:$0xff]
    %v6342 = vld [vmem:[#allocation3 + $0xf20] sm:$0xff]
    %v6343 = vld [vmem:[#allocation3 + $0xf28] sm:$0xff]
    %v6344 = vld [vmem:[#allocation3 + $0xf30] sm:$0xff]
    %v6345 = vld [vmem:[#allocation3 + $0xf38] sm:$0xff]
    %v6346 = vld [vmem:[#allocation3 + $0xf40] sm:$0xff]
    %v6347 = vld [vmem:[#allocation3 + $0xf48] sm:$0xff]
    %v6348 = vld [vmem:[#allocation3 + $0xf50] sm:$0xff]
    %v6349 = vld [vmem:[#allocation3 + $0xf58] sm:$0xff]
    %v6350 = vld [vmem:[#allocation3 + $0xf60] sm:$0xff]
    %v6351 = vld [vmem:[#allocation3 + $0xf68] sm:$0xff]
    %v6352 = vld [vmem:[#allocation3 + $0xf70] sm:$0xff]
    %v6353 = vld [vmem:[#allocation3 + $0xf78] sm:$0xff]
    %v6354 = vld [vmem:[#allocation3 + $0xf80] sm:$0xff]
    %v6355 = vld [vmem:[#allocation3 + $0xf88] sm:$0xff]
    %v6356 = vld [vmem:[#allocation3 + $0xf90] sm:$0xff]
    %v6357 = vld [vmem:[#allocation3 + $0xf98] sm:$0xff]
    %v6358 = vld [vmem:[#allocation3 + $0xfa0] sm:$0xff]
    %v6359 = vld [vmem:[#allocation3 + $0xfa8] sm:$0xff]
    %v6360 = vld [vmem:[#allocation3 + $0xfb0] sm:$0xff]
    %v6361 = vld [vmem:[#allocation3 + $0xfb8] sm:$0xff]
    %v6362 = vld [vmem:[#allocation3 + $0xfc0] sm:$0xff]
    %v6363 = vld [vmem:[#allocation3 + $0xfc8] sm:$0xff]
    %v6364 = vld [vmem:[#allocation3 + $0xfd0] sm:$0xff]
    %v6365 = vld [vmem:[#allocation3 + $0xfd8] sm:$0xff]
    %v6366 = vld [vmem:[#allocation3 + $0xfe0] sm:$0xff]
    %v6367 = vld [vmem:[#allocation3 + $0xfe8] sm:$0xff]
    %v6368 = vld [vmem:[#allocation3 + $0xff0] sm:$0xff]
    %v6369 = vld [vmem:[#allocation3 + $0xff8] sm:$0xff]
    %v6370 = vld [vmem:[#allocation3 + $0x1000] sm:$0xff]
    %v6371 = vld [vmem:[#allocation3 + $0x1008] sm:$0xff]
    %v6372 = vld [vmem:[#allocation3 + $0x1010] sm:$0xff]
    %v6373 = vld [vmem:[#allocation3 + $0x1018] sm:$0xff]
    %v6374 = vld [vmem:[#allocation3 + $0x1020] sm:$0xff]
    %v6375 = vld [vmem:[#allocation3 + $0x1028] sm:$0xff]
    %v6376 = vld [vmem:[#allocation3 + $0x1030] sm:$0xff]
    %v6377 = vld [vmem:[#allocation3 + $0x1038] sm:$0xff]
    %v6378 = vld [vmem:[#allocation3 + $0x1040] sm:$0xff]
    %v6379 = vld [vmem:[#allocation3 + $0x1048] sm:$0xff]
    %v6380 = vld [vmem:[#allocation3 + $0x1050] sm:$0xff]
    %v6381 = vld [vmem:[#allocation3 + $0x1058] sm:$0xff]
    %v6382 = vld [vmem:[#allocation3 + $0x1060] sm:$0xff]
    %v6383 = vld [vmem:[#allocation3 + $0x1068] sm:$0xff]
    %v6384 = vld [vmem:[#allocation3 + $0x1070] sm:$0xff]
    %v6385 = vld [vmem:[#allocation3 + $0x1078] sm:$0xff]
    %v6386 = vld [vmem:[#allocation3 + $0x1080] sm:$0xff]
    %v6387 = vld [vmem:[#allocation3 + $0x1088] sm:$0xff]
    %v6388 = vld [vmem:[#allocation3 + $0x1090] sm:$0xff]
    %v6389 = vld [vmem:[#allocation3 + $0x1098] sm:$0xff]
    %v6390 = vld [vmem:[#allocation3 + $0x10a0] sm:$0xff]
    %v6391 = vld [vmem:[#allocation3 + $0x10a8] sm:$0xff]
    %v6392 = vld [vmem:[#allocation3 + $0x10b0] sm:$0xff]
    %v6393 = vld [vmem:[#allocation3 + $0x10b8] sm:$0xff]
    %v6394 = vld [vmem:[#allocation3 + $0x10c0] sm:$0xff]
    %v6395 = vld [vmem:[#allocation3 + $0x10c8] sm:$0xff]
    %v6396 = vld [vmem:[#allocation3 + $0x10d0] sm:$0xff]
    %v6397 = vld [vmem:[#allocation3 + $0x10d8] sm:$0xff]
    %v6398 = vld [vmem:[#allocation3 + $0x10e0] sm:$0xff]
    %v6399 = vld [vmem:[#allocation3 + $0x10e8] sm:$0xff]
    %v6400 = vld [vmem:[#allocation3 + $0x10f0] sm:$0xff]
    %v6401 = vld [vmem:[#allocation3 + $0x10f8] sm:$0xff]
    %v6402 = vld [vmem:[#allocation3 + $0x1100] sm:$0xff]
    %v6403 = vld [vmem:[#allocation3 + $0x1108] sm:$0xff]
    %v6404 = vld [vmem:[#allocation3 + $0x1110] sm:$0xff]
    %v6405 = vld [vmem:[#allocation3 + $0x1118] sm:$0xff]
    %v6406 = vld [vmem:[#allocation3 + $0x1120] sm:$0xff]
    %v6407 = vld [vmem:[#allocation3 + $0x1128] sm:$0xff]
    %v6408 = vld [vmem:[#allocation3 + $0x1130] sm:$0xff]
    %v6409 = vld [vmem:[#allocation3 + $0x1138] sm:$0xff]
    %v6410 = vld [vmem:[#allocation3 + $0x1140] sm:$0xff]
    %v6411 = vld [vmem:[#allocation3 + $0x1148] sm:$0xff]
    %v6412 = vld [vmem:[#allocation3 + $0x1150] sm:$0xff]
    %v6413 = vld [vmem:[#allocation3 + $0x1158] sm:$0xff]
    %v6414 = vld [vmem:[#allocation3 + $0x1160] sm:$0xff]
    %v6415 = vld [vmem:[#allocation3 + $0x1168] sm:$0xff]
    %v6416 = vld [vmem:[#allocation3 + $0x1170] sm:$0xff]
    %v6417 = vld [vmem:[#allocation3 + $0x1178] sm:$0xff]
    %v6418 = vld [vmem:[#allocation3 + $0x1180] sm:$0xff]
    %v6419 = vld [vmem:[#allocation3 + $0x1188] sm:$0xff]
    %v6420 = vld [vmem:[#allocation3 + $0x1190] sm:$0xff]
    %v6421 = vld [vmem:[#allocation3 + $0x1198] sm:$0xff]
    %v6422 = vld [vmem:[#allocation3 + $0x11a0] sm:$0xff]
    %v6423 = vld [vmem:[#allocation3 + $0x11a8] sm:$0xff]
    %v6424 = vld [vmem:[#allocation3 + $0x11b0] sm:$0xff]
    %v6425 = vld [vmem:[#allocation3 + $0x11b8] sm:$0xff]
    %v6426 = vld [vmem:[#allocation3 + $0x11c0] sm:$0xff]
    %v6427 = vld [vmem:[#allocation3 + $0x11c8] sm:$0xff]
    %v6428 = vld [vmem:[#allocation3 + $0x11d0] sm:$0xff]
    %v6429 = vld [vmem:[#allocation3 + $0x11d8] sm:$0xff]
    %v6430 = vld [vmem:[#allocation3 + $0x11e0] sm:$0xff]
    %v6431 = vld [vmem:[#allocation3 + $0x11e8] sm:$0xff]
    %v6432 = vld [vmem:[#allocation3 + $0x11f0] sm:$0xff]
    %v6433 = vld [vmem:[#allocation3 + $0x11f8] sm:$0xff]
    %6434 = vmatprep.subr.mxu0 0.0
    %6435 = vmatpush1.msra.mxu0 %v4577
    %6436 = vmatprep.subr.mxu0 0.0
    %6437 = vmatpush1.msra.mxu0 %v4576
    %6438 = vmatprep.subr.mxu0 0.0
    %6439 = vmatpush1.msra.mxu0 %v4575
    %6440 = vmatprep.subr.mxu0 0.0
    %6441 = vmatpush1.msra.mxu0 %v4574
    %6442 = vmatprep.subr.mxu0 0.0
    %6443 = vmatpush1.msra.mxu0 %v4573
    %6444 = vmatprep.subr.mxu0 0.0
    %6445 = vmatpush1.msra.mxu0 %v4572
    %6446 = vmatprep.subr.mxu0 0.0
    %6447 = vmatpush1.msra.mxu0 %v4571
    %6448 = vmatprep.subr.mxu0 0.0
    %6449 = vmatpush1.msra.mxu0 %v4570
    %6450 = vmatprep.subr.mxu0 0.0
    %6451 = vmatpush1.msra.mxu0 %v4569
    %6452 = vmatprep.subr.mxu0 0.0
    %6453 = vmatpush1.msra.mxu0 %v4568
    %6454 = vmatprep.subr.mxu0 0.0
    %6455 = vmatpush1.msra.mxu0 %v4567
    %6456 = vmatprep.subr.mxu0 0.0
    %6457 = vmatpush1.msra.mxu0 %v4566
    %6458 = vmatprep.subr.mxu0 0.0
    %6459 = vmatpush1.msra.mxu0 %v4565
    %6460 = vmatprep.subr.mxu0 0.0
    %6461 = vmatpush1.msra.mxu0 %v4564
    %6462 = vmatprep.subr.mxu0 0.0
    %6463 = vmatpush1.msra.mxu0 %v4563
    %6464 = vmatprep.subr.mxu0 0.0
    %6465 = vmatpush1.msra.mxu0 %v4562
    %6466 = vmatprep.subr.mxu0 0.0
    %6467 = vmatpush2.msra.mxu0 %v4593
    %6468 = vmatprep.subr.mxu0 0.0
    %6469 = vmatpush2.msra.mxu0 %v4592
    %6470 = vmatprep.subr.mxu0 0.0
    %6471 = vmatpush2.msra.mxu0 %v4591
    %6472 = vmatprep.subr.mxu0 0.0
    %6473 = vmatpush2.msra.mxu0 %v4590
    %6474 = vmatprep.subr.mxu0 0.0
    %6475 = vmatpush2.msra.mxu0 %v4589
    %6476 = vmatprep.subr.mxu0 0.0
    %6477 = vmatpush2.msra.mxu0 %v4588
    %6478 = vmatprep.subr.mxu0 0.0
    %6479 = vmatpush2.msra.mxu0 %v4587
    %6480 = vmatprep.subr.mxu0 0.0
    %6481 = vmatpush2.msra.mxu0 %v4586
    %6482 = vmatprep.subr.mxu0 0.0
    %6483 = vmatpush2.msra.mxu0 %v4585
    %6484 = vmatprep.subr.mxu0 0.0
    %6485 = vmatpush2.msra.mxu0 %v4584
    %6486 = vmatprep.subr.mxu0 0.0
    %6487 = vmatpush2.msra.mxu0 %v4583
    %6488 = vmatprep.subr.mxu0 0.0
    %6489 = vmatpush2.msra.mxu0 %v4582
    %6490 = vmatprep.subr.mxu0 0.0
    %6491 = vmatpush2.msra.mxu0 %v4581
    %6492 = vmatprep.subr.mxu0 0.0
    %6493 = vmatpush2.msra.mxu0 %v4580
    %6494 = vmatprep.subr.mxu0 0.0
    %6495 = vmatpush2.msra.mxu0 %v4579
    %6496 = vmatprep.subr.mxu0 0.0
    %6497 = vmatpush2.msra.mxu0 %v4578
    %6498 = vmatprep.mubr.f32.mxu0 %v5859
    %6499 = vmatmul.mubr.f32.gmra.mxu0 %v5858
    %v6500 = vpop.f32.mrf.mxu0
    %v6501 = vadd.f32 0.0, %v6500
    %v6502 = vpop.f32.mrf.mxu0
    %6503 = vmatprep.mubr.f32.mxu0 %v5868
    %6504 = vmatmul.mubr.f32.gmra.mxu0 %v5867
    %v6505 = vpop.f32.mrf.mxu0
    %v6506 = vadd.f32 0.0, %v6505
    %v6507 = vpop.f32.mrf.mxu0
    %6508 = vmatprep.mubr.f32.mxu0 %v5877
    %6509 = vmatmul.mubr.f32.gmra.mxu0 %v5876
    %v6510 = vpop.f32.mrf.mxu0
    %v6511 = vadd.f32 0.0, %v6510
    %v6512 = vpop.f32.mrf.mxu0
    %6513 = vmatprep.mubr.f32.mxu0 %v5886
    %6514 = vmatmul.mubr.f32.gmra.mxu0 %v5885
    %v6515 = vpop.f32.mrf.mxu0
    %v6516 = vadd.f32 0.0, %v6515
    %v6517 = vpop.f32.mrf.mxu0
    %6518 = vmatprep.mubr.f32.mxu0 %v5895
    %6519 = vmatmul.mubr.f32.gmra.mxu0 %v5894
    %v6520 = vpop.f32.mrf.mxu0
    %v6521 = vadd.f32 0.0, %v6520
    %v6522 = vpop.f32.mrf.mxu0
    %6523 = vmatprep.mubr.f32.mxu0 %v5904
    %6524 = vmatmul.mubr.f32.gmra.mxu0 %v5903
    %v6525 = vpop.f32.mrf.mxu0
    %v6526 = vadd.f32 0.0, %v6525
    %v6527 = vpop.f32.mrf.mxu0
    %6528 = vmatprep.mubr.f32.mxu0 %v5913
    %6529 = vmatmul.mubr.f32.gmra.mxu0 %v5912
    %v6530 = vpop.f32.mrf.mxu0
    %v6531 = vadd.f32 0.0, %v6530
    %v6532 = vpop.f32.mrf.mxu0
    %6533 = vmatprep.mubr.f32.mxu0 %v5922
    %6534 = vmatmul.mubr.f32.gmra.mxu0 %v5921
    %v6535 = vpop.f32.mrf.mxu0
    %v6536 = vadd.f32 0.0, %v6535
    %v6537 = vpop.f32.mrf.mxu0
    %6538 = vmatprep.mubr.f32.mxu0 %v5931
    %6539 = vmatmul.mubr.f32.gmra.mxu0 %v5930
    %v6540 = vpop.f32.mrf.mxu0
    %v6541 = vadd.f32 0.0, %v6540
    %v6542 = vpop.f32.mrf.mxu0
    %6543 = vmatprep.mubr.f32.mxu0 %v5940
    %6544 = vmatmul.mubr.f32.gmra.mxu0 %v5939
    %v6545 = vpop.f32.mrf.mxu0
    %v6546 = vadd.f32 0.0, %v6545
    %v6547 = vpop.f32.mrf.mxu0
    %6548 = vmatprep.mubr.f32.mxu0 %v5949
    %6549 = vmatmul.mubr.f32.gmra.mxu0 %v5948
    %v6550 = vpop.f32.mrf.mxu0
    %v6551 = vadd.f32 0.0, %v6550
    %v6552 = vpop.f32.mrf.mxu0
    %6553 = vmatprep.mubr.f32.mxu0 %v5958
    %6554 = vmatmul.mubr.f32.gmra.mxu0 %v5957
    %v6555 = vpop.f32.mrf.mxu0
    %v6556 = vadd.f32 0.0, %v6555
    %v6557 = vpop.f32.mrf.mxu0
    %6558 = vmatprep.mubr.f32.mxu0 %v5967
    %6559 = vmatmul.mubr.f32.gmra.mxu0 %v5966
    %v6560 = vpop.f32.mrf.mxu0
    %v6561 = vadd.f32 0.0, %v6560
    %v6562 = vpop.f32.mrf.mxu0
    %6563 = vmatprep.mubr.f32.mxu0 %v5976
    %6564 = vmatmul.mubr.f32.gmra.mxu0 %v5975
    %v6565 = vpop.f32.mrf.mxu0
    %v6566 = vadd.f32 0.0, %v6565
    %v6567 = vpop.f32.mrf.mxu0
    %6568 = vmatprep.mubr.f32.mxu0 %v5985
    %6569 = vmatmul.mubr.f32.gmra.mxu0 %v5984
    %v6570 = vpop.f32.mrf.mxu0
    %v6571 = vadd.f32 0.0, %v6570
    %v6572 = vpop.f32.mrf.mxu0
    %6573 = vmatprep.mubr.f32.mxu0 %v5994
    %6574 = vmatmul.mubr.f32.gmra.mxu0 %v5993
    %v6575 = vpop.f32.mrf.mxu0
    %v6576 = vadd.f32 0.0, %v6575
    %v6577 = vpop.f32.mrf.mxu0
    %6578 = vmatprep.mubr.f32.mxu0 %v6003
    %6579 = vmatmul.mubr.f32.gmra.mxu0 %v6002
    %v6580 = vpop.f32.mrf.mxu0
    %v6581 = vadd.f32 0.0, %v6580
    %v6582 = vpop.f32.mrf.mxu0
    %6583 = vmatprep.mubr.f32.mxu0 %v6012
    %6584 = vmatmul.mubr.f32.gmra.mxu0 %v6011
    %v6585 = vpop.f32.mrf.mxu0
    %v6586 = vadd.f32 0.0, %v6585
    %v6587 = vpop.f32.mrf.mxu0
    %6588 = vmatprep.mubr.f32.mxu0 %v6021
    %6589 = vmatmul.mubr.f32.gmra.mxu0 %v6020
    %v6590 = vpop.f32.mrf.mxu0
    %v6591 = vadd.f32 0.0, %v6590
    %v6592 = vpop.f32.mrf.mxu0
    %6593 = vmatprep.mubr.f32.mxu0 %v6030
    %6594 = vmatmul.mubr.f32.gmra.mxu0 %v6029
    %v6595 = vpop.f32.mrf.mxu0
    %v6596 = vadd.f32 0.0, %v6595
    %v6597 = vpop.f32.mrf.mxu0
    %6598 = vmatprep.mubr.f32.mxu0 %v6039
    %6599 = vmatmul.mubr.f32.gmra.mxu0 %v6038
    %v6600 = vpop.f32.mrf.mxu0
    %v6601 = vadd.f32 0.0, %v6600
    %v6602 = vpop.f32.mrf.mxu0
    %6603 = vmatprep.mubr.f32.mxu0 %v6048
    %6604 = vmatmul.mubr.f32.gmra.mxu0 %v6047
    %v6605 = vpop.f32.mrf.mxu0
    %v6606 = vadd.f32 0.0, %v6605
    %v6607 = vpop.f32.mrf.mxu0
    %6608 = vmatprep.mubr.f32.mxu0 %v6057
    %6609 = vmatmul.mubr.f32.gmra.mxu0 %v6056
    %v6610 = vpop.f32.mrf.mxu0
    %v6611 = vadd.f32 0.0, %v6610
    %v6612 = vpop.f32.mrf.mxu0
    %6613 = vmatprep.mubr.f32.mxu0 %v6066
    %6614 = vmatmul.mubr.f32.gmra.mxu0 %v6065
    %v6615 = vpop.f32.mrf.mxu0
    %v6616 = vadd.f32 0.0, %v6615
    %v6617 = vpop.f32.mrf.mxu0
    %6618 = vmatprep.mubr.f32.mxu0 %v6075
    %6619 = vmatmul.mubr.f32.gmra.mxu0 %v6074
    %v6620 = vpop.f32.mrf.mxu0
    %v6621 = vadd.f32 0.0, %v6620
    %v6622 = vpop.f32.mrf.mxu0
    %6623 = vmatprep.mubr.f32.mxu0 %v6084
    %6624 = vmatmul.mubr.f32.gmra.mxu0 %v6083
    %v6625 = vpop.f32.mrf.mxu0
    %v6626 = vadd.f32 0.0, %v6625
    %v6627 = vpop.f32.mrf.mxu0
    %6628 = vmatprep.mubr.f32.mxu0 %v6093
    %6629 = vmatmul.mubr.f32.gmra.mxu0 %v6092
    %v6630 = vpop.f32.mrf.mxu0
    %v6631 = vadd.f32 0.0, %v6630
    %v6632 = vpop.f32.mrf.mxu0
    %6633 = vmatprep.mubr.f32.mxu0 %v6102
    %6634 = vmatmul.mubr.f32.gmra.mxu0 %v6101
    %v6635 = vpop.f32.mrf.mxu0
    %v6636 = vadd.f32 0.0, %v6635
    %v6637 = vpop.f32.mrf.mxu0
    %6638 = vmatprep.mubr.f32.mxu0 %v6111
    %6639 = vmatmul.mubr.f32.gmra.mxu0 %v6110
    %v6640 = vpop.f32.mrf.mxu0
    %v6641 = vadd.f32 0.0, %v6640
    %v6642 = vpop.f32.mrf.mxu0
    %6643 = vmatprep.mubr.f32.mxu0 %v6120
    %6644 = vmatmul.mubr.f32.gmra.mxu0 %v6119
    %v6645 = vpop.f32.mrf.mxu0
    %v6646 = vadd.f32 0.0, %v6645
    %v6647 = vpop.f32.mrf.mxu0
    %6648 = vmatprep.mubr.f32.mxu0 %v6129
    %6649 = vmatmul.mubr.f32.gmra.mxu0 %v6128
    %v6650 = vpop.f32.mrf.mxu0
    %v6651 = vadd.f32 0.0, %v6650
    %v6652 = vpop.f32.mrf.mxu0
    %6653 = vmatprep.mubr.f32.mxu0 %v6138
    %6654 = vmatmul.mubr.f32.gmra.mxu0 %v6137
    %v6655 = vpop.f32.mrf.mxu0
    %v6656 = vadd.f32 0.0, %v6655
    %v6657 = vpop.f32.mrf.mxu0
    %6658 = vmatprep.mubr.f32.mxu0 %v6147
    %6659 = vmatmul.mubr.f32.gmra.mxu0 %v6146
    %v6660 = vpop.f32.mrf.mxu0
    %v6661 = vadd.f32 0.0, %v6660
    %v6662 = vpop.f32.mrf.mxu0
    %6663 = vmatprep.mubr.f32.mxu0 %v6156
    %6664 = vmatmul.mubr.f32.gmra.mxu0 %v6155
    %v6665 = vpop.f32.mrf.mxu0
    %v6666 = vadd.f32 0.0, %v6665
    %v6667 = vpop.f32.mrf.mxu0
    %6668 = vmatprep.mubr.f32.mxu0 %v6165
    %6669 = vmatmul.mubr.f32.gmra.mxu0 %v6164
    %v6670 = vpop.f32.mrf.mxu0
    %v6671 = vadd.f32 0.0, %v6670
    %v6672 = vpop.f32.mrf.mxu0
    %6673 = vmatprep.mubr.f32.mxu0 %v6174
    %6674 = vmatmul.mubr.f32.gmra.mxu0 %v6173
    %v6675 = vpop.f32.mrf.mxu0
    %v6676 = vadd.f32 0.0, %v6675
    %v6677 = vpop.f32.mrf.mxu0
    %6678 = vmatprep.mubr.f32.mxu0 %v6183
    %6679 = vmatmul.mubr.f32.gmra.mxu0 %v6182
    %v6680 = vpop.f32.mrf.mxu0
    %v6681 = vadd.f32 0.0, %v6680
    %v6682 = vpop.f32.mrf.mxu0
    %6683 = vmatprep.mubr.f32.mxu0 %v6192
    %6684 = vmatmul.mubr.f32.gmra.mxu0 %v6191
    %v6685 = vpop.f32.mrf.mxu0
    %v6686 = vadd.f32 0.0, %v6685
    %v6687 = vpop.f32.mrf.mxu0
    %6688 = vmatprep.mubr.f32.mxu0 %v6201
    %6689 = vmatmul.mubr.f32.gmra.mxu0 %v6200
    %v6690 = vpop.f32.mrf.mxu0
    %v6691 = vadd.f32 0.0, %v6690
    %v6692 = vpop.f32.mrf.mxu0
    %6693 = vmatprep.mubr.f32.mxu0 %v6210
    %6694 = vmatmul.mubr.f32.gmra.mxu0 %v6209
    %v6695 = vpop.f32.mrf.mxu0
    %v6696 = vadd.f32 0.0, %v6695
    %v6697 = vpop.f32.mrf.mxu0
    %6698 = vmatprep.mubr.f32.mxu0 %v6219
    %6699 = vmatmul.mubr.f32.gmra.mxu0 %v6218
    %v6700 = vpop.f32.mrf.mxu0
    %v6701 = vadd.f32 0.0, %v6700
    %v6702 = vpop.f32.mrf.mxu0
    %6703 = vmatprep.mubr.f32.mxu0 %v6228
    %6704 = vmatmul.mubr.f32.gmra.mxu0 %v6227
    %v6705 = vpop.f32.mrf.mxu0
    %v6706 = vadd.f32 0.0, %v6705
    %v6707 = vpop.f32.mrf.mxu0
    %6708 = vmatprep.mubr.f32.mxu0 %v6237
    %6709 = vmatmul.mubr.f32.gmra.mxu0 %v6236
    %v6710 = vpop.f32.mrf.mxu0
    %v6711 = vadd.f32 0.0, %v6710
    %v6712 = vpop.f32.mrf.mxu0
    %6713 = vmatprep.mubr.f32.mxu0 %v6246
    %6714 = vmatmul.mubr.f32.gmra.mxu0 %v6245
    %v6715 = vpop.f32.mrf.mxu0
    %v6716 = vadd.f32 0.0, %v6715
    %v6717 = vpop.f32.mrf.mxu0
    %6718 = vmatprep.mubr.f32.mxu0 %v6255
    %6719 = vmatmul.mubr.f32.gmra.mxu0 %v6254
    %v6720 = vpop.f32.mrf.mxu0
    %v6721 = vadd.f32 0.0, %v6720
    %v6722 = vpop.f32.mrf.mxu0
    %6723 = vmatprep.mubr.f32.mxu0 %v6264
    %6724 = vmatmul.mubr.f32.gmra.mxu0 %v6263
    %v6725 = vpop.f32.mrf.mxu0
    %v6726 = vadd.f32 0.0, %v6725
    %v6727 = vpop.f32.mrf.mxu0
    %6728 = vmatprep.mubr.f32.mxu0 %v6273
    %6729 = vmatmul.mubr.f32.gmra.mxu0 %v6272
    %v6730 = vpop.f32.mrf.mxu0
    %v6731 = vadd.f32 0.0, %v6730
    %v6732 = vpop.f32.mrf.mxu0
    %6733 = vmatprep.mubr.f32.mxu0 %v6282
    %6734 = vmatmul.mubr.f32.gmra.mxu0 %v6281
    %v6735 = vpop.f32.mrf.mxu0
    %v6736 = vadd.f32 0.0, %v6735
    %v6737 = vpop.f32.mrf.mxu0
    %6738 = vmatprep.mubr.f32.mxu0 %v6291
    %6739 = vmatmul.mubr.f32.gmra.mxu0 %v6290
    %v6740 = vpop.f32.mrf.mxu0
    %v6741 = vadd.f32 0.0, %v6740
    %v6742 = vpop.f32.mrf.mxu0
    %6743 = vmatprep.mubr.f32.mxu0 %v6300
    %6744 = vmatmul.mubr.f32.gmra.mxu0 %v6299
    %v6745 = vpop.f32.mrf.mxu0
    %v6746 = vadd.f32 0.0, %v6745
    %v6747 = vpop.f32.mrf.mxu0
    %6748 = vmatprep.mubr.f32.mxu0 %v6309
    %6749 = vmatmul.mubr.f32.gmra.mxu0 %v6308
    %v6750 = vpop.f32.mrf.mxu0
    %v6751 = vadd.f32 0.0, %v6750
    %v6752 = vpop.f32.mrf.mxu0
    %6753 = vmatprep.mubr.f32.mxu0 %v6318
    %6754 = vmatmul.mubr.f32.gmra.mxu0 %v6317
    %v6755 = vpop.f32.mrf.mxu0
    %v6756 = vadd.f32 0.0, %v6755
    %v6757 = vpop.f32.mrf.mxu0
    %6758 = vmatprep.mubr.f32.mxu0 %v6327
    %6759 = vmatmul.mubr.f32.gmra.mxu0 %v6326
    %v6760 = vpop.f32.mrf.mxu0
    %v6761 = vadd.f32 0.0, %v6760
    %v6762 = vpop.f32.mrf.mxu0
    %6763 = vmatprep.mubr.f32.mxu0 %v6336
    %6764 = vmatmul.mubr.f32.gmra.mxu0 %v6335
    %v6765 = vpop.f32.mrf.mxu0
    %v6766 = vadd.f32 0.0, %v6765
    %v6767 = vpop.f32.mrf.mxu0
    %6768 = vmatprep.mubr.f32.mxu0 %v6345
    %6769 = vmatmul.mubr.f32.gmra.mxu0 %v6344
    %v6770 = vpop.f32.mrf.mxu0
    %v6771 = vadd.f32 0.0, %v6770
    %v6772 = vpop.f32.mrf.mxu0
    %6773 = vmatprep.mubr.f32.mxu0 %v6354
    %6774 = vmatmul.mubr.f32.gmra.mxu0 %v6353
    %v6775 = vpop.f32.mrf.mxu0
    %v6776 = vadd.f32 0.0, %v6775
    %v6777 = vpop.f32.mrf.mxu0
    %6778 = vmatprep.mubr.f32.mxu0 %v6363
    %6779 = vmatmul.mubr.f32.gmra.mxu0 %v6362
    %v6780 = vpop.f32.mrf.mxu0
    %v6781 = vadd.f32 0.0, %v6780
    %v6782 = vpop.f32.mrf.mxu0
    %6783 = vmatprep.mubr.f32.mxu0 %v6372
    %6784 = vmatmul.mubr.f32.gmra.mxu0 %v6371
    %v6785 = vpop.f32.mrf.mxu0
    %v6786 = vadd.f32 0.0, %v6785
    %v6787 = vpop.f32.mrf.mxu0
    %6788 = vmatprep.mubr.f32.mxu0 %v6381
    %6789 = vmatmul.mubr.f32.gmra.mxu0 %v6380
    %v6790 = vpop.f32.mrf.mxu0
    %v6791 = vadd.f32 0.0, %v6790
    %v6792 = vpop.f32.mrf.mxu0
    %6793 = vmatprep.mubr.f32.mxu0 %v6390
    %6794 = vmatmul.mubr.f32.gmra.mxu0 %v6389
    %v6795 = vpop.f32.mrf.mxu0
    %v6796 = vadd.f32 0.0, %v6795
    %v6797 = vpop.f32.mrf.mxu0
    %6798 = vmatprep.mubr.f32.mxu0 %v6399
    %6799 = vmatmul.mubr.f32.gmra.mxu0 %v6398
    %v6800 = vpop.f32.mrf.mxu0
    %v6801 = vadd.f32 0.0, %v6800
    %v6802 = vpop.f32.mrf.mxu0
    %6803 = vmatprep.mubr.f32.mxu0 %v6408
    %6804 = vmatmul.mubr.f32.gmra.mxu0 %v6407
    %v6805 = vpop.f32.mrf.mxu0
    %v6806 = vadd.f32 0.0, %v6805
    %v6807 = vpop.f32.mrf.mxu0
    %6808 = vmatprep.mubr.f32.mxu0 %v6417
    %6809 = vmatmul.mubr.f32.gmra.mxu0 %v6416
    %v6810 = vpop.f32.mrf.mxu0
    %v6811 = vadd.f32 0.0, %v6810
    %v6812 = vpop.f32.mrf.mxu0
    %6813 = vmatprep.mubr.f32.mxu0 %v6426
    %6814 = vmatmul.mubr.f32.gmra.mxu0 %v6425
    %v6815 = vpop.f32.mrf.mxu0
    %v6816 = vadd.f32 0.0, %v6815
    %v6817 = vpop.f32.mrf.mxu0
    %6818 = vdwg.mxu0
    %6819 = vmatprep.subr.mxu0 0.0
    %6820 = vmatpush1.msra.mxu0 %v4609
    %6821 = vmatprep.subr.mxu0 0.0
    %6822 = vmatpush1.msra.mxu0 %v4608
    %6823 = vmatprep.subr.mxu0 0.0
    %6824 = vmatpush1.msra.mxu0 %v4607
    %6825 = vmatprep.subr.mxu0 0.0
    %6826 = vmatpush1.msra.mxu0 %v4606
    %6827 = vmatprep.subr.mxu0 0.0
    %6828 = vmatpush1.msra.mxu0 %v4605
    %6829 = vmatprep.subr.mxu0 0.0
    %6830 = vmatpush1.msra.mxu0 %v4604
    %6831 = vmatprep.subr.mxu0 0.0
    %6832 = vmatpush1.msra.mxu0 %v4603
    %6833 = vmatprep.subr.mxu0 0.0
    %6834 = vmatpush1.msra.mxu0 %v4602
    %6835 = vmatprep.subr.mxu0 0.0
    %6836 = vmatpush1.msra.mxu0 %v4601
    %6837 = vmatprep.subr.mxu0 0.0
    %6838 = vmatpush1.msra.mxu0 %v4600
    %6839 = vmatprep.subr.mxu0 0.0
    %6840 = vmatpush1.msra.mxu0 %v4599
    %6841 = vmatprep.subr.mxu0 0.0
    %6842 = vmatpush1.msra.mxu0 %v4598
    %6843 = vmatprep.subr.mxu0 0.0
    %6844 = vmatpush1.msra.mxu0 %v4597
    %6845 = vmatprep.subr.mxu0 0.0
    %6846 = vmatpush1.msra.mxu0 %v4596
    %6847 = vmatprep.subr.mxu0 0.0
    %6848 = vmatpush1.msra.mxu0 %v4595
    %6849 = vmatprep.subr.mxu0 0.0
    %6850 = vmatpush1.msra.mxu0 %v4594
    %6851 = vmatprep.subr.mxu0 0.0
    %6852 = vmatpush2.msra.mxu0 %v4625
    %6853 = vmatprep.subr.mxu0 0.0
    %6854 = vmatpush2.msra.mxu0 %v4624
    %6855 = vmatprep.subr.mxu0 0.0
    %6856 = vmatpush2.msra.mxu0 %v4623
    %6857 = vmatprep.subr.mxu0 0.0
    %6858 = vmatpush2.msra.mxu0 %v4622
    %6859 = vmatprep.subr.mxu0 0.0
    %6860 = vmatpush2.msra.mxu0 %v4621
    %6861 = vmatprep.subr.mxu0 0.0
    %6862 = vmatpush2.msra.mxu0 %v4620
    %6863 = vmatprep.subr.mxu0 0.0
    %6864 = vmatpush2.msra.mxu0 %v4619
    %6865 = vmatprep.subr.mxu0 0.0
    %6866 = vmatpush2.msra.mxu0 %v4618
    %6867 = vmatprep.subr.mxu0 0.0
    %6868 = vmatpush2.msra.mxu0 %v4617
    %6869 = vmatprep.subr.mxu0 0.0
    %6870 = vmatpush2.msra.mxu0 %v4616
    %6871 = vmatprep.subr.mxu0 0.0
    %6872 = vmatpush2.msra.mxu0 %v4615
    %6873 = vmatprep.subr.mxu0 0.0
    %6874 = vmatpush2.msra.mxu0 %v4614
    %6875 = vmatprep.subr.mxu0 0.0
    %6876 = vmatpush2.msra.mxu0 %v4613
    %6877 = vmatprep.subr.mxu0 0.0
    %6878 = vmatpush2.msra.mxu0 %v4612
    %6879 = vmatprep.subr.mxu0 0.0
    %6880 = vmatpush2.msra.mxu0 %v4611
    %6881 = vmatprep.subr.mxu0 0.0
    %6882 = vmatpush2.msra.mxu0 %v4610
    %6883 = vmatprep.mubr.f32.mxu0 %v5861
    %6884 = vmatmul.mubr.f32.gmra.mxu0 %v5860
    %v6885 = vpop.f32.mrf.mxu0
    %v6886 = vadd.f32 %v6501, %v6885
    %v6887 = vpop.f32.mrf.mxu0
    %6888 = vmatprep.mubr.f32.mxu0 %v5870
    %6889 = vmatmul.mubr.f32.gmra.mxu0 %v5869
    %v6890 = vpop.f32.mrf.mxu0
    %v6891 = vadd.f32 %v6506, %v6890
    %v6892 = vpop.f32.mrf.mxu0
    %6893 = vmatprep.mubr.f32.mxu0 %v5879
    %6894 = vmatmul.mubr.f32.gmra.mxu0 %v5878
    %v6895 = vpop.f32.mrf.mxu0
    %v6896 = vadd.f32 %v6511, %v6895
    %v6897 = vpop.f32.mrf.mxu0
    %6898 = vmatprep.mubr.f32.mxu0 %v5888
    %6899 = vmatmul.mubr.f32.gmra.mxu0 %v5887
    %v6900 = vpop.f32.mrf.mxu0
    %v6901 = vadd.f32 %v6516, %v6900
    %v6902 = vpop.f32.mrf.mxu0
    %6903 = vmatprep.mubr.f32.mxu0 %v5897
    %6904 = vmatmul.mubr.f32.gmra.mxu0 %v5896
    %v6905 = vpop.f32.mrf.mxu0
    %v6906 = vadd.f32 %v6521, %v6905
    %v6907 = vpop.f32.mrf.mxu0
    %6908 = vmatprep.mubr.f32.mxu0 %v5906
    %6909 = vmatmul.mubr.f32.gmra.mxu0 %v5905
    %v6910 = vpop.f32.mrf.mxu0
    %v6911 = vadd.f32 %v6526, %v6910
    %v6912 = vpop.f32.mrf.mxu0
    %6913 = vmatprep.mubr.f32.mxu0 %v5915
    %6914 = vmatmul.mubr.f32.gmra.mxu0 %v5914
    %v6915 = vpop.f32.mrf.mxu0
    %v6916 = vadd.f32 %v6531, %v6915
    %v6917 = vpop.f32.mrf.mxu0
    %6918 = vmatprep.mubr.f32.mxu0 %v5924
    %6919 = vmatmul.mubr.f32.gmra.mxu0 %v5923
    %v6920 = vpop.f32.mrf.mxu0
    %v6921 = vadd.f32 %v6536, %v6920
    %v6922 = vpop.f32.mrf.mxu0
    %6923 = vmatprep.mubr.f32.mxu0 %v5933
    %6924 = vmatmul.mubr.f32.gmra.mxu0 %v5932
    %v6925 = vpop.f32.mrf.mxu0
    %v6926 = vadd.f32 %v6541, %v6925
    %v6927 = vpop.f32.mrf.mxu0
    %6928 = vmatprep.mubr.f32.mxu0 %v5942
    %6929 = vmatmul.mubr.f32.gmra.mxu0 %v5941
    %v6930 = vpop.f32.mrf.mxu0
    %v6931 = vadd.f32 %v6546, %v6930
    %v6932 = vpop.f32.mrf.mxu0
    %6933 = vmatprep.mubr.f32.mxu0 %v5951
    %6934 = vmatmul.mubr.f32.gmra.mxu0 %v5950
    %v6935 = vpop.f32.mrf.mxu0
    %v6936 = vadd.f32 %v6551, %v6935
    %v6937 = vpop.f32.mrf.mxu0
    %6938 = vmatprep.mubr.f32.mxu0 %v5960
    %6939 = vmatmul.mubr.f32.gmra.mxu0 %v5959
    %v6940 = vpop.f32.mrf.mxu0
    %v6941 = vadd.f32 %v6556, %v6940
    %v6942 = vpop.f32.mrf.mxu0
    %6943 = vmatprep.mubr.f32.mxu0 %v5969
    %6944 = vmatmul.mubr.f32.gmra.mxu0 %v5968
    %v6945 = vpop.f32.mrf.mxu0
    %v6946 = vadd.f32 %v6561, %v6945
    %v6947 = vpop.f32.mrf.mxu0
    %6948 = vmatprep.mubr.f32.mxu0 %v5978
    %6949 = vmatmul.mubr.f32.gmra.mxu0 %v5977
    %v6950 = vpop.f32.mrf.mxu0
    %v6951 = vadd.f32 %v6566, %v6950
    %v6952 = vpop.f32.mrf.mxu0
    %6953 = vmatprep.mubr.f32.mxu0 %v5987
    %6954 = vmatmul.mubr.f32.gmra.mxu0 %v5986
    %v6955 = vpop.f32.mrf.mxu0
    %v6956 = vadd.f32 %v6571, %v6955
    %v6957 = vpop.f32.mrf.mxu0
    %6958 = vmatprep.mubr.f32.mxu0 %v5996
    %6959 = vmatmul.mubr.f32.gmra.mxu0 %v5995
    %v6960 = vpop.f32.mrf.mxu0
    %v6961 = vadd.f32 %v6576, %v6960
    %v6962 = vpop.f32.mrf.mxu0
    %6963 = vmatprep.mubr.f32.mxu0 %v6005
    %6964 = vmatmul.mubr.f32.gmra.mxu0 %v6004
    %v6965 = vpop.f32.mrf.mxu0
    %v6966 = vadd.f32 %v6581, %v6965
    %v6967 = vpop.f32.mrf.mxu0
    %6968 = vmatprep.mubr.f32.mxu0 %v6014
    %6969 = vmatmul.mubr.f32.gmra.mxu0 %v6013
    %v6970 = vpop.f32.mrf.mxu0
    %v6971 = vadd.f32 %v6586, %v6970
    %v6972 = vpop.f32.mrf.mxu0
    %6973 = vmatprep.mubr.f32.mxu0 %v6023
    %6974 = vmatmul.mubr.f32.gmra.mxu0 %v6022
    %v6975 = vpop.f32.mrf.mxu0
    %v6976 = vadd.f32 %v6591, %v6975
    %v6977 = vpop.f32.mrf.mxu0
    %6978 = vmatprep.mubr.f32.mxu0 %v6032
    %6979 = vmatmul.mubr.f32.gmra.mxu0 %v6031
    %v6980 = vpop.f32.mrf.mxu0
    %v6981 = vadd.f32 %v6596, %v6980
    %v6982 = vpop.f32.mrf.mxu0
    %6983 = vmatprep.mubr.f32.mxu0 %v6041
    %6984 = vmatmul.mubr.f32.gmra.mxu0 %v6040
    %v6985 = vpop.f32.mrf.mxu0
    %v6986 = vadd.f32 %v6601, %v6985
    %v6987 = vpop.f32.mrf.mxu0
    %6988 = vmatprep.mubr.f32.mxu0 %v6050
    %6989 = vmatmul.mubr.f32.gmra.mxu0 %v6049
    %v6990 = vpop.f32.mrf.mxu0
    %v6991 = vadd.f32 %v6606, %v6990
    %v6992 = vpop.f32.mrf.mxu0
    %6993 = vmatprep.mubr.f32.mxu0 %v6059
    %6994 = vmatmul.mubr.f32.gmra.mxu0 %v6058
    %v6995 = vpop.f32.mrf.mxu0
    %v6996 = vadd.f32 %v6611, %v6995
    %v6997 = vpop.f32.mrf.mxu0
    %6998 = vmatprep.mubr.f32.mxu0 %v6068
    %6999 = vmatmul.mubr.f32.gmra.mxu0 %v6067
    %v7000 = vpop.f32.mrf.mxu0
    %v7001 = vadd.f32 %v6616, %v7000
    %v7002 = vpop.f32.mrf.mxu0
    %7003 = vmatprep.mubr.f32.mxu0 %v6077
    %7004 = vmatmul.mubr.f32.gmra.mxu0 %v6076
    %v7005 = vpop.f32.mrf.mxu0
    %v7006 = vadd.f32 %v6621, %v7005
    %v7007 = vpop.f32.mrf.mxu0
    %7008 = vmatprep.mubr.f32.mxu0 %v6086
    %7009 = vmatmul.mubr.f32.gmra.mxu0 %v6085
    %v7010 = vpop.f32.mrf.mxu0
    %v7011 = vadd.f32 %v6626, %v7010
    %v7012 = vpop.f32.mrf.mxu0
    %7013 = vmatprep.mubr.f32.mxu0 %v6095
    %7014 = vmatmul.mubr.f32.gmra.mxu0 %v6094
    %v7015 = vpop.f32.mrf.mxu0
    %v7016 = vadd.f32 %v6631, %v7015
    %v7017 = vpop.f32.mrf.mxu0
    %7018 = vmatprep.mubr.f32.mxu0 %v6104
    %7019 = vmatmul.mubr.f32.gmra.mxu0 %v6103
    %v7020 = vpop.f32.mrf.mxu0
    %v7021 = vadd.f32 %v6636, %v7020
    %v7022 = vpop.f32.mrf.mxu0
    %7023 = vmatprep.mubr.f32.mxu0 %v6113
    %7024 = vmatmul.mubr.f32.gmra.mxu0 %v6112
    %v7025 = vpop.f32.mrf.mxu0
    %v7026 = vadd.f32 %v6641, %v7025
    %v7027 = vpop.f32.mrf.mxu0
    %7028 = vmatprep.mubr.f32.mxu0 %v6122
    %7029 = vmatmul.mubr.f32.gmra.mxu0 %v6121
    %v7030 = vpop.f32.mrf.mxu0
    %v7031 = vadd.f32 %v6646, %v7030
    %v7032 = vpop.f32.mrf.mxu0
    %7033 = vmatprep.mubr.f32.mxu0 %v6131
    %7034 = vmatmul.mubr.f32.gmra.mxu0 %v6130
    %v7035 = vpop.f32.mrf.mxu0
    %v7036 = vadd.f32 %v6651, %v7035
    %v7037 = vpop.f32.mrf.mxu0
    %7038 = vmatprep.mubr.f32.mxu0 %v6140
    %7039 = vmatmul.mubr.f32.gmra.mxu0 %v6139
    %v7040 = vpop.f32.mrf.mxu0
    %v7041 = vadd.f32 %v6656, %v7040
    %v7042 = vpop.f32.mrf.mxu0
    %7043 = vmatprep.mubr.f32.mxu0 %v6149
    %7044 = vmatmul.mubr.f32.gmra.mxu0 %v6148
    %v7045 = vpop.f32.mrf.mxu0
    %v7046 = vadd.f32 %v6661, %v7045
    %v7047 = vpop.f32.mrf.mxu0
    %7048 = vmatprep.mubr.f32.mxu0 %v6158
    %7049 = vmatmul.mubr.f32.gmra.mxu0 %v6157
    %v7050 = vpop.f32.mrf.mxu0
    %v7051 = vadd.f32 %v6666, %v7050
    %v7052 = vpop.f32.mrf.mxu0
    %7053 = vmatprep.mubr.f32.mxu0 %v6167
    %7054 = vmatmul.mubr.f32.gmra.mxu0 %v6166
    %v7055 = vpop.f32.mrf.mxu0
    %v7056 = vadd.f32 %v6671, %v7055
    %v7057 = vpop.f32.mrf.mxu0
    %7058 = vmatprep.mubr.f32.mxu0 %v6176
    %7059 = vmatmul.mubr.f32.gmra.mxu0 %v6175
    %v7060 = vpop.f32.mrf.mxu0
    %v7061 = vadd.f32 %v6676, %v7060
    %v7062 = vpop.f32.mrf.mxu0
    %7063 = vmatprep.mubr.f32.mxu0 %v6185
    %7064 = vmatmul.mubr.f32.gmra.mxu0 %v6184
    %v7065 = vpop.f32.mrf.mxu0
    %v7066 = vadd.f32 %v6681, %v7065
    %v7067 = vpop.f32.mrf.mxu0
    %7068 = vmatprep.mubr.f32.mxu0 %v6194
    %7069 = vmatmul.mubr.f32.gmra.mxu0 %v6193
    %v7070 = vpop.f32.mrf.mxu0
    %v7071 = vadd.f32 %v6686, %v7070
    %v7072 = vpop.f32.mrf.mxu0
    %7073 = vmatprep.mubr.f32.mxu0 %v6203
    %7074 = vmatmul.mubr.f32.gmra.mxu0 %v6202
    %v7075 = vpop.f32.mrf.mxu0
    %v7076 = vadd.f32 %v6691, %v7075
    %v7077 = vpop.f32.mrf.mxu0
    %7078 = vmatprep.mubr.f32.mxu0 %v6212
    %7079 = vmatmul.mubr.f32.gmra.mxu0 %v6211
    %v7080 = vpop.f32.mrf.mxu0
    %v7081 = vadd.f32 %v6696, %v7080
    %v7082 = vpop.f32.mrf.mxu0
    %7083 = vmatprep.mubr.f32.mxu0 %v6221
    %7084 = vmatmul.mubr.f32.gmra.mxu0 %v6220
    %v7085 = vpop.f32.mrf.mxu0
    %v7086 = vadd.f32 %v6701, %v7085
    %v7087 = vpop.f32.mrf.mxu0
    %7088 = vmatprep.mubr.f32.mxu0 %v6230
    %7089 = vmatmul.mubr.f32.gmra.mxu0 %v6229
    %v7090 = vpop.f32.mrf.mxu0
    %v7091 = vadd.f32 %v6706, %v7090
    %v7092 = vpop.f32.mrf.mxu0
    %7093 = vmatprep.mubr.f32.mxu0 %v6239
    %7094 = vmatmul.mubr.f32.gmra.mxu0 %v6238
    %v7095 = vpop.f32.mrf.mxu0
    %v7096 = vadd.f32 %v6711, %v7095
    %v7097 = vpop.f32.mrf.mxu0
    %7098 = vmatprep.mubr.f32.mxu0 %v6248
    %7099 = vmatmul.mubr.f32.gmra.mxu0 %v6247
    %v7100 = vpop.f32.mrf.mxu0
    %v7101 = vadd.f32 %v6716, %v7100
    %v7102 = vpop.f32.mrf.mxu0
    %7103 = vmatprep.mubr.f32.mxu0 %v6257
    %7104 = vmatmul.mubr.f32.gmra.mxu0 %v6256
    %v7105 = vpop.f32.mrf.mxu0
    %v7106 = vadd.f32 %v6721, %v7105
    %v7107 = vpop.f32.mrf.mxu0
    %7108 = vmatprep.mubr.f32.mxu0 %v6266
    %7109 = vmatmul.mubr.f32.gmra.mxu0 %v6265
    %v7110 = vpop.f32.mrf.mxu0
    %v7111 = vadd.f32 %v6726, %v7110
    %v7112 = vpop.f32.mrf.mxu0
    %7113 = vmatprep.mubr.f32.mxu0 %v6275
    %7114 = vmatmul.mubr.f32.gmra.mxu0 %v6274
    %v7115 = vpop.f32.mrf.mxu0
    %v7116 = vadd.f32 %v6731, %v7115
    %v7117 = vpop.f32.mrf.mxu0
    %7118 = vmatprep.mubr.f32.mxu0 %v6284
    %7119 = vmatmul.mubr.f32.gmra.mxu0 %v6283
    %v7120 = vpop.f32.mrf.mxu0
    %v7121 = vadd.f32 %v6736, %v7120
    %v7122 = vpop.f32.mrf.mxu0
    %7123 = vmatprep.mubr.f32.mxu0 %v6293
    %7124 = vmatmul.mubr.f32.gmra.mxu0 %v6292
    %v7125 = vpop.f32.mrf.mxu0
    %v7126 = vadd.f32 %v6741, %v7125
    %v7127 = vpop.f32.mrf.mxu0
    %7128 = vmatprep.mubr.f32.mxu0 %v6302
    %7129 = vmatmul.mubr.f32.gmra.mxu0 %v6301
    %v7130 = vpop.f32.mrf.mxu0
    %v7131 = vadd.f32 %v6746, %v7130
    %v7132 = vpop.f32.mrf.mxu0
    %7133 = vmatprep.mubr.f32.mxu0 %v6311
    %7134 = vmatmul.mubr.f32.gmra.mxu0 %v6310
    %v7135 = vpop.f32.mrf.mxu0
    %v7136 = vadd.f32 %v6751, %v7135
    %v7137 = vpop.f32.mrf.mxu0
    %7138 = vmatprep.mubr.f32.mxu0 %v6320
    %7139 = vmatmul.mubr.f32.gmra.mxu0 %v6319
    %v7140 = vpop.f32.mrf.mxu0
    %v7141 = vadd.f32 %v6756, %v7140
    %v7142 = vpop.f32.mrf.mxu0
    %7143 = vmatprep.mubr.f32.mxu0 %v6329
    %7144 = vmatmul.mubr.f32.gmra.mxu0 %v6328
    %v7145 = vpop.f32.mrf.mxu0
    %v7146 = vadd.f32 %v6761, %v7145
    %v7147 = vpop.f32.mrf.mxu0
    %7148 = vmatprep.mubr.f32.mxu0 %v6338
    %7149 = vmatmul.mubr.f32.gmra.mxu0 %v6337
    %v7150 = vpop.f32.mrf.mxu0
    %v7151 = vadd.f32 %v6766, %v7150
    %v7152 = vpop.f32.mrf.mxu0
    %7153 = vmatprep.mubr.f32.mxu0 %v6347
    %7154 = vmatmul.mubr.f32.gmra.mxu0 %v6346
    %v7155 = vpop.f32.mrf.mxu0
    %v7156 = vadd.f32 %v6771, %v7155
    %v7157 = vpop.f32.mrf.mxu0
    %7158 = vmatprep.mubr.f32.mxu0 %v6356
    %7159 = vmatmul.mubr.f32.gmra.mxu0 %v6355
    %v7160 = vpop.f32.mrf.mxu0
    %v7161 = vadd.f32 %v6776, %v7160
    %v7162 = vpop.f32.mrf.mxu0
    %7163 = vmatprep.mubr.f32.mxu0 %v6365
    %7164 = vmatmul.mubr.f32.gmra.mxu0 %v6364
    %v7165 = vpop.f32.mrf.mxu0
    %v7166 = vadd.f32 %v6781, %v7165
    %v7167 = vpop.f32.mrf.mxu0
    %7168 = vmatprep.mubr.f32.mxu0 %v6374
    %7169 = vmatmul.mubr.f32.gmra.mxu0 %v6373
    %v7170 = vpop.f32.mrf.mxu0
    %v7171 = vadd.f32 %v6786, %v7170
    %v7172 = vpop.f32.mrf.mxu0
    %7173 = vmatprep.mubr.f32.mxu0 %v6383
    %7174 = vmatmul.mubr.f32.gmra.mxu0 %v6382
    %v7175 = vpop.f32.mrf.mxu0
    %v7176 = vadd.f32 %v6791, %v7175
    %v7177 = vpop.f32.mrf.mxu0
    %7178 = vmatprep.mubr.f32.mxu0 %v6392
    %7179 = vmatmul.mubr.f32.gmra.mxu0 %v6391
    %v7180 = vpop.f32.mrf.mxu0
    %v7181 = vadd.f32 %v6796, %v7180
    %v7182 = vpop.f32.mrf.mxu0
    %7183 = vmatprep.mubr.f32.mxu0 %v6401
    %7184 = vmatmul.mubr.f32.gmra.mxu0 %v6400
    %v7185 = vpop.f32.mrf.mxu0
    %v7186 = vadd.f32 %v6801, %v7185
    %v7187 = vpop.f32.mrf.mxu0
    %7188 = vmatprep.mubr.f32.mxu0 %v6410
    %7189 = vmatmul.mubr.f32.gmra.mxu0 %v6409
    %v7190 = vpop.f32.mrf.mxu0
    %v7191 = vadd.f32 %v6806, %v7190
    %v7192 = vpop.f32.mrf.mxu0
    %7193 = vmatprep.mubr.f32.mxu0 %v6419
    %7194 = vmatmul.mubr.f32.gmra.mxu0 %v6418
    %v7195 = vpop.f32.mrf.mxu0
    %v7196 = vadd.f32 %v6811, %v7195
    %v7197 = vpop.f32.mrf.mxu0
    %7198 = vmatprep.mubr.f32.mxu0 %v6428
    %7199 = vmatmul.mubr.f32.gmra.mxu0 %v6427
    %v7200 = vpop.f32.mrf.mxu0
    %v7201 = vadd.f32 %v6816, %v7200
    %v7202 = vpop.f32.mrf.mxu0
    %7203 = vdwg.mxu0
    %7204 = vmatprep.subr.mxu0 0.0
    %7205 = vmatpush1.msra.mxu0 %v4641
    %7206 = vmatprep.subr.mxu0 0.0
    %7207 = vmatpush1.msra.mxu0 %v4640
    %7208 = vmatprep.subr.mxu0 0.0
    %7209 = vmatpush1.msra.mxu0 %v4639
    %7210 = vmatprep.subr.mxu0 0.0
    %7211 = vmatpush1.msra.mxu0 %v4638
    %7212 = vmatprep.subr.mxu0 0.0
    %7213 = vmatpush1.msra.mxu0 %v4637
    %7214 = vmatprep.subr.mxu0 0.0
    %7215 = vmatpush1.msra.mxu0 %v4636
    %7216 = vmatprep.subr.mxu0 0.0
    %7217 = vmatpush1.msra.mxu0 %v4635
    %7218 = vmatprep.subr.mxu0 0.0
    %7219 = vmatpush1.msra.mxu0 %v4634
    %7220 = vmatprep.subr.mxu0 0.0
    %7221 = vmatpush1.msra.mxu0 %v4633
    %7222 = vmatprep.subr.mxu0 0.0
    %7223 = vmatpush1.msra.mxu0 %v4632
    %7224 = vmatprep.subr.mxu0 0.0
    %7225 = vmatpush1.msra.mxu0 %v4631
    %7226 = vmatprep.subr.mxu0 0.0
    %7227 = vmatpush1.msra.mxu0 %v4630
    %7228 = vmatprep.subr.mxu0 0.0
    %7229 = vmatpush1.msra.mxu0 %v4629
    %7230 = vmatprep.subr.mxu0 0.0
    %7231 = vmatpush1.msra.mxu0 %v4628
    %7232 = vmatprep.subr.mxu0 0.0
    %7233 = vmatpush1.msra.mxu0 %v4627
    %7234 = vmatprep.subr.mxu0 0.0
    %7235 = vmatpush1.msra.mxu0 %v4626
    %7236 = vmatprep.subr.mxu0 0.0
    %7237 = vmatpush2.msra.mxu0 %v4657
    %7238 = vmatprep.subr.mxu0 0.0
    %7239 = vmatpush2.msra.mxu0 %v4656
    %7240 = vmatprep.subr.mxu0 0.0
    %7241 = vmatpush2.msra.mxu0 %v4655
    %7242 = vmatprep.subr.mxu0 0.0
    %7243 = vmatpush2.msra.mxu0 %v4654
    %7244 = vmatprep.subr.mxu0 0.0
    %7245 = vmatpush2.msra.mxu0 %v4653
    %7246 = vmatprep.subr.mxu0 0.0
    %7247 = vmatpush2.msra.mxu0 %v4652
    %7248 = vmatprep.subr.mxu0 0.0
    %7249 = vmatpush2.msra.mxu0 %v4651
    %7250 = vmatprep.subr.mxu0 0.0
    %7251 = vmatpush2.msra.mxu0 %v4650
    %7252 = vmatprep.subr.mxu0 0.0
    %7253 = vmatpush2.msra.mxu0 %v4649
    %7254 = vmatprep.subr.mxu0 0.0
    %7255 = vmatpush2.msra.mxu0 %v4648
    %7256 = vmatprep.subr.mxu0 0.0
    %7257 = vmatpush2.msra.mxu0 %v4647
    %7258 = vmatprep.subr.mxu0 0.0
    %7259 = vmatpush2.msra.mxu0 %v4646
    %7260 = vmatprep.subr.mxu0 0.0
    %7261 = vmatpush2.msra.mxu0 %v4645
    %7262 = vmatprep.subr.mxu0 0.0
    %7263 = vmatpush2.msra.mxu0 %v4644
    %7264 = vmatprep.subr.mxu0 0.0
    %7265 = vmatpush2.msra.mxu0 %v4643
    %7266 = vmatprep.subr.mxu0 0.0
    %7267 = vmatpush2.msra.mxu0 %v4642
    %7268 = vmatprep.mubr.f32.mxu0 %v5863
    %7269 = vmatmul.mubr.f32.gmra.mxu0 %v5862
    %v7270 = vpop.f32.mrf.mxu0
    %v7271 = vadd.f32 %v6886, %v7270
    %v7272 = vpop.f32.mrf.mxu0
    %7273 = vmatprep.mubr.f32.mxu0 %v5872
    %7274 = vmatmul.mubr.f32.gmra.mxu0 %v5871
    %v7275 = vpop.f32.mrf.mxu0
    %v7276 = vadd.f32 %v6891, %v7275
    %v7277 = vpop.f32.mrf.mxu0
    %7278 = vmatprep.mubr.f32.mxu0 %v5881
    %7279 = vmatmul.mubr.f32.gmra.mxu0 %v5880
    %v7280 = vpop.f32.mrf.mxu0
    %v7281 = vadd.f32 %v6896, %v7280
    %v7282 = vpop.f32.mrf.mxu0
    %7283 = vmatprep.mubr.f32.mxu0 %v5890
    %7284 = vmatmul.mubr.f32.gmra.mxu0 %v5889
    %v7285 = vpop.f32.mrf.mxu0
    %v7286 = vadd.f32 %v6901, %v7285
    %v7287 = vpop.f32.mrf.mxu0
    %7288 = vmatprep.mubr.f32.mxu0 %v5899
    %7289 = vmatmul.mubr.f32.gmra.mxu0 %v5898
    %v7290 = vpop.f32.mrf.mxu0
    %v7291 = vadd.f32 %v6906, %v7290
    %v7292 = vpop.f32.mrf.mxu0
    %7293 = vmatprep.mubr.f32.mxu0 %v5908
    %7294 = vmatmul.mubr.f32.gmra.mxu0 %v5907
    %v7295 = vpop.f32.mrf.mxu0
    %v7296 = vadd.f32 %v6911, %v7295
    %v7297 = vpop.f32.mrf.mxu0
    %7298 = vmatprep.mubr.f32.mxu0 %v5917
    %7299 = vmatmul.mubr.f32.gmra.mxu0 %v5916
    %v7300 = vpop.f32.mrf.mxu0
    %v7301 = vadd.f32 %v6916, %v7300
    %v7302 = vpop.f32.mrf.mxu0
    %7303 = vmatprep.mubr.f32.mxu0 %v5926
    %7304 = vmatmul.mubr.f32.gmra.mxu0 %v5925
    %v7305 = vpop.f32.mrf.mxu0
    %v7306 = vadd.f32 %v6921, %v7305
    %v7307 = vpop.f32.mrf.mxu0
    %7308 = vmatprep.mubr.f32.mxu0 %v5935
    %7309 = vmatmul.mubr.f32.gmra.mxu0 %v5934
    %v7310 = vpop.f32.mrf.mxu0
    %v7311 = vadd.f32 %v6926, %v7310
    %v7312 = vpop.f32.mrf.mxu0
    %7313 = vmatprep.mubr.f32.mxu0 %v5944
    %7314 = vmatmul.mubr.f32.gmra.mxu0 %v5943
    %v7315 = vpop.f32.mrf.mxu0
    %v7316 = vadd.f32 %v6931, %v7315
    %v7317 = vpop.f32.mrf.mxu0
    %7318 = vmatprep.mubr.f32.mxu0 %v5953
    %7319 = vmatmul.mubr.f32.gmra.mxu0 %v5952
    %v7320 = vpop.f32.mrf.mxu0
    %v7321 = vadd.f32 %v6936, %v7320
    %v7322 = vpop.f32.mrf.mxu0
    %7323 = vmatprep.mubr.f32.mxu0 %v5962
    %7324 = vmatmul.mubr.f32.gmra.mxu0 %v5961
    %v7325 = vpop.f32.mrf.mxu0
    %v7326 = vadd.f32 %v6941, %v7325
    %v7327 = vpop.f32.mrf.mxu0
    %7328 = vmatprep.mubr.f32.mxu0 %v5971
    %7329 = vmatmul.mubr.f32.gmra.mxu0 %v5970
    %v7330 = vpop.f32.mrf.mxu0
    %v7331 = vadd.f32 %v6946, %v7330
    %v7332 = vpop.f32.mrf.mxu0
    %7333 = vmatprep.mubr.f32.mxu0 %v5980
    %7334 = vmatmul.mubr.f32.gmra.mxu0 %v5979
    %v7335 = vpop.f32.mrf.mxu0
    %v7336 = vadd.f32 %v6951, %v7335
    %v7337 = vpop.f32.mrf.mxu0
    %7338 = vmatprep.mubr.f32.mxu0 %v5989
    %7339 = vmatmul.mubr.f32.gmra.mxu0 %v5988
    %v7340 = vpop.f32.mrf.mxu0
    %v7341 = vadd.f32 %v6956, %v7340
    %v7342 = vpop.f32.mrf.mxu0
    %7343 = vmatprep.mubr.f32.mxu0 %v5998
    %7344 = vmatmul.mubr.f32.gmra.mxu0 %v5997
    %v7345 = vpop.f32.mrf.mxu0
    %v7346 = vadd.f32 %v6961, %v7345
    %v7347 = vpop.f32.mrf.mxu0
    %7348 = vmatprep.mubr.f32.mxu0 %v6007
    %7349 = vmatmul.mubr.f32.gmra.mxu0 %v6006
    %v7350 = vpop.f32.mrf.mxu0
    %v7351 = vadd.f32 %v6966, %v7350
    %v7352 = vpop.f32.mrf.mxu0
    %7353 = vmatprep.mubr.f32.mxu0 %v6016
    %7354 = vmatmul.mubr.f32.gmra.mxu0 %v6015
    %v7355 = vpop.f32.mrf.mxu0
    %v7356 = vadd.f32 %v6971, %v7355
    %v7357 = vpop.f32.mrf.mxu0
    %7358 = vmatprep.mubr.f32.mxu0 %v6025
    %7359 = vmatmul.mubr.f32.gmra.mxu0 %v6024
    %v7360 = vpop.f32.mrf.mxu0
    %v7361 = vadd.f32 %v6976, %v7360
    %v7362 = vpop.f32.mrf.mxu0
    %7363 = vmatprep.mubr.f32.mxu0 %v6034
    %7364 = vmatmul.mubr.f32.gmra.mxu0 %v6033
    %v7365 = vpop.f32.mrf.mxu0
    %v7366 = vadd.f32 %v6981, %v7365
    %v7367 = vpop.f32.mrf.mxu0
    %7368 = vmatprep.mubr.f32.mxu0 %v6043
    %7369 = vmatmul.mubr.f32.gmra.mxu0 %v6042
    %v7370 = vpop.f32.mrf.mxu0
    %v7371 = vadd.f32 %v6986, %v7370
    %v7372 = vpop.f32.mrf.mxu0
    %7373 = vmatprep.mubr.f32.mxu0 %v6052
    %7374 = vmatmul.mubr.f32.gmra.mxu0 %v6051
    %v7375 = vpop.f32.mrf.mxu0
    %v7376 = vadd.f32 %v6991, %v7375
    %v7377 = vpop.f32.mrf.mxu0
    %7378 = vmatprep.mubr.f32.mxu0 %v6061
    %7379 = vmatmul.mubr.f32.gmra.mxu0 %v6060
    %v7380 = vpop.f32.mrf.mxu0
    %v7381 = vadd.f32 %v6996, %v7380
    %v7382 = vpop.f32.mrf.mxu0
    %7383 = vmatprep.mubr.f32.mxu0 %v6070
    %7384 = vmatmul.mubr.f32.gmra.mxu0 %v6069
    %v7385 = vpop.f32.mrf.mxu0
    %v7386 = vadd.f32 %v7001, %v7385
    %v7387 = vpop.f32.mrf.mxu0
    %7388 = vmatprep.mubr.f32.mxu0 %v6079
    %7389 = vmatmul.mubr.f32.gmra.mxu0 %v6078
    %v7390 = vpop.f32.mrf.mxu0
    %v7391 = vadd.f32 %v7006, %v7390
    %v7392 = vpop.f32.mrf.mxu0
    %7393 = vmatprep.mubr.f32.mxu0 %v6088
    %7394 = vmatmul.mubr.f32.gmra.mxu0 %v6087
    %v7395 = vpop.f32.mrf.mxu0
    %v7396 = vadd.f32 %v7011, %v7395
    %v7397 = vpop.f32.mrf.mxu0
    %7398 = vmatprep.mubr.f32.mxu0 %v6097
    %7399 = vmatmul.mubr.f32.gmra.mxu0 %v6096
    %v7400 = vpop.f32.mrf.mxu0
    %v7401 = vadd.f32 %v7016, %v7400
    %v7402 = vpop.f32.mrf.mxu0
    %7403 = vmatprep.mubr.f32.mxu0 %v6106
    %7404 = vmatmul.mubr.f32.gmra.mxu0 %v6105
    %v7405 = vpop.f32.mrf.mxu0
    %v7406 = vadd.f32 %v7021, %v7405
    %v7407 = vpop.f32.mrf.mxu0
    %7408 = vmatprep.mubr.f32.mxu0 %v6115
    %7409 = vmatmul.mubr.f32.gmra.mxu0 %v6114
    %v7410 = vpop.f32.mrf.mxu0
    %v7411 = vadd.f32 %v7026, %v7410
    %v7412 = vpop.f32.mrf.mxu0
    %7413 = vmatprep.mubr.f32.mxu0 %v6124
    %7414 = vmatmul.mubr.f32.gmra.mxu0 %v6123
    %v7415 = vpop.f32.mrf.mxu0
    %v7416 = vadd.f32 %v7031, %v7415
    %v7417 = vpop.f32.mrf.mxu0
    %7418 = vmatprep.mubr.f32.mxu0 %v6133
    %7419 = vmatmul.mubr.f32.gmra.mxu0 %v6132
    %v7420 = vpop.f32.mrf.mxu0
    %v7421 = vadd.f32 %v7036, %v7420
    %v7422 = vpop.f32.mrf.mxu0
    %7423 = vmatprep.mubr.f32.mxu0 %v6142
    %7424 = vmatmul.mubr.f32.gmra.mxu0 %v6141
    %v7425 = vpop.f32.mrf.mxu0
    %v7426 = vadd.f32 %v7041, %v7425
    %v7427 = vpop.f32.mrf.mxu0
    %7428 = vmatprep.mubr.f32.mxu0 %v6151
    %7429 = vmatmul.mubr.f32.gmra.mxu0 %v6150
    %v7430 = vpop.f32.mrf.mxu0
    %v7431 = vadd.f32 %v7046, %v7430
    %v7432 = vpop.f32.mrf.mxu0
    %7433 = vmatprep.mubr.f32.mxu0 %v6160
    %7434 = vmatmul.mubr.f32.gmra.mxu0 %v6159
    %v7435 = vpop.f32.mrf.mxu0
    %v7436 = vadd.f32 %v7051, %v7435
    %v7437 = vpop.f32.mrf.mxu0
    %7438 = vmatprep.mubr.f32.mxu0 %v6169
    %7439 = vmatmul.mubr.f32.gmra.mxu0 %v6168
    %v7440 = vpop.f32.mrf.mxu0
    %v7441 = vadd.f32 %v7056, %v7440
    %v7442 = vpop.f32.mrf.mxu0
    %7443 = vmatprep.mubr.f32.mxu0 %v6178
    %7444 = vmatmul.mubr.f32.gmra.mxu0 %v6177
    %v7445 = vpop.f32.mrf.mxu0
    %v7446 = vadd.f32 %v7061, %v7445
    %v7447 = vpop.f32.mrf.mxu0
    %7448 = vmatprep.mubr.f32.mxu0 %v6187
    %7449 = vmatmul.mubr.f32.gmra.mxu0 %v6186
    %v7450 = vpop.f32.mrf.mxu0
    %v7451 = vadd.f32 %v7066, %v7450
    %v7452 = vpop.f32.mrf.mxu0
    %7453 = vmatprep.mubr.f32.mxu0 %v6196
    %7454 = vmatmul.mubr.f32.gmra.mxu0 %v6195
    %v7455 = vpop.f32.mrf.mxu0
    %v7456 = vadd.f32 %v7071, %v7455
    %v7457 = vpop.f32.mrf.mxu0
    %7458 = vmatprep.mubr.f32.mxu0 %v6205
    %7459 = vmatmul.mubr.f32.gmra.mxu0 %v6204
    %v7460 = vpop.f32.mrf.mxu0
    %v7461 = vadd.f32 %v7076, %v7460
    %v7462 = vpop.f32.mrf.mxu0
    %7463 = vmatprep.mubr.f32.mxu0 %v6214
    %7464 = vmatmul.mubr.f32.gmra.mxu0 %v6213
    %v7465 = vpop.f32.mrf.mxu0
    %v7466 = vadd.f32 %v7081, %v7465
    %v7467 = vpop.f32.mrf.mxu0
    %7468 = vmatprep.mubr.f32.mxu0 %v6223
    %7469 = vmatmul.mubr.f32.gmra.mxu0 %v6222
    %v7470 = vpop.f32.mrf.mxu0
    %v7471 = vadd.f32 %v7086, %v7470
    %v7472 = vpop.f32.mrf.mxu0
    %7473 = vmatprep.mubr.f32.mxu0 %v6232
    %7474 = vmatmul.mubr.f32.gmra.mxu0 %v6231
    %v7475 = vpop.f32.mrf.mxu0
    %v7476 = vadd.f32 %v7091, %v7475
    %v7477 = vpop.f32.mrf.mxu0
    %7478 = vmatprep.mubr.f32.mxu0 %v6241
    %7479 = vmatmul.mubr.f32.gmra.mxu0 %v6240
    %v7480 = vpop.f32.mrf.mxu0
    %v7481 = vadd.f32 %v7096, %v7480
    %v7482 = vpop.f32.mrf.mxu0
    %7483 = vmatprep.mubr.f32.mxu0 %v6250
    %7484 = vmatmul.mubr.f32.gmra.mxu0 %v6249
    %v7485 = vpop.f32.mrf.mxu0
    %v7486 = vadd.f32 %v7101, %v7485
    %v7487 = vpop.f32.mrf.mxu0
    %7488 = vmatprep.mubr.f32.mxu0 %v6259
    %7489 = vmatmul.mubr.f32.gmra.mxu0 %v6258
    %v7490 = vpop.f32.mrf.mxu0
    %v7491 = vadd.f32 %v7106, %v7490
    %v7492 = vpop.f32.mrf.mxu0
    %7493 = vmatprep.mubr.f32.mxu0 %v6268
    %7494 = vmatmul.mubr.f32.gmra.mxu0 %v6267
    %v7495 = vpop.f32.mrf.mxu0
    %v7496 = vadd.f32 %v7111, %v7495
    %v7497 = vpop.f32.mrf.mxu0
    %7498 = vmatprep.mubr.f32.mxu0 %v6277
    %7499 = vmatmul.mubr.f32.gmra.mxu0 %v6276
    %v7500 = vpop.f32.mrf.mxu0
    %v7501 = vadd.f32 %v7116, %v7500
    %v7502 = vpop.f32.mrf.mxu0
    %7503 = vmatprep.mubr.f32.mxu0 %v6286
    %7504 = vmatmul.mubr.f32.gmra.mxu0 %v6285
    %v7505 = vpop.f32.mrf.mxu0
    %v7506 = vadd.f32 %v7121, %v7505
    %v7507 = vpop.f32.mrf.mxu0
    %7508 = vmatprep.mubr.f32.mxu0 %v6295
    %7509 = vmatmul.mubr.f32.gmra.mxu0 %v6294
    %v7510 = vpop.f32.mrf.mxu0
    %v7511 = vadd.f32 %v7126, %v7510
    %v7512 = vpop.f32.mrf.mxu0
    %7513 = vmatprep.mubr.f32.mxu0 %v6304
    %7514 = vmatmul.mubr.f32.gmra.mxu0 %v6303
    %v7515 = vpop.f32.mrf.mxu0
    %v7516 = vadd.f32 %v7131, %v7515
    %v7517 = vpop.f32.mrf.mxu0
    %7518 = vmatprep.mubr.f32.mxu0 %v6313
    %7519 = vmatmul.mubr.f32.gmra.mxu0 %v6312
    %v7520 = vpop.f32.mrf.mxu0
    %v7521 = vadd.f32 %v7136, %v7520
    %v7522 = vpop.f32.mrf.mxu0
    %7523 = vmatprep.mubr.f32.mxu0 %v6322
    %7524 = vmatmul.mubr.f32.gmra.mxu0 %v6321
    %v7525 = vpop.f32.mrf.mxu0
    %v7526 = vadd.f32 %v7141, %v7525
    %v7527 = vpop.f32.mrf.mxu0
    %7528 = vmatprep.mubr.f32.mxu0 %v6331
    %7529 = vmatmul.mubr.f32.gmra.mxu0 %v6330
    %v7530 = vpop.f32.mrf.mxu0
    %v7531 = vadd.f32 %v7146, %v7530
    %v7532 = vpop.f32.mrf.mxu0
    %7533 = vmatprep.mubr.f32.mxu0 %v6340
    %7534 = vmatmul.mubr.f32.gmra.mxu0 %v6339
    %v7535 = vpop.f32.mrf.mxu0
    %v7536 = vadd.f32 %v7151, %v7535
    %v7537 = vpop.f32.mrf.mxu0
    %7538 = vmatprep.mubr.f32.mxu0 %v6349
    %7539 = vmatmul.mubr.f32.gmra.mxu0 %v6348
    %v7540 = vpop.f32.mrf.mxu0
    %v7541 = vadd.f32 %v7156, %v7540
    %v7542 = vpop.f32.mrf.mxu0
    %7543 = vmatprep.mubr.f32.mxu0 %v6358
    %7544 = vmatmul.mubr.f32.gmra.mxu0 %v6357
    %v7545 = vpop.f32.mrf.mxu0
    %v7546 = vadd.f32 %v7161, %v7545
    %v7547 = vpop.f32.mrf.mxu0
    %7548 = vmatprep.mubr.f32.mxu0 %v6367
    %7549 = vmatmul.mubr.f32.gmra.mxu0 %v6366
    %v7550 = vpop.f32.mrf.mxu0
    %v7551 = vadd.f32 %v7166, %v7550
    %v7552 = vpop.f32.mrf.mxu0
    %7553 = vmatprep.mubr.f32.mxu0 %v6376
    %7554 = vmatmul.mubr.f32.gmra.mxu0 %v6375
    %v7555 = vpop.f32.mrf.mxu0
    %v7556 = vadd.f32 %v7171, %v7555
    %v7557 = vpop.f32.mrf.mxu0
    %7558 = vmatprep.mubr.f32.mxu0 %v6385
    %7559 = vmatmul.mubr.f32.gmra.mxu0 %v6384
    %v7560 = vpop.f32.mrf.mxu0
    %v7561 = vadd.f32 %v7176, %v7560
    %v7562 = vpop.f32.mrf.mxu0
    %7563 = vmatprep.mubr.f32.mxu0 %v6394
    %7564 = vmatmul.mubr.f32.gmra.mxu0 %v6393
    %v7565 = vpop.f32.mrf.mxu0
    %v7566 = vadd.f32 %v7181, %v7565
    %v7567 = vpop.f32.mrf.mxu0
    %7568 = vmatprep.mubr.f32.mxu0 %v6403
    %7569 = vmatmul.mubr.f32.gmra.mxu0 %v6402
    %v7570 = vpop.f32.mrf.mxu0
    %v7571 = vadd.f32 %v7186, %v7570
    %v7572 = vpop.f32.mrf.mxu0
    %7573 = vmatprep.mubr.f32.mxu0 %v6412
    %7574 = vmatmul.mubr.f32.gmra.mxu0 %v6411
    %v7575 = vpop.f32.mrf.mxu0
    %v7576 = vadd.f32 %v7191, %v7575
    %v7577 = vpop.f32.mrf.mxu0
    %7578 = vmatprep.mubr.f32.mxu0 %v6421
    %7579 = vmatmul.mubr.f32.gmra.mxu0 %v6420
    %v7580 = vpop.f32.mrf.mxu0
    %v7581 = vadd.f32 %v7196, %v7580
    %v7582 = vpop.f32.mrf.mxu0
    %7583 = vmatprep.mubr.f32.mxu0 %v6430
    %7584 = vmatmul.mubr.f32.gmra.mxu0 %v6429
    %v7585 = vpop.f32.mrf.mxu0
    %v7586 = vadd.f32 %v7201, %v7585
    %v7587 = vpop.f32.mrf.mxu0
    %7588 = vdwg.mxu0
    %7589 = vmatprep.subr.mxu0 0.0
    %7590 = vmatpush1.msra.mxu0 %v4673
    %7591 = vmatprep.subr.mxu0 0.0
    %7592 = vmatpush1.msra.mxu0 %v4672
    %7593 = vmatprep.subr.mxu0 0.0
    %7594 = vmatpush1.msra.mxu0 %v4671
    %7595 = vmatprep.subr.mxu0 0.0
    %7596 = vmatpush1.msra.mxu0 %v4670
    %7597 = vmatprep.subr.mxu0 0.0
    %7598 = vmatpush1.msra.mxu0 %v4669
    %7599 = vmatprep.subr.mxu0 0.0
    %7600 = vmatpush1.msra.mxu0 %v4668
    %7601 = vmatprep.subr.mxu0 0.0
    %7602 = vmatpush1.msra.mxu0 %v4667
    %7603 = vmatprep.subr.mxu0 0.0
    %7604 = vmatpush1.msra.mxu0 %v4666
    %7605 = vmatprep.subr.mxu0 0.0
    %7606 = vmatpush1.msra.mxu0 %v4665
    %7607 = vmatprep.subr.mxu0 0.0
    %7608 = vmatpush1.msra.mxu0 %v4664
    %7609 = vmatprep.subr.mxu0 0.0
    %7610 = vmatpush1.msra.mxu0 %v4663
    %7611 = vmatprep.subr.mxu0 0.0
    %7612 = vmatpush1.msra.mxu0 %v4662
    %7613 = vmatprep.subr.mxu0 0.0
    %7614 = vmatpush1.msra.mxu0 %v4661
    %7615 = vmatprep.subr.mxu0 0.0
    %7616 = vmatpush1.msra.mxu0 %v4660
    %7617 = vmatprep.subr.mxu0 0.0
    %7618 = vmatpush1.msra.mxu0 %v4659
    %7619 = vmatprep.subr.mxu0 0.0
    %7620 = vmatpush1.msra.mxu0 %v4658
    %7621 = vmatprep.subr.mxu0 0.0
    %7622 = vmatpush2.msra.mxu0 %v4689
    %7623 = vmatprep.subr.mxu0 0.0
    %7624 = vmatpush2.msra.mxu0 %v4688
    %7625 = vmatprep.subr.mxu0 0.0
    %7626 = vmatpush2.msra.mxu0 %v4687
    %7627 = vmatprep.subr.mxu0 0.0
    %7628 = vmatpush2.msra.mxu0 %v4686
    %7629 = vmatprep.subr.mxu0 0.0
    %7630 = vmatpush2.msra.mxu0 %v4685
    %7631 = vmatprep.subr.mxu0 0.0
    %7632 = vmatpush2.msra.mxu0 %v4684
    %7633 = vmatprep.subr.mxu0 0.0
    %7634 = vmatpush2.msra.mxu0 %v4683
    %7635 = vmatprep.subr.mxu0 0.0
    %7636 = vmatpush2.msra.mxu0 %v4682
    %7637 = vmatprep.subr.mxu0 0.0
    %7638 = vmatpush2.msra.mxu0 %v4681
    %7639 = vmatprep.subr.mxu0 0.0
    %7640 = vmatpush2.msra.mxu0 %v4680
    %7641 = vmatprep.subr.mxu0 0.0
    %7642 = vmatpush2.msra.mxu0 %v4679
    %7643 = vmatprep.subr.mxu0 0.0
    %7644 = vmatpush2.msra.mxu0 %v4678
    %7645 = vmatprep.subr.mxu0 0.0
    %7646 = vmatpush2.msra.mxu0 %v4677
    %7647 = vmatprep.subr.mxu0 0.0
    %7648 = vmatpush2.msra.mxu0 %v4676
    %7649 = vmatprep.subr.mxu0 0.0
    %7650 = vmatpush2.msra.mxu0 %v4675
    %7651 = vmatprep.subr.mxu0 0.0
    %7652 = vmatpush2.msra.mxu0 %v4674
    %7653 = vmatprep.mubr.f32.mxu0 %v5865
    %7654 = vmatmul.mubr.f32.gmra.mxu0 %v5864
    %v7655 = vpop.f32.mrf.mxu0
    %v7656 = vadd.f32 %v7271, %v7655
    %v7657 = vpop.f32.mrf.mxu0
    %7658 = vmatprep.mubr.f32.mxu0 %v5874
    %7659 = vmatmul.mubr.f32.gmra.mxu0 %v5873
    %v7660 = vpop.f32.mrf.mxu0
    %v7661 = vadd.f32 %v7276, %v7660
    %v7662 = vpop.f32.mrf.mxu0
    %7663 = vmatprep.mubr.f32.mxu0 %v5883
    %7664 = vmatmul.mubr.f32.gmra.mxu0 %v5882
    %v7665 = vpop.f32.mrf.mxu0
    %v7666 = vadd.f32 %v7281, %v7665
    %v7667 = vpop.f32.mrf.mxu0
    %7668 = vmatprep.mubr.f32.mxu0 %v5892
    %7669 = vmatmul.mubr.f32.gmra.mxu0 %v5891
    %v7670 = vpop.f32.mrf.mxu0
    %v7671 = vadd.f32 %v7286, %v7670
    %v7672 = vpop.f32.mrf.mxu0
    %7673 = vmatprep.mubr.f32.mxu0 %v5901
    %7674 = vmatmul.mubr.f32.gmra.mxu0 %v5900
    %v7675 = vpop.f32.mrf.mxu0
    %v7676 = vadd.f32 %v7291, %v7675
    %v7677 = vpop.f32.mrf.mxu0
    %7678 = vmatprep.mubr.f32.mxu0 %v5910
    %7679 = vmatmul.mubr.f32.gmra.mxu0 %v5909
    %v7680 = vpop.f32.mrf.mxu0
    %v7681 = vadd.f32 %v7296, %v7680
    %v7682 = vpop.f32.mrf.mxu0
    %7683 = vmatprep.mubr.f32.mxu0 %v5919
    %7684 = vmatmul.mubr.f32.gmra.mxu0 %v5918
    %v7685 = vpop.f32.mrf.mxu0
    %v7686 = vadd.f32 %v7301, %v7685
    %v7687 = vpop.f32.mrf.mxu0
    %7688 = vmatprep.mubr.f32.mxu0 %v5928
    %7689 = vmatmul.mubr.f32.gmra.mxu0 %v5927
    %v7690 = vpop.f32.mrf.mxu0
    %v7691 = vadd.f32 %v7306, %v7690
    %v7692 = vpop.f32.mrf.mxu0
    %7693 = vmatprep.mubr.f32.mxu0 %v5937
    %7694 = vmatmul.mubr.f32.gmra.mxu0 %v5936
    %v7695 = vpop.f32.mrf.mxu0
    %v7696 = vadd.f32 %v7311, %v7695
    %v7697 = vpop.f32.mrf.mxu0
    %7698 = vmatprep.mubr.f32.mxu0 %v5946
    %7699 = vmatmul.mubr.f32.gmra.mxu0 %v5945
    %v7700 = vpop.f32.mrf.mxu0
    %v7701 = vadd.f32 %v7316, %v7700
    %v7702 = vpop.f32.mrf.mxu0
    %7703 = vmatprep.mubr.f32.mxu0 %v5955
    %7704 = vmatmul.mubr.f32.gmra.mxu0 %v5954
    %v7705 = vpop.f32.mrf.mxu0
    %v7706 = vadd.f32 %v7321, %v7705
    %v7707 = vpop.f32.mrf.mxu0
    %7708 = vmatprep.mubr.f32.mxu0 %v5964
    %7709 = vmatmul.mubr.f32.gmra.mxu0 %v5963
    %v7710 = vpop.f32.mrf.mxu0
    %v7711 = vadd.f32 %v7326, %v7710
    %v7712 = vpop.f32.mrf.mxu0
    %7713 = vmatprep.mubr.f32.mxu0 %v5973
    %7714 = vmatmul.mubr.f32.gmra.mxu0 %v5972
    %v7715 = vpop.f32.mrf.mxu0
    %v7716 = vadd.f32 %v7331, %v7715
    %v7717 = vpop.f32.mrf.mxu0
    %7718 = vmatprep.mubr.f32.mxu0 %v5982
    %7719 = vmatmul.mubr.f32.gmra.mxu0 %v5981
    %v7720 = vpop.f32.mrf.mxu0
    %v7721 = vadd.f32 %v7336, %v7720
    %v7722 = vpop.f32.mrf.mxu0
    %7723 = vmatprep.mubr.f32.mxu0 %v5991
    %7724 = vmatmul.mubr.f32.gmra.mxu0 %v5990
    %v7725 = vpop.f32.mrf.mxu0
    %v7726 = vadd.f32 %v7341, %v7725
    %v7727 = vpop.f32.mrf.mxu0
    %7728 = vmatprep.mubr.f32.mxu0 %v6000
    %7729 = vmatmul.mubr.f32.gmra.mxu0 %v5999
    %v7730 = vpop.f32.mrf.mxu0
    %v7731 = vadd.f32 %v7346, %v7730
    %v7732 = vpop.f32.mrf.mxu0
    %7733 = vmatprep.mubr.f32.mxu0 %v6009
    %7734 = vmatmul.mubr.f32.gmra.mxu0 %v6008
    %v7735 = vpop.f32.mrf.mxu0
    %v7736 = vadd.f32 %v7351, %v7735
    %v7737 = vpop.f32.mrf.mxu0
    %7738 = vmatprep.mubr.f32.mxu0 %v6018
    %7739 = vmatmul.mubr.f32.gmra.mxu0 %v6017
    %v7740 = vpop.f32.mrf.mxu0
    %v7741 = vadd.f32 %v7356, %v7740
    %v7742 = vpop.f32.mrf.mxu0
    %7743 = vmatprep.mubr.f32.mxu0 %v6027
    %7744 = vmatmul.mubr.f32.gmra.mxu0 %v6026
    %v7745 = vpop.f32.mrf.mxu0
    %v7746 = vadd.f32 %v7361, %v7745
    %v7747 = vpop.f32.mrf.mxu0
    %7748 = vmatprep.mubr.f32.mxu0 %v6036
    %7749 = vmatmul.mubr.f32.gmra.mxu0 %v6035
    %v7750 = vpop.f32.mrf.mxu0
    %v7751 = vadd.f32 %v7366, %v7750
    %v7752 = vpop.f32.mrf.mxu0
    %7753 = vmatprep.mubr.f32.mxu0 %v6045
    %7754 = vmatmul.mubr.f32.gmra.mxu0 %v6044
    %v7755 = vpop.f32.mrf.mxu0
    %v7756 = vadd.f32 %v7371, %v7755
    %v7757 = vpop.f32.mrf.mxu0
    %7758 = vmatprep.mubr.f32.mxu0 %v6054
    %7759 = vmatmul.mubr.f32.gmra.mxu0 %v6053
    %v7760 = vpop.f32.mrf.mxu0
    %v7761 = vadd.f32 %v7376, %v7760
    %v7762 = vpop.f32.mrf.mxu0
    %7763 = vmatprep.mubr.f32.mxu0 %v6063
    %7764 = vmatmul.mubr.f32.gmra.mxu0 %v6062
    %v7765 = vpop.f32.mrf.mxu0
    %v7766 = vadd.f32 %v7381, %v7765
    %v7767 = vpop.f32.mrf.mxu0
    %7768 = vmatprep.mubr.f32.mxu0 %v6072
    %7769 = vmatmul.mubr.f32.gmra.mxu0 %v6071
    %v7770 = vpop.f32.mrf.mxu0
    %v7771 = vadd.f32 %v7386, %v7770
    %v7772 = vpop.f32.mrf.mxu0
    %7773 = vmatprep.mubr.f32.mxu0 %v6081
    %7774 = vmatmul.mubr.f32.gmra.mxu0 %v6080
    %v7775 = vpop.f32.mrf.mxu0
    %v7776 = vadd.f32 %v7391, %v7775
    %v7777 = vpop.f32.mrf.mxu0
    %7778 = vmatprep.mubr.f32.mxu0 %v6090
    %7779 = vmatmul.mubr.f32.gmra.mxu0 %v6089
    %v7780 = vpop.f32.mrf.mxu0
    %v7781 = vadd.f32 %v7396, %v7780
    %v7782 = vpop.f32.mrf.mxu0
    %7783 = vmatprep.mubr.f32.mxu0 %v6099
    %7784 = vmatmul.mubr.f32.gmra.mxu0 %v6098
    %v7785 = vpop.f32.mrf.mxu0
    %v7786 = vadd.f32 %v7401, %v7785
    %v7787 = vpop.f32.mrf.mxu0
    %7788 = vmatprep.mubr.f32.mxu0 %v6108
    %7789 = vmatmul.mubr.f32.gmra.mxu0 %v6107
    %v7790 = vpop.f32.mrf.mxu0
    %v7791 = vadd.f32 %v7406, %v7790
    %v7792 = vpop.f32.mrf.mxu0
    %7793 = vmatprep.mubr.f32.mxu0 %v6117
    %7794 = vmatmul.mubr.f32.gmra.mxu0 %v6116
    %v7795 = vpop.f32.mrf.mxu0
    %v7796 = vadd.f32 %v7411, %v7795
    %v7797 = vpop.f32.mrf.mxu0
    %7798 = vmatprep.mubr.f32.mxu0 %v6126
    %7799 = vmatmul.mubr.f32.gmra.mxu0 %v6125
    %v7800 = vpop.f32.mrf.mxu0
    %v7801 = vadd.f32 %v7416, %v7800
    %v7802 = vpop.f32.mrf.mxu0
    %7803 = vmatprep.mubr.f32.mxu0 %v6135
    %7804 = vmatmul.mubr.f32.gmra.mxu0 %v6134
    %v7805 = vpop.f32.mrf.mxu0
    %v7806 = vadd.f32 %v7421, %v7805
    %v7807 = vpop.f32.mrf.mxu0
    %7808 = vmatprep.mubr.f32.mxu0 %v6144
    %7809 = vmatmul.mubr.f32.gmra.mxu0 %v6143
    %v7810 = vpop.f32.mrf.mxu0
    %v7811 = vadd.f32 %v7426, %v7810
    %v7812 = vpop.f32.mrf.mxu0
    %7813 = vmatprep.mubr.f32.mxu0 %v6153
    %7814 = vmatmul.mubr.f32.gmra.mxu0 %v6152
    %v7815 = vpop.f32.mrf.mxu0
    %v7816 = vadd.f32 %v7431, %v7815
    %v7817 = vpop.f32.mrf.mxu0
    %7818 = vmatprep.mubr.f32.mxu0 %v6162
    %7819 = vmatmul.mubr.f32.gmra.mxu0 %v6161
    %v7820 = vpop.f32.mrf.mxu0
    %v7821 = vadd.f32 %v7436, %v7820
    %v7822 = vpop.f32.mrf.mxu0
    %7823 = vmatprep.mubr.f32.mxu0 %v6171
    %7824 = vmatmul.mubr.f32.gmra.mxu0 %v6170
    %v7825 = vpop.f32.mrf.mxu0
    %v7826 = vadd.f32 %v7441, %v7825
    %v7827 = vpop.f32.mrf.mxu0
    %7828 = vmatprep.mubr.f32.mxu0 %v6180
    %7829 = vmatmul.mubr.f32.gmra.mxu0 %v6179
    %v7830 = vpop.f32.mrf.mxu0
    %v7831 = vadd.f32 %v7446, %v7830
    %v7832 = vpop.f32.mrf.mxu0
    %7833 = vmatprep.mubr.f32.mxu0 %v6189
    %7834 = vmatmul.mubr.f32.gmra.mxu0 %v6188
    %v7835 = vpop.f32.mrf.mxu0
    %v7836 = vadd.f32 %v7451, %v7835
    %v7837 = vpop.f32.mrf.mxu0
    %7838 = vmatprep.mubr.f32.mxu0 %v6198
    %7839 = vmatmul.mubr.f32.gmra.mxu0 %v6197
    %v7840 = vpop.f32.mrf.mxu0
    %v7841 = vadd.f32 %v7456, %v7840
    %v7842 = vpop.f32.mrf.mxu0
    %7843 = vmatprep.mubr.f32.mxu0 %v6207
    %7844 = vmatmul.mubr.f32.gmra.mxu0 %v6206
    %v7845 = vpop.f32.mrf.mxu0
    %v7846 = vadd.f32 %v7461, %v7845
    %v7847 = vpop.f32.mrf.mxu0
    %7848 = vmatprep.mubr.f32.mxu0 %v6216
    %7849 = vmatmul.mubr.f32.gmra.mxu0 %v6215
    %v7850 = vpop.f32.mrf.mxu0
    %v7851 = vadd.f32 %v7466, %v7850
    %v7852 = vpop.f32.mrf.mxu0
    %7853 = vmatprep.mubr.f32.mxu0 %v6225
    %7854 = vmatmul.mubr.f32.gmra.mxu0 %v6224
    %v7855 = vpop.f32.mrf.mxu0
    %v7856 = vadd.f32 %v7471, %v7855
    %v7857 = vpop.f32.mrf.mxu0
    %7858 = vmatprep.mubr.f32.mxu0 %v6234
    %7859 = vmatmul.mubr.f32.gmra.mxu0 %v6233
    %v7860 = vpop.f32.mrf.mxu0
    %v7861 = vadd.f32 %v7476, %v7860
    %v7862 = vpop.f32.mrf.mxu0
    %7863 = vmatprep.mubr.f32.mxu0 %v6243
    %7864 = vmatmul.mubr.f32.gmra.mxu0 %v6242
    %v7865 = vpop.f32.mrf.mxu0
    %v7866 = vadd.f32 %v7481, %v7865
    %v7867 = vpop.f32.mrf.mxu0
    %7868 = vmatprep.mubr.f32.mxu0 %v6252
    %7869 = vmatmul.mubr.f32.gmra.mxu0 %v6251
    %v7870 = vpop.f32.mrf.mxu0
    %v7871 = vadd.f32 %v7486, %v7870
    %v7872 = vpop.f32.mrf.mxu0
    %7873 = vmatprep.mubr.f32.mxu0 %v6261
    %7874 = vmatmul.mubr.f32.gmra.mxu0 %v6260
    %v7875 = vpop.f32.mrf.mxu0
    %v7876 = vadd.f32 %v7491, %v7875
    %v7877 = vpop.f32.mrf.mxu0
    %7878 = vmatprep.mubr.f32.mxu0 %v6270
    %7879 = vmatmul.mubr.f32.gmra.mxu0 %v6269
    %v7880 = vpop.f32.mrf.mxu0
    %v7881 = vadd.f32 %v7496, %v7880
    %v7882 = vpop.f32.mrf.mxu0
    %7883 = vmatprep.mubr.f32.mxu0 %v6279
    %7884 = vmatmul.mubr.f32.gmra.mxu0 %v6278
    %v7885 = vpop.f32.mrf.mxu0
    %v7886 = vadd.f32 %v7501, %v7885
    %v7887 = vpop.f32.mrf.mxu0
    %7888 = vmatprep.mubr.f32.mxu0 %v6288
    %7889 = vmatmul.mubr.f32.gmra.mxu0 %v6287
    %v7890 = vpop.f32.mrf.mxu0
    %v7891 = vadd.f32 %v7506, %v7890
    %v7892 = vpop.f32.mrf.mxu0
    %7893 = vmatprep.mubr.f32.mxu0 %v6297
    %7894 = vmatmul.mubr.f32.gmra.mxu0 %v6296
    %v7895 = vpop.f32.mrf.mxu0
    %v7896 = vadd.f32 %v7511, %v7895
    %v7897 = vpop.f32.mrf.mxu0
    %7898 = vmatprep.mubr.f32.mxu0 %v6306
    %7899 = vmatmul.mubr.f32.gmra.mxu0 %v6305
    %v7900 = vpop.f32.mrf.mxu0
    %v7901 = vadd.f32 %v7516, %v7900
    %v7902 = vpop.f32.mrf.mxu0
    %7903 = vmatprep.mubr.f32.mxu0 %v6315
    %7904 = vmatmul.mubr.f32.gmra.mxu0 %v6314
    %v7905 = vpop.f32.mrf.mxu0
    %v7906 = vadd.f32 %v7521, %v7905
    %v7907 = vpop.f32.mrf.mxu0
    %7908 = vmatprep.mubr.f32.mxu0 %v6324
    %7909 = vmatmul.mubr.f32.gmra.mxu0 %v6323
    %v7910 = vpop.f32.mrf.mxu0
    %v7911 = vadd.f32 %v7526, %v7910
    %v7912 = vpop.f32.mrf.mxu0
    %7913 = vmatprep.mubr.f32.mxu0 %v6333
    %7914 = vmatmul.mubr.f32.gmra.mxu0 %v6332
    %v7915 = vpop.f32.mrf.mxu0
    %v7916 = vadd.f32 %v7531, %v7915
    %v7917 = vpop.f32.mrf.mxu0
    %7918 = vmatprep.mubr.f32.mxu0 %v6342
    %7919 = vmatmul.mubr.f32.gmra.mxu0 %v6341
    %v7920 = vpop.f32.mrf.mxu0
    %v7921 = vadd.f32 %v7536, %v7920
    %v7922 = vpop.f32.mrf.mxu0
    %7923 = vmatprep.mubr.f32.mxu0 %v6351
    %7924 = vmatmul.mubr.f32.gmra.mxu0 %v6350
    %v7925 = vpop.f32.mrf.mxu0
    %v7926 = vadd.f32 %v7541, %v7925
    %v7927 = vpop.f32.mrf.mxu0
    %7928 = vmatprep.mubr.f32.mxu0 %v6360
    %7929 = vmatmul.mubr.f32.gmra.mxu0 %v6359
    %v7930 = vpop.f32.mrf.mxu0
    %v7931 = vadd.f32 %v7546, %v7930
    %v7932 = vpop.f32.mrf.mxu0
    %7933 = vmatprep.mubr.f32.mxu0 %v6369
    %7934 = vmatmul.mubr.f32.gmra.mxu0 %v6368
    %v7935 = vpop.f32.mrf.mxu0
    %v7936 = vadd.f32 %v7551, %v7935
    %v7937 = vpop.f32.mrf.mxu0
    %7938 = vmatprep.mubr.f32.mxu0 %v6378
    %7939 = vmatmul.mubr.f32.gmra.mxu0 %v6377
    %v7940 = vpop.f32.mrf.mxu0
    %v7941 = vadd.f32 %v7556, %v7940
    %v7942 = vpop.f32.mrf.mxu0
    %7943 = vmatprep.mubr.f32.mxu0 %v6387
    %7944 = vmatmul.mubr.f32.gmra.mxu0 %v6386
    %v7945 = vpop.f32.mrf.mxu0
    %v7946 = vadd.f32 %v7561, %v7945
    %v7947 = vpop.f32.mrf.mxu0
    %7948 = vmatprep.mubr.f32.mxu0 %v6396
    %7949 = vmatmul.mubr.f32.gmra.mxu0 %v6395
    %v7950 = vpop.f32.mrf.mxu0
    %v7951 = vadd.f32 %v7566, %v7950
    %v7952 = vpop.f32.mrf.mxu0
    %7953 = vmatprep.mubr.f32.mxu0 %v6405
    %7954 = vmatmul.mubr.f32.gmra.mxu0 %v6404
    %v7955 = vpop.f32.mrf.mxu0
    %v7956 = vadd.f32 %v7571, %v7955
    %v7957 = vpop.f32.mrf.mxu0
    %7958 = vmatprep.mubr.f32.mxu0 %v6414
    %7959 = vmatmul.mubr.f32.gmra.mxu0 %v6413
    %v7960 = vpop.f32.mrf.mxu0
    %v7961 = vadd.f32 %v7576, %v7960
    %v7962 = vpop.f32.mrf.mxu0
    %7963 = vmatprep.mubr.f32.mxu0 %v6423
    %7964 = vmatmul.mubr.f32.gmra.mxu0 %v6422
    %v7965 = vpop.f32.mrf.mxu0
    %v7966 = vadd.f32 %v7581, %v7965
    %v7967 = vpop.f32.mrf.mxu0
    %7968 = vmatprep.mubr.f32.mxu0 %v6432
    %7969 = vmatmul.mubr.f32.gmra.mxu0 %v6431
    %v7970 = vpop.f32.mrf.mxu0
    %v7971 = vadd.f32 %v7586, %v7970
    %v7972 = vpop.f32.mrf.mxu0
    %7973 = vdwg.mxu0
    %7974 = vmatprep.subr.mxu0 0.0
    %7975 = vmatpush1.msra.mxu0 %v4705
    %7976 = vmatprep.subr.mxu0 0.0
    %7977 = vmatpush1.msra.mxu0 %v4704
    %7978 = vmatprep.subr.mxu0 0.0
    %7979 = vmatpush1.msra.mxu0 %v4703
    %7980 = vmatprep.subr.mxu0 0.0
    %7981 = vmatpush1.msra.mxu0 %v4702
    %7982 = vmatprep.subr.mxu0 0.0
    %7983 = vmatpush1.msra.mxu0 %v4701
    %7984 = vmatprep.subr.mxu0 0.0
    %7985 = vmatpush1.msra.mxu0 %v4700
    %7986 = vmatprep.subr.mxu0 0.0
    %7987 = vmatpush1.msra.mxu0 %v4699
    %7988 = vmatprep.subr.mxu0 0.0
    %7989 = vmatpush1.msra.mxu0 %v4698
    %7990 = vmatprep.subr.mxu0 0.0
    %7991 = vmatpush1.msra.mxu0 %v4697
    %7992 = vmatprep.subr.mxu0 0.0
    %7993 = vmatpush1.msra.mxu0 %v4696
    %7994 = vmatprep.subr.mxu0 0.0
    %7995 = vmatpush1.msra.mxu0 %v4695
    %7996 = vmatprep.subr.mxu0 0.0
    %7997 = vmatpush1.msra.mxu0 %v4694
    %7998 = vmatprep.subr.mxu0 0.0
    %7999 = vmatpush1.msra.mxu0 %v4693
    %8000 = vmatprep.subr.mxu0 0.0
    %8001 = vmatpush1.msra.mxu0 %v4692
    %8002 = vmatprep.subr.mxu0 0.0
    %8003 = vmatpush1.msra.mxu0 %v4691
    %8004 = vmatprep.subr.mxu0 0.0
    %8005 = vmatpush1.msra.mxu0 %v4690
    %8006 = vmatprep.subr.mxu0 0.0
    %8007 = vmatpush2.msra.mxu0 0.0
    %8008 = vmatprep.subr.mxu0 0.0
    %8009 = vmatpush2.msra.mxu0 0.0
    %8010 = vmatprep.subr.mxu0 0.0
    %8011 = vmatpush2.msra.mxu0 0.0
    %8012 = vmatprep.subr.mxu0 0.0
    %8013 = vmatpush2.msra.mxu0 0.0
    %8014 = vmatprep.subr.mxu0 0.0
    %8015 = vmatpush2.msra.mxu0 0.0
    %8016 = vmatprep.subr.mxu0 0.0
    %8017 = vmatpush2.msra.mxu0 0.0
    %8018 = vmatprep.subr.mxu0 0.0
    %8019 = vmatpush2.msra.mxu0 0.0
    %8020 = vmatprep.subr.mxu0 0.0
    %8021 = vmatpush2.msra.mxu0 0.0
    %8022 = vmatprep.subr.mxu0 0.0
    %8023 = vmatpush2.msra.mxu0 0.0
    %8024 = vmatprep.subr.mxu0 0.0
    %8025 = vmatpush2.msra.mxu0 0.0
    %8026 = vmatprep.subr.mxu0 0.0
    %8027 = vmatpush2.msra.mxu0 0.0
    %8028 = vmatprep.subr.mxu0 0.0
    %8029 = vmatpush2.msra.mxu0 0.0
    %8030 = vmatprep.subr.mxu0 0.0
    %8031 = vmatpush2.msra.mxu0 0.0
    %8032 = vmatprep.subr.mxu0 0.0
    %8033 = vmatpush2.msra.mxu0 0.0
    %8034 = vmatprep.subr.mxu0 0.0
    %8035 = vmatpush2.msra.mxu0 0.0
    %8036 = vmatprep.subr.mxu0 0.0
    %8037 = vmatpush2.msra.mxu0 0.0
    %8038 = vmatprep.mubr.f32.mxu0 0.0
    %8039 = vmatmul.mubr.f32.gmra.mxu0 %v5866
    %v8040 = vpop.f32.mrf.mxu0
    %v8041 = vadd.f32 %v7656, %v8040
    %v8042 = vpop.f32.mrf.mxu0
    %8043 = vmatprep.mubr.f32.mxu0 0.0
    %8044 = vmatmul.mubr.f32.gmra.mxu0 %v5875
    %v8045 = vpop.f32.mrf.mxu0
    %v8046 = vadd.f32 %v7661, %v8045
    %v8047 = vpop.f32.mrf.mxu0
    %8048 = vmatprep.mubr.f32.mxu0 0.0
    %8049 = vmatmul.mubr.f32.gmra.mxu0 %v5884
    %v8050 = vpop.f32.mrf.mxu0
    %v8051 = vadd.f32 %v7666, %v8050
    %v8052 = vpop.f32.mrf.mxu0
    %8053 = vmatprep.mubr.f32.mxu0 0.0
    %8054 = vmatmul.mubr.f32.gmra.mxu0 %v5893
    %v8055 = vpop.f32.mrf.mxu0
    %v8056 = vadd.f32 %v7671, %v8055
    %v8057 = vpop.f32.mrf.mxu0
    %8058 = vmatprep.mubr.f32.mxu0 0.0
    %8059 = vmatmul.mubr.f32.gmra.mxu0 %v5902
    %v8060 = vpop.f32.mrf.mxu0
    %v8061 = vadd.f32 %v7676, %v8060
    %v8062 = vpop.f32.mrf.mxu0
    %8063 = vmatprep.mubr.f32.mxu0 0.0
    %8064 = vmatmul.mubr.f32.gmra.mxu0 %v5911
    %v8065 = vpop.f32.mrf.mxu0
    %v8066 = vadd.f32 %v7681, %v8065
    %v8067 = vpop.f32.mrf.mxu0
    %8068 = vmatprep.mubr.f32.mxu0 0.0
    %8069 = vmatmul.mubr.f32.gmra.mxu0 %v5920
    %v8070 = vpop.f32.mrf.mxu0
    %v8071 = vadd.f32 %v7686, %v8070
    %v8072 = vpop.f32.mrf.mxu0
    %8073 = vmatprep.mubr.f32.mxu0 0.0
    %8074 = vmatmul.mubr.f32.gmra.mxu0 %v5929
    %v8075 = vpop.f32.mrf.mxu0
    %v8076 = vadd.f32 %v7691, %v8075
    %v8077 = vpop.f32.mrf.mxu0
    %8078 = vmatprep.mubr.f32.mxu0 0.0
    %8079 = vmatmul.mubr.f32.gmra.mxu0 %v5938
    %v8080 = vpop.f32.mrf.mxu0
    %v8081 = vadd.f32 %v7696, %v8080
    %v8082 = vpop.f32.mrf.mxu0
    %8083 = vmatprep.mubr.f32.mxu0 0.0
    %8084 = vmatmul.mubr.f32.gmra.mxu0 %v5947
    %v8085 = vpop.f32.mrf.mxu0
    %v8086 = vadd.f32 %v7701, %v8085
    %v8087 = vpop.f32.mrf.mxu0
    %8088 = vmatprep.mubr.f32.mxu0 0.0
    %8089 = vmatmul.mubr.f32.gmra.mxu0 %v5956
    %v8090 = vpop.f32.mrf.mxu0
    %v8091 = vadd.f32 %v7706, %v8090
    %v8092 = vpop.f32.mrf.mxu0
    %8093 = vmatprep.mubr.f32.mxu0 0.0
    %8094 = vmatmul.mubr.f32.gmra.mxu0 %v5965
    %v8095 = vpop.f32.mrf.mxu0
    %v8096 = vadd.f32 %v7711, %v8095
    %v8097 = vpop.f32.mrf.mxu0
    %8098 = vmatprep.mubr.f32.mxu0 0.0
    %8099 = vmatmul.mubr.f32.gmra.mxu0 %v5974
    %v8100 = vpop.f32.mrf.mxu0
    %v8101 = vadd.f32 %v7716, %v8100
    %v8102 = vpop.f32.mrf.mxu0
    %8103 = vmatprep.mubr.f32.mxu0 0.0
    %8104 = vmatmul.mubr.f32.gmra.mxu0 %v5983
    %v8105 = vpop.f32.mrf.mxu0
    %v8106 = vadd.f32 %v7721, %v8105
    %v8107 = vpop.f32.mrf.mxu0
    %8108 = vmatprep.mubr.f32.mxu0 0.0
    %8109 = vmatmul.mubr.f32.gmra.mxu0 %v5992
    %v8110 = vpop.f32.mrf.mxu0
    %v8111 = vadd.f32 %v7726, %v8110
    %v8112 = vpop.f32.mrf.mxu0
    %8113 = vmatprep.mubr.f32.mxu0 0.0
    %8114 = vmatmul.mubr.f32.gmra.mxu0 %v6001
    %v8115 = vpop.f32.mrf.mxu0
    %v8116 = vadd.f32 %v7731, %v8115
    %v8117 = vpop.f32.mrf.mxu0
    %8118 = vmatprep.mubr.f32.mxu0 0.0
    %8119 = vmatmul.mubr.f32.gmra.mxu0 %v6010
    %v8120 = vpop.f32.mrf.mxu0
    %v8121 = vadd.f32 %v7736, %v8120
    %v8122 = vpop.f32.mrf.mxu0
    %8123 = vmatprep.mubr.f32.mxu0 0.0
    %8124 = vmatmul.mubr.f32.gmra.mxu0 %v6019
    %v8125 = vpop.f32.mrf.mxu0
    %v8126 = vadd.f32 %v7741, %v8125
    %v8127 = vpop.f32.mrf.mxu0
    %8128 = vmatprep.mubr.f32.mxu0 0.0
    %8129 = vmatmul.mubr.f32.gmra.mxu0 %v6028
    %v8130 = vpop.f32.mrf.mxu0
    %v8131 = vadd.f32 %v7746, %v8130
    %v8132 = vpop.f32.mrf.mxu0
    %8133 = vmatprep.mubr.f32.mxu0 0.0
    %8134 = vmatmul.mubr.f32.gmra.mxu0 %v6037
    %v8135 = vpop.f32.mrf.mxu0
    %v8136 = vadd.f32 %v7751, %v8135
    %v8137 = vpop.f32.mrf.mxu0
    %8138 = vmatprep.mubr.f32.mxu0 0.0
    %8139 = vmatmul.mubr.f32.gmra.mxu0 %v6046
    %v8140 = vpop.f32.mrf.mxu0
    %v8141 = vadd.f32 %v7756, %v8140
    %v8142 = vpop.f32.mrf.mxu0
    %8143 = vmatprep.mubr.f32.mxu0 0.0
    %8144 = vmatmul.mubr.f32.gmra.mxu0 %v6055
    %v8145 = vpop.f32.mrf.mxu0
    %v8146 = vadd.f32 %v7761, %v8145
    %v8147 = vpop.f32.mrf.mxu0
    %8148 = vmatprep.mubr.f32.mxu0 0.0
    %8149 = vmatmul.mubr.f32.gmra.mxu0 %v6064
    %v8150 = vpop.f32.mrf.mxu0
    %v8151 = vadd.f32 %v7766, %v8150
    %v8152 = vpop.f32.mrf.mxu0
    %8153 = vmatprep.mubr.f32.mxu0 0.0
    %8154 = vmatmul.mubr.f32.gmra.mxu0 %v6073
    %v8155 = vpop.f32.mrf.mxu0
    %v8156 = vadd.f32 %v7771, %v8155
    %v8157 = vpop.f32.mrf.mxu0
    %8158 = vmatprep.mubr.f32.mxu0 0.0
    %8159 = vmatmul.mubr.f32.gmra.mxu0 %v6082
    %v8160 = vpop.f32.mrf.mxu0
    %v8161 = vadd.f32 %v7776, %v8160
    %v8162 = vpop.f32.mrf.mxu0
    %8163 = vmatprep.mubr.f32.mxu0 0.0
    %8164 = vmatmul.mubr.f32.gmra.mxu0 %v6091
    %v8165 = vpop.f32.mrf.mxu0
    %v8166 = vadd.f32 %v7781, %v8165
    %v8167 = vpop.f32.mrf.mxu0
    %8168 = vmatprep.mubr.f32.mxu0 0.0
    %8169 = vmatmul.mubr.f32.gmra.mxu0 %v6100
    %v8170 = vpop.f32.mrf.mxu0
    %v8171 = vadd.f32 %v7786, %v8170
    %v8172 = vpop.f32.mrf.mxu0
    %8173 = vmatprep.mubr.f32.mxu0 0.0
    %8174 = vmatmul.mubr.f32.gmra.mxu0 %v6109
    %v8175 = vpop.f32.mrf.mxu0
    %v8176 = vadd.f32 %v7791, %v8175
    %v8177 = vpop.f32.mrf.mxu0
    %8178 = vmatprep.mubr.f32.mxu0 0.0
    %8179 = vmatmul.mubr.f32.gmra.mxu0 %v6118
    %v8180 = vpop.f32.mrf.mxu0
    %v8181 = vadd.f32 %v7796, %v8180
    %v8182 = vpop.f32.mrf.mxu0
    %8183 = vmatprep.mubr.f32.mxu0 0.0
    %8184 = vmatmul.mubr.f32.gmra.mxu0 %v6127
    %v8185 = vpop.f32.mrf.mxu0
    %v8186 = vadd.f32 %v7801, %v8185
    %v8187 = vpop.f32.mrf.mxu0
    %8188 = vmatprep.mubr.f32.mxu0 0.0
    %8189 = vmatmul.mubr.f32.gmra.mxu0 %v6136
    %v8190 = vpop.f32.mrf.mxu0
    %v8191 = vadd.f32 %v7806, %v8190
    %v8192 = vpop.f32.mrf.mxu0
    %8193 = vmatprep.mubr.f32.mxu0 0.0
    %8194 = vmatmul.mubr.f32.gmra.mxu0 %v6145
    %v8195 = vpop.f32.mrf.mxu0
    %v8196 = vadd.f32 %v7811, %v8195
    %v8197 = vpop.f32.mrf.mxu0
    %8198 = vmatprep.mubr.f32.mxu0 0.0
    %8199 = vmatmul.mubr.f32.gmra.mxu0 %v6154
    %v8200 = vpop.f32.mrf.mxu0
    %v8201 = vadd.f32 %v7816, %v8200
    %v8202 = vpop.f32.mrf.mxu0
    %8203 = vmatprep.mubr.f32.mxu0 0.0
    %8204 = vmatmul.mubr.f32.gmra.mxu0 %v6163
    %v8205 = vpop.f32.mrf.mxu0
    %v8206 = vadd.f32 %v7821, %v8205
    %v8207 = vpop.f32.mrf.mxu0
    %8208 = vmatprep.mubr.f32.mxu0 0.0
    %8209 = vmatmul.mubr.f32.gmra.mxu0 %v6172
    %v8210 = vpop.f32.mrf.mxu0
    %v8211 = vadd.f32 %v7826, %v8210
    %v8212 = vpop.f32.mrf.mxu0
    %8213 = vmatprep.mubr.f32.mxu0 0.0
    %8214 = vmatmul.mubr.f32.gmra.mxu0 %v6181
    %v8215 = vpop.f32.mrf.mxu0
    %v8216 = vadd.f32 %v7831, %v8215
    %v8217 = vpop.f32.mrf.mxu0
    %8218 = vmatprep.mubr.f32.mxu0 0.0
    %8219 = vmatmul.mubr.f32.gmra.mxu0 %v6190
    %v8220 = vpop.f32.mrf.mxu0
    %v8221 = vadd.f32 %v7836, %v8220
    %v8222 = vpop.f32.mrf.mxu0
    %8223 = vmatprep.mubr.f32.mxu0 0.0
    %8224 = vmatmul.mubr.f32.gmra.mxu0 %v6199
    %v8225 = vpop.f32.mrf.mxu0
    %v8226 = vadd.f32 %v7841, %v8225
    %v8227 = vpop.f32.mrf.mxu0
    %8228 = vmatprep.mubr.f32.mxu0 0.0
    %8229 = vmatmul.mubr.f32.gmra.mxu0 %v6208
    %v8230 = vpop.f32.mrf.mxu0
    %v8231 = vadd.f32 %v7846, %v8230
    %v8232 = vpop.f32.mrf.mxu0
    %8233 = vmatprep.mubr.f32.mxu0 0.0
    %8234 = vmatmul.mubr.f32.gmra.mxu0 %v6217
    %v8235 = vpop.f32.mrf.mxu0
    %v8236 = vadd.f32 %v7851, %v8235
    %v8237 = vpop.f32.mrf.mxu0
    %8238 = vmatprep.mubr.f32.mxu0 0.0
    %8239 = vmatmul.mubr.f32.gmra.mxu0 %v6226
    %v8240 = vpop.f32.mrf.mxu0
    %v8241 = vadd.f32 %v7856, %v8240
    %v8242 = vpop.f32.mrf.mxu0
    %8243 = vmatprep.mubr.f32.mxu0 0.0
    %8244 = vmatmul.mubr.f32.gmra.mxu0 %v6235
    %v8245 = vpop.f32.mrf.mxu0
    %v8246 = vadd.f32 %v7861, %v8245
    %v8247 = vpop.f32.mrf.mxu0
    %8248 = vmatprep.mubr.f32.mxu0 0.0
    %8249 = vmatmul.mubr.f32.gmra.mxu0 %v6244
    %v8250 = vpop.f32.mrf.mxu0
    %v8251 = vadd.f32 %v7866, %v8250
    %v8252 = vpop.f32.mrf.mxu0
    %8253 = vmatprep.mubr.f32.mxu0 0.0
    %8254 = vmatmul.mubr.f32.gmra.mxu0 %v6253
    %v8255 = vpop.f32.mrf.mxu0
    %v8256 = vadd.f32 %v7871, %v8255
    %v8257 = vpop.f32.mrf.mxu0
    %8258 = vmatprep.mubr.f32.mxu0 0.0
    %8259 = vmatmul.mubr.f32.gmra.mxu0 %v6262
    %v8260 = vpop.f32.mrf.mxu0
    %v8261 = vadd.f32 %v7876, %v8260
    %v8262 = vpop.f32.mrf.mxu0
    %8263 = vmatprep.mubr.f32.mxu0 0.0
    %8264 = vmatmul.mubr.f32.gmra.mxu0 %v6271
    %v8265 = vpop.f32.mrf.mxu0
    %v8266 = vadd.f32 %v7881, %v8265
    %v8267 = vpop.f32.mrf.mxu0
    %8268 = vmatprep.mubr.f32.mxu0 0.0
    %8269 = vmatmul.mubr.f32.gmra.mxu0 %v6280
    %v8270 = vpop.f32.mrf.mxu0
    %v8271 = vadd.f32 %v7886, %v8270
    %v8272 = vpop.f32.mrf.mxu0
    %8273 = vmatprep.mubr.f32.mxu0 0.0
    %8274 = vmatmul.mubr.f32.gmra.mxu0 %v6289
    %v8275 = vpop.f32.mrf.mxu0
    %v8276 = vadd.f32 %v7891, %v8275
    %v8277 = vpop.f32.mrf.mxu0
    %8278 = vmatprep.mubr.f32.mxu0 0.0
    %8279 = vmatmul.mubr.f32.gmra.mxu0 %v6298
    %v8280 = vpop.f32.mrf.mxu0
    %v8281 = vadd.f32 %v7896, %v8280
    %v8282 = vpop.f32.mrf.mxu0
    %8283 = vmatprep.mubr.f32.mxu0 0.0
    %8284 = vmatmul.mubr.f32.gmra.mxu0 %v6307
    %v8285 = vpop.f32.mrf.mxu0
    %v8286 = vadd.f32 %v7901, %v8285
    %v8287 = vpop.f32.mrf.mxu0
    %8288 = vmatprep.mubr.f32.mxu0 0.0
    %8289 = vmatmul.mubr.f32.gmra.mxu0 %v6316
    %v8290 = vpop.f32.mrf.mxu0
    %v8291 = vadd.f32 %v7906, %v8290
    %v8292 = vpop.f32.mrf.mxu0
    %8293 = vmatprep.mubr.f32.mxu0 0.0
    %8294 = vmatmul.mubr.f32.gmra.mxu0 %v6325
    %v8295 = vpop.f32.mrf.mxu0
    %v8296 = vadd.f32 %v7911, %v8295
    %v8297 = vpop.f32.mrf.mxu0
    %8298 = vmatprep.mubr.f32.mxu0 0.0
    %8299 = vmatmul.mubr.f32.gmra.mxu0 %v6334
    %v8300 = vpop.f32.mrf.mxu0
    %v8301 = vadd.f32 %v7916, %v8300
    %v8302 = vpop.f32.mrf.mxu0
    %8303 = vmatprep.mubr.f32.mxu0 0.0
    %8304 = vmatmul.mubr.f32.gmra.mxu0 %v6343
    %v8305 = vpop.f32.mrf.mxu0
    %v8306 = vadd.f32 %v7921, %v8305
    %v8307 = vpop.f32.mrf.mxu0
    %8308 = vmatprep.mubr.f32.mxu0 0.0
    %8309 = vmatmul.mubr.f32.gmra.mxu0 %v6352
    %v8310 = vpop.f32.mrf.mxu0
    %v8311 = vadd.f32 %v7926, %v8310
    %v8312 = vpop.f32.mrf.mxu0
    %8313 = vmatprep.mubr.f32.mxu0 0.0
    %8314 = vmatmul.mubr.f32.gmra.mxu0 %v6361
    %v8315 = vpop.f32.mrf.mxu0
    %v8316 = vadd.f32 %v7931, %v8315
    %v8317 = vpop.f32.mrf.mxu0
    %8318 = vmatprep.mubr.f32.mxu0 0.0
    %8319 = vmatmul.mubr.f32.gmra.mxu0 %v6370
    %v8320 = vpop.f32.mrf.mxu0
    %v8321 = vadd.f32 %v7936, %v8320
    %v8322 = vpop.f32.mrf.mxu0
    %8323 = vmatprep.mubr.f32.mxu0 0.0
    %8324 = vmatmul.mubr.f32.gmra.mxu0 %v6379
    %v8325 = vpop.f32.mrf.mxu0
    %v8326 = vadd.f32 %v7941, %v8325
    %v8327 = vpop.f32.mrf.mxu0
    %8328 = vmatprep.mubr.f32.mxu0 0.0
    %8329 = vmatmul.mubr.f32.gmra.mxu0 %v6388
    %v8330 = vpop.f32.mrf.mxu0
    %v8331 = vadd.f32 %v7946, %v8330
    %v8332 = vpop.f32.mrf.mxu0
    %8333 = vmatprep.mubr.f32.mxu0 0.0
    %8334 = vmatmul.mubr.f32.gmra.mxu0 %v6397
    %v8335 = vpop.f32.mrf.mxu0
    %v8336 = vadd.f32 %v7951, %v8335
    %v8337 = vpop.f32.mrf.mxu0
    %8338 = vmatprep.mubr.f32.mxu0 0.0
    %8339 = vmatmul.mubr.f32.gmra.mxu0 %v6406
    %v8340 = vpop.f32.mrf.mxu0
    %v8341 = vadd.f32 %v7956, %v8340
    %v8342 = vpop.f32.mrf.mxu0
    %8343 = vmatprep.mubr.f32.mxu0 0.0
    %8344 = vmatmul.mubr.f32.gmra.mxu0 %v6415
    %v8345 = vpop.f32.mrf.mxu0
    %v8346 = vadd.f32 %v7961, %v8345
    %v8347 = vpop.f32.mrf.mxu0
    %8348 = vmatprep.mubr.f32.mxu0 0.0
    %8349 = vmatmul.mubr.f32.gmra.mxu0 %v6424
    %v8350 = vpop.f32.mrf.mxu0
    %v8351 = vadd.f32 %v7966, %v8350
    %v8352 = vpop.f32.mrf.mxu0
    %8353 = vmatprep.mubr.f32.mxu0 0.0
    %8354 = vmatmul.mubr.f32.gmra.mxu0 %v6433
    %v8355 = vpop.f32.mrf.mxu0
    %v8356 = vadd.f32 %v7971, %v8355
    %v8357 = vpop.f32.mrf.mxu0
    %8358 = vdwg.mxu0
    %v8359 = vld [vmem:[%s5] sm:$0x1]
    %v8360 = vld [vmem:[%s6] sm:$0x1]
    %v8361 = vadd.f32 %v8041, %v8046
    %v8362 = vadd.f32 %v8361, %v8051
    %v8363 = vadd.f32 %v8362, %v8056
    %v8364 = vadd.f32 %v8363, %v8061
    %v8365 = vadd.f32 %v8364, %v8066
    %v8366 = vadd.f32 %v8365, %v8071
    %v8367 = vadd.f32 %v8366, %v8076
    %v8368 = vadd.f32 %v8367, %v8081
    %v8369 = vadd.f32 %v8368, %v8086
    %v8370 = vadd.f32 %v8369, %v8091
    %v8371 = vadd.f32 %v8370, %v8096
    %v8372 = vadd.f32 %v8371, %v8101
    %v8373 = vadd.f32 %v8372, %v8106
    %v8374 = vadd.f32 %v8373, %v8111
    %v8375 = vadd.f32 %v8374, %v8116
    %v8376 = vadd.f32 %v8375, %v8121
    %v8377 = vadd.f32 %v8376, %v8126
    %v8378 = vadd.f32 %v8377, %v8131
    %v8379 = vadd.f32 %v8378, %v8136
    %v8380 = vadd.f32 %v8379, %v8141
    %v8381 = vadd.f32 %v8380, %v8146
    %v8382 = vadd.f32 %v8381, %v8151
    %v8383 = vadd.f32 %v8382, %v8156
    %v8384 = vadd.f32 %v8383, %v8161
    %v8385 = vadd.f32 %v8384, %v8166
    %v8386 = vadd.f32 %v8385, %v8171
    %v8387 = vadd.f32 %v8386, %v8176
    %v8388 = vadd.f32 %v8387, %v8181
    %v8389 = vadd.f32 %v8388, %v8186
    %v8390 = vadd.f32 %v8389, %v8191
    %v8391 = vadd.f32 %v8390, %v8196
    %v8392 = vadd.f32 %v8391, %v8201
    %v8393 = vadd.f32 %v8392, %v8206
    %v8394 = vadd.f32 %v8393, %v8211
    %v8395 = vadd.f32 %v8394, %v8216
    %v8396 = vadd.f32 %v8395, %v8221
    %v8397 = vadd.f32 %v8396, %v8226
    %v8398 = vadd.f32 %v8397, %v8231
    %v8399 = vadd.f32 %v8398, %v8236
    %v8400 = vadd.f32 %v8399, %v8241
    %v8401 = vadd.f32 %v8400, %v8246
    %v8402 = vadd.f32 %v8401, %v8251
    %v8403 = vadd.f32 %v8402, %v8256
    %v8404 = vadd.f32 %v8403, %v8261
    %v8405 = vadd.f32 %v8404, %v8266
    %v8406 = vadd.f32 %v8405, %v8271
    %v8407 = vadd.f32 %v8406, %v8276
    %v8408 = vadd.f32 %v8407, %v8281
    %v8409 = vadd.f32 %v8408, %v8286
    %v8410 = vadd.f32 %v8409, %v8291
    %v8411 = vadd.f32 %v8410, %v8296
    %v8412 = vadd.f32 %v8411, %v8301
    %v8413 = vadd.f32 %v8412, %v8306
    %v8414 = vadd.f32 %v8413, %v8311
    %v8415 = vadd.f32 %v8414, %v8316
    %v8416 = vadd.f32 %v8415, %v8321
    %v8417 = vadd.f32 %v8416, %v8326
    %v8418 = vadd.f32 %v8417, %v8331
    %v8419 = vadd.f32 %v8418, %v8336
    %v8420 = vadd.f32 %v8419, %v8341
    %v8421 = vadd.f32 %v8420, %v8346
    %v8422 = vadd.f32 %v8421, %v8351
    %v8423 = vadd.f32 %v8422, %v8356
    %v8424 = vrot.slane %v8423, 4
    %v8425 = vadd.f32 %v8423, %v8424
    %v8426 = vrot.slane %v8425, 2
    %v8427 = vadd.f32 %v8425, %v8426
    %v8428 = vrot.slane %v8427, 1
    %v8429 = vadd.f32 %v8427, %v8428
    %v8430 = vmul.f32 %v8041, %v8041
    %v8431 = vmul.f32 %v8046, %v8046
    %v8432 = vmul.f32 %v8051, %v8051
    %v8433 = vmul.f32 %v8056, %v8056
    %v8434 = vmul.f32 %v8061, %v8061
    %v8435 = vmul.f32 %v8066, %v8066
    %v8436 = vmul.f32 %v8071, %v8071
    %v8437 = vmul.f32 %v8076, %v8076
    %v8438 = vmul.f32 %v8081, %v8081
    %v8439 = vmul.f32 %v8086, %v8086
    %v8440 = vmul.f32 %v8091, %v8091
    %v8441 = vmul.f32 %v8096, %v8096
    %v8442 = vmul.f32 %v8101, %v8101
    %v8443 = vmul.f32 %v8106, %v8106
    %v8444 = vmul.f32 %v8111, %v8111
    %v8445 = vmul.f32 %v8116, %v8116
    %v8446 = vmul.f32 %v8121, %v8121
    %v8447 = vmul.f32 %v8126, %v8126
    %v8448 = vmul.f32 %v8131, %v8131
    %v8449 = vmul.f32 %v8136, %v8136
    %v8450 = vmul.f32 %v8141, %v8141
    %v8451 = vmul.f32 %v8146, %v8146
    %v8452 = vmul.f32 %v8151, %v8151
    %v8453 = vmul.f32 %v8156, %v8156
    %v8454 = vmul.f32 %v8161, %v8161
    %v8455 = vmul.f32 %v8166, %v8166
    %v8456 = vmul.f32 %v8171, %v8171
    %v8457 = vmul.f32 %v8176, %v8176
    %v8458 = vmul.f32 %v8181, %v8181
    %v8459 = vmul.f32 %v8186, %v8186
    %v8460 = vmul.f32 %v8191, %v8191
    %v8461 = vmul.f32 %v8196, %v8196
    %v8462 = vmul.f32 %v8201, %v8201
    %v8463 = vmul.f32 %v8206, %v8206
    %v8464 = vmul.f32 %v8211, %v8211
    %v8465 = vmul.f32 %v8216, %v8216
    %v8466 = vmul.f32 %v8221, %v8221
    %v8467 = vmul.f32 %v8226, %v8226
    %v8468 = vmul.f32 %v8231, %v8231
    %v8469 = vmul.f32 %v8236, %v8236
    %v8470 = vmul.f32 %v8241, %v8241
    %v8471 = vmul.f32 %v8246, %v8246
    %v8472 = vmul.f32 %v8251, %v8251
    %v8473 = vmul.f32 %v8256, %v8256
    %v8474 = vmul.f32 %v8261, %v8261
    %v8475 = vmul.f32 %v8266, %v8266
    %v8476 = vmul.f32 %v8271, %v8271
    %v8477 = vmul.f32 %v8276, %v8276
    %v8478 = vmul.f32 %v8281, %v8281
    %v8479 = vmul.f32 %v8286, %v8286
    %v8480 = vmul.f32 %v8291, %v8291
    %v8481 = vmul.f32 %v8296, %v8296
    %v8482 = vmul.f32 %v8301, %v8301
    %v8483 = vmul.f32 %v8306, %v8306
    %v8484 = vmul.f32 %v8311, %v8311
    %v8485 = vmul.f32 %v8316, %v8316
    %v8486 = vmul.f32 %v8321, %v8321
    %v8487 = vmul.f32 %v8326, %v8326
    %v8488 = vmul.f32 %v8331, %v8331
    %v8489 = vmul.f32 %v8336, %v8336
    %v8490 = vmul.f32 %v8341, %v8341
    %v8491 = vmul.f32 %v8346, %v8346
    %v8492 = vmul.f32 %v8351, %v8351
    %v8493 = vmul.f32 %v8356, %v8356
    %v8494 = vadd.f32 %v8430, %v8431
    %v8495 = vadd.f32 %v8494, %v8432
    %v8496 = vadd.f32 %v8495, %v8433
    %v8497 = vadd.f32 %v8496, %v8434
    %v8498 = vadd.f32 %v8497, %v8435
    %v8499 = vadd.f32 %v8498, %v8436
    %v8500 = vadd.f32 %v8499, %v8437
    %v8501 = vadd.f32 %v8500, %v8438
    %v8502 = vadd.f32 %v8501, %v8439
    %v8503 = vadd.f32 %v8502, %v8440
    %v8504 = vadd.f32 %v8503, %v8441
    %v8505 = vadd.f32 %v8504, %v8442
    %v8506 = vadd.f32 %v8505, %v8443
    %v8507 = vadd.f32 %v8506, %v8444
    %v8508 = vadd.f32 %v8507, %v8445
    %v8509 = vadd.f32 %v8508, %v8446
    %v8510 = vadd.f32 %v8509, %v8447
    %v8511 = vadd.f32 %v8510, %v8448
    %v8512 = vadd.f32 %v8511, %v8449
    %v8513 = vadd.f32 %v8512, %v8450
    %v8514 = vadd.f32 %v8513, %v8451
    %v8515 = vadd.f32 %v8514, %v8452
    %v8516 = vadd.f32 %v8515, %v8453
    %v8517 = vadd.f32 %v8516, %v8454
    %v8518 = vadd.f32 %v8517, %v8455
    %v8519 = vadd.f32 %v8518, %v8456
    %v8520 = vadd.f32 %v8519, %v8457
    %v8521 = vadd.f32 %v8520, %v8458
    %v8522 = vadd.f32 %v8521, %v8459
    %v8523 = vadd.f32 %v8522, %v8460
    %v8524 = vadd.f32 %v8523, %v8461
    %v8525 = vadd.f32 %v8524, %v8462
    %v8526 = vadd.f32 %v8525, %v8463
    %v8527 = vadd.f32 %v8526, %v8464
    %v8528 = vadd.f32 %v8527, %v8465
    %v8529 = vadd.f32 %v8528, %v8466
    %v8530 = vadd.f32 %v8529, %v8467
    %v8531 = vadd.f32 %v8530, %v8468
    %v8532 = vadd.f32 %v8531, %v8469
    %v8533 = vadd.f32 %v8532, %v8470
    %v8534 = vadd.f32 %v8533, %v8471
    %v8535 = vadd.f32 %v8534, %v8472
    %v8536 = vadd.f32 %v8535, %v8473
    %v8537 = vadd.f32 %v8536, %v8474
    %v8538 = vadd.f32 %v8537, %v8475
    %v8539 = vadd.f32 %v8538, %v8476
    %v8540 = vadd.f32 %v8539, %v8477
    %v8541 = vadd.f32 %v8540, %v8478
    %v8542 = vadd.f32 %v8541, %v8479
    %v8543 = vadd.f32 %v8542, %v8480
    %v8544 = vadd.f32 %v8543, %v8481
    %v8545 = vadd.f32 %v8544, %v8482
    %v8546 = vadd.f32 %v8545, %v8483
    %v8547 = vadd.f32 %v8546, %v8484
    %v8548 = vadd.f32 %v8547, %v8485
    %v8549 = vadd.f32 %v8548, %v8486
    %v8550 = vadd.f32 %v8549, %v8487
    %v8551 = vadd.f32 %v8550, %v8488
    %v8552 = vadd.f32 %v8551, %v8489
    %v8553 = vadd.f32 %v8552, %v8490
    %v8554 = vadd.f32 %v8553, %v8491
    %v8555 = vadd.f32 %v8554, %v8492
    %v8556 = vadd.f32 %v8555, %v8493
    %v8557 = vrot.slane %v8556, 4
    %v8558 = vadd.f32 %v8556, %v8557
    %v8559 = vrot.slane %v8558, 2
    %v8560 = vadd.f32 %v8558, %v8559
    %v8561 = vrot.slane %v8560, 1
    %v8562 = vadd.f32 %v8560, %v8561
    %v8563 = vmul.f32 %v8429, 0.001953125
    %v8564 = vmul.f32 %v8562, 0.001953125
    %v8565 = vmul.f32 %v8563, %v8563
    %v8566 = vsub.f32 %v8564, %v8565
    %v8567 = vmax.f32 %v8566, 0.0
    %v8568 = vadd.f32 %v8567, 1e-05
    %v8569 = vrsqrt.pop %v8568
    %v8570 = vmul.f32 %v8359, %v8569
    %v8571 = vmul.f32 %v8563, %v8570
    %v8572 = vsub.f32 %v8360, %v8571
    %v8574 = vlaneseq
    %v8575 = vshrl.u32 %v8574, 7
    %v8576 = vsub.s32 0, %v8575
    %v8577 = vrot.slane %v8570, %v8576
    %v8579 = vmul.f32 %v8041, %v8577
    %v8580 = vmul.f32 %v8046, %v8577
    %v8581 = vmul.f32 %v8051, %v8577
    %v8582 = vmul.f32 %v8056, %v8577
    %v8583 = vmul.f32 %v8061, %v8577
    %v8584 = vmul.f32 %v8066, %v8577
    %v8585 = vmul.f32 %v8071, %v8577
    %v8586 = vmul.f32 %v8076, %v8577
    %v8587 = vmul.f32 %v8081, %v8577
    %v8588 = vmul.f32 %v8086, %v8577
    %v8589 = vmul.f32 %v8091, %v8577
    %v8590 = vmul.f32 %v8096, %v8577
    %v8591 = vmul.f32 %v8101, %v8577
    %v8592 = vmul.f32 %v8106, %v8577
    %v8593 = vmul.f32 %v8111, %v8577
    %v8594 = vmul.f32 %v8116, %v8577
    %v8595 = vmul.f32 %v8121, %v8577
    %v8596 = vmul.f32 %v8126, %v8577
    %v8597 = vmul.f32 %v8131, %v8577
    %v8598 = vmul.f32 %v8136, %v8577
    %v8599 = vmul.f32 %v8141, %v8577
    %v8600 = vmul.f32 %v8146, %v8577
    %v8601 = vmul.f32 %v8151, %v8577
    %v8602 = vmul.f32 %v8156, %v8577
    %v8603 = vmul.f32 %v8161, %v8577
    %v8604 = vmul.f32 %v8166, %v8577
    %v8605 = vmul.f32 %v8171, %v8577
    %v8606 = vmul.f32 %v8176, %v8577
    %v8607 = vmul.f32 %v8181, %v8577
    %v8608 = vmul.f32 %v8186, %v8577
    %v8609 = vmul.f32 %v8191, %v8577
    %v8610 = vmul.f32 %v8196, %v8577
    %v8611 = vmul.f32 %v8201, %v8577
    %v8612 = vmul.f32 %v8206, %v8577
    %v8613 = vmul.f32 %v8211, %v8577
    %v8614 = vmul.f32 %v8216, %v8577
    %v8615 = vmul.f32 %v8221, %v8577
    %v8616 = vmul.f32 %v8226, %v8577
    %v8617 = vmul.f32 %v8231, %v8577
    %v8618 = vmul.f32 %v8236, %v8577
    %v8619 = vmul.f32 %v8241, %v8577
    %v8620 = vmul.f32 %v8246, %v8577
    %v8621 = vmul.f32 %v8251, %v8577
    %v8622 = vmul.f32 %v8256, %v8577
    %v8623 = vmul.f32 %v8261, %v8577
    %v8624 = vmul.f32 %v8266, %v8577
    %v8625 = vmul.f32 %v8271, %v8577
    %v8626 = vmul.f32 %v8276, %v8577
    %v8627 = vmul.f32 %v8281, %v8577
    %v8628 = vmul.f32 %v8286, %v8577
    %v8629 = vmul.f32 %v8291, %v8577
    %v8630 = vmul.f32 %v8296, %v8577
    %v8631 = vmul.f32 %v8301, %v8577
    %v8632 = vmul.f32 %v8306, %v8577
    %v8633 = vmul.f32 %v8311, %v8577
    %v8634 = vmul.f32 %v8316, %v8577
    %v8635 = vmul.f32 %v8321, %v8577
    %v8636 = vmul.f32 %v8326, %v8577
    %v8637 = vmul.f32 %v8331, %v8577
    %v8638 = vmul.f32 %v8336, %v8577
    %v8639 = vmul.f32 %v8341, %v8577
    %v8640 = vmul.f32 %v8346, %v8577
    %v8641 = vmul.f32 %v8351, %v8577
    %v8642 = vmul.f32 %v8356, %v8577
    %v8644 = vlaneseq
    %v8645 = vshrl.u32 %v8644, 7
    %v8646 = vsub.s32 0, %v8645
    %v8647 = vrot.slane %v8572, %v8646
    %v8649 = vadd.f32 %v8579, %v8647
    %v8650 = vadd.f32 %v8580, %v8647
    %v8651 = vadd.f32 %v8581, %v8647
    %v8652 = vadd.f32 %v8582, %v8647
    %v8653 = vadd.f32 %v8583, %v8647
    %v8654 = vadd.f32 %v8584, %v8647
    %v8655 = vadd.f32 %v8585, %v8647
    %v8656 = vadd.f32 %v8586, %v8647
    %v8657 = vadd.f32 %v8587, %v8647
    %v8658 = vadd.f32 %v8588, %v8647
    %v8659 = vadd.f32 %v8589, %v8647
    %v8660 = vadd.f32 %v8590, %v8647
    %v8661 = vadd.f32 %v8591, %v8647
    %v8662 = vadd.f32 %v8592, %v8647
    %v8663 = vadd.f32 %v8593, %v8647
    %v8664 = vadd.f32 %v8594, %v8647
    %v8665 = vadd.f32 %v8595, %v8647
    %v8666 = vadd.f32 %v8596, %v8647
    %v8667 = vadd.f32 %v8597, %v8647
    %v8668 = vadd.f32 %v8598, %v8647
    %v8669 = vadd.f32 %v8599, %v8647
    %v8670 = vadd.f32 %v8600, %v8647
    %v8671 = vadd.f32 %v8601, %v8647
    %v8672 = vadd.f32 %v8602, %v8647
    %v8673 = vadd.f32 %v8603, %v8647
    %v8674 = vadd.f32 %v8604, %v8647
    %v8675 = vadd.f32 %v8605, %v8647
    %v8676 = vadd.f32 %v8606, %v8647
    %v8677 = vadd.f32 %v8607, %v8647
    %v8678 = vadd.f32 %v8608, %v8647
    %v8679 = vadd.f32 %v8609, %v8647
    %v8680 = vadd.f32 %v8610, %v8647
    %v8681 = vadd.f32 %v8611, %v8647
    %v8682 = vadd.f32 %v8612, %v8647
    %v8683 = vadd.f32 %v8613, %v8647
    %v8684 = vadd.f32 %v8614, %v8647
    %v8685 = vadd.f32 %v8615, %v8647
    %v8686 = vadd.f32 %v8616, %v8647
    %v8687 = vadd.f32 %v8617, %v8647
    %v8688 = vadd.f32 %v8618, %v8647
    %v8689 = vadd.f32 %v8619, %v8647
    %v8690 = vadd.f32 %v8620, %v8647
    %v8691 = vadd.f32 %v8621, %v8647
    %v8692 = vadd.f32 %v8622, %v8647
    %v8693 = vadd.f32 %v8623, %v8647
    %v8694 = vadd.f32 %v8624, %v8647
    %v8695 = vadd.f32 %v8625, %v8647
    %v8696 = vadd.f32 %v8626, %v8647
    %v8697 = vadd.f32 %v8627, %v8647
    %v8698 = vadd.f32 %v8628, %v8647
    %v8699 = vadd.f32 %v8629, %v8647
    %v8700 = vadd.f32 %v8630, %v8647
    %v8701 = vadd.f32 %v8631, %v8647
    %v8702 = vadd.f32 %v8632, %v8647
    %v8703 = vadd.f32 %v8633, %v8647
    %v8704 = vadd.f32 %v8634, %v8647
    %v8705 = vadd.f32 %v8635, %v8647
    %v8706 = vadd.f32 %v8636, %v8647
    %v8707 = vadd.f32 %v8637, %v8647
    %v8708 = vadd.f32 %v8638, %v8647
    %v8709 = vadd.f32 %v8639, %v8647
    %v8710 = vadd.f32 %v8640, %v8647
    %v8711 = vadd.f32 %v8641, %v8647
    %v8712 = vadd.f32 %v8642, %v8647
    %v8713 = vld [vmem:[#allocation4] sm:$0xff]
    %v8714 = vld [vmem:[#allocation4 + $0x8] sm:$0xff]
    %v8715 = vld [vmem:[#allocation4 + $0x10] sm:$0xff]
    %v8716 = vld [vmem:[#allocation4 + $0x18] sm:$0xff]
    %v8717 = vld [vmem:[#allocation4 + $0x20] sm:$0xff]
    %v8718 = vld [vmem:[#allocation4 + $0x28] sm:$0xff]
    %v8719 = vld [vmem:[#allocation4 + $0x30] sm:$0xff]
    %v8720 = vld [vmem:[#allocation4 + $0x38] sm:$0xff]
    %v8721 = vld [vmem:[#allocation4 + $0x40] sm:$0xff]
    %v8722 = vld [vmem:[#allocation4 + $0x48] sm:$0xff]
    %v8723 = vld [vmem:[#allocation4 + $0x50] sm:$0xff]
    %v8724 = vld [vmem:[#allocation4 + $0x58] sm:$0xff]
    %v8725 = vld [vmem:[#allocation4 + $0x60] sm:$0xff]
    %v8726 = vld [vmem:[#allocation4 + $0x68] sm:$0xff]
    %v8727 = vld [vmem:[#allocation4 + $0x70] sm:$0xff]
    %v8728 = vld [vmem:[#allocation4 + $0x78] sm:$0xff]
    %v8729 = vld [vmem:[#allocation4 + $0x80] sm:$0xff]
    %v8730 = vld [vmem:[#allocation4 + $0x88] sm:$0xff]
    %v8731 = vld [vmem:[#allocation4 + $0x90] sm:$0xff]
    %v8732 = vld [vmem:[#allocation4 + $0x98] sm:$0xff]
    %v8733 = vld [vmem:[#allocation4 + $0xa0] sm:$0xff]
    %v8734 = vld [vmem:[#allocation4 + $0xa8] sm:$0xff]
    %v8735 = vld [vmem:[#allocation4 + $0xb0] sm:$0xff]
    %v8736 = vld [vmem:[#allocation4 + $0xb8] sm:$0xff]
    %v8737 = vld [vmem:[#allocation4 + $0xc0] sm:$0xff]
    %v8738 = vld [vmem:[#allocation4 + $0xc8] sm:$0xff]
    %v8739 = vld [vmem:[#allocation4 + $0xd0] sm:$0xff]
    %v8740 = vld [vmem:[#allocation4 + $0xd8] sm:$0xff]
    %v8741 = vld [vmem:[#allocation4 + $0xe0] sm:$0xff]
    %v8742 = vld [vmem:[#allocation4 + $0xe8] sm:$0xff]
    %v8743 = vld [vmem:[#allocation4 + $0xf0] sm:$0xff]
    %v8744 = vld [vmem:[#allocation4 + $0xf8] sm:$0xff]
    %v8745 = vld [vmem:[#allocation4 + $0x100] sm:$0xff]
    %v8746 = vld [vmem:[#allocation4 + $0x108] sm:$0xff]
    %v8747 = vld [vmem:[#allocation4 + $0x110] sm:$0xff]
    %v8748 = vld [vmem:[#allocation4 + $0x118] sm:$0xff]
    %v8749 = vld [vmem:[#allocation4 + $0x120] sm:$0xff]
    %v8750 = vld [vmem:[#allocation4 + $0x128] sm:$0xff]
    %v8751 = vld [vmem:[#allocation4 + $0x130] sm:$0xff]
    %v8752 = vld [vmem:[#allocation4 + $0x138] sm:$0xff]
    %v8753 = vld [vmem:[#allocation4 + $0x140] sm:$0xff]
    %v8754 = vld [vmem:[#allocation4 + $0x148] sm:$0xff]
    %v8755 = vld [vmem:[#allocation4 + $0x150] sm:$0xff]
    %v8756 = vld [vmem:[#allocation4 + $0x158] sm:$0xff]
    %v8757 = vld [vmem:[#allocation4 + $0x160] sm:$0xff]
    %v8758 = vld [vmem:[#allocation4 + $0x168] sm:$0xff]
    %v8759 = vld [vmem:[#allocation4 + $0x170] sm:$0xff]
    %v8760 = vld [vmem:[#allocation4 + $0x178] sm:$0xff]
    %v8761 = vld [vmem:[#allocation4 + $0x180] sm:$0xff]
    %v8762 = vld [vmem:[#allocation4 + $0x188] sm:$0xff]
    %v8763 = vld [vmem:[#allocation4 + $0x190] sm:$0xff]
    %v8764 = vld [vmem:[#allocation4 + $0x198] sm:$0xff]
    %v8765 = vld [vmem:[#allocation4 + $0x1a0] sm:$0xff]
    %v8766 = vld [vmem:[#allocation4 + $0x1a8] sm:$0xff]
    %v8767 = vld [vmem:[#allocation4 + $0x1b0] sm:$0xff]
    %v8768 = vld [vmem:[#allocation4 + $0x1b8] sm:$0xff]
    %v8769 = vld [vmem:[#allocation4 + $0x1c0] sm:$0xff]
    %v8770 = vld [vmem:[#allocation4 + $0x1c8] sm:$0xff]
    %v8771 = vld [vmem:[#allocation4 + $0x1d0] sm:$0xff]
    %v8772 = vld [vmem:[#allocation4 + $0x1d8] sm:$0xff]
    %v8773 = vld [vmem:[#allocation4 + $0x1e0] sm:$0xff]
    %v8774 = vld [vmem:[#allocation4 + $0x1e8] sm:$0xff]
    %v8775 = vld [vmem:[#allocation4 + $0x1f0] sm:$0xff]
    %v8776 = vld [vmem:[#allocation4 + $0x1f8] sm:$0xff]
    %v8777 = vadd.f32 %v8713, %v8649
    %v8778 = vadd.f32 %v8714, %v8650
    %v8779 = vadd.f32 %v8715, %v8651
    %v8780 = vadd.f32 %v8716, %v8652
    %v8781 = vadd.f32 %v8717, %v8653
    %v8782 = vadd.f32 %v8718, %v8654
    %v8783 = vadd.f32 %v8719, %v8655
    %v8784 = vadd.f32 %v8720, %v8656
    %v8785 = vadd.f32 %v8721, %v8657
    %v8786 = vadd.f32 %v8722, %v8658
    %v8787 = vadd.f32 %v8723, %v8659
    %v8788 = vadd.f32 %v8724, %v8660
    %v8789 = vadd.f32 %v8725, %v8661
    %v8790 = vadd.f32 %v8726, %v8662
    %v8791 = vadd.f32 %v8727, %v8663
    %v8792 = vadd.f32 %v8728, %v8664
    %v8793 = vadd.f32 %v8729, %v8665
    %v8794 = vadd.f32 %v8730, %v8666
    %v8795 = vadd.f32 %v8731, %v8667
    %v8796 = vadd.f32 %v8732, %v8668
    %v8797 = vadd.f32 %v8733, %v8669
    %v8798 = vadd.f32 %v8734, %v8670
    %v8799 = vadd.f32 %v8735, %v8671
    %v8800 = vadd.f32 %v8736, %v8672
    %v8801 = vadd.f32 %v8737, %v8673
    %v8802 = vadd.f32 %v8738, %v8674
    %v8803 = vadd.f32 %v8739, %v8675
    %v8804 = vadd.f32 %v8740, %v8676
    %v8805 = vadd.f32 %v8741, %v8677
    %v8806 = vadd.f32 %v8742, %v8678
    %v8807 = vadd.f32 %v8743, %v8679
    %v8808 = vadd.f32 %v8744, %v8680
    %v8809 = vadd.f32 %v8745, %v8681
    %v8810 = vadd.f32 %v8746, %v8682
    %v8811 = vadd.f32 %v8747, %v8683
    %v8812 = vadd.f32 %v8748, %v8684
    %v8813 = vadd.f32 %v8749, %v8685
    %v8814 = vadd.f32 %v8750, %v8686
    %v8815 = vadd.f32 %v8751, %v8687
    %v8816 = vadd.f32 %v8752, %v8688
    %v8817 = vadd.f32 %v8753, %v8689
    %v8818 = vadd.f32 %v8754, %v8690
    %v8819 = vadd.f32 %v8755, %v8691
    %v8820 = vadd.f32 %v8756, %v8692
    %v8821 = vadd.f32 %v8757, %v8693
    %v8822 = vadd.f32 %v8758, %v8694
    %v8823 = vadd.f32 %v8759, %v8695
    %v8824 = vadd.f32 %v8760, %v8696
    %v8825 = vadd.f32 %v8761, %v8697
    %v8826 = vadd.f32 %v8762, %v8698
    %v8827 = vadd.f32 %v8763, %v8699
    %v8828 = vadd.f32 %v8764, %v8700
    %v8829 = vadd.f32 %v8765, %v8701
    %v8830 = vadd.f32 %v8766, %v8702
    %v8831 = vadd.f32 %v8767, %v8703
    %v8832 = vadd.f32 %v8768, %v8704
    %v8833 = vadd.f32 %v8769, %v8705
    %v8834 = vadd.f32 %v8770, %v8706
    %v8835 = vadd.f32 %v8771, %v8707
    %v8836 = vadd.f32 %v8772, %v8708
    %v8837 = vadd.f32 %v8773, %v8709
    %v8838 = vadd.f32 %v8774, %v8710
    %v8839 = vadd.f32 %v8775, %v8711
    %v8840 = vadd.f32 %v8776, %v8712
    %v8841 = vmax.f32 %v8777, 0.0
    %v8842 = vmax.f32 %v8778, 0.0
    %v8843 = vmax.f32 %v8779, 0.0
    %v8844 = vmax.f32 %v8780, 0.0
    %v8845 = vmax.f32 %v8781, 0.0
    %v8846 = vmax.f32 %v8782, 0.0
    %v8847 = vmax.f32 %v8783, 0.0
    %v8848 = vmax.f32 %v8784, 0.0
    %v8849 = vmax.f32 %v8785, 0.0
    %v8850 = vmax.f32 %v8786, 0.0
    %v8851 = vmax.f32 %v8787, 0.0
    %v8852 = vmax.f32 %v8788, 0.0
    %v8853 = vmax.f32 %v8789, 0.0
    %v8854 = vmax.f32 %v8790, 0.0
    %v8855 = vmax.f32 %v8791, 0.0
    %v8856 = vmax.f32 %v8792, 0.0
    %v8857 = vmax.f32 %v8793, 0.0
    %v8858 = vmax.f32 %v8794, 0.0
    %v8859 = vmax.f32 %v8795, 0.0
    %v8860 = vmax.f32 %v8796, 0.0
    %v8861 = vmax.f32 %v8797, 0.0
    %v8862 = vmax.f32 %v8798, 0.0
    %v8863 = vmax.f32 %v8799, 0.0
    %v8864 = vmax.f32 %v8800, 0.0
    %v8865 = vmax.f32 %v8801, 0.0
    %v8866 = vmax.f32 %v8802, 0.0
    %v8867 = vmax.f32 %v8803, 0.0
    %v8868 = vmax.f32 %v8804, 0.0
    %v8869 = vmax.f32 %v8805, 0.0
    %v8870 = vmax.f32 %v8806, 0.0
    %v8871 = vmax.f32 %v8807, 0.0
    %v8872 = vmax.f32 %v8808, 0.0
    %v8873 = vmax.f32 %v8809, 0.0
    %v8874 = vmax.f32 %v8810, 0.0
    %v8875 = vmax.f32 %v8811, 0.0
    %v8876 = vmax.f32 %v8812, 0.0
    %v8877 = vmax.f32 %v8813, 0.0
    %v8878 = vmax.f32 %v8814, 0.0
    %v8879 = vmax.f32 %v8815, 0.0
    %v8880 = vmax.f32 %v8816, 0.0
    %v8881 = vmax.f32 %v8817, 0.0
    %v8882 = vmax.f32 %v8818, 0.0
    %v8883 = vmax.f32 %v8819, 0.0
    %v8884 = vmax.f32 %v8820, 0.0
    %v8885 = vmax.f32 %v8821, 0.0
    %v8886 = vmax.f32 %v8822, 0.0
    %v8887 = vmax.f32 %v8823, 0.0
    %v8888 = vmax.f32 %v8824, 0.0
    %v8889 = vmax.f32 %v8825, 0.0
    %v8890 = vmax.f32 %v8826, 0.0
    %v8891 = vmax.f32 %v8827, 0.0
    %v8892 = vmax.f32 %v8828, 0.0
    %v8893 = vmax.f32 %v8829, 0.0
    %v8894 = vmax.f32 %v8830, 0.0
    %v8895 = vmax.f32 %v8831, 0.0
    %v8896 = vmax.f32 %v8832, 0.0
    %v8897 = vmax.f32 %v8833, 0.0
    %v8898 = vmax.f32 %v8834, 0.0
    %v8899 = vmax.f32 %v8835, 0.0
    %v8900 = vmax.f32 %v8836, 0.0
    %v8901 = vmax.f32 %v8837, 0.0
    %v8902 = vmax.f32 %v8838, 0.0
    %v8903 = vmax.f32 %v8839, 0.0
    %v8904 = vmax.f32 %v8840, 0.0
    %8905 = vst [vmem:[#allocation10] sm:$0xff] %v8841
    %8906 = vst [vmem:[#allocation10 + $0x8] sm:$0xff] %v8842
    %8907 = vst [vmem:[#allocation10 + $0x10] sm:$0xff] %v8843
    %8908 = vst [vmem:[#allocation10 + $0x18] sm:$0xff] %v8844
    %8909 = vst [vmem:[#allocation10 + $0x20] sm:$0xff] %v8845
    %8910 = vst [vmem:[#allocation10 + $0x28] sm:$0xff] %v8846
    %8911 = vst [vmem:[#allocation10 + $0x30] sm:$0xff] %v8847
    %8912 = vst [vmem:[#allocation10 + $0x38] sm:$0xff] %v8848
    %8913 = vst [vmem:[#allocation10 + $0x40] sm:$0xff] %v8849
    %8914 = vst [vmem:[#allocation10 + $0x48] sm:$0xff] %v8850
    %8915 = vst [vmem:[#allocation10 + $0x50] sm:$0xff] %v8851
    %8916 = vst [vmem:[#allocation10 + $0x58] sm:$0xff] %v8852
    %8917 = vst [vmem:[#allocation10 + $0x60] sm:$0xff] %v8853
    %8918 = vst [vmem:[#allocation10 + $0x68] sm:$0xff] %v8854
    %8919 = vst [vmem:[#allocation10 + $0x70] sm:$0xff] %v8855
    %8920 = vst [vmem:[#allocation10 + $0x78] sm:$0xff] %v8856
    %8921 = vst [vmem:[#allocation10 + $0x80] sm:$0xff] %v8857
    %8922 = vst [vmem:[#allocation10 + $0x88] sm:$0xff] %v8858
    %8923 = vst [vmem:[#allocation10 + $0x90] sm:$0xff] %v8859
    %8924 = vst [vmem:[#allocation10 + $0x98] sm:$0xff] %v8860
    %8925 = vst [vmem:[#allocation10 + $0xa0] sm:$0xff] %v8861
    %8926 = vst [vmem:[#allocation10 + $0xa8] sm:$0xff] %v8862
    %8927 = vst [vmem:[#allocation10 + $0xb0] sm:$0xff] %v8863
    %8928 = vst [vmem:[#allocation10 + $0xb8] sm:$0xff] %v8864
    %8929 = vst [vmem:[#allocation10 + $0xc0] sm:$0xff] %v8865
    %8930 = vst [vmem:[#allocation10 + $0xc8] sm:$0xff] %v8866
    %8931 = vst [vmem:[#allocation10 + $0xd0] sm:$0xff] %v8867
    %8932 = vst [vmem:[#allocation10 + $0xd8] sm:$0xff] %v8868
    %8933 = vst [vmem:[#allocation10 + $0xe0] sm:$0xff] %v8869
    %8934 = vst [vmem:[#allocation10 + $0xe8] sm:$0xff] %v8870
    %8935 = vst [vmem:[#allocation10 + $0xf0] sm:$0xff] %v8871
    %8936 = vst [vmem:[#allocation10 + $0xf8] sm:$0xff] %v8872
    %8937 = vst [vmem:[#allocation10 + $0x100] sm:$0xff] %v8873
    %8938 = vst [vmem:[#allocation10 + $0x108] sm:$0xff] %v8874
    %8939 = vst [vmem:[#allocation10 + $0x110] sm:$0xff] %v8875
    %8940 = vst [vmem:[#allocation10 + $0x118] sm:$0xff] %v8876
    %8941 = vst [vmem:[#allocation10 + $0x120] sm:$0xff] %v8877
    %8942 = vst [vmem:[#allocation10 + $0x128] sm:$0xff] %v8878
    %8943 = vst [vmem:[#allocation10 + $0x130] sm:$0xff] %v8879
    %8944 = vst [vmem:[#allocation10 + $0x138] sm:$0xff] %v8880
    %8945 = vst [vmem:[#allocation10 + $0x140] sm:$0xff] %v8881
    %8946 = vst [vmem:[#allocation10 + $0x148] sm:$0xff] %v8882
    %8947 = vst [vmem:[#allocation10 + $0x150] sm:$0xff] %v8883
    %8948 = vst [vmem:[#allocation10 + $0x158] sm:$0xff] %v8884
    %8949 = vst [vmem:[#allocation10 + $0x160] sm:$0xff] %v8885
    %8950 = vst [vmem:[#allocation10 + $0x168] sm:$0xff] %v8886
    %8951 = vst [vmem:[#allocation10 + $0x170] sm:$0xff] %v8887
    %8952 = vst [vmem:[#allocation10 + $0x178] sm:$0xff] %v8888
    %8953 = vst [vmem:[#allocation10 + $0x180] sm:$0xff] %v8889
    %8954 = vst [vmem:[#allocation10 + $0x188] sm:$0xff] %v8890
    %8955 = vst [vmem:[#allocation10 + $0x190] sm:$0xff] %v8891
    %8956 = vst [vmem:[#allocation10 + $0x198] sm:$0xff] %v8892
    %8957 = vst [vmem:[#allocation10 + $0x1a0] sm:$0xff] %v8893
    %8958 = vst [vmem:[#allocation10 + $0x1a8] sm:$0xff] %v8894
    %8959 = vst [vmem:[#allocation10 + $0x1b0] sm:$0xff] %v8895
    %8960 = vst [vmem:[#allocation10 + $0x1b8] sm:$0xff] %v8896
    %8961 = vst [vmem:[#allocation10 + $0x1c0] sm:$0xff] %v8897
    %8962 = vst [vmem:[#allocation10 + $0x1c8] sm:$0xff] %v8898
    %8963 = vst [vmem:[#allocation10 + $0x1d0] sm:$0xff] %v8899
    %8964 = vst [vmem:[#allocation10 + $0x1d8] sm:$0xff] %v8900
    %8965 = vst [vmem:[#allocation10 + $0x1e0] sm:$0xff] %v8901
    %8966 = vst [vmem:[#allocation10 + $0x1e8] sm:$0xff] %v8902
    %8967 = vst [vmem:[#allocation10 + $0x1f0] sm:$0xff] %v8903
    %8968 = vst [vmem:[#allocation10 + $0x1f8] sm:$0xff] %v8904
    // Predicated region
    $region42: #{tpu_custom_call.1} parent=1 // pred_check
      _
    $region43: #{tpu_custom_call.1} parent=1 // pred_check_branch
      %8970 = sbr.rel (0) target = $region45
    $region44: #{tpu_custom_call.1} parent=1 // pred_region
      %s8972 = ssub.s32 8192, 8192
      %8973 = vsyncadd [#allocation6], %s8972
      %s8974 = sshll.u32 [#allocation10], 4
      %s8975 = int_to_ptr.vmem [resolvable:$true] %s8974
      %8980 = dma.vmem_to_hbm [thread:$0]  %s8975, 8192, %s7, [#allocation6], 128, 128, 8
    $region45: #{tpu_custom_call.1} parent=1 // pred_fallthru
      _
    // Predicated region
    $region46: #{tpu_custom_call.1} parent=1 // pred_check
      _
    $region47: #{tpu_custom_call.1} parent=1 // pred_check_branch
      %8982 = sbr.rel (0) target = $region49
    $region48: #{tpu_custom_call.1} parent=1 // pred_region
      %8983 = dma.done [#allocation6], 8192
    $region49: #{tpu_custom_call.1} parent=1 // pred_fallthru
      _
    %8984 = vsyncpa [#allocation5], 1
    %8985 = vsyncpa [#allocation8], 1
    %8986 = vsyncpa [#allocation6], 1

</llo_original>
